<compile_context>
chip_gen: v5e
topology: v5e:2x2
jax: 0.10.0
libtpu: 0.0.40
codegen_flags: <defaults>
</compile_context>

<pallas_src>
import functools

import jax
import jax.numpy as jnp
import numpy as np
from jax.experimental import pallas as pl
from jax.experimental.pallas import tpu as pltpu


def _encoder_kernel(a1_ref, w1_ref, w234_ref, b_ref, o_ref,
                    act1, act2, act3, slab, *, bb):
    """Fused 4-layer 3x3-conv + ReLU encoder for one block of `bb` images.

    Layouts (lane index of every activation = w*bb + b, batch innermost):
      a1_ref : (1, OH1, 9*Cin, OW1*bb)  layer-1 im2col (stride 2), bf16
      act<l> : (OH_l, 32, OW_l*bb)      bf16 activations, resident in VMEM
      slab   : (288, OW2*bb)            reused K=288 im2col slab (layers 2-4)
      o_ref  : (1, OH4, 32, OW4*bb)     f32 output
    """
    f32 = jnp.float32

    # ---- layer 1 (stride 2): lane-dense GEMM per output row, K = 9*Cin ----
    w1 = w1_ref[...]                                       # (32, 9*Cin) bf16
    b1 = jnp.broadcast_to(b_ref[0], (32, act1.shape[2]))   # hoisted broadcast
    for r in range(act1.shape[0]):
        acc = jnp.dot(w1, a1_ref[0, r], preferred_element_type=f32) + b1
        act1[r] = jnp.maximum(acc, 0.0).astype(act1.dtype)

    # ---- layers 2-4 (stride 1): K=288 GEMM per output row via VMEM im2col ----
    def conv3x3_relu(src, layer_idx, store_row):
        oh_in, _, lanes_in = src.shape
        ow_in = lanes_in // bb
        oh_out, ow_out = oh_in - 2, ow_in - 2
        lanes = ow_out * bb
        wmat = w234_ref[layer_idx]                          # (32, 288) bf16
        bias = jnp.broadcast_to(b_ref[layer_idx + 1], (32, lanes))
        for r in range(oh_out):
            # Gather the 9 shifted taps of source rows r..r+2 into the slab:
            # slab[(kh*3+kw)*32 + c, w*bb + b] = src[r+kh, c, (w+kw)*bb + b]
            for kh in range(3):
                row = src[r + kh]                           # (32, ow_in*bb)
                for kw in range(3):
                    t = kh * 3 + kw
                    slab[t * 32:(t + 1) * 32, :lanes] = \
                        row[:, kw * bb:kw * bb + lanes]
            acc = jnp.dot(wmat, slab[:, :lanes],
                          preferred_element_type=f32) + bias
            store_row(r, jnp.maximum(acc, 0.0))

    def store2(r, v):
        act2[r] = v.astype(act2.dtype)

    def store3(r, v):
        act3[r] = v.astype(act3.dtype)

    def store_out(r, v):
        o_ref[0, r] = v.astype(o_ref.dtype)

    conv3x3_relu(act1, 0, store2)
    conv3x3_relu(act2, 1, store3)
    conv3x3_relu(act3, 2, store_out)


def _prep_weights(params):
    """Fold normalization into layer 1 and lay weights out for the kernel."""
    (w1, b1), (w2, b2), (w3, b3), (w4, b4) = params

    # conv(obs/255 - 0.5, W1) + b1 == conv(obs, W1/255) + (b1 - 0.5*sum(W1))
    w1f = w1.astype(jnp.float32) / 255.0
    b1f = b1.astype(jnp.float32) - 0.5 * jnp.sum(w1.astype(jnp.float32),
                                                 axis=(1, 2, 3))

    def flat(wf):  # OIHW -> (Cout, K) with K index = (kh*3 + kw)*Cin + ci
        return jnp.transpose(wf.astype(jnp.float32), (0, 2, 3, 1)).reshape(
            wf.shape[0], -1)

    w1t = flat(w1f).astype(jnp.bfloat16)                    # (32, 9*Cin)
    w234 = jnp.stack([flat(w2), flat(w3), flat(w4)],
                     axis=0).astype(jnp.bfloat16)           # (3, 32, 288)
    biases = jnp.stack(
        [b1f, b2.astype(jnp.float32), b3.astype(jnp.float32),
         b4.astype(jnp.float32)], axis=0).reshape(4, 32, 1)  # f32
    return w1t, w234, biases


def init_encoder_params(key, in_channels):
    """Deterministic synthetic init (PyTorch uses orthogonal weight_init; any
    deterministic init is fine for the forward-pass check). OIHW, zero bias."""
    params = []
    cin = in_channels
    for _ in range(4):
        key, wk = jax.random.split(key)
        w = jax.random.normal(wk, (32, cin, 3, 3), jnp.float32) * 0.05
        b = jnp.zeros((32,), jnp.float32)
        params.append((w, b))
        cin = 32
    return params


def encoder_forward(params, obs_nchw, block_b=None):
    """obs_nchw: (N, C, H, W) raw pixel observations (integer-valued, e.g. uint8).

    block_b = images per grid step (folded into GEMM lanes).  Default 32; on
    v7x keep N/block_b >= 2 so both TensorCores get whole blocks.
    """
    n, cin, h, w = obs_nchw.shape
    oh1, ow1 = (h - 3) // 2 + 1, (w - 3) // 2 + 1
    oh2, ow2 = oh1 - 2, ow1 - 2
    oh3, ow3 = oh2 - 2, ow2 - 2
    oh4, ow4 = oh3 - 2, ow3 - 2

    if block_b is None:
        block_b = max(1, min(32, n))
    nblk = -(-n // block_b)
    n_pad = nblk * block_b
    if n_pad != n:
        pad = jnp.zeros((n_pad - n, cin, h, w), obs_nchw.dtype)
        obs_nchw = jnp.concatenate([obs_nchw, pad], axis=0)

    w1t, w234, biases = _prep_weights(params)

    # Layer-1 im2col (stride 2) with the batch folded innermost into the lane
    # dim:  a1[blk, r, (kh*3+kw)*Cin + ci, w*B + b] = obs[blk*B+b, ci, 2r+kh, 2w+kw]
    # The transpose runs on the non-replicated obs; tap extraction is just
    # strided slices + a stack.  Raw pixels (0..255 ints) are exact in bf16.
    obs_b = obs_nchw.reshape(nblk, block_b, cin, h, w).astype(jnp.bfloat16)
    obs_b = jnp.transpose(obs_b, (0, 3, 2, 4, 1))           # (nblk, H, Cin, W, B)
    cols = [obs_b[:, kh:kh + 2 * (oh1 - 1) + 1:2, :,
                  kw:kw + 2 * (ow1 - 1) + 1:2, :]
            for kh in range(3) for kw in range(3)]          # (nblk, OH1, Cin, OW1, B)
    a1 = jnp.stack(cols, axis=2)                            # (nblk, OH1, 9, Cin, OW1, B)
    a1 = a1.reshape(nblk, oh1, 9 * cin, ow1 * block_b)

    kernel = functools.partial(_encoder_kernel, bb=block_b)
    out = pl.pallas_call(
        kernel,
        out_shape=jax.ShapeDtypeStruct((nblk, oh4, 32, ow4 * block_b),
                                       jnp.float32),
        grid=(nblk,),
        in_specs=[
            pl.BlockSpec((1, oh1, 9 * cin, ow1 * block_b),
                         lambda i: (i, 0, 0, 0)),
            pl.BlockSpec((32, 9 * cin), lambda i: (0, 0)),
            pl.BlockSpec((3, 32, 9 * 32), lambda i: (0, 0, 0)),
            pl.BlockSpec((4, 32, 1), lambda i: (0, 0, 0)),
        ],
        out_specs=pl.BlockSpec((1, oh4, 32, ow4 * block_b),
                               lambda i: (i, 0, 0, 0)),
        scratch_shapes=[
            pltpu.VMEM((oh1, 32, ow1 * block_b), jnp.bfloat16),  # act layer 1
            pltpu.VMEM((oh2, 32, ow2 * block_b), jnp.bfloat16),  # act layer 2
            pltpu.VMEM((oh3, 32, ow3 * block_b), jnp.bfloat16),  # act layer 3
            pltpu.VMEM((9 * 32, ow2 * block_b), jnp.bfloat16),   # K=288 slab
        ],
        compiler_params=pltpu.CompilerParams(
            dimension_semantics=("parallel",)),
    )(a1, w1t, w234, biases)

    # Un-interleave the batch from the lane dim (tiny: 32*OH4*OW4 per image)
    # and flatten exactly like torch's h.view(N, -1) on NCHW.
    out = out.reshape(nblk, oh4, 32, ow4, block_b)
    out = jnp.transpose(out, (0, 4, 2, 1, 3))               # (nblk, B, 32, OH4, OW4)
    return out.reshape(n_pad, 32 * oh4 * ow4)[:n]


def _reference_forward(params, obs_nchw):
    """Plain-JAX f32 reference (lax conv) matching the PyTorch module."""
    x = obs_nchw.astype(jnp.float32) / 255.0 - 0.5
    strides = (2, 1, 1, 1)
    for (w, b), s in zip(params, strides):
        x = jax.lax.conv_general_dilated(
            x, w, window_strides=(s, s), padding="VALID",
            dimension_numbers=("NCHW", "OIHW", "NCHW"))
        x = jnp.maximum(x + b.reshape(1, -1, 1, 1), 0.0)
    return x.reshape(x.shape[0], -1)


if __name__ == "__main__":
    key = jax.random.PRNGKey(0)
    pkey, xkey = jax.random.split(key)

    # obs_shape = (4, 20, 20), batch 8. Spatial chain: 20 -> 9 -> 7 -> 5 -> 3.
    obs = jax.random.randint(xkey, (8, 4, 20, 20), 0, 256,
                             dtype=jnp.int32).astype(jnp.uint8)
    params = init_encoder_params(pkey, in_channels=4)

    fwd = jax.jit(encoder_forward, static_argnames=("block_b",))
    # block_b=4 -> grid=(2,) exercises batch-blocking + the parallel grid.
    h = jax.block_until_ready(fwd(params, obs, block_b=4))
    assert h.shape == (8, 32 * 3 * 3), h.shape

    h_ref = jax.block_until_ready(_reference_forward(params, obs))
    np.testing.assert_allclose(np.asarray(h), np.asarray(h_ref),
                               rtol=2e-2, atol=2e-2)

    print("KERNEL_OK")
</pallas_src>

<mosaic_0001>
module attributes {stable_mosaic.version = 11 : i64} {
  func.func @_encoder_kernel(%arg0: i32, %arg1: memref<1x9x36x36xbf16, #tpu.memory_space<vmem>>, %arg2: memref<32x36xbf16, #tpu.memory_space<vmem>>, %arg3: memref<3x32x288xbf16, #tpu.memory_space<vmem>>, %arg4: memref<4x32x1xf32, #tpu.memory_space<vmem>>, %arg5: memref<1x3x32x12xf32, #tpu.memory_space<vmem>>, %arg6: memref<9x32x36xbf16, #tpu.memory_space<vmem>>, %arg7: memref<7x32x28xbf16, #tpu.memory_space<vmem>>, %arg8: memref<5x32x20xbf16, #tpu.memory_space<vmem>>, %arg9: memref<288x28xbf16, #tpu.memory_space<vmem>>) attributes {dimension_semantics = [#tpu.dimension_semantics<parallel>], iteration_bounds = array<i64: 2>, scalar_prefetch = 0 : i64, scratch_operands = 4 : i64, tpu.core_type = #tpu.core_type<tc>, window_params = [{transform_indices = @transform_0, window_bounds = array<i64: 1, 9, 36, 36>}, {pipeline_mode = #tpu.pipeline_mode<synchronous>, transform_indices = @transform_1, window_bounds = array<i64: 32, 36>}, {pipeline_mode = #tpu.pipeline_mode<synchronous>, transform_indices = @transform_2, window_bounds = array<i64: 3, 32, 288>}, {pipeline_mode = #tpu.pipeline_mode<synchronous>, transform_indices = @transform_3, window_bounds = array<i64: 4, 32, 1>}, {transform_indices = @transform_4, window_bounds = array<i64: 1, 3, 32, 12>}]} {
    %c0 = arith.constant 0 : index
    %c0_0 = arith.constant 0 : index
    %0 = vector.load %arg2[%c0, %c0_0] : memref<32x36xbf16, #tpu.memory_space<vmem>>, vector<32x36xbf16>
    %c0_1 = arith.constant 0 : index
    %c0_2 = arith.constant 0 : index
    %c0_3 = arith.constant 0 : index
    %1 = vector.load %arg4[%c0_1, %c0_2, %c0_3] : memref<4x32x1xf32, #tpu.memory_space<vmem>>, vector<1x32x1xf32>
    %2 = vector.shape_cast %1 : vector<1x32x1xf32> to vector<32x1xf32>
    %3 = vector.shape_cast %2 : vector<32x1xf32> to vector<32x1xf32>
    %4 = vector.broadcast %3 : vector<32x1xf32> to vector<32x36xf32>
    %c0_4 = arith.constant 0 : index
    %c0_5 = arith.constant 0 : index
    %c0_6 = arith.constant 0 : index
    %c0_7 = arith.constant 0 : index
    %5 = vector.load %arg1[%c0_4, %c0_5, %c0_6, %c0_7] : memref<1x9x36x36xbf16, #tpu.memory_space<vmem>>, vector<1x1x36x36xbf16>
    %6 = vector.shape_cast %5 : vector<1x1x36x36xbf16> to vector<36x36xbf16>
    %cst = arith.constant dense<0.000000e+00> : vector<32x36xf32>
    %7 = tpu.matmul %0, %6, %cst {dimension_numbers = #tpu.dot_dimension_numbers<[1], [0], [0], [1], [0, 0, 1, 1], [], []>} : vector<32x36xbf16>, vector<36x36xbf16>, vector<32x36xf32> -> vector<32x36xf32>
    %8 = arith.addf %7, %4 : vector<32x36xf32>
    %cst_8 = arith.constant 0.000000e+00 : f32
    %9 = vector.broadcast %cst_8 : f32 to vector<32x36xf32>
    %10 = arith.maximumf %8, %9 : vector<32x36xf32>
    %11 = arith.truncf %10 : vector<32x36xf32> to vector<32x36xbf16>
    %c0_9 = arith.constant 0 : index
    %c0_10 = arith.constant 0 : index
    %c0_11 = arith.constant 0 : index
    %12 = vector.load %arg6[%c0_9, %c0_10, %c0_11] : memref<9x32x36xbf16, #tpu.memory_space<vmem>>, vector<1x32x36xbf16>
    %13 = vector.shape_cast %12 : vector<1x32x36xbf16> to vector<32x36xbf16>
    %14 = vector.shape_cast %11 : vector<32x36xbf16> to vector<1x32x36xbf16>
    tpu.vector_store %arg6[%c0_9, %c0_10, %c0_11], %14 {strides = array<i32>} : memref<9x32x36xbf16, #tpu.memory_space<vmem>>, vector<1x32x36xbf16>,
    %c0_12 = arith.constant 0 : index
    %c1 = arith.constant 1 : index
    %c0_13 = arith.constant 0 : index
    %c0_14 = arith.constant 0 : index
    %15 = vector.load %arg1[%c0_12, %c1, %c0_13, %c0_14] : memref<1x9x36x36xbf16, #tpu.memory_space<vmem>>, vector<1x1x36x36xbf16>
    %16 = vector.shape_cast %15 : vector<1x1x36x36xbf16> to vector<36x36xbf16>
    %cst_15 = arith.constant dense<0.000000e+00> : vector<32x36xf32>
    %17 = tpu.matmul %0, %16, %cst_15 {dimension_numbers = #tpu.dot_dimension_numbers<[1], [0], [0], [1], [0, 0, 1, 1], [], []>} : vector<32x36xbf16>, vector<36x36xbf16>, vector<32x36xf32> -> vector<32x36xf32>
    %18 = arith.addf %17, %4 : vector<32x36xf32>
    %cst_16 = arith.constant 0.000000e+00 : f32
    %19 = vector.broadcast %cst_16 : f32 to vector<32x36xf32>
    %20 = arith.maximumf %18, %19 : vector<32x36xf32>
    %21 = arith.truncf %20 : vector<32x36xf32> to vector<32x36xbf16>
    %c1_17 = arith.constant 1 : index
    %c0_18 = arith.constant 0 : index
    %c0_19 = arith.constant 0 : index
    %22 = vector.load %arg6[%c1_17, %c0_18, %c0_19] : memref<9x32x36xbf16, #tpu.memory_space<vmem>>, vector<1x32x36xbf16>
    %23 = vector.shape_cast %22 : vector<1x32x36xbf16> to vector<32x36xbf16>
    %24 = vector.shape_cast %21 : vector<32x36xbf16> to vector<1x32x36xbf16>
    tpu.vector_store %arg6[%c1_17, %c0_18, %c0_19], %24 {strides = array<i32>} : memref<9x32x36xbf16, #tpu.memory_space<vmem>>, vector<1x32x36xbf16>,
    %c0_20 = arith.constant 0 : index
    %c2 = arith.constant 2 : index
    %c0_21 = arith.constant 0 : index
    %c0_22 = arith.constant 0 : index
    %25 = vector.load %arg1[%c0_20, %c2, %c0_21, %c0_22] : memref<1x9x36x36xbf16, #tpu.memory_space<vmem>>, vector<1x1x36x36xbf16>
    %26 = vector.shape_cast %25 : vector<1x1x36x36xbf16> to vector<36x36xbf16>
    %cst_23 = arith.constant dense<0.000000e+00> : vector<32x36xf32>
    %27 = tpu.matmul %0, %26, %cst_23 {dimension_numbers = #tpu.dot_dimension_numbers<[1], [0], [0], [1], [0, 0, 1, 1], [], []>} : vector<32x36xbf16>, vector<36x36xbf16>, vector<32x36xf32> -> vector<32x36xf32>
    %28 = arith.addf %27, %4 : vector<32x36xf32>
    %cst_24 = arith.constant 0.000000e+00 : f32
    %29 = vector.broadcast %cst_24 : f32 to vector<32x36xf32>
    %30 = arith.maximumf %28, %29 : vector<32x36xf32>
    %31 = arith.truncf %30 : vector<32x36xf32> to vector<32x36xbf16>
    %c2_25 = arith.constant 2 : index
    %c0_26 = arith.constant 0 : index
    %c0_27 = arith.constant 0 : index
    %32 = vector.load %arg6[%c2_25, %c0_26, %c0_27] : memref<9x32x36xbf16, #tpu.memory_space<vmem>>, vector<1x32x36xbf16>
    %33 = vector.shape_cast %32 : vector<1x32x36xbf16> to vector<32x36xbf16>
    %34 = vector.shape_cast %31 : vector<32x36xbf16> to vector<1x32x36xbf16>
    tpu.vector_store %arg6[%c2_25, %c0_26, %c0_27], %34 {strides = array<i32>} : memref<9x32x36xbf16, #tpu.memory_space<vmem>>, vector<1x32x36xbf16>,
    %c0_28 = arith.constant 0 : index
    %c3 = arith.constant 3 : index
    %c0_29 = arith.constant 0 : index
    %c0_30 = arith.constant 0 : index
    %35 = vector.load %arg1[%c0_28, %c3, %c0_29, %c0_30] : memref<1x9x36x36xbf16, #tpu.memory_space<vmem>>, vector<1x1x36x36xbf16>
    %36 = vector.shape_cast %35 : vector<1x1x36x36xbf16> to vector<36x36xbf16>
    %cst_31 = arith.constant dense<0.000000e+00> : vector<32x36xf32>
    %37 = tpu.matmul %0, %36, %cst_31 {dimension_numbers = #tpu.dot_dimension_numbers<[1], [0], [0], [1], [0, 0, 1, 1], [], []>} : vector<32x36xbf16>, vector<36x36xbf16>, vector<32x36xf32> -> vector<32x36xf32>
    %38 = arith.addf %37, %4 : vector<32x36xf32>
    %cst_32 = arith.constant 0.000000e+00 : f32
    %39 = vector.broadcast %cst_32 : f32 to vector<32x36xf32>
    %40 = arith.maximumf %38, %39 : vector<32x36xf32>
    %41 = arith.truncf %40 : vector<32x36xf32> to vector<32x36xbf16>
    %c3_33 = arith.constant 3 : index
    %c0_34 = arith.constant 0 : index
    %c0_35 = arith.constant 0 : index
    %42 = vector.load %arg6[%c3_33, %c0_34, %c0_35] : memref<9x32x36xbf16, #tpu.memory_space<vmem>>, vector<1x32x36xbf16>
    %43 = vector.shape_cast %42 : vector<1x32x36xbf16> to vector<32x36xbf16>
    %44 = vector.shape_cast %41 : vector<32x36xbf16> to vector<1x32x36xbf16>
    tpu.vector_store %arg6[%c3_33, %c0_34, %c0_35], %44 {strides = array<i32>} : memref<9x32x36xbf16, #tpu.memory_space<vmem>>, vector<1x32x36xbf16>,
    %c0_36 = arith.constant 0 : index
    %c4 = arith.constant 4 : index
    %c0_37 = arith.constant 0 : index
    %c0_38 = arith.constant 0 : index
    %45 = vector.load %arg1[%c0_36, %c4, %c0_37, %c0_38] : memref<1x9x36x36xbf16, #tpu.memory_space<vmem>>, vector<1x1x36x36xbf16>
    %46 = vector.shape_cast %45 : vector<1x1x36x36xbf16> to vector<36x36xbf16>
    %cst_39 = arith.constant dense<0.000000e+00> : vector<32x36xf32>
    %47 = tpu.matmul %0, %46, %cst_39 {dimension_numbers = #tpu.dot_dimension_numbers<[1], [0], [0], [1], [0, 0, 1, 1], [], []>} : vector<32x36xbf16>, vector<36x36xbf16>, vector<32x36xf32> -> vector<32x36xf32>
    %48 = arith.addf %47, %4 : vector<32x36xf32>
    %cst_40 = arith.constant 0.000000e+00 : f32
    %49 = vector.broadcast %cst_40 : f32 to vector<32x36xf32>
    %50 = arith.maximumf %48, %49 : vector<32x36xf32>
    %51 = arith.truncf %50 : vector<32x36xf32> to vector<32x36xbf16>
    %c4_41 = arith.constant 4 : index
    %c0_42 = arith.constant 0 : index
    %c0_43 = arith.constant 0 : index
    %52 = vector.load %arg6[%c4_41, %c0_42, %c0_43] : memref<9x32x36xbf16, #tpu.memory_space<vmem>>, vector<1x32x36xbf16>
    %53 = vector.shape_cast %52 : vector<1x32x36xbf16> to vector<32x36xbf16>
    %54 = vector.shape_cast %51 : vector<32x36xbf16> to vector<1x32x36xbf16>
    tpu.vector_store %arg6[%c4_41, %c0_42, %c0_43], %54 {strides = array<i32>} : memref<9x32x36xbf16, #tpu.memory_space<vmem>>, vector<1x32x36xbf16>,
    %c0_44 = arith.constant 0 : index
    %c5 = arith.constant 5 : index
    %c0_45 = arith.constant 0 : index
    %c0_46 = arith.constant 0 : index
    %55 = vector.load %arg1[%c0_44, %c5, %c0_45, %c0_46] : memref<1x9x36x36xbf16, #tpu.memory_space<vmem>>, vector<1x1x36x36xbf16>
    %56 = vector.shape_cast %55 : vector<1x1x36x36xbf16> to vector<36x36xbf16>
    %cst_47 = arith.constant dense<0.000000e+00> : vector<32x36xf32>
    %57 = tpu.matmul %0, %56, %cst_47 {dimension_numbers = #tpu.dot_dimension_numbers<[1], [0], [0], [1], [0, 0, 1, 1], [], []>} : vector<32x36xbf16>, vector<36x36xbf16>, vector<32x36xf32> -> vector<32x36xf32>
    %58 = arith.addf %57, %4 : vector<32x36xf32>
    %cst_48 = arith.constant 0.000000e+00 : f32
    %59 = vector.broadcast %cst_48 : f32 to vector<32x36xf32>
    %60 = arith.maximumf %58, %59 : vector<32x36xf32>
    %61 = arith.truncf %60 : vector<32x36xf32> to vector<32x36xbf16>
    %c5_49 = arith.constant 5 : index
    %c0_50 = arith.constant 0 : index
    %c0_51 = arith.constant 0 : index
    %62 = vector.load %arg6[%c5_49, %c0_50, %c0_51] : memref<9x32x36xbf16, #tpu.memory_space<vmem>>, vector<1x32x36xbf16>
    %63 = vector.shape_cast %62 : vector<1x32x36xbf16> to vector<32x36xbf16>
    %64 = vector.shape_cast %61 : vector<32x36xbf16> to vector<1x32x36xbf16>
    tpu.vector_store %arg6[%c5_49, %c0_50, %c0_51], %64 {strides = array<i32>} : memref<9x32x36xbf16, #tpu.memory_space<vmem>>, vector<1x32x36xbf16>,
    %c0_52 = arith.constant 0 : index
    %c6 = arith.constant 6 : index
    %c0_53 = arith.constant 0 : index
    %c0_54 = arith.constant 0 : index
    %65 = vector.load %arg1[%c0_52, %c6, %c0_53, %c0_54] : memref<1x9x36x36xbf16, #tpu.memory_space<vmem>>, vector<1x1x36x36xbf16>
    %66 = vector.shape_cast %65 : vector<1x1x36x36xbf16> to vector<36x36xbf16>
    %cst_55 = arith.constant dense<0.000000e+00> : vector<32x36xf32>
    %67 = tpu.matmul %0, %66, %cst_55 {dimension_numbers = #tpu.dot_dimension_numbers<[1], [0], [0], [1], [0, 0, 1, 1], [], []>} : vector<32x36xbf16>, vector<36x36xbf16>, vector<32x36xf32> -> vector<32x36xf32>
    %68 = arith.addf %67, %4 : vector<32x36xf32>
    %cst_56 = arith.constant 0.000000e+00 : f32
    %69 = vector.broadcast %cst_56 : f32 to vector<32x36xf32>
    %70 = arith.maximumf %68, %69 : vector<32x36xf32>
    %71 = arith.truncf %70 : vector<32x36xf32> to vector<32x36xbf16>
    %c6_57 = arith.constant 6 : index
    %c0_58 = arith.constant 0 : index
    %c0_59 = arith.constant 0 : index
    %72 = vector.load %arg6[%c6_57, %c0_58, %c0_59] : memref<9x32x36xbf16, #tpu.memory_space<vmem>>, vector<1x32x36xbf16>
    %73 = vector.shape_cast %72 : vector<1x32x36xbf16> to vector<32x36xbf16>
    %74 = vector.shape_cast %71 : vector<32x36xbf16> to vector<1x32x36xbf16>
    tpu.vector_store %arg6[%c6_57, %c0_58, %c0_59], %74 {strides = array<i32>} : memref<9x32x36xbf16, #tpu.memory_space<vmem>>, vector<1x32x36xbf16>,
    %c0_60 = arith.constant 0 : index
    %c7 = arith.constant 7 : index
    %c0_61 = arith.constant 0 : index
    %c0_62 = arith.constant 0 : index
    %75 = vector.load %arg1[%c0_60, %c7, %c0_61, %c0_62] : memref<1x9x36x36xbf16, #tpu.memory_space<vmem>>, vector<1x1x36x36xbf16>
    %76 = vector.shape_cast %75 : vector<1x1x36x36xbf16> to vector<36x36xbf16>
    %cst_63 = arith.constant dense<0.000000e+00> : vector<32x36xf32>
    %77 = tpu.matmul %0, %76, %cst_63 {dimension_numbers = #tpu.dot_dimension_numbers<[1], [0], [0], [1], [0, 0, 1, 1], [], []>} : vector<32x36xbf16>, vector<36x36xbf16>, vector<32x36xf32> -> vector<32x36xf32>
    %78 = arith.addf %77, %4 : vector<32x36xf32>
    %cst_64 = arith.constant 0.000000e+00 : f32
    %79 = vector.broadcast %cst_64 : f32 to vector<32x36xf32>
    %80 = arith.maximumf %78, %79 : vector<32x36xf32>
    %81 = arith.truncf %80 : vector<32x36xf32> to vector<32x36xbf16>
    %c7_65 = arith.constant 7 : index
    %c0_66 = arith.constant 0 : index
    %c0_67 = arith.constant 0 : index
    %82 = vector.load %arg6[%c7_65, %c0_66, %c0_67] : memref<9x32x36xbf16, #tpu.memory_space<vmem>>, vector<1x32x36xbf16>
    %83 = vector.shape_cast %82 : vector<1x32x36xbf16> to vector<32x36xbf16>
    %84 = vector.shape_cast %81 : vector<32x36xbf16> to vector<1x32x36xbf16>
    tpu.vector_store %arg6[%c7_65, %c0_66, %c0_67], %84 {strides = array<i32>} : memref<9x32x36xbf16, #tpu.memory_space<vmem>>, vector<1x32x36xbf16>,
    %c0_68 = arith.constant 0 : index
    %c8 = arith.constant 8 : index
    %c0_69 = arith.constant 0 : index
    %c0_70 = arith.constant 0 : index
    %85 = vector.load %arg1[%c0_68, %c8, %c0_69, %c0_70] : memref<1x9x36x36xbf16, #tpu.memory_space<vmem>>, vector<1x1x36x36xbf16>
    %86 = vector.shape_cast %85 : vector<1x1x36x36xbf16> to vector<36x36xbf16>
    %cst_71 = arith.constant dense<0.000000e+00> : vector<32x36xf32>
    %87 = tpu.matmul %0, %86, %cst_71 {dimension_numbers = #tpu.dot_dimension_numbers<[1], [0], [0], [1], [0, 0, 1, 1], [], []>} : vector<32x36xbf16>, vector<36x36xbf16>, vector<32x36xf32> -> vector<32x36xf32>
    %88 = arith.addf %87, %4 : vector<32x36xf32>
    %cst_72 = arith.constant 0.000000e+00 : f32
    %89 = vector.broadcast %cst_72 : f32 to vector<32x36xf32>
    %90 = arith.maximumf %88, %89 : vector<32x36xf32>
    %91 = arith.truncf %90 : vector<32x36xf32> to vector<32x36xbf16>
    %c8_73 = arith.constant 8 : index
    %c0_74 = arith.constant 0 : index
    %c0_75 = arith.constant 0 : index
    %92 = vector.load %arg6[%c8_73, %c0_74, %c0_75] : memref<9x32x36xbf16, #tpu.memory_space<vmem>>, vector<1x32x36xbf16>
    %93 = vector.shape_cast %92 : vector<1x32x36xbf16> to vector<32x36xbf16>
    %94 = vector.shape_cast %91 : vector<32x36xbf16> to vector<1x32x36xbf16>
    tpu.vector_store %arg6[%c8_73, %c0_74, %c0_75], %94 {strides = array<i32>} : memref<9x32x36xbf16, #tpu.memory_space<vmem>>, vector<1x32x36xbf16>,
    %c0_76 = arith.constant 0 : index
    %c0_77 = arith.constant 0 : index
    %c0_78 = arith.constant 0 : index
    %95 = vector.load %arg3[%c0_76, %c0_77, %c0_78] : memref<3x32x288xbf16, #tpu.memory_space<vmem>>, vector<1x32x288xbf16>
    %96 = vector.shape_cast %95 : vector<1x32x288xbf16> to vector<32x288xbf16>
    %c1_79 = arith.constant 1 : index
    %c0_80 = arith.constant 0 : index
    %c0_81 = arith.constant 0 : index
    %97 = vector.load %arg4[%c1_79, %c0_80, %c0_81] : memref<4x32x1xf32, #tpu.memory_space<vmem>>, vector<1x32x1xf32>
    %98 = vector.shape_cast %97 : vector<1x32x1xf32> to vector<32x1xf32>
    %99 = vector.shape_cast %98 : vector<32x1xf32> to vector<32x1xf32>
    %100 = vector.broadcast %99 : vector<32x1xf32> to vector<32x28xf32>
    %c0_82 = arith.constant 0 : index
    %c0_83 = arith.constant 0 : index
    %c0_84 = arith.constant 0 : index
    %101 = vector.load %arg6[%c0_82, %c0_83, %c0_84] : memref<9x32x36xbf16, #tpu.memory_space<vmem>>, vector<1x32x36xbf16>
    %102 = vector.shape_cast %101 : vector<1x32x36xbf16> to vector<32x36xbf16>
    %103 = vector.extract_strided_slice %102 {offsets = [0, 0], sizes = [32, 28], strides = [1, 1]} : vector<32x36xbf16> to vector<32x28xbf16>
    %c0_85 = arith.constant 0 : index
    %c0_86 = arith.constant 0 : index
    %104 = vector.load %arg9[%c0_85, %c0_86] : memref<288x28xbf16, #tpu.memory_space<vmem>>, vector<32x28xbf16>
    tpu.vector_store %arg9[%c0_85, %c0_86], %103 {strides = array<i32>} : memref<288x28xbf16, #tpu.memory_space<vmem>>, vector<32x28xbf16>,
    %105 = vector.extract_strided_slice %102 {offsets = [0, 4], sizes = [32, 28], strides = [1, 1]} : vector<32x36xbf16> to vector<32x28xbf16>
    %c32 = arith.constant 32 : index
    %c0_87 = arith.constant 0 : index
    %106 = vector.load %arg9[%c32, %c0_87] : memref<288x28xbf16, #tpu.memory_space<vmem>>, vector<32x28xbf16>
    tpu.vector_store %arg9[%c32, %c0_87], %105 {strides = array<i32>} : memref<288x28xbf16, #tpu.memory_space<vmem>>, vector<32x28xbf16>,
    %107 = vector.extract_strided_slice %102 {offsets = [0, 8], sizes = [32, 28], strides = [1, 1]} : vector<32x36xbf16> to vector<32x28xbf16>
    %c64 = arith.constant 64 : index
    %c0_88 = arith.constant 0 : index
    %108 = vector.load %arg9[%c64, %c0_88] : memref<288x28xbf16, #tpu.memory_space<vmem>>, vector<32x28xbf16>
    tpu.vector_store %arg9[%c64, %c0_88], %107 {strides = array<i32>} : memref<288x28xbf16, #tpu.memory_space<vmem>>, vector<32x28xbf16>,
    %c1_89 = arith.constant 1 : index
    %c0_90 = arith.constant 0 : index
    %c0_91 = arith.constant 0 : index
    %109 = vector.load %arg6[%c1_89, %c0_90, %c0_91] : memref<9x32x36xbf16, #tpu.memory_space<vmem>>, vector<1x32x36xbf16>
    %110 = vector.shape_cast %109 : vector<1x32x36xbf16> to vector<32x36xbf16>
    %111 = vector.extract_strided_slice %110 {offsets = [0, 0], sizes = [32, 28], strides = [1, 1]} : vector<32x36xbf16> to vector<32x28xbf16>
    %c96 = arith.constant 96 : index
    %c0_92 = arith.constant 0 : index
    %112 = vector.load %arg9[%c96, %c0_92] : memref<288x28xbf16, #tpu.memory_space<vmem>>, vector<32x28xbf16>
    tpu.vector_store %arg9[%c96, %c0_92], %111 {strides = array<i32>} : memref<288x28xbf16, #tpu.memory_space<vmem>>, vector<32x28xbf16>,
    %113 = vector.extract_strided_slice %110 {offsets = [0, 4], sizes = [32, 28], strides = [1, 1]} : vector<32x36xbf16> to vector<32x28xbf16>
    %c128 = arith.constant 128 : index
    %c0_93 = arith.constant 0 : index
    %114 = vector.load %arg9[%c128, %c0_93] : memref<288x28xbf16, #tpu.memory_space<vmem>>, vector<32x28xbf16>
    tpu.vector_store %arg9[%c128, %c0_93], %113 {strides = array<i32>} : memref<288x28xbf16, #tpu.memory_space<vmem>>, vector<32x28xbf16>,
    %115 = vector.extract_strided_slice %110 {offsets = [0, 8], sizes = [32, 28], strides = [1, 1]} : vector<32x36xbf16> to vector<32x28xbf16>
    %c160 = arith.constant 160 : index
    %c0_94 = arith.constant 0 : index
    %116 = vector.load %arg9[%c160, %c0_94] : memref<288x28xbf16, #tpu.memory_space<vmem>>, vector<32x28xbf16>
    tpu.vector_store %arg9[%c160, %c0_94], %115 {strides = array<i32>} : memref<288x28xbf16, #tpu.memory_space<vmem>>, vector<32x28xbf16>,
    %c2_95 = arith.constant 2 : index
    %c0_96 = arith.constant 0 : index
    %c0_97 = arith.constant 0 : index
    %117 = vector.load %arg6[%c2_95, %c0_96, %c0_97] : memref<9x32x36xbf16, #tpu.memory_space<vmem>>, vector<1x32x36xbf16>
    %118 = vector.shape_cast %117 : vector<1x32x36xbf16> to vector<32x36xbf16>
    %119 = vector.extract_strided_slice %118 {offsets = [0, 0], sizes = [32, 28], strides = [1, 1]} : vector<32x36xbf16> to vector<32x28xbf16>
    %c192 = arith.constant 192 : index
    %c0_98 = arith.constant 0 : index
    %120 = vector.load %arg9[%c192, %c0_98] : memref<288x28xbf16, #tpu.memory_space<vmem>>, vector<32x28xbf16>
    tpu.vector_store %arg9[%c192, %c0_98], %119 {strides = array<i32>} : memref<288x28xbf16, #tpu.memory_space<vmem>>, vector<32x28xbf16>,
    %121 = vector.extract_strided_slice %118 {offsets = [0, 4], sizes = [32, 28], strides = [1, 1]} : vector<32x36xbf16> to vector<32x28xbf16>
    %c224 = arith.constant 224 : index
    %c0_99 = arith.constant 0 : index
    %122 = vector.load %arg9[%c224, %c0_99] : memref<288x28xbf16, #tpu.memory_space<vmem>>, vector<32x28xbf16>
    tpu.vector_store %arg9[%c224, %c0_99], %121 {strides = array<i32>} : memref<288x28xbf16, #tpu.memory_space<vmem>>, vector<32x28xbf16>,
    %123 = vector.extract_strided_slice %118 {offsets = [0, 8], sizes = [32, 28], strides = [1, 1]} : vector<32x36xbf16> to vector<32x28xbf16>
    %c256 = arith.constant 256 : index
    %c0_100 = arith.constant 0 : index
    %124 = vector.load %arg9[%c256, %c0_100] : memref<288x28xbf16, #tpu.memory_space<vmem>>, vector<32x28xbf16>
    tpu.vector_store %arg9[%c256, %c0_100], %123 {strides = array<i32>} : memref<288x28xbf16, #tpu.memory_space<vmem>>, vector<32x28xbf16>,
    %c0_101 = arith.constant 0 : index
    %c0_102 = arith.constant 0 : index
    %125 = vector.load %arg9[%c0_101, %c0_102] : memref<288x28xbf16, #tpu.memory_space<vmem>>, vector<288x28xbf16>
    %cst_103 = arith.constant dense<0.000000e+00> : vector<32x28xf32>
    %126 = tpu.matmul %96, %125, %cst_103 {dimension_numbers = #tpu.dot_dimension_numbers<[1], [0], [0], [1], [0, 0, 1, 1], [], []>} : vector<32x288xbf16>, vector<288x28xbf16>, vector<32x28xf32> -> vector<32x28xf32>
    %127 = arith.addf %126, %100 : vector<32x28xf32>
    %cst_104 = arith.constant 0.000000e+00 : f32
    %128 = vector.broadcast %cst_104 : f32 to vector<32x28xf32>
    %129 = arith.maximumf %127, %128 : vector<32x28xf32>
    %130 = arith.truncf %129 : vector<32x28xf32> to vector<32x28xbf16>
    %c0_105 = arith.constant 0 : index
    %c0_106 = arith.constant 0 : index
    %c0_107 = arith.constant 0 : index
    %131 = vector.load %arg7[%c0_105, %c0_106, %c0_107] : memref<7x32x28xbf16, #tpu.memory_space<vmem>>, vector<1x32x28xbf16>
    %132 = vector.shape_cast %131 : vector<1x32x28xbf16> to vector<32x28xbf16>
    %133 = vector.shape_cast %130 : vector<32x28xbf16> to vector<1x32x28xbf16>
    tpu.vector_store %arg7[%c0_105, %c0_106, %c0_107], %133 {strides = array<i32>} : memref<7x32x28xbf16, #tpu.memory_space<vmem>>, vector<1x32x28xbf16>,
    %c1_108 = arith.constant 1 : index
    %c0_109 = arith.constant 0 : index
    %c0_110 = arith.constant 0 : index
    %134 = vector.load %arg6[%c1_108, %c0_109, %c0_110] : memref<9x32x36xbf16, #tpu.memory_space<vmem>>, vector<1x32x36xbf16>
    %135 = vector.shape_cast %134 : vector<1x32x36xbf16> to vector<32x36xbf16>
    %136 = vector.extract_strided_slice %135 {offsets = [0, 0], sizes = [32, 28], strides = [1, 1]} : vector<32x36xbf16> to vector<32x28xbf16>
    %c0_111 = arith.constant 0 : index
    %c0_112 = arith.constant 0 : index
    %137 = vector.load %arg9[%c0_111, %c0_112] : memref<288x28xbf16, #tpu.memory_space<vmem>>, vector<32x28xbf16>
    tpu.vector_store %arg9[%c0_111, %c0_112], %136 {strides = array<i32>} : memref<288x28xbf16, #tpu.memory_space<vmem>>, vector<32x28xbf16>,
    %138 = vector.extract_strided_slice %135 {offsets = [0, 4], sizes = [32, 28], strides = [1, 1]} : vector<32x36xbf16> to vector<32x28xbf16>
    %c32_113 = arith.constant 32 : index
    %c0_114 = arith.constant 0 : index
    %139 = vector.load %arg9[%c32_113, %c0_114] : memref<288x28xbf16, #tpu.memory_space<vmem>>, vector<32x28xbf16>
    tpu.vector_store %arg9[%c32_113, %c0_114], %138 {strides = array<i32>} : memref<288x28xbf16, #tpu.memory_space<vmem>>, vector<32x28xbf16>,
    %140 = vector.extract_strided_slice %135 {offsets = [0, 8], sizes = [32, 28], strides = [1, 1]} : vector<32x36xbf16> to vector<32x28xbf16>
    %c64_115 = arith.constant 64 : index
    %c0_116 = arith.constant 0 : index
    %141 = vector.load %arg9[%c64_115, %c0_116] : memref<288x28xbf16, #tpu.memory_space<vmem>>, vector<32x28xbf16>
    tpu.vector_store %arg9[%c64_115, %c0_116], %140 {strides = array<i32>} : memref<288x28xbf16, #tpu.memory_space<vmem>>, vector<32x28xbf16>,
    %c2_117 = arith.constant 2 : index
    %c0_118 = arith.constant 0 : index
    %c0_119 = arith.constant 0 : index
    %142 = vector.load %arg6[%c2_117, %c0_118, %c0_119] : memref<9x32x36xbf16, #tpu.memory_space<vmem>>, vector<1x32x36xbf16>
    %143 = vector.shape_cast %142 : vector<1x32x36xbf16> to vector<32x36xbf16>
    %144 = vector.extract_strided_slice %143 {offsets = [0, 0], sizes = [32, 28], strides = [1, 1]} : vector<32x36xbf16> to vector<32x28xbf16>
    %c96_120 = arith.constant 96 : index
    %c0_121 = arith.constant 0 : index
    %145 = vector.load %arg9[%c96_120, %c0_121] : memref<288x28xbf16, #tpu.memory_space<vmem>>, vector<32x28xbf16>
    tpu.vector_store %arg9[%c96_120, %c0_121], %144 {strides = array<i32>} : memref<288x28xbf16, #tpu.memory_space<vmem>>, vector<32x28xbf16>,
    %146 = vector.extract_strided_slice %143 {offsets = [0, 4], sizes = [32, 28], strides = [1, 1]} : vector<32x36xbf16> to vector<32x28xbf16>
    %c128_122 = arith.constant 128 : index
    %c0_123 = arith.constant 0 : index
    %147 = vector.load %arg9[%c128_122, %c0_123] : memref<288x28xbf16, #tpu.memory_space<vmem>>, vector<32x28xbf16>
    tpu.vector_store %arg9[%c128_122, %c0_123], %146 {strides = array<i32>} : memref<288x28xbf16, #tpu.memory_space<vmem>>, vector<32x28xbf16>,
    %148 = vector.extract_strided_slice %143 {offsets = [0, 8], sizes = [32, 28], strides = [1, 1]} : vector<32x36xbf16> to vector<32x28xbf16>
    %c160_124 = arith.constant 160 : index
    %c0_125 = arith.constant 0 : index
    %149 = vector.load %arg9[%c160_124, %c0_125] : memref<288x28xbf16, #tpu.memory_space<vmem>>, vector<32x28xbf16>
    tpu.vector_store %arg9[%c160_124, %c0_125], %148 {strides = array<i32>} : memref<288x28xbf16, #tpu.memory_space<vmem>>, vector<32x28xbf16>,
    %c3_126 = arith.constant 3 : index
    %c0_127 = arith.constant 0 : index
    %c0_128 = arith.constant 0 : index
    %150 = vector.load %arg6[%c3_126, %c0_127, %c0_128] : memref<9x32x36xbf16, #tpu.memory_space<vmem>>, vector<1x32x36xbf16>
    %151 = vector.shape_cast %150 : vector<1x32x36xbf16> to vector<32x36xbf16>
    %152 = vector.extract_strided_slice %151 {offsets = [0, 0], sizes = [32, 28], strides = [1, 1]} : vector<32x36xbf16> to vector<32x28xbf16>
    %c192_129 = arith.constant 192 : index
    %c0_130 = arith.constant 0 : index
    %153 = vector.load %arg9[%c192_129, %c0_130] : memref<288x28xbf16, #tpu.memory_space<vmem>>, vector<32x28xbf16>
    tpu.vector_store %arg9[%c192_129, %c0_130], %152 {strides = array<i32>} : memref<288x28xbf16, #tpu.memory_space<vmem>>, vector<32x28xbf16>,
    %154 = vector.extract_strided_slice %151 {offsets = [0, 4], sizes = [32, 28], strides = [1, 1]} : vector<32x36xbf16> to vector<32x28xbf16>
    %c224_131 = arith.constant 224 : index
    %c0_132 = arith.constant 0 : index
    %155 = vector.load %arg9[%c224_131, %c0_132] : memref<288x28xbf16, #tpu.memory_space<vmem>>, vector<32x28xbf16>
    tpu.vector_store %arg9[%c224_131, %c0_132], %154 {strides = array<i32>} : memref<288x28xbf16, #tpu.memory_space<vmem>>, vector<32x28xbf16>,
    %156 = vector.extract_strided_slice %151 {offsets = [0, 8], sizes = [32, 28], strides = [1, 1]} : vector<32x36xbf16> to vector<32x28xbf16>
    %c256_133 = arith.constant 256 : index
    %c0_134 = arith.constant 0 : index
    %157 = vector.load %arg9[%c256_133, %c0_134] : memref<288x28xbf16, #tpu.memory_space<vmem>>, vector<32x28xbf16>
    tpu.vector_store %arg9[%c256_133, %c0_134], %156 {strides = array<i32>} : memref<288x28xbf16, #tpu.memory_space<vmem>>, vector<32x28xbf16>,
    %c0_135 = arith.constant 0 : index
    %c0_136 = arith.constant 0 : index
    %158 = vector.load %arg9[%c0_135, %c0_136] : memref<288x28xbf16, #tpu.memory_space<vmem>>, vector<288x28xbf16>
    %cst_137 = arith.constant dense<0.000000e+00> : vector<32x28xf32>
    %159 = tpu.matmul %96, %158, %cst_137 {dimension_numbers = #tpu.dot_dimension_numbers<[1], [0], [0], [1], [0, 0, 1, 1], [], []>} : vector<32x288xbf16>, vector<288x28xbf16>, vector<32x28xf32> -> vector<32x28xf32>
    %160 = arith.addf %159, %100 : vector<32x28xf32>
    %cst_138 = arith.constant 0.000000e+00 : f32
    %161 = vector.broadcast %cst_138 : f32 to vector<32x28xf32>
    %162 = arith.maximumf %160, %161 : vector<32x28xf32>
    %163 = arith.truncf %162 : vector<32x28xf32> to vector<32x28xbf16>
    %c1_139 = arith.constant 1 : index
    %c0_140 = arith.constant 0 : index
    %c0_141 = arith.constant 0 : index
    %164 = vector.load %arg7[%c1_139, %c0_140, %c0_141] : memref<7x32x28xbf16, #tpu.memory_space<vmem>>, vector<1x32x28xbf16>
    %165 = vector.shape_cast %164 : vector<1x32x28xbf16> to vector<32x28xbf16>
    %166 = vector.shape_cast %163 : vector<32x28xbf16> to vector<1x32x28xbf16>
    tpu.vector_store %arg7[%c1_139, %c0_140, %c0_141], %166 {strides = array<i32>} : memref<7x32x28xbf16, #tpu.memory_space<vmem>>, vector<1x32x28xbf16>,
    %c2_142 = arith.constant 2 : index
    %c0_143 = arith.constant 0 : index
    %c0_144 = arith.constant 0 : index
    %167 = vector.load %arg6[%c2_142, %c0_143, %c0_144] : memref<9x32x36xbf16, #tpu.memory_space<vmem>>, vector<1x32x36xbf16>
    %168 = vector.shape_cast %167 : vector<1x32x36xbf16> to vector<32x36xbf16>
    %169 = vector.extract_strided_slice %168 {offsets = [0, 0], sizes = [32, 28], strides = [1, 1]} : vector<32x36xbf16> to vector<32x28xbf16>
    %c0_145 = arith.constant 0 : index
    %c0_146 = arith.constant 0 : index
    %170 = vector.load %arg9[%c0_145, %c0_146] : memref<288x28xbf16, #tpu.memory_space<vmem>>, vector<32x28xbf16>
    tpu.vector_store %arg9[%c0_145, %c0_146], %169 {strides = array<i32>} : memref<288x28xbf16, #tpu.memory_space<vmem>>, vector<32x28xbf16>,
    %171 = vector.extract_strided_slice %168 {offsets = [0, 4], sizes = [32, 28], strides = [1, 1]} : vector<32x36xbf16> to vector<32x28xbf16>
    %c32_147 = arith.constant 32 : index
    %c0_148 = arith.constant 0 : index
    %172 = vector.load %arg9[%c32_147, %c0_148] : memref<288x28xbf16, #tpu.memory_space<vmem>>, vector<32x28xbf16>
    tpu.vector_store %arg9[%c32_147, %c0_148], %171 {strides = array<i32>} : memref<288x28xbf16, #tpu.memory_space<vmem>>, vector<32x28xbf16>,
    %173 = vector.extract_strided_slice %168 {offsets = [0, 8], sizes = [32, 28], strides = [1, 1]} : vector<32x36xbf16> to vector<32x28xbf16>
    %c64_149 = arith.constant 64 : index
    %c0_150 = arith.constant 0 : index
    %174 = vector.load %arg9[%c64_149, %c0_150] : memref<288x28xbf16, #tpu.memory_space<vmem>>, vector<32x28xbf16>
    tpu.vector_store %arg9[%c64_149, %c0_150], %173 {strides = array<i32>} : memref<288x28xbf16, #tpu.memory_space<vmem>>, vector<32x28xbf16>,
    %c3_151 = arith.constant 3 : index
    %c0_152 = arith.constant 0 : index
    %c0_153 = arith.constant 0 : index
    %175 = vector.load %arg6[%c3_151, %c0_152, %c0_153] : memref<9x32x36xbf16, #tpu.memory_space<vmem>>, vector<1x32x36xbf16>
    %176 = vector.shape_cast %175 : vector<1x32x36xbf16> to vector<32x36xbf16>
    %177 = vector.extract_strided_slice %176 {offsets = [0, 0], sizes = [32, 28], strides = [1, 1]} : vector<32x36xbf16> to vector<32x28xbf16>
    %c96_154 = arith.constant 96 : index
    %c0_155 = arith.constant 0 : index
    %178 = vector.load %arg9[%c96_154, %c0_155] : memref<288x28xbf16, #tpu.memory_space<vmem>>, vector<32x28xbf16>
    tpu.vector_store %arg9[%c96_154, %c0_155], %177 {strides = array<i32>} : memref<288x28xbf16, #tpu.memory_space<vmem>>, vector<32x28xbf16>,
    %179 = vector.extract_strided_slice %176 {offsets = [0, 4], sizes = [32, 28], strides = [1, 1]} : vector<32x36xbf16> to vector<32x28xbf16>
    %c128_156 = arith.constant 128 : index
    %c0_157 = arith.constant 0 : index
    %180 = vector.load %arg9[%c128_156, %c0_157] : memref<288x28xbf16, #tpu.memory_space<vmem>>, vector<32x28xbf16>
    tpu.vector_store %arg9[%c128_156, %c0_157], %179 {strides = array<i32>} : memref<288x28xbf16, #tpu.memory_space<vmem>>, vector<32x28xbf16>,
    %181 = vector.extract_strided_slice %176 {offsets = [0, 8], sizes = [32, 28], strides = [1, 1]} : vector<32x36xbf16> to vector<32x28xbf16>
    %c160_158 = arith.constant 160 : index
    %c0_159 = arith.constant 0 : index
    %182 = vector.load %arg9[%c160_158, %c0_159] : memref<288x28xbf16, #tpu.memory_space<vmem>>, vector<32x28xbf16>
    tpu.vector_store %arg9[%c160_158, %c0_159], %181 {strides = array<i32>} : memref<288x28xbf16, #tpu.memory_space<vmem>>, vector<32x28xbf16>,
    %c4_160 = arith.constant 4 : index
    %c0_161 = arith.constant 0 : index
    %c0_162 = arith.constant 0 : index
    %183 = vector.load %arg6[%c4_160, %c0_161, %c0_162] : memref<9x32x36xbf16, #tpu.memory_space<vmem>>, vector<1x32x36xbf16>
    %184 = vector.shape_cast %183 : vector<1x32x36xbf16> to vector<32x36xbf16>
    %185 = vector.extract_strided_slice %184 {offsets = [0, 0], sizes = [32, 28], strides = [1, 1]} : vector<32x36xbf16> to vector<32x28xbf16>
    %c192_163 = arith.constant 192 : index
    %c0_164 = arith.constant 0 : index
    %186 = vector.load %arg9[%c192_163, %c0_164] : memref<288x28xbf16, #tpu.memory_space<vmem>>, vector<32x28xbf16>
    tpu.vector_store %arg9[%c192_163, %c0_164], %185 {strides = array<i32>} : memref<288x28xbf16, #tpu.memory_space<vmem>>, vector<32x28xbf16>,
    %187 = vector.extract_strided_slice %184 {offsets = [0, 4], sizes = [32, 28], strides = [1, 1]} : vector<32x36xbf16> to vector<32x28xbf16>
    %c224_165 = arith.constant 224 : index
    %c0_166 = arith.constant 0 : index
    %188 = vector.load %arg9[%c224_165, %c0_166] : memref<288x28xbf16, #tpu.memory_space<vmem>>, vector<32x28xbf16>
    tpu.vector_store %arg9[%c224_165, %c0_166], %187 {strides = array<i32>} : memref<288x28xbf16, #tpu.memory_space<vmem>>, vector<32x28xbf16>,
    %189 = vector.extract_strided_slice %184 {offsets = [0, 8], sizes = [32, 28], strides = [1, 1]} : vector<32x36xbf16> to vector<32x28xbf16>
    %c256_167 = arith.constant 256 : index
    %c0_168 = arith.constant 0 : index
    %190 = vector.load %arg9[%c256_167, %c0_168] : memref<288x28xbf16, #tpu.memory_space<vmem>>, vector<32x28xbf16>
    tpu.vector_store %arg9[%c256_167, %c0_168], %189 {strides = array<i32>} : memref<288x28xbf16, #tpu.memory_space<vmem>>, vector<32x28xbf16>,
    %c0_169 = arith.constant 0 : index
    %c0_170 = arith.constant 0 : index
    %191 = vector.load %arg9[%c0_169, %c0_170] : memref<288x28xbf16, #tpu.memory_space<vmem>>, vector<288x28xbf16>
    %cst_171 = arith.constant dense<0.000000e+00> : vector<32x28xf32>
    %192 = tpu.matmul %96, %191, %cst_171 {dimension_numbers = #tpu.dot_dimension_numbers<[1], [0], [0], [1], [0, 0, 1, 1], [], []>} : vector<32x288xbf16>, vector<288x28xbf16>, vector<32x28xf32> -> vector<32x28xf32>
    %193 = arith.addf %192, %100 : vector<32x28xf32>
    %cst_172 = arith.constant 0.000000e+00 : f32
    %194 = vector.broadcast %cst_172 : f32 to vector<32x28xf32>
    %195 = arith.maximumf %193, %194 : vector<32x28xf32>
    %196 = arith.truncf %195 : vector<32x28xf32> to vector<32x28xbf16>
    %c2_173 = arith.constant 2 : index
    %c0_174 = arith.constant 0 : index
    %c0_175 = arith.constant 0 : index
    %197 = vector.load %arg7[%c2_173, %c0_174, %c0_175] : memref<7x32x28xbf16, #tpu.memory_space<vmem>>, vector<1x32x28xbf16>
    %198 = vector.shape_cast %197 : vector<1x32x28xbf16> to vector<32x28xbf16>
    %199 = vector.shape_cast %196 : vector<32x28xbf16> to vector<1x32x28xbf16>
    tpu.vector_store %arg7[%c2_173, %c0_174, %c0_175], %199 {strides = array<i32>} : memref<7x32x28xbf16, #tpu.memory_space<vmem>>, vector<1x32x28xbf16>,
    %c3_176 = arith.constant 3 : index
    %c0_177 = arith.constant 0 : index
    %c0_178 = arith.constant 0 : index
    %200 = vector.load %arg6[%c3_176, %c0_177, %c0_178] : memref<9x32x36xbf16, #tpu.memory_space<vmem>>, vector<1x32x36xbf16>
    %201 = vector.shape_cast %200 : vector<1x32x36xbf16> to vector<32x36xbf16>
    %202 = vector.extract_strided_slice %201 {offsets = [0, 0], sizes = [32, 28], strides = [1, 1]} : vector<32x36xbf16> to vector<32x28xbf16>
    %c0_179 = arith.constant 0 : index
    %c0_180 = arith.constant 0 : index
    %203 = vector.load %arg9[%c0_179, %c0_180] : memref<288x28xbf16, #tpu.memory_space<vmem>>, vector<32x28xbf16>
    tpu.vector_store %arg9[%c0_179, %c0_180], %202 {strides = array<i32>} : memref<288x28xbf16, #tpu.memory_space<vmem>>, vector<32x28xbf16>,
    %204 = vector.extract_strided_slice %201 {offsets = [0, 4], sizes = [32, 28], strides = [1, 1]} : vector<32x36xbf16> to vector<32x28xbf16>
    %c32_181 = arith.constant 32 : index
    %c0_182 = arith.constant 0 : index
    %205 = vector.load %arg9[%c32_181, %c0_182] : memref<288x28xbf16, #tpu.memory_space<vmem>>, vector<32x28xbf16>
    tpu.vector_store %arg9[%c32_181, %c0_182], %204 {strides = array<i32>} : memref<288x28xbf16, #tpu.memory_space<vmem>>, vector<32x28xbf16>,
    %206 = vector.extract_strided_slice %201 {offsets = [0, 8], sizes = [32, 28], strides = [1, 1]} : vector<32x36xbf16> to vector<32x28xbf16>
    %c64_183 = arith.constant 64 : index
    %c0_184 = arith.constant 0 : index
    %207 = vector.load %arg9[%c64_183, %c0_184] : memref<288x28xbf16, #tpu.memory_space<vmem>>, vector<32x28xbf16>
    tpu.vector_store %arg9[%c64_183, %c0_184], %206 {strides = array<i32>} : memref<288x28xbf16, #tpu.memory_space<vmem>>, vector<32x28xbf16>,
    %c4_185 = arith.constant 4 : index
    %c0_186 = arith.constant 0 : index
    %c0_187 = arith.constant 0 : index
    %208 = vector.load %arg6[%c4_185, %c0_186, %c0_187] : memref<9x32x36xbf16, #tpu.memory_space<vmem>>, vector<1x32x36xbf16>
    %209 = vector.shape_cast %208 : vector<1x32x36xbf16> to vector<32x36xbf16>
    %210 = vector.extract_strided_slice %209 {offsets = [0, 0], sizes = [32, 28], strides = [1, 1]} : vector<32x36xbf16> to vector<32x28xbf16>
    %c96_188 = arith.constant 96 : index
    %c0_189 = arith.constant 0 : index
    %211 = vector.load %arg9[%c96_188, %c0_189] : memref<288x28xbf16, #tpu.memory_space<vmem>>, vector<32x28xbf16>
    tpu.vector_store %arg9[%c96_188, %c0_189], %210 {strides = array<i32>} : memref<288x28xbf16, #tpu.memory_space<vmem>>, vector<32x28xbf16>,
    %212 = vector.extract_strided_slice %209 {offsets = [0, 4], sizes = [32, 28], strides = [1, 1]} : vector<32x36xbf16> to vector<32x28xbf16>
    %c128_190 = arith.constant 128 : index
    %c0_191 = arith.constant 0 : index
    %213 = vector.load %arg9[%c128_190, %c0_191] : memref<288x28xbf16, #tpu.memory_space<vmem>>, vector<32x28xbf16>
    tpu.vector_store %arg9[%c128_190, %c0_191], %212 {strides = array<i32>} : memref<288x28xbf16, #tpu.memory_space<vmem>>, vector<32x28xbf16>,
    %214 = vector.extract_strided_slice %209 {offsets = [0, 8], sizes = [32, 28], strides = [1, 1]} : vector<32x36xbf16> to vector<32x28xbf16>
    %c160_192 = arith.constant 160 : index
    %c0_193 = arith.constant 0 : index
    %215 = vector.load %arg9[%c160_192, %c0_193] : memref<288x28xbf16, #tpu.memory_space<vmem>>, vector<32x28xbf16>
    tpu.vector_store %arg9[%c160_192, %c0_193], %214 {strides = array<i32>} : memref<288x28xbf16, #tpu.memory_space<vmem>>, vector<32x28xbf16>,
    %c5_194 = arith.constant 5 : index
    %c0_195 = arith.constant 0 : index
    %c0_196 = arith.constant 0 : index
    %216 = vector.load %arg6[%c5_194, %c0_195, %c0_196] : memref<9x32x36xbf16, #tpu.memory_space<vmem>>, vector<1x32x36xbf16>
    %217 = vector.shape_cast %216 : vector<1x32x36xbf16> to vector<32x36xbf16>
    %218 = vector.extract_strided_slice %217 {offsets = [0, 0], sizes = [32, 28], strides = [1, 1]} : vector<32x36xbf16> to vector<32x28xbf16>
    %c192_197 = arith.constant 192 : index
    %c0_198 = arith.constant 0 : index
    %219 = vector.load %arg9[%c192_197, %c0_198] : memref<288x28xbf16, #tpu.memory_space<vmem>>, vector<32x28xbf16>
    tpu.vector_store %arg9[%c192_197, %c0_198], %218 {strides = array<i32>} : memref<288x28xbf16, #tpu.memory_space<vmem>>, vector<32x28xbf16>,
    %220 = vector.extract_strided_slice %217 {offsets = [0, 4], sizes = [32, 28], strides = [1, 1]} : vector<32x36xbf16> to vector<32x28xbf16>
    %c224_199 = arith.constant 224 : index
    %c0_200 = arith.constant 0 : index
    %221 = vector.load %arg9[%c224_199, %c0_200] : memref<288x28xbf16, #tpu.memory_space<vmem>>, vector<32x28xbf16>
    tpu.vector_store %arg9[%c224_199, %c0_200], %220 {strides = array<i32>} : memref<288x28xbf16, #tpu.memory_space<vmem>>, vector<32x28xbf16>,
    %222 = vector.extract_strided_slice %217 {offsets = [0, 8], sizes = [32, 28], strides = [1, 1]} : vector<32x36xbf16> to vector<32x28xbf16>
    %c256_201 = arith.constant 256 : index
    %c0_202 = arith.constant 0 : index
    %223 = vector.load %arg9[%c256_201, %c0_202] : memref<288x28xbf16, #tpu.memory_space<vmem>>, vector<32x28xbf16>
    tpu.vector_store %arg9[%c256_201, %c0_202], %222 {strides = array<i32>} : memref<288x28xbf16, #tpu.memory_space<vmem>>, vector<32x28xbf16>,
    %c0_203 = arith.constant 0 : index
    %c0_204 = arith.constant 0 : index
    %224 = vector.load %arg9[%c0_203, %c0_204] : memref<288x28xbf16, #tpu.memory_space<vmem>>, vector<288x28xbf16>
    %cst_205 = arith.constant dense<0.000000e+00> : vector<32x28xf32>
    %225 = tpu.matmul %96, %224, %cst_205 {dimension_numbers = #tpu.dot_dimension_numbers<[1], [0], [0], [1], [0, 0, 1, 1], [], []>} : vector<32x288xbf16>, vector<288x28xbf16>, vector<32x28xf32> -> vector<32x28xf32>
    %226 = arith.addf %225, %100 : vector<32x28xf32>
    %cst_206 = arith.constant 0.000000e+00 : f32
    %227 = vector.broadcast %cst_206 : f32 to vector<32x28xf32>
    %228 = arith.maximumf %226, %227 : vector<32x28xf32>
    %229 = arith.truncf %228 : vector<32x28xf32> to vector<32x28xbf16>
    %c3_207 = arith.constant 3 : index
    %c0_208 = arith.constant 0 : index
    %c0_209 = arith.constant 0 : index
    %230 = vector.load %arg7[%c3_207, %c0_208, %c0_209] : memref<7x32x28xbf16, #tpu.memory_space<vmem>>, vector<1x32x28xbf16>
    %231 = vector.shape_cast %230 : vector<1x32x28xbf16> to vector<32x28xbf16>
    %232 = vector.shape_cast %229 : vector<32x28xbf16> to vector<1x32x28xbf16>
    tpu.vector_store %arg7[%c3_207, %c0_208, %c0_209], %232 {strides = array<i32>} : memref<7x32x28xbf16, #tpu.memory_space<vmem>>, vector<1x32x28xbf16>,
    %c4_210 = arith.constant 4 : index
    %c0_211 = arith.constant 0 : index
    %c0_212 = arith.constant 0 : index
    %233 = vector.load %arg6[%c4_210, %c0_211, %c0_212] : memref<9x32x36xbf16, #tpu.memory_space<vmem>>, vector<1x32x36xbf16>
    %234 = vector.shape_cast %233 : vector<1x32x36xbf16> to vector<32x36xbf16>
    %235 = vector.extract_strided_slice %234 {offsets = [0, 0], sizes = [32, 28], strides = [1, 1]} : vector<32x36xbf16> to vector<32x28xbf16>
    %c0_213 = arith.constant 0 : index
    %c0_214 = arith.constant 0 : index
    %236 = vector.load %arg9[%c0_213, %c0_214] : memref<288x28xbf16, #tpu.memory_space<vmem>>, vector<32x28xbf16>
    tpu.vector_store %arg9[%c0_213, %c0_214], %235 {strides = array<i32>} : memref<288x28xbf16, #tpu.memory_space<vmem>>, vector<32x28xbf16>,
    %237 = vector.extract_strided_slice %234 {offsets = [0, 4], sizes = [32, 28], strides = [1, 1]} : vector<32x36xbf16> to vector<32x28xbf16>
    %c32_215 = arith.constant 32 : index
    %c0_216 = arith.constant 0 : index
    %238 = vector.load %arg9[%c32_215, %c0_216] : memref<288x28xbf16, #tpu.memory_space<vmem>>, vector<32x28xbf16>
    tpu.vector_store %arg9[%c32_215, %c0_216], %237 {strides = array<i32>} : memref<288x28xbf16, #tpu.memory_space<vmem>>, vector<32x28xbf16>,
    %239 = vector.extract_strided_slice %234 {offsets = [0, 8], sizes = [32, 28], strides = [1, 1]} : vector<32x36xbf16> to vector<32x28xbf16>
    %c64_217 = arith.constant 64 : index
    %c0_218 = arith.constant 0 : index
    %240 = vector.load %arg9[%c64_217, %c0_218] : memref<288x28xbf16, #tpu.memory_space<vmem>>, vector<32x28xbf16>
    tpu.vector_store %arg9[%c64_217, %c0_218], %239 {strides = array<i32>} : memref<288x28xbf16, #tpu.memory_space<vmem>>, vector<32x28xbf16>,
    %c5_219 = arith.constant 5 : index
    %c0_220 = arith.constant 0 : index
    %c0_221 = arith.constant 0 : index
    %241 = vector.load %arg6[%c5_219, %c0_220, %c0_221] : memref<9x32x36xbf16, #tpu.memory_space<vmem>>, vector<1x32x36xbf16>
    %242 = vector.shape_cast %241 : vector<1x32x36xbf16> to vector<32x36xbf16>
    %243 = vector.extract_strided_slice %242 {offsets = [0, 0], sizes = [32, 28], strides = [1, 1]} : vector<32x36xbf16> to vector<32x28xbf16>
    %c96_222 = arith.constant 96 : index
    %c0_223 = arith.constant 0 : index
    %244 = vector.load %arg9[%c96_222, %c0_223] : memref<288x28xbf16, #tpu.memory_space<vmem>>, vector<32x28xbf16>
    tpu.vector_store %arg9[%c96_222, %c0_223], %243 {strides = array<i32>} : memref<288x28xbf16, #tpu.memory_space<vmem>>, vector<32x28xbf16>,
    %245 = vector.extract_strided_slice %242 {offsets = [0, 4], sizes = [32, 28], strides = [1, 1]} : vector<32x36xbf16> to vector<32x28xbf16>
    %c128_224 = arith.constant 128 : index
    %c0_225 = arith.constant 0 : index
    %246 = vector.load %arg9[%c128_224, %c0_225] : memref<288x28xbf16, #tpu.memory_space<vmem>>, vector<32x28xbf16>
    tpu.vector_store %arg9[%c128_224, %c0_225], %245 {strides = array<i32>} : memref<288x28xbf16, #tpu.memory_space<vmem>>, vector<32x28xbf16>,
    %247 = vector.extract_strided_slice %242 {offsets = [0, 8], sizes = [32, 28], strides = [1, 1]} : vector<32x36xbf16> to vector<32x28xbf16>
    %c160_226 = arith.constant 160 : index
    %c0_227 = arith.constant 0 : index
    %248 = vector.load %arg9[%c160_226, %c0_227] : memref<288x28xbf16, #tpu.memory_space<vmem>>, vector<32x28xbf16>
    tpu.vector_store %arg9[%c160_226, %c0_227], %247 {strides = array<i32>} : memref<288x28xbf16, #tpu.memory_space<vmem>>, vector<32x28xbf16>,
    %c6_228 = arith.constant 6 : index
    %c0_229 = arith.constant 0 : index
    %c0_230 = arith.constant 0 : index
    %249 = vector.load %arg6[%c6_228, %c0_229, %c0_230] : memref<9x32x36xbf16, #tpu.memory_space<vmem>>, vector<1x32x36xbf16>
    %250 = vector.shape_cast %249 : vector<1x32x36xbf16> to vector<32x36xbf16>
    %251 = vector.extract_strided_slice %250 {offsets = [0, 0], sizes = [32, 28], strides = [1, 1]} : vector<32x36xbf16> to vector<32x28xbf16>
    %c192_231 = arith.constant 192 : index
    %c0_232 = arith.constant 0 : index
    %252 = vector.load %arg9[%c192_231, %c0_232] : memref<288x28xbf16, #tpu.memory_space<vmem>>, vector<32x28xbf16>
    tpu.vector_store %arg9[%c192_231, %c0_232], %251 {strides = array<i32>} : memref<288x28xbf16, #tpu.memory_space<vmem>>, vector<32x28xbf16>,
    %253 = vector.extract_strided_slice %250 {offsets = [0, 4], sizes = [32, 28], strides = [1, 1]} : vector<32x36xbf16> to vector<32x28xbf16>
    %c224_233 = arith.constant 224 : index
    %c0_234 = arith.constant 0 : index
    %254 = vector.load %arg9[%c224_233, %c0_234] : memref<288x28xbf16, #tpu.memory_space<vmem>>, vector<32x28xbf16>
    tpu.vector_store %arg9[%c224_233, %c0_234], %253 {strides = array<i32>} : memref<288x28xbf16, #tpu.memory_space<vmem>>, vector<32x28xbf16>,
    %255 = vector.extract_strided_slice %250 {offsets = [0, 8], sizes = [32, 28], strides = [1, 1]} : vector<32x36xbf16> to vector<32x28xbf16>
    %c256_235 = arith.constant 256 : index
    %c0_236 = arith.constant 0 : index
    %256 = vector.load %arg9[%c256_235, %c0_236] : memref<288x28xbf16, #tpu.memory_space<vmem>>, vector<32x28xbf16>
    tpu.vector_store %arg9[%c256_235, %c0_236], %255 {strides = array<i32>} : memref<288x28xbf16, #tpu.memory_space<vmem>>, vector<32x28xbf16>,
    %c0_237 = arith.constant 0 : index
    %c0_238 = arith.constant 0 : index
    %257 = vector.load %arg9[%c0_237, %c0_238] : memref<288x28xbf16, #tpu.memory_space<vmem>>, vector<288x28xbf16>
    %cst_239 = arith.constant dense<0.000000e+00> : vector<32x28xf32>
    %258 = tpu.matmul %96, %257, %cst_239 {dimension_numbers = #tpu.dot_dimension_numbers<[1], [0], [0], [1], [0, 0, 1, 1], [], []>} : vector<32x288xbf16>, vector<288x28xbf16>, vector<32x28xf32> -> vector<32x28xf32>
    %259 = arith.addf %258, %100 : vector<32x28xf32>
    %cst_240 = arith.constant 0.000000e+00 : f32
    %260 = vector.broadcast %cst_240 : f32 to vector<32x28xf32>
    %261 = arith.maximumf %259, %260 : vector<32x28xf32>
    %262 = arith.truncf %261 : vector<32x28xf32> to vector<32x28xbf16>
    %c4_241 = arith.constant 4 : index
    %c0_242 = arith.constant 0 : index
    %c0_243 = arith.constant 0 : index
    %263 = vector.load %arg7[%c4_241, %c0_242, %c0_243] : memref<7x32x28xbf16, #tpu.memory_space<vmem>>, vector<1x32x28xbf16>
    %264 = vector.shape_cast %263 : vector<1x32x28xbf16> to vector<32x28xbf16>
    %265 = vector.shape_cast %262 : vector<32x28xbf16> to vector<1x32x28xbf16>
    tpu.vector_store %arg7[%c4_241, %c0_242, %c0_243], %265 {strides = array<i32>} : memref<7x32x28xbf16, #tpu.memory_space<vmem>>, vector<1x32x28xbf16>,
    %c5_244 = arith.constant 5 : index
    %c0_245 = arith.constant 0 : index
    %c0_246 = arith.constant 0 : index
    %266 = vector.load %arg6[%c5_244, %c0_245, %c0_246] : memref<9x32x36xbf16, #tpu.memory_space<vmem>>, vector<1x32x36xbf16>
    %267 = vector.shape_cast %266 : vector<1x32x36xbf16> to vector<32x36xbf16>
    %268 = vector.extract_strided_slice %267 {offsets = [0, 0], sizes = [32, 28], strides = [1, 1]} : vector<32x36xbf16> to vector<32x28xbf16>
    %c0_247 = arith.constant 0 : index
    %c0_248 = arith.constant 0 : index
    %269 = vector.load %arg9[%c0_247, %c0_248] : memref<288x28xbf16, #tpu.memory_space<vmem>>, vector<32x28xbf16>
    tpu.vector_store %arg9[%c0_247, %c0_248], %268 {strides = array<i32>} : memref<288x28xbf16, #tpu.memory_space<vmem>>, vector<32x28xbf16>,
    %270 = vector.extract_strided_slice %267 {offsets = [0, 4], sizes = [32, 28], strides = [1, 1]} : vector<32x36xbf16> to vector<32x28xbf16>
    %c32_249 = arith.constant 32 : index
    %c0_250 = arith.constant 0 : index
    %271 = vector.load %arg9[%c32_249, %c0_250] : memref<288x28xbf16, #tpu.memory_space<vmem>>, vector<32x28xbf16>
    tpu.vector_store %arg9[%c32_249, %c0_250], %270 {strides = array<i32>} : memref<288x28xbf16, #tpu.memory_space<vmem>>, vector<32x28xbf16>,
    %272 = vector.extract_strided_slice %267 {offsets = [0, 8], sizes = [32, 28], strides = [1, 1]} : vector<32x36xbf16> to vector<32x28xbf16>
    %c64_251 = arith.constant 64 : index
    %c0_252 = arith.constant 0 : index
    %273 = vector.load %arg9[%c64_251, %c0_252] : memref<288x28xbf16, #tpu.memory_space<vmem>>, vector<32x28xbf16>
    tpu.vector_store %arg9[%c64_251, %c0_252], %272 {strides = array<i32>} : memref<288x28xbf16, #tpu.memory_space<vmem>>, vector<32x28xbf16>,
    %c6_253 = arith.constant 6 : index
    %c0_254 = arith.constant 0 : index
    %c0_255 = arith.constant 0 : index
    %274 = vector.load %arg6[%c6_253, %c0_254, %c0_255] : memref<9x32x36xbf16, #tpu.memory_space<vmem>>, vector<1x32x36xbf16>
    %275 = vector.shape_cast %274 : vector<1x32x36xbf16> to vector<32x36xbf16>
    %276 = vector.extract_strided_slice %275 {offsets = [0, 0], sizes = [32, 28], strides = [1, 1]} : vector<32x36xbf16> to vector<32x28xbf16>
    %c96_256 = arith.constant 96 : index
    %c0_257 = arith.constant 0 : index
    %277 = vector.load %arg9[%c96_256, %c0_257] : memref<288x28xbf16, #tpu.memory_space<vmem>>, vector<32x28xbf16>
    tpu.vector_store %arg9[%c96_256, %c0_257], %276 {strides = array<i32>} : memref<288x28xbf16, #tpu.memory_space<vmem>>, vector<32x28xbf16>,
    %278 = vector.extract_strided_slice %275 {offsets = [0, 4], sizes = [32, 28], strides = [1, 1]} : vector<32x36xbf16> to vector<32x28xbf16>
    %c128_258 = arith.constant 128 : index
    %c0_259 = arith.constant 0 : index
    %279 = vector.load %arg9[%c128_258, %c0_259] : memref<288x28xbf16, #tpu.memory_space<vmem>>, vector<32x28xbf16>
    tpu.vector_store %arg9[%c128_258, %c0_259], %278 {strides = array<i32>} : memref<288x28xbf16, #tpu.memory_space<vmem>>, vector<32x28xbf16>,
    %280 = vector.extract_strided_slice %275 {offsets = [0, 8], sizes = [32, 28], strides = [1, 1]} : vector<32x36xbf16> to vector<32x28xbf16>
    %c160_260 = arith.constant 160 : index
    %c0_261 = arith.constant 0 : index
    %281 = vector.load %arg9[%c160_260, %c0_261] : memref<288x28xbf16, #tpu.memory_space<vmem>>, vector<32x28xbf16>
    tpu.vector_store %arg9[%c160_260, %c0_261], %280 {strides = array<i32>} : memref<288x28xbf16, #tpu.memory_space<vmem>>, vector<32x28xbf16>,
    %c7_262 = arith.constant 7 : index
    %c0_263 = arith.constant 0 : index
    %c0_264 = arith.constant 0 : index
    %282 = vector.load %arg6[%c7_262, %c0_263, %c0_264] : memref<9x32x36xbf16, #tpu.memory_space<vmem>>, vector<1x32x36xbf16>
    %283 = vector.shape_cast %282 : vector<1x32x36xbf16> to vector<32x36xbf16>
    %284 = vector.extract_strided_slice %283 {offsets = [0, 0], sizes = [32, 28], strides = [1, 1]} : vector<32x36xbf16> to vector<32x28xbf16>
    %c192_265 = arith.constant 192 : index
    %c0_266 = arith.constant 0 : index
    %285 = vector.load %arg9[%c192_265, %c0_266] : memref<288x28xbf16, #tpu.memory_space<vmem>>, vector<32x28xbf16>
    tpu.vector_store %arg9[%c192_265, %c0_266], %284 {strides = array<i32>} : memref<288x28xbf16, #tpu.memory_space<vmem>>, vector<32x28xbf16>,
    %286 = vector.extract_strided_slice %283 {offsets = [0, 4], sizes = [32, 28], strides = [1, 1]} : vector<32x36xbf16> to vector<32x28xbf16>
    %c224_267 = arith.constant 224 : index
    %c0_268 = arith.constant 0 : index
    %287 = vector.load %arg9[%c224_267, %c0_268] : memref<288x28xbf16, #tpu.memory_space<vmem>>, vector<32x28xbf16>
    tpu.vector_store %arg9[%c224_267, %c0_268], %286 {strides = array<i32>} : memref<288x28xbf16, #tpu.memory_space<vmem>>, vector<32x28xbf16>,
    %288 = vector.extract_strided_slice %283 {offsets = [0, 8], sizes = [32, 28], strides = [1, 1]} : vector<32x36xbf16> to vector<32x28xbf16>
    %c256_269 = arith.constant 256 : index
    %c0_270 = arith.constant 0 : index
    %289 = vector.load %arg9[%c256_269, %c0_270] : memref<288x28xbf16, #tpu.memory_space<vmem>>, vector<32x28xbf16>
    tpu.vector_store %arg9[%c256_269, %c0_270], %288 {strides = array<i32>} : memref<288x28xbf16, #tpu.memory_space<vmem>>, vector<32x28xbf16>,
    %c0_271 = arith.constant 0 : index
    %c0_272 = arith.constant 0 : index
    %290 = vector.load %arg9[%c0_271, %c0_272] : memref<288x28xbf16, #tpu.memory_space<vmem>>, vector<288x28xbf16>
    %cst_273 = arith.constant dense<0.000000e+00> : vector<32x28xf32>
    %291 = tpu.matmul %96, %290, %cst_273 {dimension_numbers = #tpu.dot_dimension_numbers<[1], [0], [0], [1], [0, 0, 1, 1], [], []>} : vector<32x288xbf16>, vector<288x28xbf16>, vector<32x28xf32> -> vector<32x28xf32>
    %292 = arith.addf %291, %100 : vector<32x28xf32>
    %cst_274 = arith.constant 0.000000e+00 : f32
    %293 = vector.broadcast %cst_274 : f32 to vector<32x28xf32>
    %294 = arith.maximumf %292, %293 : vector<32x28xf32>
    %295 = arith.truncf %294 : vector<32x28xf32> to vector<32x28xbf16>
    %c5_275 = arith.constant 5 : index
    %c0_276 = arith.constant 0 : index
    %c0_277 = arith.constant 0 : index
    %296 = vector.load %arg7[%c5_275, %c0_276, %c0_277] : memref<7x32x28xbf16, #tpu.memory_space<vmem>>, vector<1x32x28xbf16>
    %297 = vector.shape_cast %296 : vector<1x32x28xbf16> to vector<32x28xbf16>
    %298 = vector.shape_cast %295 : vector<32x28xbf16> to vector<1x32x28xbf16>
    tpu.vector_store %arg7[%c5_275, %c0_276, %c0_277], %298 {strides = array<i32>} : memref<7x32x28xbf16, #tpu.memory_space<vmem>>, vector<1x32x28xbf16>,
    %c6_278 = arith.constant 6 : index
    %c0_279 = arith.constant 0 : index
    %c0_280 = arith.constant 0 : index
    %299 = vector.load %arg6[%c6_278, %c0_279, %c0_280] : memref<9x32x36xbf16, #tpu.memory_space<vmem>>, vector<1x32x36xbf16>
    %300 = vector.shape_cast %299 : vector<1x32x36xbf16> to vector<32x36xbf16>
    %301 = vector.extract_strided_slice %300 {offsets = [0, 0], sizes = [32, 28], strides = [1, 1]} : vector<32x36xbf16> to vector<32x28xbf16>
    %c0_281 = arith.constant 0 : index
    %c0_282 = arith.constant 0 : index
    %302 = vector.load %arg9[%c0_281, %c0_282] : memref<288x28xbf16, #tpu.memory_space<vmem>>, vector<32x28xbf16>
    tpu.vector_store %arg9[%c0_281, %c0_282], %301 {strides = array<i32>} : memref<288x28xbf16, #tpu.memory_space<vmem>>, vector<32x28xbf16>,
    %303 = vector.extract_strided_slice %300 {offsets = [0, 4], sizes = [32, 28], strides = [1, 1]} : vector<32x36xbf16> to vector<32x28xbf16>
    %c32_283 = arith.constant 32 : index
    %c0_284 = arith.constant 0 : index
    %304 = vector.load %arg9[%c32_283, %c0_284] : memref<288x28xbf16, #tpu.memory_space<vmem>>, vector<32x28xbf16>
    tpu.vector_store %arg9[%c32_283, %c0_284], %303 {strides = array<i32>} : memref<288x28xbf16, #tpu.memory_space<vmem>>, vector<32x28xbf16>,
    %305 = vector.extract_strided_slice %300 {offsets = [0, 8], sizes = [32, 28], strides = [1, 1]} : vector<32x36xbf16> to vector<32x28xbf16>
    %c64_285 = arith.constant 64 : index
    %c0_286 = arith.constant 0 : index
    %306 = vector.load %arg9[%c64_285, %c0_286] : memref<288x28xbf16, #tpu.memory_space<vmem>>, vector<32x28xbf16>
    tpu.vector_store %arg9[%c64_285, %c0_286], %305 {strides = array<i32>} : memref<288x28xbf16, #tpu.memory_space<vmem>>, vector<32x28xbf16>,
    %c7_287 = arith.constant 7 : index
    %c0_288 = arith.constant 0 : index
    %c0_289 = arith.constant 0 : index
    %307 = vector.load %arg6[%c7_287, %c0_288, %c0_289] : memref<9x32x36xbf16, #tpu.memory_space<vmem>>, vector<1x32x36xbf16>
    %308 = vector.shape_cast %307 : vector<1x32x36xbf16> to vector<32x36xbf16>
    %309 = vector.extract_strided_slice %308 {offsets = [0, 0], sizes = [32, 28], strides = [1, 1]} : vector<32x36xbf16> to vector<32x28xbf16>
    %c96_290 = arith.constant 96 : index
    %c0_291 = arith.constant 0 : index
    %310 = vector.load %arg9[%c96_290, %c0_291] : memref<288x28xbf16, #tpu.memory_space<vmem>>, vector<32x28xbf16>
    tpu.vector_store %arg9[%c96_290, %c0_291], %309 {strides = array<i32>} : memref<288x28xbf16, #tpu.memory_space<vmem>>, vector<32x28xbf16>,
    %311 = vector.extract_strided_slice %308 {offsets = [0, 4], sizes = [32, 28], strides = [1, 1]} : vector<32x36xbf16> to vector<32x28xbf16>
    %c128_292 = arith.constant 128 : index
    %c0_293 = arith.constant 0 : index
    %312 = vector.load %arg9[%c128_292, %c0_293] : memref<288x28xbf16, #tpu.memory_space<vmem>>, vector<32x28xbf16>
    tpu.vector_store %arg9[%c128_292, %c0_293], %311 {strides = array<i32>} : memref<288x28xbf16, #tpu.memory_space<vmem>>, vector<32x28xbf16>,
    %313 = vector.extract_strided_slice %308 {offsets = [0, 8], sizes = [32, 28], strides = [1, 1]} : vector<32x36xbf16> to vector<32x28xbf16>
    %c160_294 = arith.constant 160 : index
    %c0_295 = arith.constant 0 : index
    %314 = vector.load %arg9[%c160_294, %c0_295] : memref<288x28xbf16, #tpu.memory_space<vmem>>, vector<32x28xbf16>
    tpu.vector_store %arg9[%c160_294, %c0_295], %313 {strides = array<i32>} : memref<288x28xbf16, #tpu.memory_space<vmem>>, vector<32x28xbf16>,
    %c8_296 = arith.constant 8 : index
    %c0_297 = arith.constant 0 : index
    %c0_298 = arith.constant 0 : index
    %315 = vector.load %arg6[%c8_296, %c0_297, %c0_298] : memref<9x32x36xbf16, #tpu.memory_space<vmem>>, vector<1x32x36xbf16>
    %316 = vector.shape_cast %315 : vector<1x32x36xbf16> to vector<32x36xbf16>
    %317 = vector.extract_strided_slice %316 {offsets = [0, 0], sizes = [32, 28], strides = [1, 1]} : vector<32x36xbf16> to vector<32x28xbf16>
    %c192_299 = arith.constant 192 : index
    %c0_300 = arith.constant 0 : index
    %318 = vector.load %arg9[%c192_299, %c0_300] : memref<288x28xbf16, #tpu.memory_space<vmem>>, vector<32x28xbf16>
    tpu.vector_store %arg9[%c192_299, %c0_300], %317 {strides = array<i32>} : memref<288x28xbf16, #tpu.memory_space<vmem>>, vector<32x28xbf16>,
    %319 = vector.extract_strided_slice %316 {offsets = [0, 4], sizes = [32, 28], strides = [1, 1]} : vector<32x36xbf16> to vector<32x28xbf16>
    %c224_301 = arith.constant 224 : index
    %c0_302 = arith.constant 0 : index
    %320 = vector.load %arg9[%c224_301, %c0_302] : memref<288x28xbf16, #tpu.memory_space<vmem>>, vector<32x28xbf16>
    tpu.vector_store %arg9[%c224_301, %c0_302], %319 {strides = array<i32>} : memref<288x28xbf16, #tpu.memory_space<vmem>>, vector<32x28xbf16>,
    %321 = vector.extract_strided_slice %316 {offsets = [0, 8], sizes = [32, 28], strides = [1, 1]} : vector<32x36xbf16> to vector<32x28xbf16>
    %c256_303 = arith.constant 256 : index
    %c0_304 = arith.constant 0 : index
    %322 = vector.load %arg9[%c256_303, %c0_304] : memref<288x28xbf16, #tpu.memory_space<vmem>>, vector<32x28xbf16>
    tpu.vector_store %arg9[%c256_303, %c0_304], %321 {strides = array<i32>} : memref<288x28xbf16, #tpu.memory_space<vmem>>, vector<32x28xbf16>,
    %c0_305 = arith.constant 0 : index
    %c0_306 = arith.constant 0 : index
    %323 = vector.load %arg9[%c0_305, %c0_306] : memref<288x28xbf16, #tpu.memory_space<vmem>>, vector<288x28xbf16>
    %cst_307 = arith.constant dense<0.000000e+00> : vector<32x28xf32>
    %324 = tpu.matmul %96, %323, %cst_307 {dimension_numbers = #tpu.dot_dimension_numbers<[1], [0], [0], [1], [0, 0, 1, 1], [], []>} : vector<32x288xbf16>, vector<288x28xbf16>, vector<32x28xf32> -> vector<32x28xf32>
    %325 = arith.addf %324, %100 : vector<32x28xf32>
    %cst_308 = arith.constant 0.000000e+00 : f32
    %326 = vector.broadcast %cst_308 : f32 to vector<32x28xf32>
    %327 = arith.maximumf %325, %326 : vector<32x28xf32>
    %328 = arith.truncf %327 : vector<32x28xf32> to vector<32x28xbf16>
    %c6_309 = arith.constant 6 : index
    %c0_310 = arith.constant 0 : index
    %c0_311 = arith.constant 0 : index
    %329 = vector.load %arg7[%c6_309, %c0_310, %c0_311] : memref<7x32x28xbf16, #tpu.memory_space<vmem>>, vector<1x32x28xbf16>
    %330 = vector.shape_cast %329 : vector<1x32x28xbf16> to vector<32x28xbf16>
    %331 = vector.shape_cast %328 : vector<32x28xbf16> to vector<1x32x28xbf16>
    tpu.vector_store %arg7[%c6_309, %c0_310, %c0_311], %331 {strides = array<i32>} : memref<7x32x28xbf16, #tpu.memory_space<vmem>>, vector<1x32x28xbf16>,
    %c1_312 = arith.constant 1 : index
    %c0_313 = arith.constant 0 : index
    %c0_314 = arith.constant 0 : index
    %332 = vector.load %arg3[%c1_312, %c0_313, %c0_314] : memref<3x32x288xbf16, #tpu.memory_space<vmem>>, vector<1x32x288xbf16>
    %333 = vector.shape_cast %332 : vector<1x32x288xbf16> to vector<32x288xbf16>
    %c2_315 = arith.constant 2 : index
    %c0_316 = arith.constant 0 : index
    %c0_317 = arith.constant 0 : index
    %334 = vector.load %arg4[%c2_315, %c0_316, %c0_317] : memref<4x32x1xf32, #tpu.memory_space<vmem>>, vector<1x32x1xf32>
    %335 = vector.shape_cast %334 : vector<1x32x1xf32> to vector<32x1xf32>
    %336 = vector.shape_cast %335 : vector<32x1xf32> to vector<32x1xf32>
    %337 = vector.broadcast %336 : vector<32x1xf32> to vector<32x20xf32>
    %c0_318 = arith.constant 0 : index
    %c0_319 = arith.constant 0 : index
    %c0_320 = arith.constant 0 : index
    %338 = vector.load %arg7[%c0_318, %c0_319, %c0_320] : memref<7x32x28xbf16, #tpu.memory_space<vmem>>, vector<1x32x28xbf16>
    %339 = vector.shape_cast %338 : vector<1x32x28xbf16> to vector<32x28xbf16>
    %340 = vector.extract_strided_slice %339 {offsets = [0, 0], sizes = [32, 20], strides = [1, 1]} : vector<32x28xbf16> to vector<32x20xbf16>
    %c0_321 = arith.constant 0 : index
    %c0_322 = arith.constant 0 : index
    %341 = vector.load %arg9[%c0_321, %c0_322] : memref<288x28xbf16, #tpu.memory_space<vmem>>, vector<32x20xbf16>
    tpu.vector_store %arg9[%c0_321, %c0_322], %340 {strides = array<i32>} : memref<288x28xbf16, #tpu.memory_space<vmem>>, vector<32x20xbf16>,
    %342 = vector.extract_strided_slice %339 {offsets = [0, 4], sizes = [32, 20], strides = [1, 1]} : vector<32x28xbf16> to vector<32x20xbf16>
    %c32_323 = arith.constant 32 : index
    %c0_324 = arith.constant 0 : index
    %343 = vector.load %arg9[%c32_323, %c0_324] : memref<288x28xbf16, #tpu.memory_space<vmem>>, vector<32x20xbf16>
    tpu.vector_store %arg9[%c32_323, %c0_324], %342 {strides = array<i32>} : memref<288x28xbf16, #tpu.memory_space<vmem>>, vector<32x20xbf16>,
    %344 = vector.extract_strided_slice %339 {offsets = [0, 8], sizes = [32, 20], strides = [1, 1]} : vector<32x28xbf16> to vector<32x20xbf16>
    %c64_325 = arith.constant 64 : index
    %c0_326 = arith.constant 0 : index
    %345 = vector.load %arg9[%c64_325, %c0_326] : memref<288x28xbf16, #tpu.memory_space<vmem>>, vector<32x20xbf16>
    tpu.vector_store %arg9[%c64_325, %c0_326], %344 {strides = array<i32>} : memref<288x28xbf16, #tpu.memory_space<vmem>>, vector<32x20xbf16>,
    %c1_327 = arith.constant 1 : index
    %c0_328 = arith.constant 0 : index
    %c0_329 = arith.constant 0 : index
    %346 = vector.load %arg7[%c1_327, %c0_328, %c0_329] : memref<7x32x28xbf16, #tpu.memory_space<vmem>>, vector<1x32x28xbf16>
    %347 = vector.shape_cast %346 : vector<1x32x28xbf16> to vector<32x28xbf16>
    %348 = vector.extract_strided_slice %347 {offsets = [0, 0], sizes = [32, 20], strides = [1, 1]} : vector<32x28xbf16> to vector<32x20xbf16>
    %c96_330 = arith.constant 96 : index
    %c0_331 = arith.constant 0 : index
    %349 = vector.load %arg9[%c96_330, %c0_331] : memref<288x28xbf16, #tpu.memory_space<vmem>>, vector<32x20xbf16>
    tpu.vector_store %arg9[%c96_330, %c0_331], %348 {strides = array<i32>} : memref<288x28xbf16, #tpu.memory_space<vmem>>, vector<32x20xbf16>,
    %350 = vector.extract_strided_slice %347 {offsets = [0, 4], sizes = [32, 20], strides = [1, 1]} : vector<32x28xbf16> to vector<32x20xbf16>
    %c128_332 = arith.constant 128 : index
    %c0_333 = arith.constant 0 : index
    %351 = vector.load %arg9[%c128_332, %c0_333] : memref<288x28xbf16, #tpu.memory_space<vmem>>, vector<32x20xbf16>
    tpu.vector_store %arg9[%c128_332, %c0_333], %350 {strides = array<i32>} : memref<288x28xbf16, #tpu.memory_space<vmem>>, vector<32x20xbf16>,
    %352 = vector.extract_strided_slice %347 {offsets = [0, 8], sizes = [32, 20], strides = [1, 1]} : vector<32x28xbf16> to vector<32x20xbf16>
    %c160_334 = arith.constant 160 : index
    %c0_335 = arith.constant 0 : index
    %353 = vector.load %arg9[%c160_334, %c0_335] : memref<288x28xbf16, #tpu.memory_space<vmem>>, vector<32x20xbf16>
    tpu.vector_store %arg9[%c160_334, %c0_335], %352 {strides = array<i32>} : memref<288x28xbf16, #tpu.memory_space<vmem>>, vector<32x20xbf16>,
    %c2_336 = arith.constant 2 : index
    %c0_337 = arith.constant 0 : index
    %c0_338 = arith.constant 0 : index
    %354 = vector.load %arg7[%c2_336, %c0_337, %c0_338] : memref<7x32x28xbf16, #tpu.memory_space<vmem>>, vector<1x32x28xbf16>
    %355 = vector.shape_cast %354 : vector<1x32x28xbf16> to vector<32x28xbf16>
    %356 = vector.extract_strided_slice %355 {offsets = [0, 0], sizes = [32, 20], strides = [1, 1]} : vector<32x28xbf16> to vector<32x20xbf16>
    %c192_339 = arith.constant 192 : index
    %c0_340 = arith.constant 0 : index
    %357 = vector.load %arg9[%c192_339, %c0_340] : memref<288x28xbf16, #tpu.memory_space<vmem>>, vector<32x20xbf16>
    tpu.vector_store %arg9[%c192_339, %c0_340], %356 {strides = array<i32>} : memref<288x28xbf16, #tpu.memory_space<vmem>>, vector<32x20xbf16>,
    %358 = vector.extract_strided_slice %355 {offsets = [0, 4], sizes = [32, 20], strides = [1, 1]} : vector<32x28xbf16> to vector<32x20xbf16>
    %c224_341 = arith.constant 224 : index
    %c0_342 = arith.constant 0 : index
    %359 = vector.load %arg9[%c224_341, %c0_342] : memref<288x28xbf16, #tpu.memory_space<vmem>>, vector<32x20xbf16>
    tpu.vector_store %arg9[%c224_341, %c0_342], %358 {strides = array<i32>} : memref<288x28xbf16, #tpu.memory_space<vmem>>, vector<32x20xbf16>,
    %360 = vector.extract_strided_slice %355 {offsets = [0, 8], sizes = [32, 20], strides = [1, 1]} : vector<32x28xbf16> to vector<32x20xbf16>
    %c256_343 = arith.constant 256 : index
    %c0_344 = arith.constant 0 : index
    %361 = vector.load %arg9[%c256_343, %c0_344] : memref<288x28xbf16, #tpu.memory_space<vmem>>, vector<32x20xbf16>
    tpu.vector_store %arg9[%c256_343, %c0_344], %360 {strides = array<i32>} : memref<288x28xbf16, #tpu.memory_space<vmem>>, vector<32x20xbf16>,
    %c0_345 = arith.constant 0 : index
    %c0_346 = arith.constant 0 : index
    %362 = vector.load %arg9[%c0_345, %c0_346] : memref<288x28xbf16, #tpu.memory_space<vmem>>, vector<288x20xbf16>
    %cst_347 = arith.constant dense<0.000000e+00> : vector<32x20xf32>
    %363 = tpu.matmul %333, %362, %cst_347 {dimension_numbers = #tpu.dot_dimension_numbers<[1], [0], [0], [1], [0, 0, 1, 1], [], []>} : vector<32x288xbf16>, vector<288x20xbf16>, vector<32x20xf32> -> vector<32x20xf32>
    %364 = arith.addf %363, %337 : vector<32x20xf32>
    %cst_348 = arith.constant 0.000000e+00 : f32
    %365 = vector.broadcast %cst_348 : f32 to vector<32x20xf32>
    %366 = arith.maximumf %364, %365 : vector<32x20xf32>
    %367 = arith.truncf %366 : vector<32x20xf32> to vector<32x20xbf16>
    %c0_349 = arith.constant 0 : index
    %c0_350 = arith.constant 0 : index
    %c0_351 = arith.constant 0 : index
    %368 = vector.load %arg8[%c0_349, %c0_350, %c0_351] : memref<5x32x20xbf16, #tpu.memory_space<vmem>>, vector<1x32x20xbf16>
    %369 = vector.shape_cast %368 : vector<1x32x20xbf16> to vector<32x20xbf16>
    %370 = vector.shape_cast %367 : vector<32x20xbf16> to vector<1x32x20xbf16>
    tpu.vector_store %arg8[%c0_349, %c0_350, %c0_351], %370 {strides = array<i32>} : memref<5x32x20xbf16, #tpu.memory_space<vmem>>, vector<1x32x20xbf16>,
    %c1_352 = arith.constant 1 : index
    %c0_353 = arith.constant 0 : index
    %c0_354 = arith.constant 0 : index
    %371 = vector.load %arg7[%c1_352, %c0_353, %c0_354] : memref<7x32x28xbf16, #tpu.memory_space<vmem>>, vector<1x32x28xbf16>
    %372 = vector.shape_cast %371 : vector<1x32x28xbf16> to vector<32x28xbf16>
    %373 = vector.extract_strided_slice %372 {offsets = [0, 0], sizes = [32, 20], strides = [1, 1]} : vector<32x28xbf16> to vector<32x20xbf16>
    %c0_355 = arith.constant 0 : index
    %c0_356 = arith.constant 0 : index
    %374 = vector.load %arg9[%c0_355, %c0_356] : memref<288x28xbf16, #tpu.memory_space<vmem>>, vector<32x20xbf16>
    tpu.vector_store %arg9[%c0_355, %c0_356], %373 {strides = array<i32>} : memref<288x28xbf16, #tpu.memory_space<vmem>>, vector<32x20xbf16>,
    %375 = vector.extract_strided_slice %372 {offsets = [0, 4], sizes = [32, 20], strides = [1, 1]} : vector<32x28xbf16> to vector<32x20xbf16>
    %c32_357 = arith.constant 32 : index
    %c0_358 = arith.constant 0 : index
    %376 = vector.load %arg9[%c32_357, %c0_358] : memref<288x28xbf16, #tpu.memory_space<vmem>>, vector<32x20xbf16>
    tpu.vector_store %arg9[%c32_357, %c0_358], %375 {strides = array<i32>} : memref<288x28xbf16, #tpu.memory_space<vmem>>, vector<32x20xbf16>,
    %377 = vector.extract_strided_slice %372 {offsets = [0, 8], sizes = [32, 20], strides = [1, 1]} : vector<32x28xbf16> to vector<32x20xbf16>
    %c64_359 = arith.constant 64 : index
    %c0_360 = arith.constant 0 : index
    %378 = vector.load %arg9[%c64_359, %c0_360] : memref<288x28xbf16, #tpu.memory_space<vmem>>, vector<32x20xbf16>
    tpu.vector_store %arg9[%c64_359, %c0_360], %377 {strides = array<i32>} : memref<288x28xbf16, #tpu.memory_space<vmem>>, vector<32x20xbf16>,
    %c2_361 = arith.constant 2 : index
    %c0_362 = arith.constant 0 : index
    %c0_363 = arith.constant 0 : index
    %379 = vector.load %arg7[%c2_361, %c0_362, %c0_363] : memref<7x32x28xbf16, #tpu.memory_space<vmem>>, vector<1x32x28xbf16>
    %380 = vector.shape_cast %379 : vector<1x32x28xbf16> to vector<32x28xbf16>
    %381 = vector.extract_strided_slice %380 {offsets = [0, 0], sizes = [32, 20], strides = [1, 1]} : vector<32x28xbf16> to vector<32x20xbf16>
    %c96_364 = arith.constant 96 : index
    %c0_365 = arith.constant 0 : index
    %382 = vector.load %arg9[%c96_364, %c0_365] : memref<288x28xbf16, #tpu.memory_space<vmem>>, vector<32x20xbf16>
    tpu.vector_store %arg9[%c96_364, %c0_365], %381 {strides = array<i32>} : memref<288x28xbf16, #tpu.memory_space<vmem>>, vector<32x20xbf16>,
    %383 = vector.extract_strided_slice %380 {offsets = [0, 4], sizes = [32, 20], strides = [1, 1]} : vector<32x28xbf16> to vector<32x20xbf16>
    %c128_366 = arith.constant 128 : index
    %c0_367 = arith.constant 0 : index
    %384 = vector.load %arg9[%c128_366, %c0_367] : memref<288x28xbf16, #tpu.memory_space<vmem>>, vector<32x20xbf16>
    tpu.vector_store %arg9[%c128_366, %c0_367], %383 {strides = array<i32>} : memref<288x28xbf16, #tpu.memory_space<vmem>>, vector<32x20xbf16>,
    %385 = vector.extract_strided_slice %380 {offsets = [0, 8], sizes = [32, 20], strides = [1, 1]} : vector<32x28xbf16> to vector<32x20xbf16>
    %c160_368 = arith.constant 160 : index
    %c0_369 = arith.constant 0 : index
    %386 = vector.load %arg9[%c160_368, %c0_369] : memref<288x28xbf16, #tpu.memory_space<vmem>>, vector<32x20xbf16>
    tpu.vector_store %arg9[%c160_368, %c0_369], %385 {strides = array<i32>} : memref<288x28xbf16, #tpu.memory_space<vmem>>, vector<32x20xbf16>,
    %c3_370 = arith.constant 3 : index
    %c0_371 = arith.constant 0 : index
    %c0_372 = arith.constant 0 : index
    %387 = vector.load %arg7[%c3_370, %c0_371, %c0_372] : memref<7x32x28xbf16, #tpu.memory_space<vmem>>, vector<1x32x28xbf16>
    %388 = vector.shape_cast %387 : vector<1x32x28xbf16> to vector<32x28xbf16>
    %389 = vector.extract_strided_slice %388 {offsets = [0, 0], sizes = [32, 20], strides = [1, 1]} : vector<32x28xbf16> to vector<32x20xbf16>
    %c192_373 = arith.constant 192 : index
    %c0_374 = arith.constant 0 : index
    %390 = vector.load %arg9[%c192_373, %c0_374] : memref<288x28xbf16, #tpu.memory_space<vmem>>, vector<32x20xbf16>
    tpu.vector_store %arg9[%c192_373, %c0_374], %389 {strides = array<i32>} : memref<288x28xbf16, #tpu.memory_space<vmem>>, vector<32x20xbf16>,
    %391 = vector.extract_strided_slice %388 {offsets = [0, 4], sizes = [32, 20], strides = [1, 1]} : vector<32x28xbf16> to vector<32x20xbf16>
    %c224_375 = arith.constant 224 : index
    %c0_376 = arith.constant 0 : index
    %392 = vector.load %arg9[%c224_375, %c0_376] : memref<288x28xbf16, #tpu.memory_space<vmem>>, vector<32x20xbf16>
    tpu.vector_store %arg9[%c224_375, %c0_376], %391 {strides = array<i32>} : memref<288x28xbf16, #tpu.memory_space<vmem>>, vector<32x20xbf16>,
    %393 = vector.extract_strided_slice %388 {offsets = [0, 8], sizes = [32, 20], strides = [1, 1]} : vector<32x28xbf16> to vector<32x20xbf16>
    %c256_377 = arith.constant 256 : index
    %c0_378 = arith.constant 0 : index
    %394 = vector.load %arg9[%c256_377, %c0_378] : memref<288x28xbf16, #tpu.memory_space<vmem>>, vector<32x20xbf16>
    tpu.vector_store %arg9[%c256_377, %c0_378], %393 {strides = array<i32>} : memref<288x28xbf16, #tpu.memory_space<vmem>>, vector<32x20xbf16>,
    %c0_379 = arith.constant 0 : index
    %c0_380 = arith.constant 0 : index
    %395 = vector.load %arg9[%c0_379, %c0_380] : memref<288x28xbf16, #tpu.memory_space<vmem>>, vector<288x20xbf16>
    %cst_381 = arith.constant dense<0.000000e+00> : vector<32x20xf32>
    %396 = tpu.matmul %333, %395, %cst_381 {dimension_numbers = #tpu.dot_dimension_numbers<[1], [0], [0], [1], [0, 0, 1, 1], [], []>} : vector<32x288xbf16>, vector<288x20xbf16>, vector<32x20xf32> -> vector<32x20xf32>
    %397 = arith.addf %396, %337 : vector<32x20xf32>
    %cst_382 = arith.constant 0.000000e+00 : f32
    %398 = vector.broadcast %cst_382 : f32 to vector<32x20xf32>
    %399 = arith.maximumf %397, %398 : vector<32x20xf32>
    %400 = arith.truncf %399 : vector<32x20xf32> to vector<32x20xbf16>
    %c1_383 = arith.constant 1 : index
    %c0_384 = arith.constant 0 : index
    %c0_385 = arith.constant 0 : index
    %401 = vector.load %arg8[%c1_383, %c0_384, %c0_385] : memref<5x32x20xbf16, #tpu.memory_space<vmem>>, vector<1x32x20xbf16>
    %402 = vector.shape_cast %401 : vector<1x32x20xbf16> to vector<32x20xbf16>
    %403 = vector.shape_cast %400 : vector<32x20xbf16> to vector<1x32x20xbf16>
    tpu.vector_store %arg8[%c1_383, %c0_384, %c0_385], %403 {strides = array<i32>} : memref<5x32x20xbf16, #tpu.memory_space<vmem>>, vector<1x32x20xbf16>,
    %c2_386 = arith.constant 2 : index
    %c0_387 = arith.constant 0 : index
    %c0_388 = arith.constant 0 : index
    %404 = vector.load %arg7[%c2_386, %c0_387, %c0_388] : memref<7x32x28xbf16, #tpu.memory_space<vmem>>, vector<1x32x28xbf16>
    %405 = vector.shape_cast %404 : vector<1x32x28xbf16> to vector<32x28xbf16>
    %406 = vector.extract_strided_slice %405 {offsets = [0, 0], sizes = [32, 20], strides = [1, 1]} : vector<32x28xbf16> to vector<32x20xbf16>
    %c0_389 = arith.constant 0 : index
    %c0_390 = arith.constant 0 : index
    %407 = vector.load %arg9[%c0_389, %c0_390] : memref<288x28xbf16, #tpu.memory_space<vmem>>, vector<32x20xbf16>
    tpu.vector_store %arg9[%c0_389, %c0_390], %406 {strides = array<i32>} : memref<288x28xbf16, #tpu.memory_space<vmem>>, vector<32x20xbf16>,
    %408 = vector.extract_strided_slice %405 {offsets = [0, 4], sizes = [32, 20], strides = [1, 1]} : vector<32x28xbf16> to vector<32x20xbf16>
    %c32_391 = arith.constant 32 : index
    %c0_392 = arith.constant 0 : index
    %409 = vector.load %arg9[%c32_391, %c0_392] : memref<288x28xbf16, #tpu.memory_space<vmem>>, vector<32x20xbf16>
    tpu.vector_store %arg9[%c32_391, %c0_392], %408 {strides = array<i32>} : memref<288x28xbf16, #tpu.memory_space<vmem>>, vector<32x20xbf16>,
    %410 = vector.extract_strided_slice %405 {offsets = [0, 8], sizes = [32, 20], strides = [1, 1]} : vector<32x28xbf16> to vector<32x20xbf16>
    %c64_393 = arith.constant 64 : index
    %c0_394 = arith.constant 0 : index
    %411 = vector.load %arg9[%c64_393, %c0_394] : memref<288x28xbf16, #tpu.memory_space<vmem>>, vector<32x20xbf16>
    tpu.vector_store %arg9[%c64_393, %c0_394], %410 {strides = array<i32>} : memref<288x28xbf16, #tpu.memory_space<vmem>>, vector<32x20xbf16>,
    %c3_395 = arith.constant 3 : index
    %c0_396 = arith.constant 0 : index
    %c0_397 = arith.constant 0 : index
    %412 = vector.load %arg7[%c3_395, %c0_396, %c0_397] : memref<7x32x28xbf16, #tpu.memory_space<vmem>>, vector<1x32x28xbf16>
    %413 = vector.shape_cast %412 : vector<1x32x28xbf16> to vector<32x28xbf16>
    %414 = vector.extract_strided_slice %413 {offsets = [0, 0], sizes = [32, 20], strides = [1, 1]} : vector<32x28xbf16> to vector<32x20xbf16>
    %c96_398 = arith.constant 96 : index
    %c0_399 = arith.constant 0 : index
    %415 = vector.load %arg9[%c96_398, %c0_399] : memref<288x28xbf16, #tpu.memory_space<vmem>>, vector<32x20xbf16>
    tpu.vector_store %arg9[%c96_398, %c0_399], %414 {strides = array<i32>} : memref<288x28xbf16, #tpu.memory_space<vmem>>, vector<32x20xbf16>,
    %416 = vector.extract_strided_slice %413 {offsets = [0, 4], sizes = [32, 20], strides = [1, 1]} : vector<32x28xbf16> to vector<32x20xbf16>
    %c128_400 = arith.constant 128 : index
    %c0_401 = arith.constant 0 : index
    %417 = vector.load %arg9[%c128_400, %c0_401] : memref<288x28xbf16, #tpu.memory_space<vmem>>, vector<32x20xbf16>
    tpu.vector_store %arg9[%c128_400, %c0_401], %416 {strides = array<i32>} : memref<288x28xbf16, #tpu.memory_space<vmem>>, vector<32x20xbf16>,
    %418 = vector.extract_strided_slice %413 {offsets = [0, 8], sizes = [32, 20], strides = [1, 1]} : vector<32x28xbf16> to vector<32x20xbf16>
    %c160_402 = arith.constant 160 : index
    %c0_403 = arith.constant 0 : index
    %419 = vector.load %arg9[%c160_402, %c0_403] : memref<288x28xbf16, #tpu.memory_space<vmem>>, vector<32x20xbf16>
    tpu.vector_store %arg9[%c160_402, %c0_403], %418 {strides = array<i32>} : memref<288x28xbf16, #tpu.memory_space<vmem>>, vector<32x20xbf16>,
    %c4_404 = arith.constant 4 : index
    %c0_405 = arith.constant 0 : index
    %c0_406 = arith.constant 0 : index
    %420 = vector.load %arg7[%c4_404, %c0_405, %c0_406] : memref<7x32x28xbf16, #tpu.memory_space<vmem>>, vector<1x32x28xbf16>
    %421 = vector.shape_cast %420 : vector<1x32x28xbf16> to vector<32x28xbf16>
    %422 = vector.extract_strided_slice %421 {offsets = [0, 0], sizes = [32, 20], strides = [1, 1]} : vector<32x28xbf16> to vector<32x20xbf16>
    %c192_407 = arith.constant 192 : index
    %c0_408 = arith.constant 0 : index
    %423 = vector.load %arg9[%c192_407, %c0_408] : memref<288x28xbf16, #tpu.memory_space<vmem>>, vector<32x20xbf16>
    tpu.vector_store %arg9[%c192_407, %c0_408], %422 {strides = array<i32>} : memref<288x28xbf16, #tpu.memory_space<vmem>>, vector<32x20xbf16>,
    %424 = vector.extract_strided_slice %421 {offsets = [0, 4], sizes = [32, 20], strides = [1, 1]} : vector<32x28xbf16> to vector<32x20xbf16>
    %c224_409 = arith.constant 224 : index
    %c0_410 = arith.constant 0 : index
    %425 = vector.load %arg9[%c224_409, %c0_410] : memref<288x28xbf16, #tpu.memory_space<vmem>>, vector<32x20xbf16>
    tpu.vector_store %arg9[%c224_409, %c0_410], %424 {strides = array<i32>} : memref<288x28xbf16, #tpu.memory_space<vmem>>, vector<32x20xbf16>,
    %426 = vector.extract_strided_slice %421 {offsets = [0, 8], sizes = [32, 20], strides = [1, 1]} : vector<32x28xbf16> to vector<32x20xbf16>
    %c256_411 = arith.constant 256 : index
    %c0_412 = arith.constant 0 : index
    %427 = vector.load %arg9[%c256_411, %c0_412] : memref<288x28xbf16, #tpu.memory_space<vmem>>, vector<32x20xbf16>
    tpu.vector_store %arg9[%c256_411, %c0_412], %426 {strides = array<i32>} : memref<288x28xbf16, #tpu.memory_space<vmem>>, vector<32x20xbf16>,
    %c0_413 = arith.constant 0 : index
    %c0_414 = arith.constant 0 : index
    %428 = vector.load %arg9[%c0_413, %c0_414] : memref<288x28xbf16, #tpu.memory_space<vmem>>, vector<288x20xbf16>
    %cst_415 = arith.constant dense<0.000000e+00> : vector<32x20xf32>
    %429 = tpu.matmul %333, %428, %cst_415 {dimension_numbers = #tpu.dot_dimension_numbers<[1], [0], [0], [1], [0, 0, 1, 1], [], []>} : vector<32x288xbf16>, vector<288x20xbf16>, vector<32x20xf32> -> vector<32x20xf32>
    %430 = arith.addf %429, %337 : vector<32x20xf32>
    %cst_416 = arith.constant 0.000000e+00 : f32
    %431 = vector.broadcast %cst_416 : f32 to vector<32x20xf32>
    %432 = arith.maximumf %430, %431 : vector<32x20xf32>
    %433 = arith.truncf %432 : vector<32x20xf32> to vector<32x20xbf16>
    %c2_417 = arith.constant 2 : index
    %c0_418 = arith.constant 0 : index
    %c0_419 = arith.constant 0 : index
    %434 = vector.load %arg8[%c2_417, %c0_418, %c0_419] : memref<5x32x20xbf16, #tpu.memory_space<vmem>>, vector<1x32x20xbf16>
    %435 = vector.shape_cast %434 : vector<1x32x20xbf16> to vector<32x20xbf16>
    %436 = vector.shape_cast %433 : vector<32x20xbf16> to vector<1x32x20xbf16>
    tpu.vector_store %arg8[%c2_417, %c0_418, %c0_419], %436 {strides = array<i32>} : memref<5x32x20xbf16, #tpu.memory_space<vmem>>, vector<1x32x20xbf16>,
    %c3_420 = arith.constant 3 : index
    %c0_421 = arith.constant 0 : index
    %c0_422 = arith.constant 0 : index
    %437 = vector.load %arg7[%c3_420, %c0_421, %c0_422] : memref<7x32x28xbf16, #tpu.memory_space<vmem>>, vector<1x32x28xbf16>
    %438 = vector.shape_cast %437 : vector<1x32x28xbf16> to vector<32x28xbf16>
    %439 = vector.extract_strided_slice %438 {offsets = [0, 0], sizes = [32, 20], strides = [1, 1]} : vector<32x28xbf16> to vector<32x20xbf16>
    %c0_423 = arith.constant 0 : index
    %c0_424 = arith.constant 0 : index
    %440 = vector.load %arg9[%c0_423, %c0_424] : memref<288x28xbf16, #tpu.memory_space<vmem>>, vector<32x20xbf16>
    tpu.vector_store %arg9[%c0_423, %c0_424], %439 {strides = array<i32>} : memref<288x28xbf16, #tpu.memory_space<vmem>>, vector<32x20xbf16>,
    %441 = vector.extract_strided_slice %438 {offsets = [0, 4], sizes = [32, 20], strides = [1, 1]} : vector<32x28xbf16> to vector<32x20xbf16>
    %c32_425 = arith.constant 32 : index
    %c0_426 = arith.constant 0 : index
    %442 = vector.load %arg9[%c32_425, %c0_426] : memref<288x28xbf16, #tpu.memory_space<vmem>>, vector<32x20xbf16>
    tpu.vector_store %arg9[%c32_425, %c0_426], %441 {strides = array<i32>} : memref<288x28xbf16, #tpu.memory_space<vmem>>, vector<32x20xbf16>,
    %443 = vector.extract_strided_slice %438 {offsets = [0, 8], sizes = [32, 20], strides = [1, 1]} : vector<32x28xbf16> to vector<32x20xbf16>
    %c64_427 = arith.constant 64 : index
    %c0_428 = arith.constant 0 : index
    %444 = vector.load %arg9[%c64_427, %c0_428] : memref<288x28xbf16, #tpu.memory_space<vmem>>, vector<32x20xbf16>
    tpu.vector_store %arg9[%c64_427, %c0_428], %443 {strides = array<i32>} : memref<288x28xbf16, #tpu.memory_space<vmem>>, vector<32x20xbf16>,
    %c4_429 = arith.constant 4 : index
    %c0_430 = arith.constant 0 : index
    %c0_431 = arith.constant 0 : index
    %445 = vector.load %arg7[%c4_429, %c0_430, %c0_431] : memref<7x32x28xbf16, #tpu.memory_space<vmem>>, vector<1x32x28xbf16>
    %446 = vector.shape_cast %445 : vector<1x32x28xbf16> to vector<32x28xbf16>
    %447 = vector.extract_strided_slice %446 {offsets = [0, 0], sizes = [32, 20], strides = [1, 1]} : vector<32x28xbf16> to vector<32x20xbf16>
    %c96_432 = arith.constant 96 : index
    %c0_433 = arith.constant 0 : index
    %448 = vector.load %arg9[%c96_432, %c0_433] : memref<288x28xbf16, #tpu.memory_space<vmem>>, vector<32x20xbf16>
    tpu.vector_store %arg9[%c96_432, %c0_433], %447 {strides = array<i32>} : memref<288x28xbf16, #tpu.memory_space<vmem>>, vector<32x20xbf16>,
    %449 = vector.extract_strided_slice %446 {offsets = [0, 4], sizes = [32, 20], strides = [1, 1]} : vector<32x28xbf16> to vector<32x20xbf16>
    %c128_434 = arith.constant 128 : index
    %c0_435 = arith.constant 0 : index
    %450 = vector.load %arg9[%c128_434, %c0_435] : memref<288x28xbf16, #tpu.memory_space<vmem>>, vector<32x20xbf16>
    tpu.vector_store %arg9[%c128_434, %c0_435], %449 {strides = array<i32>} : memref<288x28xbf16, #tpu.memory_space<vmem>>, vector<32x20xbf16>,
    %451 = vector.extract_strided_slice %446 {offsets = [0, 8], sizes = [32, 20], strides = [1, 1]} : vector<32x28xbf16> to vector<32x20xbf16>
    %c160_436 = arith.constant 160 : index
    %c0_437 = arith.constant 0 : index
    %452 = vector.load %arg9[%c160_436, %c0_437] : memref<288x28xbf16, #tpu.memory_space<vmem>>, vector<32x20xbf16>
    tpu.vector_store %arg9[%c160_436, %c0_437], %451 {strides = array<i32>} : memref<288x28xbf16, #tpu.memory_space<vmem>>, vector<32x20xbf16>,
    %c5_438 = arith.constant 5 : index
    %c0_439 = arith.constant 0 : index
    %c0_440 = arith.constant 0 : index
    %453 = vector.load %arg7[%c5_438, %c0_439, %c0_440] : memref<7x32x28xbf16, #tpu.memory_space<vmem>>, vector<1x32x28xbf16>
    %454 = vector.shape_cast %453 : vector<1x32x28xbf16> to vector<32x28xbf16>
    %455 = vector.extract_strided_slice %454 {offsets = [0, 0], sizes = [32, 20], strides = [1, 1]} : vector<32x28xbf16> to vector<32x20xbf16>
    %c192_441 = arith.constant 192 : index
    %c0_442 = arith.constant 0 : index
    %456 = vector.load %arg9[%c192_441, %c0_442] : memref<288x28xbf16, #tpu.memory_space<vmem>>, vector<32x20xbf16>
    tpu.vector_store %arg9[%c192_441, %c0_442], %455 {strides = array<i32>} : memref<288x28xbf16, #tpu.memory_space<vmem>>, vector<32x20xbf16>,
    %457 = vector.extract_strided_slice %454 {offsets = [0, 4], sizes = [32, 20], strides = [1, 1]} : vector<32x28xbf16> to vector<32x20xbf16>
    %c224_443 = arith.constant 224 : index
    %c0_444 = arith.constant 0 : index
    %458 = vector.load %arg9[%c224_443, %c0_444] : memref<288x28xbf16, #tpu.memory_space<vmem>>, vector<32x20xbf16>
    tpu.vector_store %arg9[%c224_443, %c0_444], %457 {strides = array<i32>} : memref<288x28xbf16, #tpu.memory_space<vmem>>, vector<32x20xbf16>,
    %459 = vector.extract_strided_slice %454 {offsets = [0, 8], sizes = [32, 20], strides = [1, 1]} : vector<32x28xbf16> to vector<32x20xbf16>
    %c256_445 = arith.constant 256 : index
    %c0_446 = arith.constant 0 : index
    %460 = vector.load %arg9[%c256_445, %c0_446] : memref<288x28xbf16, #tpu.memory_space<vmem>>, vector<32x20xbf16>
    tpu.vector_store %arg9[%c256_445, %c0_446], %459 {strides = array<i32>} : memref<288x28xbf16, #tpu.memory_space<vmem>>, vector<32x20xbf16>,
    %c0_447 = arith.constant 0 : index
    %c0_448 = arith.constant 0 : index
    %461 = vector.load %arg9[%c0_447, %c0_448] : memref<288x28xbf16, #tpu.memory_space<vmem>>, vector<288x20xbf16>
    %cst_449 = arith.constant dense<0.000000e+00> : vector<32x20xf32>
    %462 = tpu.matmul %333, %461, %cst_449 {dimension_numbers = #tpu.dot_dimension_numbers<[1], [0], [0], [1], [0, 0, 1, 1], [], []>} : vector<32x288xbf16>, vector<288x20xbf16>, vector<32x20xf32> -> vector<32x20xf32>
    %463 = arith.addf %462, %337 : vector<32x20xf32>
    %cst_450 = arith.constant 0.000000e+00 : f32
    %464 = vector.broadcast %cst_450 : f32 to vector<32x20xf32>
    %465 = arith.maximumf %463, %464 : vector<32x20xf32>
    %466 = arith.truncf %465 : vector<32x20xf32> to vector<32x20xbf16>
    %c3_451 = arith.constant 3 : index
    %c0_452 = arith.constant 0 : index
    %c0_453 = arith.constant 0 : index
    %467 = vector.load %arg8[%c3_451, %c0_452, %c0_453] : memref<5x32x20xbf16, #tpu.memory_space<vmem>>, vector<1x32x20xbf16>
    %468 = vector.shape_cast %467 : vector<1x32x20xbf16> to vector<32x20xbf16>
    %469 = vector.shape_cast %466 : vector<32x20xbf16> to vector<1x32x20xbf16>
    tpu.vector_store %arg8[%c3_451, %c0_452, %c0_453], %469 {strides = array<i32>} : memref<5x32x20xbf16, #tpu.memory_space<vmem>>, vector<1x32x20xbf16>,
    %c4_454 = arith.constant 4 : index
    %c0_455 = arith.constant 0 : index
    %c0_456 = arith.constant 0 : index
    %470 = vector.load %arg7[%c4_454, %c0_455, %c0_456] : memref<7x32x28xbf16, #tpu.memory_space<vmem>>, vector<1x32x28xbf16>
    %471 = vector.shape_cast %470 : vector<1x32x28xbf16> to vector<32x28xbf16>
    %472 = vector.extract_strided_slice %471 {offsets = [0, 0], sizes = [32, 20], strides = [1, 1]} : vector<32x28xbf16> to vector<32x20xbf16>
    %c0_457 = arith.constant 0 : index
    %c0_458 = arith.constant 0 : index
    %473 = vector.load %arg9[%c0_457, %c0_458] : memref<288x28xbf16, #tpu.memory_space<vmem>>, vector<32x20xbf16>
    tpu.vector_store %arg9[%c0_457, %c0_458], %472 {strides = array<i32>} : memref<288x28xbf16, #tpu.memory_space<vmem>>, vector<32x20xbf16>,
    %474 = vector.extract_strided_slice %471 {offsets = [0, 4], sizes = [32, 20], strides = [1, 1]} : vector<32x28xbf16> to vector<32x20xbf16>
    %c32_459 = arith.constant 32 : index
    %c0_460 = arith.constant 0 : index
    %475 = vector.load %arg9[%c32_459, %c0_460] : memref<288x28xbf16, #tpu.memory_space<vmem>>, vector<32x20xbf16>
    tpu.vector_store %arg9[%c32_459, %c0_460], %474 {strides = array<i32>} : memref<288x28xbf16, #tpu.memory_space<vmem>>, vector<32x20xbf16>,
    %476 = vector.extract_strided_slice %471 {offsets = [0, 8], sizes = [32, 20], strides = [1, 1]} : vector<32x28xbf16> to vector<32x20xbf16>
    %c64_461 = arith.constant 64 : index
    %c0_462 = arith.constant 0 : index
    %477 = vector.load %arg9[%c64_461, %c0_462] : memref<288x28xbf16, #tpu.memory_space<vmem>>, vector<32x20xbf16>
    tpu.vector_store %arg9[%c64_461, %c0_462], %476 {strides = array<i32>} : memref<288x28xbf16, #tpu.memory_space<vmem>>, vector<32x20xbf16>,
    %c5_463 = arith.constant 5 : index
    %c0_464 = arith.constant 0 : index
    %c0_465 = arith.constant 0 : index
    %478 = vector.load %arg7[%c5_463, %c0_464, %c0_465] : memref<7x32x28xbf16, #tpu.memory_space<vmem>>, vector<1x32x28xbf16>
    %479 = vector.shape_cast %478 : vector<1x32x28xbf16> to vector<32x28xbf16>
    %480 = vector.extract_strided_slice %479 {offsets = [0, 0], sizes = [32, 20], strides = [1, 1]} : vector<32x28xbf16> to vector<32x20xbf16>
    %c96_466 = arith.constant 96 : index
    %c0_467 = arith.constant 0 : index
    %481 = vector.load %arg9[%c96_466, %c0_467] : memref<288x28xbf16, #tpu.memory_space<vmem>>, vector<32x20xbf16>
    tpu.vector_store %arg9[%c96_466, %c0_467], %480 {strides = array<i32>} : memref<288x28xbf16, #tpu.memory_space<vmem>>, vector<32x20xbf16>,
    %482 = vector.extract_strided_slice %479 {offsets = [0, 4], sizes = [32, 20], strides = [1, 1]} : vector<32x28xbf16> to vector<32x20xbf16>
    %c128_468 = arith.constant 128 : index
    %c0_469 = arith.constant 0 : index
    %483 = vector.load %arg9[%c128_468, %c0_469] : memref<288x28xbf16, #tpu.memory_space<vmem>>, vector<32x20xbf16>
    tpu.vector_store %arg9[%c128_468, %c0_469], %482 {strides = array<i32>} : memref<288x28xbf16, #tpu.memory_space<vmem>>, vector<32x20xbf16>,
    %484 = vector.extract_strided_slice %479 {offsets = [0, 8], sizes = [32, 20], strides = [1, 1]} : vector<32x28xbf16> to vector<32x20xbf16>
    %c160_470 = arith.constant 160 : index
    %c0_471 = arith.constant 0 : index
    %485 = vector.load %arg9[%c160_470, %c0_471] : memref<288x28xbf16, #tpu.memory_space<vmem>>, vector<32x20xbf16>
    tpu.vector_store %arg9[%c160_470, %c0_471], %484 {strides = array<i32>} : memref<288x28xbf16, #tpu.memory_space<vmem>>, vector<32x20xbf16>,
    %c6_472 = arith.constant 6 : index
    %c0_473 = arith.constant 0 : index
    %c0_474 = arith.constant 0 : index
    %486 = vector.load %arg7[%c6_472, %c0_473, %c0_474] : memref<7x32x28xbf16, #tpu.memory_space<vmem>>, vector<1x32x28xbf16>
    %487 = vector.shape_cast %486 : vector<1x32x28xbf16> to vector<32x28xbf16>
    %488 = vector.extract_strided_slice %487 {offsets = [0, 0], sizes = [32, 20], strides = [1, 1]} : vector<32x28xbf16> to vector<32x20xbf16>
    %c192_475 = arith.constant 192 : index
    %c0_476 = arith.constant 0 : index
    %489 = vector.load %arg9[%c192_475, %c0_476] : memref<288x28xbf16, #tpu.memory_space<vmem>>, vector<32x20xbf16>
    tpu.vector_store %arg9[%c192_475, %c0_476], %488 {strides = array<i32>} : memref<288x28xbf16, #tpu.memory_space<vmem>>, vector<32x20xbf16>,
    %490 = vector.extract_strided_slice %487 {offsets = [0, 4], sizes = [32, 20], strides = [1, 1]} : vector<32x28xbf16> to vector<32x20xbf16>
    %c224_477 = arith.constant 224 : index
    %c0_478 = arith.constant 0 : index
    %491 = vector.load %arg9[%c224_477, %c0_478] : memref<288x28xbf16, #tpu.memory_space<vmem>>, vector<32x20xbf16>
    tpu.vector_store %arg9[%c224_477, %c0_478], %490 {strides = array<i32>} : memref<288x28xbf16, #tpu.memory_space<vmem>>, vector<32x20xbf16>,
    %492 = vector.extract_strided_slice %487 {offsets = [0, 8], sizes = [32, 20], strides = [1, 1]} : vector<32x28xbf16> to vector<32x20xbf16>
    %c256_479 = arith.constant 256 : index
    %c0_480 = arith.constant 0 : index
    %493 = vector.load %arg9[%c256_479, %c0_480] : memref<288x28xbf16, #tpu.memory_space<vmem>>, vector<32x20xbf16>
    tpu.vector_store %arg9[%c256_479, %c0_480], %492 {strides = array<i32>} : memref<288x28xbf16, #tpu.memory_space<vmem>>, vector<32x20xbf16>,
    %c0_481 = arith.constant 0 : index
    %c0_482 = arith.constant 0 : index
    %494 = vector.load %arg9[%c0_481, %c0_482] : memref<288x28xbf16, #tpu.memory_space<vmem>>, vector<288x20xbf16>
    %cst_483 = arith.constant dense<0.000000e+00> : vector<32x20xf32>
    %495 = tpu.matmul %333, %494, %cst_483 {dimension_numbers = #tpu.dot_dimension_numbers<[1], [0], [0], [1], [0, 0, 1, 1], [], []>} : vector<32x288xbf16>, vector<288x20xbf16>, vector<32x20xf32> -> vector<32x20xf32>
    %496 = arith.addf %495, %337 : vector<32x20xf32>
    %cst_484 = arith.constant 0.000000e+00 : f32
    %497 = vector.broadcast %cst_484 : f32 to vector<32x20xf32>
    %498 = arith.maximumf %496, %497 : vector<32x20xf32>
    %499 = arith.truncf %498 : vector<32x20xf32> to vector<32x20xbf16>
    %c4_485 = arith.constant 4 : index
    %c0_486 = arith.constant 0 : index
    %c0_487 = arith.constant 0 : index
    %500 = vector.load %arg8[%c4_485, %c0_486, %c0_487] : memref<5x32x20xbf16, #tpu.memory_space<vmem>>, vector<1x32x20xbf16>
    %501 = vector.shape_cast %500 : vector<1x32x20xbf16> to vector<32x20xbf16>
    %502 = vector.shape_cast %499 : vector<32x20xbf16> to vector<1x32x20xbf16>
    tpu.vector_store %arg8[%c4_485, %c0_486, %c0_487], %502 {strides = array<i32>} : memref<5x32x20xbf16, #tpu.memory_space<vmem>>, vector<1x32x20xbf16>,
    %c2_488 = arith.constant 2 : index
    %c0_489 = arith.constant 0 : index
    %c0_490 = arith.constant 0 : index
    %503 = vector.load %arg3[%c2_488, %c0_489, %c0_490] : memref<3x32x288xbf16, #tpu.memory_space<vmem>>, vector<1x32x288xbf16>
    %504 = vector.shape_cast %503 : vector<1x32x288xbf16> to vector<32x288xbf16>
    %c3_491 = arith.constant 3 : index
    %c0_492 = arith.constant 0 : index
    %c0_493 = arith.constant 0 : index
    %505 = vector.load %arg4[%c3_491, %c0_492, %c0_493] : memref<4x32x1xf32, #tpu.memory_space<vmem>>, vector<1x32x1xf32>
    %506 = vector.shape_cast %505 : vector<1x32x1xf32> to vector<32x1xf32>
    %507 = vector.shape_cast %506 : vector<32x1xf32> to vector<32x1xf32>
    %508 = vector.broadcast %507 : vector<32x1xf32> to vector<32x12xf32>
    %c0_494 = arith.constant 0 : index
    %c0_495 = arith.constant 0 : index
    %c0_496 = arith.constant 0 : index
    %509 = vector.load %arg8[%c0_494, %c0_495, %c0_496] : memref<5x32x20xbf16, #tpu.memory_space<vmem>>, vector<1x32x20xbf16>
    %510 = vector.shape_cast %509 : vector<1x32x20xbf16> to vector<32x20xbf16>
    %511 = vector.extract_strided_slice %510 {offsets = [0, 0], sizes = [32, 12], strides = [1, 1]} : vector<32x20xbf16> to vector<32x12xbf16>
    %c0_497 = arith.constant 0 : index
    %c0_498 = arith.constant 0 : index
    %512 = vector.load %arg9[%c0_497, %c0_498] : memref<288x28xbf16, #tpu.memory_space<vmem>>, vector<32x12xbf16>
    tpu.vector_store %arg9[%c0_497, %c0_498], %511 {strides = array<i32>} : memref<288x28xbf16, #tpu.memory_space<vmem>>, vector<32x12xbf16>,
    %513 = vector.extract_strided_slice %510 {offsets = [0, 4], sizes = [32, 12], strides = [1, 1]} : vector<32x20xbf16> to vector<32x12xbf16>
    %c32_499 = arith.constant 32 : index
    %c0_500 = arith.constant 0 : index
    %514 = vector.load %arg9[%c32_499, %c0_500] : memref<288x28xbf16, #tpu.memory_space<vmem>>, vector<32x12xbf16>
    tpu.vector_store %arg9[%c32_499, %c0_500], %513 {strides = array<i32>} : memref<288x28xbf16, #tpu.memory_space<vmem>>, vector<32x12xbf16>,
    %515 = vector.extract_strided_slice %510 {offsets = [0, 8], sizes = [32, 12], strides = [1, 1]} : vector<32x20xbf16> to vector<32x12xbf16>
    %c64_501 = arith.constant 64 : index
    %c0_502 = arith.constant 0 : index
    %516 = vector.load %arg9[%c64_501, %c0_502] : memref<288x28xbf16, #tpu.memory_space<vmem>>, vector<32x12xbf16>
    tpu.vector_store %arg9[%c64_501, %c0_502], %515 {strides = array<i32>} : memref<288x28xbf16, #tpu.memory_space<vmem>>, vector<32x12xbf16>,
    %c1_503 = arith.constant 1 : index
    %c0_504 = arith.constant 0 : index
    %c0_505 = arith.constant 0 : index
    %517 = vector.load %arg8[%c1_503, %c0_504, %c0_505] : memref<5x32x20xbf16, #tpu.memory_space<vmem>>, vector<1x32x20xbf16>
    %518 = vector.shape_cast %517 : vector<1x32x20xbf16> to vector<32x20xbf16>
    %519 = vector.extract_strided_slice %518 {offsets = [0, 0], sizes = [32, 12], strides = [1, 1]} : vector<32x20xbf16> to vector<32x12xbf16>
    %c96_506 = arith.constant 96 : index
    %c0_507 = arith.constant 0 : index
    %520 = vector.load %arg9[%c96_506, %c0_507] : memref<288x28xbf16, #tpu.memory_space<vmem>>, vector<32x12xbf16>
    tpu.vector_store %arg9[%c96_506, %c0_507], %519 {strides = array<i32>} : memref<288x28xbf16, #tpu.memory_space<vmem>>, vector<32x12xbf16>,
    %521 = vector.extract_strided_slice %518 {offsets = [0, 4], sizes = [32, 12], strides = [1, 1]} : vector<32x20xbf16> to vector<32x12xbf16>
    %c128_508 = arith.constant 128 : index
    %c0_509 = arith.constant 0 : index
    %522 = vector.load %arg9[%c128_508, %c0_509] : memref<288x28xbf16, #tpu.memory_space<vmem>>, vector<32x12xbf16>
    tpu.vector_store %arg9[%c128_508, %c0_509], %521 {strides = array<i32>} : memref<288x28xbf16, #tpu.memory_space<vmem>>, vector<32x12xbf16>,
    %523 = vector.extract_strided_slice %518 {offsets = [0, 8], sizes = [32, 12], strides = [1, 1]} : vector<32x20xbf16> to vector<32x12xbf16>
    %c160_510 = arith.constant 160 : index
    %c0_511 = arith.constant 0 : index
    %524 = vector.load %arg9[%c160_510, %c0_511] : memref<288x28xbf16, #tpu.memory_space<vmem>>, vector<32x12xbf16>
    tpu.vector_store %arg9[%c160_510, %c0_511], %523 {strides = array<i32>} : memref<288x28xbf16, #tpu.memory_space<vmem>>, vector<32x12xbf16>,
    %c2_512 = arith.constant 2 : index
    %c0_513 = arith.constant 0 : index
    %c0_514 = arith.constant 0 : index
    %525 = vector.load %arg8[%c2_512, %c0_513, %c0_514] : memref<5x32x20xbf16, #tpu.memory_space<vmem>>, vector<1x32x20xbf16>
    %526 = vector.shape_cast %525 : vector<1x32x20xbf16> to vector<32x20xbf16>
    %527 = vector.extract_strided_slice %526 {offsets = [0, 0], sizes = [32, 12], strides = [1, 1]} : vector<32x20xbf16> to vector<32x12xbf16>
    %c192_515 = arith.constant 192 : index
    %c0_516 = arith.constant 0 : index
    %528 = vector.load %arg9[%c192_515, %c0_516] : memref<288x28xbf16, #tpu.memory_space<vmem>>, vector<32x12xbf16>
    tpu.vector_store %arg9[%c192_515, %c0_516], %527 {strides = array<i32>} : memref<288x28xbf16, #tpu.memory_space<vmem>>, vector<32x12xbf16>,
    %529 = vector.extract_strided_slice %526 {offsets = [0, 4], sizes = [32, 12], strides = [1, 1]} : vector<32x20xbf16> to vector<32x12xbf16>
    %c224_517 = arith.constant 224 : index
    %c0_518 = arith.constant 0 : index
    %530 = vector.load %arg9[%c224_517, %c0_518] : memref<288x28xbf16, #tpu.memory_space<vmem>>, vector<32x12xbf16>
    tpu.vector_store %arg9[%c224_517, %c0_518], %529 {strides = array<i32>} : memref<288x28xbf16, #tpu.memory_space<vmem>>, vector<32x12xbf16>,
    %531 = vector.extract_strided_slice %526 {offsets = [0, 8], sizes = [32, 12], strides = [1, 1]} : vector<32x20xbf16> to vector<32x12xbf16>
    %c256_519 = arith.constant 256 : index
    %c0_520 = arith.constant 0 : index
    %532 = vector.load %arg9[%c256_519, %c0_520] : memref<288x28xbf16, #tpu.memory_space<vmem>>, vector<32x12xbf16>
    tpu.vector_store %arg9[%c256_519, %c0_520], %531 {strides = array<i32>} : memref<288x28xbf16, #tpu.memory_space<vmem>>, vector<32x12xbf16>,
    %c0_521 = arith.constant 0 : index
    %c0_522 = arith.constant 0 : index
    %533 = vector.load %arg9[%c0_521, %c0_522] : memref<288x28xbf16, #tpu.memory_space<vmem>>, vector<288x12xbf16>
    %cst_523 = arith.constant dense<0.000000e+00> : vector<32x12xf32>
    %534 = tpu.matmul %504, %533, %cst_523 {dimension_numbers = #tpu.dot_dimension_numbers<[1], [0], [0], [1], [0, 0, 1, 1], [], []>} : vector<32x288xbf16>, vector<288x12xbf16>, vector<32x12xf32> -> vector<32x12xf32>
    %535 = arith.addf %534, %508 : vector<32x12xf32>
    %cst_524 = arith.constant 0.000000e+00 : f32
    %536 = vector.broadcast %cst_524 : f32 to vector<32x12xf32>
    %537 = arith.maximumf %535, %536 : vector<32x12xf32>
    %c0_525 = arith.constant 0 : index
    %c0_526 = arith.constant 0 : index
    %c0_527 = arith.constant 0 : index
    %c0_528 = arith.constant 0 : index
    %538 = vector.load %arg5[%c0_525, %c0_526, %c0_527, %c0_528] : memref<1x3x32x12xf32, #tpu.memory_space<vmem>>, vector<1x1x32x12xf32>
    %539 = vector.shape_cast %538 : vector<1x1x32x12xf32> to vector<32x12xf32>
    %540 = vector.shape_cast %537 : vector<32x12xf32> to vector<1x1x32x12xf32>
    tpu.vector_store %arg5[%c0_525, %c0_526, %c0_527, %c0_528], %540 {strides = array<i32>} : memref<1x3x32x12xf32, #tpu.memory_space<vmem>>, vector<1x1x32x12xf32>,
    %c1_529 = arith.constant 1 : index
    %c0_530 = arith.constant 0 : index
    %c0_531 = arith.constant 0 : index
    %541 = vector.load %arg8[%c1_529, %c0_530, %c0_531] : memref<5x32x20xbf16, #tpu.memory_space<vmem>>, vector<1x32x20xbf16>
    %542 = vector.shape_cast %541 : vector<1x32x20xbf16> to vector<32x20xbf16>
    %543 = vector.extract_strided_slice %542 {offsets = [0, 0], sizes = [32, 12], strides = [1, 1]} : vector<32x20xbf16> to vector<32x12xbf16>
    %c0_532 = arith.constant 0 : index
    %c0_533 = arith.constant 0 : index
    %544 = vector.load %arg9[%c0_532, %c0_533] : memref<288x28xbf16, #tpu.memory_space<vmem>>, vector<32x12xbf16>
    tpu.vector_store %arg9[%c0_532, %c0_533], %543 {strides = array<i32>} : memref<288x28xbf16, #tpu.memory_space<vmem>>, vector<32x12xbf16>,
    %545 = vector.extract_strided_slice %542 {offsets = [0, 4], sizes = [32, 12], strides = [1, 1]} : vector<32x20xbf16> to vector<32x12xbf16>
    %c32_534 = arith.constant 32 : index
    %c0_535 = arith.constant 0 : index
    %546 = vector.load %arg9[%c32_534, %c0_535] : memref<288x28xbf16, #tpu.memory_space<vmem>>, vector<32x12xbf16>
    tpu.vector_store %arg9[%c32_534, %c0_535], %545 {strides = array<i32>} : memref<288x28xbf16, #tpu.memory_space<vmem>>, vector<32x12xbf16>,
    %547 = vector.extract_strided_slice %542 {offsets = [0, 8], sizes = [32, 12], strides = [1, 1]} : vector<32x20xbf16> to vector<32x12xbf16>
    %c64_536 = arith.constant 64 : index
    %c0_537 = arith.constant 0 : index
    %548 = vector.load %arg9[%c64_536, %c0_537] : memref<288x28xbf16, #tpu.memory_space<vmem>>, vector<32x12xbf16>
    tpu.vector_store %arg9[%c64_536, %c0_537], %547 {strides = array<i32>} : memref<288x28xbf16, #tpu.memory_space<vmem>>, vector<32x12xbf16>,
    %c2_538 = arith.constant 2 : index
    %c0_539 = arith.constant 0 : index
    %c0_540 = arith.constant 0 : index
    %549 = vector.load %arg8[%c2_538, %c0_539, %c0_540] : memref<5x32x20xbf16, #tpu.memory_space<vmem>>, vector<1x32x20xbf16>
    %550 = vector.shape_cast %549 : vector<1x32x20xbf16> to vector<32x20xbf16>
    %551 = vector.extract_strided_slice %550 {offsets = [0, 0], sizes = [32, 12], strides = [1, 1]} : vector<32x20xbf16> to vector<32x12xbf16>
    %c96_541 = arith.constant 96 : index
    %c0_542 = arith.constant 0 : index
    %552 = vector.load %arg9[%c96_541, %c0_542] : memref<288x28xbf16, #tpu.memory_space<vmem>>, vector<32x12xbf16>
    tpu.vector_store %arg9[%c96_541, %c0_542], %551 {strides = array<i32>} : memref<288x28xbf16, #tpu.memory_space<vmem>>, vector<32x12xbf16>,
    %553 = vector.extract_strided_slice %550 {offsets = [0, 4], sizes = [32, 12], strides = [1, 1]} : vector<32x20xbf16> to vector<32x12xbf16>
    %c128_543 = arith.constant 128 : index
    %c0_544 = arith.constant 0 : index
    %554 = vector.load %arg9[%c128_543, %c0_544] : memref<288x28xbf16, #tpu.memory_space<vmem>>, vector<32x12xbf16>
    tpu.vector_store %arg9[%c128_543, %c0_544], %553 {strides = array<i32>} : memref<288x28xbf16, #tpu.memory_space<vmem>>, vector<32x12xbf16>,
    %555 = vector.extract_strided_slice %550 {offsets = [0, 8], sizes = [32, 12], strides = [1, 1]} : vector<32x20xbf16> to vector<32x12xbf16>
    %c160_545 = arith.constant 160 : index
    %c0_546 = arith.constant 0 : index
    %556 = vector.load %arg9[%c160_545, %c0_546] : memref<288x28xbf16, #tpu.memory_space<vmem>>, vector<32x12xbf16>
    tpu.vector_store %arg9[%c160_545, %c0_546], %555 {strides = array<i32>} : memref<288x28xbf16, #tpu.memory_space<vmem>>, vector<32x12xbf16>,
    %c3_547 = arith.constant 3 : index
    %c0_548 = arith.constant 0 : index
    %c0_549 = arith.constant 0 : index
    %557 = vector.load %arg8[%c3_547, %c0_548, %c0_549] : memref<5x32x20xbf16, #tpu.memory_space<vmem>>, vector<1x32x20xbf16>
    %558 = vector.shape_cast %557 : vector<1x32x20xbf16> to vector<32x20xbf16>
    %559 = vector.extract_strided_slice %558 {offsets = [0, 0], sizes = [32, 12], strides = [1, 1]} : vector<32x20xbf16> to vector<32x12xbf16>
    %c192_550 = arith.constant 192 : index
    %c0_551 = arith.constant 0 : index
    %560 = vector.load %arg9[%c192_550, %c0_551] : memref<288x28xbf16, #tpu.memory_space<vmem>>, vector<32x12xbf16>
    tpu.vector_store %arg9[%c192_550, %c0_551], %559 {strides = array<i32>} : memref<288x28xbf16, #tpu.memory_space<vmem>>, vector<32x12xbf16>,
    %561 = vector.extract_strided_slice %558 {offsets = [0, 4], sizes = [32, 12], strides = [1, 1]} : vector<32x20xbf16> to vector<32x12xbf16>
    %c224_552 = arith.constant 224 : index
    %c0_553 = arith.constant 0 : index
    %562 = vector.load %arg9[%c224_552, %c0_553] : memref<288x28xbf16, #tpu.memory_space<vmem>>, vector<32x12xbf16>
    tpu.vector_store %arg9[%c224_552, %c0_553], %561 {strides = array<i32>} : memref<288x28xbf16, #tpu.memory_space<vmem>>, vector<32x12xbf16>,
    %563 = vector.extract_strided_slice %558 {offsets = [0, 8], sizes = [32, 12], strides = [1, 1]} : vector<32x20xbf16> to vector<32x12xbf16>
    %c256_554 = arith.constant 256 : index
    %c0_555 = arith.constant 0 : index
    %564 = vector.load %arg9[%c256_554, %c0_555] : memref<288x28xbf16, #tpu.memory_space<vmem>>, vector<32x12xbf16>
    tpu.vector_store %arg9[%c256_554, %c0_555], %563 {strides = array<i32>} : memref<288x28xbf16, #tpu.memory_space<vmem>>, vector<32x12xbf16>,
    %c0_556 = arith.constant 0 : index
    %c0_557 = arith.constant 0 : index
    %565 = vector.load %arg9[%c0_556, %c0_557] : memref<288x28xbf16, #tpu.memory_space<vmem>>, vector<288x12xbf16>
    %cst_558 = arith.constant dense<0.000000e+00> : vector<32x12xf32>
    %566 = tpu.matmul %504, %565, %cst_558 {dimension_numbers = #tpu.dot_dimension_numbers<[1], [0], [0], [1], [0, 0, 1, 1], [], []>} : vector<32x288xbf16>, vector<288x12xbf16>, vector<32x12xf32> -> vector<32x12xf32>
    %567 = arith.addf %566, %508 : vector<32x12xf32>
    %cst_559 = arith.constant 0.000000e+00 : f32
    %568 = vector.broadcast %cst_559 : f32 to vector<32x12xf32>
    %569 = arith.maximumf %567, %568 : vector<32x12xf32>
    %c0_560 = arith.constant 0 : index
    %c1_561 = arith.constant 1 : index
    %c0_562 = arith.constant 0 : index
    %c0_563 = arith.constant 0 : index
    %570 = vector.load %arg5[%c0_560, %c1_561, %c0_562, %c0_563] : memref<1x3x32x12xf32, #tpu.memory_space<vmem>>, vector<1x1x32x12xf32>
    %571 = vector.shape_cast %570 : vector<1x1x32x12xf32> to vector<32x12xf32>
    %572 = vector.shape_cast %569 : vector<32x12xf32> to vector<1x1x32x12xf32>
    tpu.vector_store %arg5[%c0_560, %c1_561, %c0_562, %c0_563], %572 {strides = array<i32>} : memref<1x3x32x12xf32, #tpu.memory_space<vmem>>, vector<1x1x32x12xf32>,
    %c2_564 = arith.constant 2 : index
    %c0_565 = arith.constant 0 : index
    %c0_566 = arith.constant 0 : index
    %573 = vector.load %arg8[%c2_564, %c0_565, %c0_566] : memref<5x32x20xbf16, #tpu.memory_space<vmem>>, vector<1x32x20xbf16>
    %574 = vector.shape_cast %573 : vector<1x32x20xbf16> to vector<32x20xbf16>
    %575 = vector.extract_strided_slice %574 {offsets = [0, 0], sizes = [32, 12], strides = [1, 1]} : vector<32x20xbf16> to vector<32x12xbf16>
    %c0_567 = arith.constant 0 : index
    %c0_568 = arith.constant 0 : index
    %576 = vector.load %arg9[%c0_567, %c0_568] : memref<288x28xbf16, #tpu.memory_space<vmem>>, vector<32x12xbf16>
    tpu.vector_store %arg9[%c0_567, %c0_568], %575 {strides = array<i32>} : memref<288x28xbf16, #tpu.memory_space<vmem>>, vector<32x12xbf16>,
    %577 = vector.extract_strided_slice %574 {offsets = [0, 4], sizes = [32, 12], strides = [1, 1]} : vector<32x20xbf16> to vector<32x12xbf16>
    %c32_569 = arith.constant 32 : index
    %c0_570 = arith.constant 0 : index
    %578 = vector.load %arg9[%c32_569, %c0_570] : memref<288x28xbf16, #tpu.memory_space<vmem>>, vector<32x12xbf16>
    tpu.vector_store %arg9[%c32_569, %c0_570], %577 {strides = array<i32>} : memref<288x28xbf16, #tpu.memory_space<vmem>>, vector<32x12xbf16>,
    %579 = vector.extract_strided_slice %574 {offsets = [0, 8], sizes = [32, 12], strides = [1, 1]} : vector<32x20xbf16> to vector<32x12xbf16>
    %c64_571 = arith.constant 64 : index
    %c0_572 = arith.constant 0 : index
    %580 = vector.load %arg9[%c64_571, %c0_572] : memref<288x28xbf16, #tpu.memory_space<vmem>>, vector<32x12xbf16>
    tpu.vector_store %arg9[%c64_571, %c0_572], %579 {strides = array<i32>} : memref<288x28xbf16, #tpu.memory_space<vmem>>, vector<32x12xbf16>,
    %c3_573 = arith.constant 3 : index
    %c0_574 = arith.constant 0 : index
    %c0_575 = arith.constant 0 : index
    %581 = vector.load %arg8[%c3_573, %c0_574, %c0_575] : memref<5x32x20xbf16, #tpu.memory_space<vmem>>, vector<1x32x20xbf16>
    %582 = vector.shape_cast %581 : vector<1x32x20xbf16> to vector<32x20xbf16>
    %583 = vector.extract_strided_slice %582 {offsets = [0, 0], sizes = [32, 12], strides = [1, 1]} : vector<32x20xbf16> to vector<32x12xbf16>
    %c96_576 = arith.constant 96 : index
    %c0_577 = arith.constant 0 : index
    %584 = vector.load %arg9[%c96_576, %c0_577] : memref<288x28xbf16, #tpu.memory_space<vmem>>, vector<32x12xbf16>
    tpu.vector_store %arg9[%c96_576, %c0_577], %583 {strides = array<i32>} : memref<288x28xbf16, #tpu.memory_space<vmem>>, vector<32x12xbf16>,
    %585 = vector.extract_strided_slice %582 {offsets = [0, 4], sizes = [32, 12], strides = [1, 1]} : vector<32x20xbf16> to vector<32x12xbf16>
    %c128_578 = arith.constant 128 : index
    %c0_579 = arith.constant 0 : index
    %586 = vector.load %arg9[%c128_578, %c0_579] : memref<288x28xbf16, #tpu.memory_space<vmem>>, vector<32x12xbf16>
    tpu.vector_store %arg9[%c128_578, %c0_579], %585 {strides = array<i32>} : memref<288x28xbf16, #tpu.memory_space<vmem>>, vector<32x12xbf16>,
    %587 = vector.extract_strided_slice %582 {offsets = [0, 8], sizes = [32, 12], strides = [1, 1]} : vector<32x20xbf16> to vector<32x12xbf16>
    %c160_580 = arith.constant 160 : index
    %c0_581 = arith.constant 0 : index
    %588 = vector.load %arg9[%c160_580, %c0_581] : memref<288x28xbf16, #tpu.memory_space<vmem>>, vector<32x12xbf16>
    tpu.vector_store %arg9[%c160_580, %c0_581], %587 {strides = array<i32>} : memref<288x28xbf16, #tpu.memory_space<vmem>>, vector<32x12xbf16>,
    %c4_582 = arith.constant 4 : index
    %c0_583 = arith.constant 0 : index
    %c0_584 = arith.constant 0 : index
    %589 = vector.load %arg8[%c4_582, %c0_583, %c0_584] : memref<5x32x20xbf16, #tpu.memory_space<vmem>>, vector<1x32x20xbf16>
    %590 = vector.shape_cast %589 : vector<1x32x20xbf16> to vector<32x20xbf16>
    %591 = vector.extract_strided_slice %590 {offsets = [0, 0], sizes = [32, 12], strides = [1, 1]} : vector<32x20xbf16> to vector<32x12xbf16>
    %c192_585 = arith.constant 192 : index
    %c0_586 = arith.constant 0 : index
    %592 = vector.load %arg9[%c192_585, %c0_586] : memref<288x28xbf16, #tpu.memory_space<vmem>>, vector<32x12xbf16>
    tpu.vector_store %arg9[%c192_585, %c0_586], %591 {strides = array<i32>} : memref<288x28xbf16, #tpu.memory_space<vmem>>, vector<32x12xbf16>,
    %593 = vector.extract_strided_slice %590 {offsets = [0, 4], sizes = [32, 12], strides = [1, 1]} : vector<32x20xbf16> to vector<32x12xbf16>
    %c224_587 = arith.constant 224 : index
    %c0_588 = arith.constant 0 : index
    %594 = vector.load %arg9[%c224_587, %c0_588] : memref<288x28xbf16, #tpu.memory_space<vmem>>, vector<32x12xbf16>
    tpu.vector_store %arg9[%c224_587, %c0_588], %593 {strides = array<i32>} : memref<288x28xbf16, #tpu.memory_space<vmem>>, vector<32x12xbf16>,
    %595 = vector.extract_strided_slice %590 {offsets = [0, 8], sizes = [32, 12], strides = [1, 1]} : vector<32x20xbf16> to vector<32x12xbf16>
    %c256_589 = arith.constant 256 : index
    %c0_590 = arith.constant 0 : index
    %596 = vector.load %arg9[%c256_589, %c0_590] : memref<288x28xbf16, #tpu.memory_space<vmem>>, vector<32x12xbf16>
    tpu.vector_store %arg9[%c256_589, %c0_590], %595 {strides = array<i32>} : memref<288x28xbf16, #tpu.memory_space<vmem>>, vector<32x12xbf16>,
    %c0_591 = arith.constant 0 : index
    %c0_592 = arith.constant 0 : index
    %597 = vector.load %arg9[%c0_591, %c0_592] : memref<288x28xbf16, #tpu.memory_space<vmem>>, vector<288x12xbf16>
    %cst_593 = arith.constant dense<0.000000e+00> : vector<32x12xf32>
    %598 = tpu.matmul %504, %597, %cst_593 {dimension_numbers = #tpu.dot_dimension_numbers<[1], [0], [0], [1], [0, 0, 1, 1], [], []>} : vector<32x288xbf16>, vector<288x12xbf16>, vector<32x12xf32> -> vector<32x12xf32>
    %599 = arith.addf %598, %508 : vector<32x12xf32>
    %cst_594 = arith.constant 0.000000e+00 : f32
    %600 = vector.broadcast %cst_594 : f32 to vector<32x12xf32>
    %601 = arith.maximumf %599, %600 : vector<32x12xf32>
    %c0_595 = arith.constant 0 : index
    %c2_596 = arith.constant 2 : index
    %c0_597 = arith.constant 0 : index
    %c0_598 = arith.constant 0 : index
    %602 = vector.load %arg5[%c0_595, %c2_596, %c0_597, %c0_598] : memref<1x3x32x12xf32, #tpu.memory_space<vmem>>, vector<1x1x32x12xf32>
    %603 = vector.shape_cast %602 : vector<1x1x32x12xf32> to vector<32x12xf32>
    %604 = vector.shape_cast %601 : vector<32x12xf32> to vector<1x1x32x12xf32>
    tpu.vector_store %arg5[%c0_595, %c2_596, %c0_597, %c0_598], %604 {strides = array<i32>} : memref<1x3x32x12xf32, #tpu.memory_space<vmem>>, vector<1x1x32x12xf32>,
    return
  }
  func.func @transform_0(%arg0: i32) -> (i32, i32, i32, i32) {
    %c0_i32 = arith.constant 0 : i32
    %c0_i32_0 = arith.constant 0 : i32
    %c0_i32_1 = arith.constant 0 : i32
    %c0_i32_2 = arith.constant 0 : i32
    return %arg0, %c0_i32, %c0_i32_0, %c0_i32_1 : i32, i32, i32, i32
  }
  func.func @transform_1(%arg0: i32) -> (i32, i32) {
    %c0_i32 = arith.constant 0 : i32
    %c0_i32_0 = arith.constant 0 : i32
    %c0_i32_1 = arith.constant 0 : i32
    return %c0_i32, %c0_i32_0 : i32, i32
  }
  func.func @transform_2(%arg0: i32) -> (i32, i32, i32) {
    %c0_i32 = arith.constant 0 : i32
    %c0_i32_0 = arith.constant 0 : i32
    %c0_i32_1 = arith.constant 0 : i32
    %c0_i32_2 = arith.constant 0 : i32
    return %c0_i32, %c0_i32_0, %c0_i32_1 : i32, i32, i32
  }
  func.func @transform_3(%arg0: i32) -> (i32, i32, i32) {
    %c0_i32 = arith.constant 0 : i32
    %c0_i32_0 = arith.constant 0 : i32
    %c0_i32_1 = arith.constant 0 : i32
    %c0_i32_2 = arith.constant 0 : i32
    return %c0_i32, %c0_i32_0, %c0_i32_1 : i32, i32, i32
  }
  func.func @transform_4(%arg0: i32) -> (i32, i32, i32, i32) {
    %c0_i32 = arith.constant 0 : i32
    %c0_i32_0 = arith.constant 0 : i32
    %c0_i32_1 = arith.constant 0 : i32
    %c0_i32_2 = arith.constant 0 : i32
    return %arg0, %c0_i32, %c0_i32_0, %c0_i32_1 : i32, i32, i32, i32
  }
}

</mosaic_0001>

<llo_original>
// kernel: encoder_forward.1
$region0: #{encoder_forward.1}
  #allocation0 [shape = 'u32[]', space=smem, size = 0x4, offset = 0x4, fixed_abs, tag = 'smem constant byte address 0x4 - core index']
  #allocation1 [shape = 'u32[72,128]{1,0:T(1,128)}', space=vmem, size = 0x9000, scoped, tag = 'internal scratch']
  #allocation2 [shape = 'bf16[9,32,36]{2,1,0:T(8,128)(2,1)}', space=vmem, size = 0x12000, scoped, tag = 'scratch operand']
  #allocation3 [shape = 'bf16[7,32,28]{2,1,0:T(8,128)(2,1)}', space=vmem, size = 0xe000, scoped, tag = 'scratch operand']
  #allocation4 [shape = 'bf16[5,32,20]{2,1,0:T(8,128)(2,1)}', space=vmem, size = 0xa000, scoped, tag = 'scratch operand']
  #allocation5 [shape = 'bf16[288,28]{1,0:T(8,128)(2,1)}', space=vmem, size = 0x12000, scoped, tag = 'scratch operand']
  %s0 = inlined_call_operand.vmem [shape: bf16[2,9,36,36], index: 0, kind: input, shape index: {}]
  %s1 = inlined_call_operand.vmem [shape: bf16[32,36], index: 1, kind: input, shape index: {}]
  %s2 = inlined_call_operand.vmem [shape: bf16[3,32,288], index: 2, kind: input, shape index: {}]
  %s3 = inlined_call_operand.vmem [shape: f32[4,32,1], index: 3, kind: input, shape index: {}]
  %s4 = inlined_call_operand.vmem [shape: f32[2,3,32,12], index: 4, kind: output, shape index: {}]
  %s5 = sld [smem:[#allocation0]]
  $region49: #{encoder_forward.1} parent=0
    _
  %s7 = ssub.s32 1, %s5
  %s8 = scalar_select 0, %s7, %s5
  loop: start=0, step=1, limit=4
  $region2: #{encoder_forward.1} parent=0 // loop_pre_header
    _
  $region3: #{encoder_forward.1} parent=0 // loop_header
    %s10 = sphi 0, %s14
    %p11 = scmp.ge.s32.totalorder %s10, 4
    %s20 = sphi 0, %s22
    %s23 = sphi 0, %s20
    %s24 = sphi 0, %s23
    %s40 = sphi 0, %s24
    %s44 = sphi 0, %s44
    %s46 = sphi 0, %s44
    %s47 = sphi 0, %s46
    %s61 = sphi 0, %s47
    %s65 = sphi 0, %s65
    %s67 = sphi 0, %s65
    %s68 = sphi 0, %s67
    %s82 = sphi 0, %s68
    %s86 = sphi 0, %s86
    %s88 = sphi 0, %s86
    %s89 = sphi 0, %s88
    %s103 = sphi 0, %s89
    %s109 = sphi 0, %s111
    %s112 = sphi 0, %s109
    %s113 = sphi 0, %s112
    %s129 = sphi 0, %s113
  $region4: #{encoder_forward.1} parent=0 // loop_header_branch
    %13 = sbr.rel (%p11) target = $region8
  $region5: #{encoder_forward.1} parent=0 // loop_body
    %s15 = ssub.s32 %s10, 1
    %s16 = ssub.s32 %s10, 2
    %s17 = sadd.s32 %s10, 1
    %s18 = ssub.s32 %s10, %s17
    %p19 = scmp.eq.s32.totalorder %s18, 0
    %s21 = sadd.s32 %s20, 1
    %s22 = scalar_select %p19, %s20, %s21
    %p25 = pneg %p19
    %p26 = scmp.eq.s32.totalorder %s10, 1
    %p27 = por %p25, %p26
    %p28 = scmp.ne.s32.totalorder %s20, %s23
    %p29 = scmp.eq.s32.totalorder %s10, 0
    %p30 = por %p28, %p29
    %p31 = scmp.ne.s32.totalorder %s20, %s23
    %p32 = scmp.eq.s32.totalorder %s15, 1
    %p33 = por %p31, %p32
    %p34 = scmp.ne.s32.totalorder %s23, %s24
    %p35 = scmp.eq.s32.totalorder %s15, 0
    %p36 = por %p34, %p35
    %p37 = scmp.ne.s32.totalorder %s23, %s24
    %p38 = scmp.eq.s32.totalorder %s16, 1
    %p39 = por %p37, %p38
    %p41 = scmp.ne.s32.totalorder %s24, %s40
    %p42 = scmp.eq.s32.totalorder %s16, 0
    %p43 = por %p41, %p42
    %s45 = sadd.s32 %s44, 1
    %p48 = scmp.eq.s32.totalorder %s10, 1
    %p49 = scmp.ne.s32.totalorder %s44, %s46
    %p50 = scmp.eq.s32.totalorder %s10, 0
    %p51 = por %p49, %p50
    %p52 = scmp.ne.s32.totalorder %s44, %s46
    %p53 = scmp.eq.s32.totalorder %s15, 1
    %p54 = por %p52, %p53
    %p55 = scmp.ne.s32.totalorder %s46, %s47
    %p56 = scmp.eq.s32.totalorder %s15, 0
    %p57 = por %p55, %p56
    %p58 = scmp.ne.s32.totalorder %s46, %s47
    %p59 = scmp.eq.s32.totalorder %s16, 1
    %p60 = por %p58, %p59
    %p62 = scmp.ne.s32.totalorder %s47, %s61
    %p63 = scmp.eq.s32.totalorder %s16, 0
    %p64 = por %p62, %p63
    %s66 = sadd.s32 %s65, 1
    %p69 = scmp.eq.s32.totalorder %s10, 1
    %p70 = scmp.ne.s32.totalorder %s65, %s67
    %p71 = scmp.eq.s32.totalorder %s10, 0
    %p72 = por %p70, %p71
    %p73 = scmp.ne.s32.totalorder %s65, %s67
    %p74 = scmp.eq.s32.totalorder %s15, 1
    %p75 = por %p73, %p74
    %p76 = scmp.ne.s32.totalorder %s67, %s68
    %p77 = scmp.eq.s32.totalorder %s15, 0
    %p78 = por %p76, %p77
    %p79 = scmp.ne.s32.totalorder %s67, %s68
    %p80 = scmp.eq.s32.totalorder %s16, 1
    %p81 = por %p79, %p80
    %p83 = scmp.ne.s32.totalorder %s68, %s82
    %p84 = scmp.eq.s32.totalorder %s16, 0
    %p85 = por %p83, %p84
    %s87 = sadd.s32 %s86, 1
    %p90 = scmp.eq.s32.totalorder %s10, 1
    %p91 = scmp.ne.s32.totalorder %s86, %s88
    %p92 = scmp.eq.s32.totalorder %s10, 0
    %p93 = por %p91, %p92
    %p94 = scmp.ne.s32.totalorder %s86, %s88
    %p95 = scmp.eq.s32.totalorder %s15, 1
    %p96 = por %p94, %p95
    %p97 = scmp.ne.s32.totalorder %s88, %s89
    %p98 = scmp.eq.s32.totalorder %s15, 0
    %p99 = por %p97, %p98
    %p100 = scmp.ne.s32.totalorder %s88, %s89
    %p101 = scmp.eq.s32.totalorder %s16, 1
    %p102 = por %p100, %p101
    %p104 = scmp.ne.s32.totalorder %s89, %s103
    %p105 = scmp.eq.s32.totalorder %s16, 0
    %p106 = por %p104, %p105
    %s107 = ssub.s32 %s10, %s17
    %p108 = scmp.eq.s32.totalorder %s107, 0
    %s110 = sadd.s32 %s109, 1
    %s111 = scalar_select %p108, %s109, %s110
    %p114 = pneg %p108
    %p115 = scmp.eq.s32.totalorder %s10, 1
    %p116 = por %p114, %p115
    %p117 = scmp.ne.s32.totalorder %s109, %s112
    %p118 = scmp.eq.s32.totalorder %s10, 0
    %p119 = por %p117, %p118
    %p120 = scmp.ne.s32.totalorder %s109, %s112
    %p121 = scmp.eq.s32.totalorder %s15, 1
    %p122 = por %p120, %p121
    %p123 = scmp.ne.s32.totalorder %s112, %s113
    %p124 = scmp.eq.s32.totalorder %s15, 0
    %p125 = por %p123, %p124
    %p126 = scmp.ne.s32.totalorder %s112, %s113
    %p127 = scmp.eq.s32.totalorder %s16, 1
    %p128 = por %p126, %p127
    %p130 = scmp.ne.s32.totalorder %s113, %s129
    %p131 = scmp.eq.s32.totalorder %s16, 0
    %p132 = por %p130, %p131
    %p133 = scmp.le.s32.totalorder 1, %s10
    %p134 = scmp.lt.s32.totalorder %s10, 3
    %p135 = pnand %p133, %p134
    %p136 = pneg %p135
    // Predicated region
    $region9: #{encoder_forward.1} parent=5 // pred_check
      _
    $region10: #{encoder_forward.1} parent=5 // pred_check_branch
      %138 = sbr.rel (%p135) target = $region12
    $region11: #{encoder_forward.1} parent=5 // pred_region
      %s139 = ssub.s32 %s10, 1
      // Predicated region
      $region13: #{encoder_forward.1} parent=11 // pred_check
        %p140 = pneg %p57
      $region14: #{encoder_forward.1} parent=11 // pred_check_branch
        %142 = sbr.rel (%p140) target = $region16
      $region15: #{encoder_forward.1} parent=11 // pred_region
        _
      $region16: #{encoder_forward.1} parent=11 // pred_fallthru
        _
      // Predicated region
      $region17: #{encoder_forward.1} parent=11 // pred_check
        %p143 = pneg %p78
      $region18: #{encoder_forward.1} parent=11 // pred_check_branch
        %145 = sbr.rel (%p143) target = $region20
      $region19: #{encoder_forward.1} parent=11 // pred_region
        _
      $region20: #{encoder_forward.1} parent=11 // pred_fallthru
        _
      // Predicated region
      $region21: #{encoder_forward.1} parent=11 // pred_check
        %p146 = pneg %p99
      $region22: #{encoder_forward.1} parent=11 // pred_check_branch
        %148 = sbr.rel (%p146) target = $region24
      $region23: #{encoder_forward.1} parent=11 // pred_region
        _
      $region24: #{encoder_forward.1} parent=11 // pred_fallthru
        _
    $region12: #{encoder_forward.1} parent=5 // pred_fallthru
      _
    %p149 = scmp.lt.s32.totalorder %s10, 2
    // Predicated region
    $region25: #{encoder_forward.1} parent=5 // pred_check
      %p150 = pneg %p149
    $region26: #{encoder_forward.1} parent=5 // pred_check_branch
      %152 = sbr.rel (%p150) target = $region28
    $region27: #{encoder_forward.1} parent=5 // pred_region
      // Predicated region
      $region29: #{encoder_forward.1} parent=27 // pred_check
        %p153 = pneg %p30
      $region30: #{encoder_forward.1} parent=27 // pred_check_branch
        %155 = sbr.rel (%p153) target = $region32
      $region31: #{encoder_forward.1} parent=27 // pred_region
        %p156 = scmp.lt.s32.totalorder %s10, 1
        %s157 = scalar_select %p156, %s10, 1
        %s158 = smul.addr %s157, 45
        %s159 = smul.addr %s158, 4
        %s160 = scalar_lea.vmem %s0, %s159
      $region32: #{encoder_forward.1} parent=27 // pred_fallthru
        _
    $region28: #{encoder_forward.1} parent=5 // pred_fallthru
      _
    %p161 = scmp.le.s32.totalorder 1, %s10
    %p162 = scmp.lt.s32.totalorder %s10, 3
    %p163 = pnand %p161, %p162
    %p164 = pneg %p163
    // Predicated region
    $region33: #{encoder_forward.1} parent=5 // pred_check
      _
    $region34: #{encoder_forward.1} parent=5 // pred_check_branch
      %166 = sbr.rel (%p163) target = $region36
    $region35: #{encoder_forward.1} parent=5 // pred_region
      %s167 = ssub.s32 %s10, 1
      %p168 = scmp.lt.s32.totalorder %s15, 1
      %s169 = scalar_select %p168, %s15, 1
      %s170 = smul.addr %s169, 45
      %s171 = smul.addr %s170, 4
      %s172 = scalar_lea.vmem %s0, %s171
      %p173 = pneg %p36
      %p174 = pneg %p33
      %p175 = pneg %p57
      %p176 = pneg %p54
      %p177 = pneg %p78
      %p178 = pneg %p75
      %p179 = pneg %p99
      %p180 = pneg %p96
      %p181 = pneg %p125
      %p182 = pneg %p122
      %p183 = scmp.lt.s32.totalorder %s15, 1
      %s184 = scalar_select %p183, %s15, 1
      %s185 = smul.addr %s184, 12
      %s186 = smul.addr %s185, 8
      %s187 = scalar_lea.vmem %s4, %s186
      %p188 = scmp.lt.s32.totalorder %s15, 1
      %s189 = scalar_select %p188, %s15, 1
      %s190 = smul.addr %s189, 45
      %s191 = smul.addr %s190, 4
      %s192 = scalar_lea.vmem %s0, %s191
      %p193 = scmp.lt.s32.totalorder %s15, 1
      %s194 = scalar_select %p193, %s15, 1
      %s195 = smul.addr %s194, 12
      %s196 = smul.addr %s195, 8
      %s197 = scalar_lea.vmem %s4, %s196
      %v199 = vld [vmem:[%s1] sm:$0xf]
      %v200 = vld [vmem:[%s1 + $0x4] sm:$0xf]
      %v201 = vld [vmem:[%s1 + $0x8] sm:$0xf]
      %v202 = vld [vmem:[%s1 + $0xc] sm:$0xf]
      %v203 = vld [vmem:[%s3] sm:$0xff]
      %v204 = vld [vmem:[%s3 + $0x8] sm:$0xff]
      %v205 = vld [vmem:[%s3 + $0x10] sm:$0xff]
      %v206 = vld [vmem:[%s3 + $0x18] sm:$0xff]
      %208 = vset.pattern.permute.xlu0 0
      %209 = vperm.xlu0 %208, %v203
      %v210 = vpop.permute.xlu0 %209
      %213 = vset.pattern.permute.xlu0 0
      %214 = vperm.xlu0 %213, %v204
      %v215 = vpop.permute.xlu0 %214
      %218 = vset.pattern.permute.xlu0 0
      %219 = vperm.xlu0 %218, %v205
      %v220 = vpop.permute.xlu0 %219
      %223 = vset.pattern.permute.xlu0 0
      %224 = vperm.xlu0 %223, %v206
      %v225 = vpop.permute.xlu0 %224
      %v227 = vld [vmem:[%s192] sm:$0xf]
      %v228 = vld [vmem:[%s192 + $0x4] sm:$0xf]
      %v229 = vld [vmem:[%s192 + $0x8] sm:$0xf]
      %v230 = vld [vmem:[%s192 + $0xc] sm:$0xf]
      %v231 = vld [vmem:[%s192 + $0x10] sm:$0x3]
      %v236 = vunpack.c.l.b16 %v199
      %v237 = vunpack.c.l.b16 %v200
      %v238 = vunpack.c.l.b16 %v201
      %v239 = vunpack.c.l.b16 %v202
      %v240 = vpack.c.b16 %v237, %v236
      %v241 = vpack.c.b16 %v239, %v238
      %v247 = vunpack.c.l.b16 %v227
      %v248 = vunpack.c.l.b16 %v228
      %v249 = vunpack.c.l.b16 %v229
      %v250 = vunpack.c.l.b16 %v230
      %v251 = vunpack.c.l.b16 %v231
      %v252 = vpack.c.b16 %v248, %v247
      %v253 = vpack.c.b16 %v250, %v249
      %v254 = vpack.c.b16 %v251, %v251
      %vm257 = vcmask 293888
      %v259 = vsel %vm257, %v240, 0
      %v262 = vsel %vm257, %v241, 0
      %vm264 = vcmask 1041408
      %v266 = vsel %vm264, %v254, 0
      %268 = vmatpush.bf16.msra.mxu0 0
      %269 = vmatpush.bf16.msra.mxu0 0
      %270 = vmatpush.bf16.msra.mxu0 0
      %271 = vmatpush.bf16.msra.mxu0 0
      %272 = vmatpush.bf16.msra.mxu0 0
      %273 = vmatpush.bf16.msra.mxu0 %v266
      %274 = vmatpush.bf16.msra.mxu0 %v253
      %275 = vmatpush.bf16.msra.mxu0 %v252
      %276 = vmatmul.bf16.gmra.mxu0 %v259
      %v277 = vpop.f32.mrf.mxu0
      %v278 = vadd.f32 %v210, %v277
      %v279 = vpop.f32.mrf.mxu0
      %v280 = vadd.f32 %v215, %v279
      %281 = vmatmul.bf16.gmra.mxu0 %v262
      %v282 = vpop.f32.mrf.mxu0
      %v283 = vadd.f32 %v220, %v282
      %v284 = vpop.f32.mrf.mxu0
      %v285 = vadd.f32 %v225, %v284
      %286 = vdwg.mxu0
      %v287 = vmax.f32 %v278, 0.0
      %v288 = vmax.f32 %v280, 0.0
      %v289 = vmax.f32 %v283, 0.0
      %v290 = vmax.f32 %v285, 0.0
      %v291 = vpack.c.bf16 %v287, %v287
      %v292 = vpack.c.bf16 %v288, %v288
      %v293 = vpack.c.bf16 %v289, %v289
      %v294 = vpack.c.bf16 %v290, %v290
      %vm295 = vcmask 289792
      %296 = vst.msk [vmem:[#allocation2] sm:$0xf] %vm295, %v291
      %297 = vst.msk [vmem:[#allocation2 + $0x4] sm:$0xf] %vm295, %v292
      %298 = vst.msk [vmem:[#allocation2 + $0x8] sm:$0xf] %vm295, %v293
      %299 = vst.msk [vmem:[#allocation2 + $0xc] sm:$0xf] %vm295, %v294
      %s300 = scalar_lea.vmem %s192, 20
      %v301 = vld [vmem:[%s300] sm:$0xf]
      %v302 = vld [vmem:[%s300 + $0x4] sm:$0xf]
      %v303 = vld [vmem:[%s300 + $0x8] sm:$0xf]
      %v304 = vld [vmem:[%s300 + $0xc] sm:$0xf]
      %v305 = vld [vmem:[%s300 + $0x10] sm:$0x3]
      %v311 = vunpack.c.l.b16 %v301
      %v312 = vunpack.c.l.b16 %v302
      %v313 = vunpack.c.l.b16 %v303
      %v314 = vunpack.c.l.b16 %v304
      %v315 = vunpack.c.l.b16 %v305
      %v316 = vpack.c.b16 %v312, %v311
      %v317 = vpack.c.b16 %v314, %v313
      %v318 = vpack.c.b16 %v315, %v315
      %v322 = vsel %vm264, %v318, 0
      %324 = vmatpush.bf16.msra.mxu0 0
      %325 = vmatpush.bf16.msra.mxu0 0
      %326 = vmatpush.bf16.msra.mxu0 0
      %327 = vmatpush.bf16.msra.mxu0 0
      %328 = vmatpush.bf16.msra.mxu0 0
      %329 = vmatpush.bf16.msra.mxu0 %v322
      %330 = vmatpush.bf16.msra.mxu0 %v317
      %331 = vmatpush.bf16.msra.mxu0 %v316
      %332 = vmatmul.bf16.gmra.mxu0 %v259
      %v333 = vpop.f32.mrf.mxu0
      %v334 = vadd.f32 %v210, %v333
      %v335 = vpop.f32.mrf.mxu0
      %v336 = vadd.f32 %v215, %v335
      %337 = vmatmul.bf16.gmra.mxu0 %v262
      %v338 = vpop.f32.mrf.mxu0
      %v339 = vadd.f32 %v220, %v338
      %v340 = vpop.f32.mrf.mxu0
      %v341 = vadd.f32 %v225, %v340
      %342 = vdwg.mxu0
      %v343 = vmax.f32 %v334, 0.0
      %v344 = vmax.f32 %v336, 0.0
      %v345 = vmax.f32 %v339, 0.0
      %v346 = vmax.f32 %v341, 0.0
      %v347 = vpack.c.bf16 %v343, %v343
      %v348 = vpack.c.bf16 %v344, %v344
      %v349 = vpack.c.bf16 %v345, %v345
      %v350 = vpack.c.bf16 %v346, %v346
      %s351 = scalar_lea.vmem [#allocation2], 16
      %352 = vst.msk [vmem:[%s351] sm:$0xf] %vm295, %v347
      %353 = vst.msk [vmem:[%s351 + $0x4] sm:$0xf] %vm295, %v348
      %354 = vst.msk [vmem:[%s351 + $0x8] sm:$0xf] %vm295, %v349
      %355 = vst.msk [vmem:[%s351 + $0xc] sm:$0xf] %vm295, %v350
      %s356 = scalar_lea.vmem %s192, 40
      %v357 = vld [vmem:[%s356] sm:$0xf]
      %v358 = vld [vmem:[%s356 + $0x4] sm:$0xf]
      %v359 = vld [vmem:[%s356 + $0x8] sm:$0xf]
      %v360 = vld [vmem:[%s356 + $0xc] sm:$0xf]
      %v361 = vld [vmem:[%s356 + $0x10] sm:$0x3]
      %v367 = vunpack.c.l.b16 %v357
      %v368 = vunpack.c.l.b16 %v358
      %v369 = vunpack.c.l.b16 %v359
      %v370 = vunpack.c.l.b16 %v360
      %v371 = vunpack.c.l.b16 %v361
      %v372 = vpack.c.b16 %v368, %v367
      %v373 = vpack.c.b16 %v370, %v369
      %v374 = vpack.c.b16 %v371, %v371
      %v378 = vsel %vm264, %v374, 0
      %380 = vmatpush.bf16.msra.mxu0 0
      %381 = vmatpush.bf16.msra.mxu0 0
      %382 = vmatpush.bf16.msra.mxu0 0
      %383 = vmatpush.bf16.msra.mxu0 0
      %384 = vmatpush.bf16.msra.mxu0 0
      %385 = vmatpush.bf16.msra.mxu0 %v378
      %386 = vmatpush.bf16.msra.mxu0 %v373
      %387 = vmatpush.bf16.msra.mxu0 %v372
      %388 = vmatmul.bf16.gmra.mxu0 %v259
      %v389 = vpop.f32.mrf.mxu0
      %v390 = vadd.f32 %v210, %v389
      %v391 = vpop.f32.mrf.mxu0
      %v392 = vadd.f32 %v215, %v391
      %393 = vmatmul.bf16.gmra.mxu0 %v262
      %v394 = vpop.f32.mrf.mxu0
      %v395 = vadd.f32 %v220, %v394
      %v396 = vpop.f32.mrf.mxu0
      %v397 = vadd.f32 %v225, %v396
      %398 = vdwg.mxu0
      %v399 = vmax.f32 %v390, 0.0
      %v400 = vmax.f32 %v392, 0.0
      %v401 = vmax.f32 %v395, 0.0
      %v402 = vmax.f32 %v397, 0.0
      %v403 = vpack.c.bf16 %v399, %v399
      %v404 = vpack.c.bf16 %v400, %v400
      %v405 = vpack.c.bf16 %v401, %v401
      %v406 = vpack.c.bf16 %v402, %v402
      %s407 = scalar_lea.vmem [#allocation2], 32
      %408 = vst.msk [vmem:[%s407] sm:$0xf] %vm295, %v403
      %409 = vst.msk [vmem:[%s407 + $0x4] sm:$0xf] %vm295, %v404
      %410 = vst.msk [vmem:[%s407 + $0x8] sm:$0xf] %vm295, %v405
      %411 = vst.msk [vmem:[%s407 + $0xc] sm:$0xf] %vm295, %v406
      %s412 = scalar_lea.vmem %s192, 60
      %v413 = vld [vmem:[%s412] sm:$0xf]
      %v414 = vld [vmem:[%s412 + $0x4] sm:$0xf]
      %v415 = vld [vmem:[%s412 + $0x8] sm:$0xf]
      %v416 = vld [vmem:[%s412 + $0xc] sm:$0xf]
      %v417 = vld [vmem:[%s412 + $0x10] sm:$0x3]
      %v423 = vunpack.c.l.b16 %v413
      %v424 = vunpack.c.l.b16 %v414
      %v425 = vunpack.c.l.b16 %v415
      %v426 = vunpack.c.l.b16 %v416
      %v427 = vunpack.c.l.b16 %v417
      %v428 = vpack.c.b16 %v424, %v423
      %v429 = vpack.c.b16 %v426, %v425
      %v430 = vpack.c.b16 %v427, %v427
      %v434 = vsel %vm264, %v430, 0
      %436 = vmatpush.bf16.msra.mxu0 0
      %437 = vmatpush.bf16.msra.mxu0 0
      %438 = vmatpush.bf16.msra.mxu0 0
      %439 = vmatpush.bf16.msra.mxu0 0
      %440 = vmatpush.bf16.msra.mxu0 0
      %441 = vmatpush.bf16.msra.mxu0 %v434
      %442 = vmatpush.bf16.msra.mxu0 %v429
      %443 = vmatpush.bf16.msra.mxu0 %v428
      %444 = vmatmul.bf16.gmra.mxu0 %v259
      %v445 = vpop.f32.mrf.mxu0
      %v446 = vadd.f32 %v210, %v445
      %v447 = vpop.f32.mrf.mxu0
      %v448 = vadd.f32 %v215, %v447
      %449 = vmatmul.bf16.gmra.mxu0 %v262
      %v450 = vpop.f32.mrf.mxu0
      %v451 = vadd.f32 %v220, %v450
      %v452 = vpop.f32.mrf.mxu0
      %v453 = vadd.f32 %v225, %v452
      %454 = vdwg.mxu0
      %v455 = vmax.f32 %v446, 0.0
      %v456 = vmax.f32 %v448, 0.0
      %v457 = vmax.f32 %v451, 0.0
      %v458 = vmax.f32 %v453, 0.0
      %v459 = vpack.c.bf16 %v455, %v455
      %v460 = vpack.c.bf16 %v456, %v456
      %v461 = vpack.c.bf16 %v457, %v457
      %v462 = vpack.c.bf16 %v458, %v458
      %s463 = scalar_lea.vmem [#allocation2], 48
      %464 = vst.msk [vmem:[%s463] sm:$0xf] %vm295, %v459
      %465 = vst.msk [vmem:[%s463 + $0x4] sm:$0xf] %vm295, %v460
      %466 = vst.msk [vmem:[%s463 + $0x8] sm:$0xf] %vm295, %v461
      %467 = vst.msk [vmem:[%s463 + $0xc] sm:$0xf] %vm295, %v462
      %s468 = scalar_lea.vmem %s192, 80
      %v469 = vld [vmem:[%s468] sm:$0xf]
      %v470 = vld [vmem:[%s468 + $0x4] sm:$0xf]
      %v471 = vld [vmem:[%s468 + $0x8] sm:$0xf]
      %v472 = vld [vmem:[%s468 + $0xc] sm:$0xf]
      %v473 = vld [vmem:[%s468 + $0x10] sm:$0x3]
      %v479 = vunpack.c.l.b16 %v469
      %v480 = vunpack.c.l.b16 %v470
      %v481 = vunpack.c.l.b16 %v471
      %v482 = vunpack.c.l.b16 %v472
      %v483 = vunpack.c.l.b16 %v473
      %v484 = vpack.c.b16 %v480, %v479
      %v485 = vpack.c.b16 %v482, %v481
      %v486 = vpack.c.b16 %v483, %v483
      %v490 = vsel %vm264, %v486, 0
      %492 = vmatpush.bf16.msra.mxu0 0
      %493 = vmatpush.bf16.msra.mxu0 0
      %494 = vmatpush.bf16.msra.mxu0 0
      %495 = vmatpush.bf16.msra.mxu0 0
      %496 = vmatpush.bf16.msra.mxu0 0
      %497 = vmatpush.bf16.msra.mxu0 %v490
      %498 = vmatpush.bf16.msra.mxu0 %v485
      %499 = vmatpush.bf16.msra.mxu0 %v484
      %500 = vmatmul.bf16.gmra.mxu0 %v259
      %v501 = vpop.f32.mrf.mxu0
      %v502 = vadd.f32 %v210, %v501
      %v503 = vpop.f32.mrf.mxu0
      %v504 = vadd.f32 %v215, %v503
      %505 = vmatmul.bf16.gmra.mxu0 %v262
      %v506 = vpop.f32.mrf.mxu0
      %v507 = vadd.f32 %v220, %v506
      %v508 = vpop.f32.mrf.mxu0
      %v509 = vadd.f32 %v225, %v508
      %510 = vdwg.mxu0
      %v511 = vmax.f32 %v502, 0.0
      %v512 = vmax.f32 %v504, 0.0
      %v513 = vmax.f32 %v507, 0.0
      %v514 = vmax.f32 %v509, 0.0
      %v515 = vpack.c.bf16 %v511, %v511
      %v516 = vpack.c.bf16 %v512, %v512
      %v517 = vpack.c.bf16 %v513, %v513
      %v518 = vpack.c.bf16 %v514, %v514
      %s519 = scalar_lea.vmem [#allocation2], 64
      %520 = vst.msk [vmem:[%s519] sm:$0xf] %vm295, %v515
      %521 = vst.msk [vmem:[%s519 + $0x4] sm:$0xf] %vm295, %v516
      %522 = vst.msk [vmem:[%s519 + $0x8] sm:$0xf] %vm295, %v517
      %523 = vst.msk [vmem:[%s519 + $0xc] sm:$0xf] %vm295, %v518
      %s524 = scalar_lea.vmem %s192, 100
      %v525 = vld [vmem:[%s524] sm:$0xf]
      %v526 = vld [vmem:[%s524 + $0x4] sm:$0xf]
      %v527 = vld [vmem:[%s524 + $0x8] sm:$0xf]
      %v528 = vld [vmem:[%s524 + $0xc] sm:$0xf]
      %v529 = vld [vmem:[%s524 + $0x10] sm:$0x3]
      %v535 = vunpack.c.l.b16 %v525
      %v536 = vunpack.c.l.b16 %v526
      %v537 = vunpack.c.l.b16 %v527
      %v538 = vunpack.c.l.b16 %v528
      %v539 = vunpack.c.l.b16 %v529
      %v540 = vpack.c.b16 %v536, %v535
      %v541 = vpack.c.b16 %v538, %v537
      %v542 = vpack.c.b16 %v539, %v539
      %v546 = vsel %vm264, %v542, 0
      %548 = vmatpush.bf16.msra.mxu0 0
      %549 = vmatpush.bf16.msra.mxu0 0
      %550 = vmatpush.bf16.msra.mxu0 0
      %551 = vmatpush.bf16.msra.mxu0 0
      %552 = vmatpush.bf16.msra.mxu0 0
      %553 = vmatpush.bf16.msra.mxu0 %v546
      %554 = vmatpush.bf16.msra.mxu0 %v541
      %555 = vmatpush.bf16.msra.mxu0 %v540
      %556 = vmatmul.bf16.gmra.mxu0 %v259
      %v557 = vpop.f32.mrf.mxu0
      %v558 = vadd.f32 %v210, %v557
      %v559 = vpop.f32.mrf.mxu0
      %v560 = vadd.f32 %v215, %v559
      %561 = vmatmul.bf16.gmra.mxu0 %v262
      %v562 = vpop.f32.mrf.mxu0
      %v563 = vadd.f32 %v220, %v562
      %v564 = vpop.f32.mrf.mxu0
      %v565 = vadd.f32 %v225, %v564
      %566 = vdwg.mxu0
      %v567 = vmax.f32 %v558, 0.0
      %v568 = vmax.f32 %v560, 0.0
      %v569 = vmax.f32 %v563, 0.0
      %v570 = vmax.f32 %v565, 0.0
      %v571 = vpack.c.bf16 %v567, %v567
      %v572 = vpack.c.bf16 %v568, %v568
      %v573 = vpack.c.bf16 %v569, %v569
      %v574 = vpack.c.bf16 %v570, %v570
      %s575 = scalar_lea.vmem [#allocation2], 80
      %576 = vst.msk [vmem:[%s575] sm:$0xf] %vm295, %v571
      %577 = vst.msk [vmem:[%s575 + $0x4] sm:$0xf] %vm295, %v572
      %578 = vst.msk [vmem:[%s575 + $0x8] sm:$0xf] %vm295, %v573
      %579 = vst.msk [vmem:[%s575 + $0xc] sm:$0xf] %vm295, %v574
      %s580 = scalar_lea.vmem %s192, 120
      %v581 = vld [vmem:[%s580] sm:$0xf]
      %v582 = vld [vmem:[%s580 + $0x4] sm:$0xf]
      %v583 = vld [vmem:[%s580 + $0x8] sm:$0xf]
      %v584 = vld [vmem:[%s580 + $0xc] sm:$0xf]
      %v585 = vld [vmem:[%s580 + $0x10] sm:$0x3]
      %v591 = vunpack.c.l.b16 %v581
      %v592 = vunpack.c.l.b16 %v582
      %v593 = vunpack.c.l.b16 %v583
      %v594 = vunpack.c.l.b16 %v584
      %v595 = vunpack.c.l.b16 %v585
      %v596 = vpack.c.b16 %v592, %v591
      %v597 = vpack.c.b16 %v594, %v593
      %v598 = vpack.c.b16 %v595, %v595
      %v602 = vsel %vm264, %v598, 0
      %604 = vmatpush.bf16.msra.mxu0 0
      %605 = vmatpush.bf16.msra.mxu0 0
      %606 = vmatpush.bf16.msra.mxu0 0
      %607 = vmatpush.bf16.msra.mxu0 0
      %608 = vmatpush.bf16.msra.mxu0 0
      %609 = vmatpush.bf16.msra.mxu0 %v602
      %610 = vmatpush.bf16.msra.mxu0 %v597
      %611 = vmatpush.bf16.msra.mxu0 %v596
      %612 = vmatmul.bf16.gmra.mxu0 %v259
      %v613 = vpop.f32.mrf.mxu0
      %v614 = vadd.f32 %v210, %v613
      %v615 = vpop.f32.mrf.mxu0
      %v616 = vadd.f32 %v215, %v615
      %617 = vmatmul.bf16.gmra.mxu0 %v262
      %v618 = vpop.f32.mrf.mxu0
      %v619 = vadd.f32 %v220, %v618
      %v620 = vpop.f32.mrf.mxu0
      %v621 = vadd.f32 %v225, %v620
      %622 = vdwg.mxu0
      %v623 = vmax.f32 %v614, 0.0
      %v624 = vmax.f32 %v616, 0.0
      %v625 = vmax.f32 %v619, 0.0
      %v626 = vmax.f32 %v621, 0.0
      %v627 = vpack.c.bf16 %v623, %v623
      %v628 = vpack.c.bf16 %v624, %v624
      %v629 = vpack.c.bf16 %v625, %v625
      %v630 = vpack.c.bf16 %v626, %v626
      %s631 = scalar_lea.vmem [#allocation2], 96
      %632 = vst.msk [vmem:[%s631] sm:$0xf] %vm295, %v627
      %633 = vst.msk [vmem:[%s631 + $0x4] sm:$0xf] %vm295, %v628
      %634 = vst.msk [vmem:[%s631 + $0x8] sm:$0xf] %vm295, %v629
      %635 = vst.msk [vmem:[%s631 + $0xc] sm:$0xf] %vm295, %v630
      %s636 = scalar_lea.vmem %s192, 140
      %v637 = vld [vmem:[%s636] sm:$0xf]
      %v638 = vld [vmem:[%s636 + $0x4] sm:$0xf]
      %v639 = vld [vmem:[%s636 + $0x8] sm:$0xf]
      %v640 = vld [vmem:[%s636 + $0xc] sm:$0xf]
      %v641 = vld [vmem:[%s636 + $0x10] sm:$0x3]
      %v647 = vunpack.c.l.b16 %v637
      %v648 = vunpack.c.l.b16 %v638
      %v649 = vunpack.c.l.b16 %v639
      %v650 = vunpack.c.l.b16 %v640
      %v651 = vunpack.c.l.b16 %v641
      %v652 = vpack.c.b16 %v648, %v647
      %v653 = vpack.c.b16 %v650, %v649
      %v654 = vpack.c.b16 %v651, %v651
      %v658 = vsel %vm264, %v654, 0
      %660 = vmatpush.bf16.msra.mxu0 0
      %661 = vmatpush.bf16.msra.mxu0 0
      %662 = vmatpush.bf16.msra.mxu0 0
      %663 = vmatpush.bf16.msra.mxu0 0
      %664 = vmatpush.bf16.msra.mxu0 0
      %665 = vmatpush.bf16.msra.mxu0 %v658
      %666 = vmatpush.bf16.msra.mxu0 %v653
      %667 = vmatpush.bf16.msra.mxu0 %v652
      %668 = vmatmul.bf16.gmra.mxu0 %v259
      %v669 = vpop.f32.mrf.mxu0
      %v670 = vadd.f32 %v210, %v669
      %v671 = vpop.f32.mrf.mxu0
      %v672 = vadd.f32 %v215, %v671
      %673 = vmatmul.bf16.gmra.mxu0 %v262
      %v674 = vpop.f32.mrf.mxu0
      %v675 = vadd.f32 %v220, %v674
      %v676 = vpop.f32.mrf.mxu0
      %v677 = vadd.f32 %v225, %v676
      %678 = vdwg.mxu0
      %v679 = vmax.f32 %v670, 0.0
      %v680 = vmax.f32 %v672, 0.0
      %v681 = vmax.f32 %v675, 0.0
      %v682 = vmax.f32 %v677, 0.0
      %v683 = vpack.c.bf16 %v679, %v679
      %v684 = vpack.c.bf16 %v680, %v680
      %v685 = vpack.c.bf16 %v681, %v681
      %v686 = vpack.c.bf16 %v682, %v682
      %s687 = scalar_lea.vmem [#allocation2], 112
      %688 = vst.msk [vmem:[%s687] sm:$0xf] %vm295, %v683
      %689 = vst.msk [vmem:[%s687 + $0x4] sm:$0xf] %vm295, %v684
      %690 = vst.msk [vmem:[%s687 + $0x8] sm:$0xf] %vm295, %v685
      %691 = vst.msk [vmem:[%s687 + $0xc] sm:$0xf] %vm295, %v686
      %s692 = scalar_lea.vmem %s192, 160
      %v693 = vld [vmem:[%s692] sm:$0xf]
      %v694 = vld [vmem:[%s692 + $0x4] sm:$0xf]
      %v695 = vld [vmem:[%s692 + $0x8] sm:$0xf]
      %v696 = vld [vmem:[%s692 + $0xc] sm:$0xf]
      %v697 = vld [vmem:[%s692 + $0x10] sm:$0x3]
      %v703 = vunpack.c.l.b16 %v693
      %v704 = vunpack.c.l.b16 %v694
      %v705 = vunpack.c.l.b16 %v695
      %v706 = vunpack.c.l.b16 %v696
      %v707 = vunpack.c.l.b16 %v697
      %v708 = vpack.c.b16 %v704, %v703
      %v709 = vpack.c.b16 %v706, %v705
      %v710 = vpack.c.b16 %v707, %v707
      %v714 = vsel %vm264, %v710, 0
      %716 = vmatpush.bf16.msra.mxu0 0
      %717 = vmatpush.bf16.msra.mxu0 0
      %718 = vmatpush.bf16.msra.mxu0 0
      %719 = vmatpush.bf16.msra.mxu0 0
      %720 = vmatpush.bf16.msra.mxu0 0
      %721 = vmatpush.bf16.msra.mxu0 %v714
      %722 = vmatpush.bf16.msra.mxu0 %v709
      %723 = vmatpush.bf16.msra.mxu0 %v708
      %724 = vmatmul.bf16.gmra.mxu0 %v259
      %v725 = vpop.f32.mrf.mxu0
      %v726 = vadd.f32 %v210, %v725
      %v727 = vpop.f32.mrf.mxu0
      %v728 = vadd.f32 %v215, %v727
      %729 = vmatmul.bf16.gmra.mxu0 %v262
      %v730 = vpop.f32.mrf.mxu0
      %v731 = vadd.f32 %v220, %v730
      %v732 = vpop.f32.mrf.mxu0
      %v733 = vadd.f32 %v225, %v732
      %734 = vdwg.mxu0
      %v735 = vmax.f32 %v726, 0.0
      %v736 = vmax.f32 %v728, 0.0
      %v737 = vmax.f32 %v731, 0.0
      %v738 = vmax.f32 %v733, 0.0
      %v739 = vpack.c.bf16 %v735, %v735
      %v740 = vpack.c.bf16 %v736, %v736
      %v741 = vpack.c.bf16 %v737, %v737
      %v742 = vpack.c.bf16 %v738, %v738
      %s743 = scalar_lea.vmem [#allocation2], 128
      %744 = vst.msk [vmem:[%s743] sm:$0xf] %vm295, %v739
      %745 = vst.msk [vmem:[%s743 + $0x4] sm:$0xf] %vm295, %v740
      %746 = vst.msk [vmem:[%s743 + $0x8] sm:$0xf] %vm295, %v741
      %747 = vst.msk [vmem:[%s743 + $0xc] sm:$0xf] %vm295, %v742
      %v748 = vld [vmem:[%s2] sm:$0xff]
      %v749 = vld [vmem:[%s2 + $0x8] sm:$0xf]
      %v750 = vld [vmem:[%s2 + $0xc] sm:$0xff]
      %v751 = vld [vmem:[%s2 + $0x14] sm:$0xf]
      %v752 = vld [vmem:[%s2 + $0x18] sm:$0xff]
      %v753 = vld [vmem:[%s2 + $0x20] sm:$0xf]
      %v754 = vld [vmem:[%s2 + $0x24] sm:$0xff]
      %v755 = vld [vmem:[%s2 + $0x2c] sm:$0xf]
      %s756 = scalar_lea.vmem %s3, 32
      %v757 = vld [vmem:[%s756] sm:$0xff]
      %v758 = vld [vmem:[%s756 + $0x8] sm:$0xff]
      %v759 = vld [vmem:[%s756 + $0x10] sm:$0xff]
      %v760 = vld [vmem:[%s756 + $0x18] sm:$0xff]
      %762 = vset.pattern.permute.xlu0 0
      %763 = vperm.xlu0 %762, %v757
      %v764 = vpop.permute.xlu0 %763
      %767 = vset.pattern.permute.xlu0 0
      %768 = vperm.xlu0 %767, %v758
      %v769 = vpop.permute.xlu0 %768
      %772 = vset.pattern.permute.xlu0 0
      %773 = vperm.xlu0 %772, %v759
      %v774 = vpop.permute.xlu0 %773
      %777 = vset.pattern.permute.xlu0 0
      %778 = vperm.xlu0 %777, %v760
      %v779 = vpop.permute.xlu0 %778
      %v781 = vld [vmem:[#allocation2] sm:$0xf]
      %v782 = vld [vmem:[#allocation2 + $0x4] sm:$0xf]
      %v783 = vld [vmem:[#allocation2 + $0x8] sm:$0xf]
      %v784 = vld [vmem:[#allocation2 + $0xc] sm:$0xf]
      %vm785 = vcmask 224256
      %786 = vst.msk [vmem:[#allocation5] sm:$0xf] %vm785, %v781
      %787 = vst.msk [vmem:[#allocation5 + $0x4] sm:$0xf] %vm785, %v782
      %788 = vst.msk [vmem:[#allocation5 + $0x8] sm:$0xf] %vm785, %v783
      %789 = vst.msk [vmem:[#allocation5 + $0xc] sm:$0xf] %vm785, %v784
      %794 = vrot.lane.b32.xlu0 %v781, 124
      %v795 = vpop.permute.xlu0 %794
      %796 = vrot.lane.b32.xlu0 %v782, 124
      %v797 = vpop.permute.xlu0 %796
      %798 = vrot.lane.b32.xlu0 %v783, 124
      %v799 = vpop.permute.xlu0 %798
      %800 = vrot.lane.b32.xlu0 %v784, 124
      %v801 = vpop.permute.xlu0 %800
      %806 = vst.msk [vmem:[#allocation5 + $0x10] sm:$0xf] %vm785, %v795
      %807 = vst.msk [vmem:[#allocation5 + $0x14] sm:$0xf] %vm785, %v797
      %808 = vst.msk [vmem:[#allocation5 + $0x18] sm:$0xf] %vm785, %v799
      %809 = vst.msk [vmem:[#allocation5 + $0x1c] sm:$0xf] %vm785, %v801
      %810 = vrot.lane.b32.xlu0 %v781, 120
      %v811 = vpop.permute.xlu0 %810
      %812 = vrot.lane.b32.xlu0 %v782, 120
      %v813 = vpop.permute.xlu0 %812
      %814 = vrot.lane.b32.xlu0 %v783, 120
      %v815 = vpop.permute.xlu0 %814
      %816 = vrot.lane.b32.xlu0 %v784, 120
      %v817 = vpop.permute.xlu0 %816
      %822 = vst.msk [vmem:[#allocation5 + $0x20] sm:$0xf] %vm785, %v811
      %823 = vst.msk [vmem:[#allocation5 + $0x24] sm:$0xf] %vm785, %v813
      %824 = vst.msk [vmem:[#allocation5 + $0x28] sm:$0xf] %vm785, %v815
      %825 = vst.msk [vmem:[#allocation5 + $0x2c] sm:$0xf] %vm785, %v817
      %v826 = vld [vmem:[%s351] sm:$0xf]
      %v827 = vld [vmem:[%s351 + $0x4] sm:$0xf]
      %v828 = vld [vmem:[%s351 + $0x8] sm:$0xf]
      %v829 = vld [vmem:[%s351 + $0xc] sm:$0xf]
      %830 = vst.msk [vmem:[#allocation5 + $0x30] sm:$0xf] %vm785, %v826
      %831 = vst.msk [vmem:[#allocation5 + $0x34] sm:$0xf] %vm785, %v827
      %832 = vst.msk [vmem:[#allocation5 + $0x38] sm:$0xf] %vm785, %v828
      %833 = vst.msk [vmem:[#allocation5 + $0x3c] sm:$0xf] %vm785, %v829
      %838 = vrot.lane.b32.xlu0 %v826, 124
      %v839 = vpop.permute.xlu0 %838
      %840 = vrot.lane.b32.xlu0 %v827, 124
      %v841 = vpop.permute.xlu0 %840
      %842 = vrot.lane.b32.xlu0 %v828, 124
      %v843 = vpop.permute.xlu0 %842
      %844 = vrot.lane.b32.xlu0 %v829, 124
      %v845 = vpop.permute.xlu0 %844
      %850 = vst.msk [vmem:[#allocation5 + $0x40] sm:$0xf] %vm785, %v839
      %851 = vst.msk [vmem:[#allocation5 + $0x44] sm:$0xf] %vm785, %v841
      %852 = vst.msk [vmem:[#allocation5 + $0x48] sm:$0xf] %vm785, %v843
      %853 = vst.msk [vmem:[#allocation5 + $0x4c] sm:$0xf] %vm785, %v845
      %854 = vrot.lane.b32.xlu0 %v826, 120
      %v855 = vpop.permute.xlu0 %854
      %856 = vrot.lane.b32.xlu0 %v827, 120
      %v857 = vpop.permute.xlu0 %856
      %858 = vrot.lane.b32.xlu0 %v828, 120
      %v859 = vpop.permute.xlu0 %858
      %860 = vrot.lane.b32.xlu0 %v829, 120
      %v861 = vpop.permute.xlu0 %860
      %866 = vst.msk [vmem:[#allocation5 + $0x50] sm:$0xf] %vm785, %v855
      %867 = vst.msk [vmem:[#allocation5 + $0x54] sm:$0xf] %vm785, %v857
      %868 = vst.msk [vmem:[#allocation5 + $0x58] sm:$0xf] %vm785, %v859
      %869 = vst.msk [vmem:[#allocation5 + $0x5c] sm:$0xf] %vm785, %v861
      %v870 = vld [vmem:[%s407] sm:$0xf]
      %v871 = vld [vmem:[%s407 + $0x4] sm:$0xf]
      %v872 = vld [vmem:[%s407 + $0x8] sm:$0xf]
      %v873 = vld [vmem:[%s407 + $0xc] sm:$0xf]
      %874 = vst.msk [vmem:[#allocation5 + $0x60] sm:$0xf] %vm785, %v870
      %875 = vst.msk [vmem:[#allocation5 + $0x64] sm:$0xf] %vm785, %v871
      %876 = vst.msk [vmem:[#allocation5 + $0x68] sm:$0xf] %vm785, %v872
      %877 = vst.msk [vmem:[#allocation5 + $0x6c] sm:$0xf] %vm785, %v873
      %882 = vrot.lane.b32.xlu0 %v870, 124
      %v883 = vpop.permute.xlu0 %882
      %884 = vrot.lane.b32.xlu0 %v871, 124
      %v885 = vpop.permute.xlu0 %884
      %886 = vrot.lane.b32.xlu0 %v872, 124
      %v887 = vpop.permute.xlu0 %886
      %888 = vrot.lane.b32.xlu0 %v873, 124
      %v889 = vpop.permute.xlu0 %888
      %894 = vst.msk [vmem:[#allocation5 + $0x70] sm:$0xf] %vm785, %v883
      %895 = vst.msk [vmem:[#allocation5 + $0x74] sm:$0xf] %vm785, %v885
      %896 = vst.msk [vmem:[#allocation5 + $0x78] sm:$0xf] %vm785, %v887
      %897 = vst.msk [vmem:[#allocation5 + $0x7c] sm:$0xf] %vm785, %v889
      %898 = vrot.lane.b32.xlu0 %v870, 120
      %v899 = vpop.permute.xlu0 %898
      %900 = vrot.lane.b32.xlu0 %v871, 120
      %v901 = vpop.permute.xlu0 %900
      %902 = vrot.lane.b32.xlu0 %v872, 120
      %v903 = vpop.permute.xlu0 %902
      %904 = vrot.lane.b32.xlu0 %v873, 120
      %v905 = vpop.permute.xlu0 %904
      %910 = vst.msk [vmem:[#allocation5 + $0x80] sm:$0xf] %vm785, %v899
      %911 = vst.msk [vmem:[#allocation5 + $0x84] sm:$0xf] %vm785, %v901
      %912 = vst.msk [vmem:[#allocation5 + $0x88] sm:$0xf] %vm785, %v903
      %913 = vst.msk [vmem:[#allocation5 + $0x8c] sm:$0xf] %vm785, %v905
      %v914 = vld [vmem:[#allocation5] sm:$0xf]
      %v915 = vld [vmem:[#allocation5 + $0x4] sm:$0xf]
      %v916 = vld [vmem:[#allocation5 + $0x8] sm:$0xf]
      %v917 = vld [vmem:[#allocation5 + $0xc] sm:$0xf]
      %v918 = vld [vmem:[#allocation5 + $0x10] sm:$0xf]
      %v919 = vld [vmem:[#allocation5 + $0x14] sm:$0xf]
      %v920 = vld [vmem:[#allocation5 + $0x18] sm:$0xf]
      %v921 = vld [vmem:[#allocation5 + $0x1c] sm:$0xf]
      %v922 = vld [vmem:[#allocation5 + $0x20] sm:$0xf]
      %v923 = vld [vmem:[#allocation5 + $0x24] sm:$0xf]
      %v924 = vld [vmem:[#allocation5 + $0x28] sm:$0xf]
      %v925 = vld [vmem:[#allocation5 + $0x2c] sm:$0xf]
      %v926 = vld [vmem:[#allocation5 + $0x30] sm:$0xf]
      %v927 = vld [vmem:[#allocation5 + $0x34] sm:$0xf]
      %v928 = vld [vmem:[#allocation5 + $0x38] sm:$0xf]
      %v929 = vld [vmem:[#allocation5 + $0x3c] sm:$0xf]
      %v930 = vld [vmem:[#allocation5 + $0x40] sm:$0xf]
      %v931 = vld [vmem:[#allocation5 + $0x44] sm:$0xf]
      %v932 = vld [vmem:[#allocation5 + $0x48] sm:$0xf]
      %v933 = vld [vmem:[#allocation5 + $0x4c] sm:$0xf]
      %v934 = vld [vmem:[#allocation5 + $0x50] sm:$0xf]
      %v935 = vld [vmem:[#allocation5 + $0x54] sm:$0xf]
      %v936 = vld [vmem:[#allocation5 + $0x58] sm:$0xf]
      %v937 = vld [vmem:[#allocation5 + $0x5c] sm:$0xf]
      %v938 = vld [vmem:[#allocation5 + $0x60] sm:$0xf]
      %v939 = vld [vmem:[#allocation5 + $0x64] sm:$0xf]
      %v940 = vld [vmem:[#allocation5 + $0x68] sm:$0xf]
      %v941 = vld [vmem:[#allocation5 + $0x6c] sm:$0xf]
      %v942 = vld [vmem:[#allocation5 + $0x70] sm:$0xf]
      %v943 = vld [vmem:[#allocation5 + $0x74] sm:$0xf]
      %v944 = vld [vmem:[#allocation5 + $0x78] sm:$0xf]
      %v945 = vld [vmem:[#allocation5 + $0x7c] sm:$0xf]
      %v946 = vld [vmem:[#allocation5 + $0x80] sm:$0xf]
      %v947 = vld [vmem:[#allocation5 + $0x84] sm:$0xf]
      %v948 = vld [vmem:[#allocation5 + $0x88] sm:$0xf]
      %v949 = vld [vmem:[#allocation5 + $0x8c] sm:$0xf]
      %v958 = vunpack.c.l.b16 %v748
      %v959 = vunpack.c.h.b16 %v748
      %v960 = vunpack.c.l.b16 %v749
      %v961 = vunpack.c.l.b16 %v750
      %v962 = vunpack.c.h.b16 %v750
      %v963 = vunpack.c.l.b16 %v751
      %v964 = vunpack.c.l.b16 %v752
      %v965 = vunpack.c.h.b16 %v752
      %v966 = vunpack.c.l.b16 %v753
      %v967 = vunpack.c.l.b16 %v754
      %v968 = vunpack.c.h.b16 %v754
      %v969 = vunpack.c.l.b16 %v755
      %v970 = vpack.c.b16 %v961, %v958
      %v971 = vpack.c.b16 %v962, %v959
      %v972 = vpack.c.b16 %v963, %v960
      %v973 = vpack.c.b16 %v967, %v964
      %v974 = vpack.c.b16 %v968, %v965
      %v975 = vpack.c.b16 %v969, %v966
      %v1016 = vunpack.c.l.b16 %v914
      %v1017 = vunpack.c.l.b16 %v915
      %v1018 = vunpack.c.l.b16 %v916
      %v1019 = vunpack.c.l.b16 %v917
      %v1020 = vunpack.c.l.b16 %v918
      %v1021 = vunpack.c.l.b16 %v919
      %v1022 = vunpack.c.l.b16 %v920
      %v1023 = vunpack.c.l.b16 %v921
      %v1024 = vunpack.c.l.b16 %v922
      %v1025 = vunpack.c.l.b16 %v923
      %v1026 = vunpack.c.l.b16 %v924
      %v1027 = vunpack.c.l.b16 %v925
      %v1028 = vunpack.c.l.b16 %v926
      %v1029 = vunpack.c.l.b16 %v927
      %v1030 = vunpack.c.l.b16 %v928
      %v1031 = vunpack.c.l.b16 %v929
      %v1032 = vunpack.c.l.b16 %v930
      %v1033 = vunpack.c.l.b16 %v931
      %v1034 = vunpack.c.l.b16 %v932
      %v1035 = vunpack.c.l.b16 %v933
      %v1036 = vunpack.c.l.b16 %v934
      %v1037 = vunpack.c.l.b16 %v935
      %v1038 = vunpack.c.l.b16 %v936
      %v1039 = vunpack.c.l.b16 %v937
      %v1040 = vunpack.c.l.b16 %v938
      %v1041 = vunpack.c.l.b16 %v939
      %v1042 = vunpack.c.l.b16 %v940
      %v1043 = vunpack.c.l.b16 %v941
      %v1044 = vunpack.c.l.b16 %v942
      %v1045 = vunpack.c.l.b16 %v943
      %v1046 = vunpack.c.l.b16 %v944
      %v1047 = vunpack.c.l.b16 %v945
      %v1048 = vunpack.c.l.b16 %v946
      %v1049 = vunpack.c.l.b16 %v947
      %v1050 = vunpack.c.l.b16 %v948
      %v1051 = vunpack.c.l.b16 %v949
      %v1052 = vpack.c.b16 %v1017, %v1016
      %v1053 = vpack.c.b16 %v1019, %v1018
      %v1054 = vpack.c.b16 %v1021, %v1020
      %v1055 = vpack.c.b16 %v1023, %v1022
      %v1056 = vpack.c.b16 %v1025, %v1024
      %v1057 = vpack.c.b16 %v1027, %v1026
      %v1058 = vpack.c.b16 %v1029, %v1028
      %v1059 = vpack.c.b16 %v1031, %v1030
      %v1060 = vpack.c.b16 %v1033, %v1032
      %v1061 = vpack.c.b16 %v1035, %v1034
      %v1062 = vpack.c.b16 %v1037, %v1036
      %v1063 = vpack.c.b16 %v1039, %v1038
      %v1064 = vpack.c.b16 %v1041, %v1040
      %v1065 = vpack.c.b16 %v1043, %v1042
      %v1066 = vpack.c.b16 %v1045, %v1044
      %v1067 = vpack.c.b16 %v1047, %v1046
      %v1068 = vpack.c.b16 %v1049, %v1048
      %v1069 = vpack.c.b16 %v1051, %v1050
      %vm1088 = vcmask 261120
      %v1090 = vsel %vm1088, %v972, 0
      %v1093 = vsel %vm1088, %v975, 0
      %1095 = vmatpush.bf16.msra.mxu0 %v1059
      %1096 = vmatpush.bf16.msra.mxu0 %v1058
      %1097 = vmatpush.bf16.msra.mxu0 %v1057
      %1098 = vmatpush.bf16.msra.mxu0 %v1056
      %1099 = vmatpush.bf16.msra.mxu0 %v1055
      %1100 = vmatpush.bf16.msra.mxu0 %v1054
      %1101 = vmatpush.bf16.msra.mxu0 %v1053
      %1102 = vmatpush.bf16.msra.mxu0 %v1052
      %1103 = vmatmul.bf16.gmra.mxu0 %v970
      %v1104 = vpop.f32.mrf.mxu0
      %v1105 = vadd.f32 %v764, %v1104
      %v1106 = vpop.f32.mrf.mxu0
      %v1107 = vadd.f32 %v769, %v1106
      %1108 = vmatmul.bf16.gmra.mxu0 %v973
      %v1109 = vpop.f32.mrf.mxu0
      %v1110 = vadd.f32 %v774, %v1109
      %v1111 = vpop.f32.mrf.mxu0
      %v1112 = vadd.f32 %v779, %v1111
      %1113 = vdwg.mxu0
      %1114 = vmatpush.bf16.msra.mxu0 %v1067
      %1115 = vmatpush.bf16.msra.mxu0 %v1066
      %1116 = vmatpush.bf16.msra.mxu0 %v1065
      %1117 = vmatpush.bf16.msra.mxu0 %v1064
      %1118 = vmatpush.bf16.msra.mxu0 %v1063
      %1119 = vmatpush.bf16.msra.mxu0 %v1062
      %1120 = vmatpush.bf16.msra.mxu0 %v1061
      %1121 = vmatpush.bf16.msra.mxu0 %v1060
      %1122 = vmatmul.bf16.gmra.mxu0 %v971
      %v1123 = vpop.f32.mrf.mxu0
      %v1124 = vadd.f32 %v1105, %v1123
      %v1125 = vpop.f32.mrf.mxu0
      %v1126 = vadd.f32 %v1107, %v1125
      %1127 = vmatmul.bf16.gmra.mxu0 %v974
      %v1128 = vpop.f32.mrf.mxu0
      %v1129 = vadd.f32 %v1110, %v1128
      %v1130 = vpop.f32.mrf.mxu0
      %v1131 = vadd.f32 %v1112, %v1130
      %1132 = vdwg.mxu0
      %1133 = vmatpush.bf16.msra.mxu0 0
      %1134 = vmatpush.bf16.msra.mxu0 0
      %1135 = vmatpush.bf16.msra.mxu0 0
      %1136 = vmatpush.bf16.msra.mxu0 0
      %1137 = vmatpush.bf16.msra.mxu0 0
      %1138 = vmatpush.bf16.msra.mxu0 0
      %1139 = vmatpush.bf16.msra.mxu0 %v1069
      %1140 = vmatpush.bf16.msra.mxu0 %v1068
      %1141 = vmatmul.bf16.gmra.mxu0 %v1090
      %v1142 = vpop.f32.mrf.mxu0
      %v1143 = vadd.f32 %v1124, %v1142
      %v1144 = vpop.f32.mrf.mxu0
      %v1145 = vadd.f32 %v1126, %v1144
      %1146 = vmatmul.bf16.gmra.mxu0 %v1093
      %v1147 = vpop.f32.mrf.mxu0
      %v1148 = vadd.f32 %v1129, %v1147
      %v1149 = vpop.f32.mrf.mxu0
      %v1150 = vadd.f32 %v1131, %v1149
      %1151 = vdwg.mxu0
      %v1152 = vmax.f32 %v1143, 0.0
      %v1153 = vmax.f32 %v1145, 0.0
      %v1154 = vmax.f32 %v1148, 0.0
      %v1155 = vmax.f32 %v1150, 0.0
      %v1156 = vpack.c.bf16 %v1152, %v1152
      %v1157 = vpack.c.bf16 %v1153, %v1153
      %v1158 = vpack.c.bf16 %v1154, %v1154
      %v1159 = vpack.c.bf16 %v1155, %v1155
      %1160 = vst.msk [vmem:[#allocation3] sm:$0xf] %vm785, %v1156
      %1161 = vst.msk [vmem:[#allocation3 + $0x4] sm:$0xf] %vm785, %v1157
      %1162 = vst.msk [vmem:[#allocation3 + $0x8] sm:$0xf] %vm785, %v1158
      %1163 = vst.msk [vmem:[#allocation3 + $0xc] sm:$0xf] %vm785, %v1159
      %v1164 = vld [vmem:[%s351] sm:$0xf]
      %v1165 = vld [vmem:[%s351 + $0x4] sm:$0xf]
      %v1166 = vld [vmem:[%s351 + $0x8] sm:$0xf]
      %v1167 = vld [vmem:[%s351 + $0xc] sm:$0xf]
      %1168 = vst.msk [vmem:[#allocation5] sm:$0xf] %vm785, %v1164
      %1169 = vst.msk [vmem:[#allocation5 + $0x4] sm:$0xf] %vm785, %v1165
      %1170 = vst.msk [vmem:[#allocation5 + $0x8] sm:$0xf] %vm785, %v1166
      %1171 = vst.msk [vmem:[#allocation5 + $0xc] sm:$0xf] %vm785, %v1167
      %1176 = vrot.lane.b32.xlu0 %v1164, 124
      %v1177 = vpop.permute.xlu0 %1176
      %1178 = vrot.lane.b32.xlu0 %v1165, 124
      %v1179 = vpop.permute.xlu0 %1178
      %1180 = vrot.lane.b32.xlu0 %v1166, 124
      %v1181 = vpop.permute.xlu0 %1180
      %1182 = vrot.lane.b32.xlu0 %v1167, 124
      %v1183 = vpop.permute.xlu0 %1182
      %1188 = vst.msk [vmem:[#allocation5 + $0x10] sm:$0xf] %vm785, %v1177
      %1189 = vst.msk [vmem:[#allocation5 + $0x14] sm:$0xf] %vm785, %v1179
      %1190 = vst.msk [vmem:[#allocation5 + $0x18] sm:$0xf] %vm785, %v1181
      %1191 = vst.msk [vmem:[#allocation5 + $0x1c] sm:$0xf] %vm785, %v1183
      %1192 = vrot.lane.b32.xlu0 %v1164, 120
      %v1193 = vpop.permute.xlu0 %1192
      %1194 = vrot.lane.b32.xlu0 %v1165, 120
      %v1195 = vpop.permute.xlu0 %1194
      %1196 = vrot.lane.b32.xlu0 %v1166, 120
      %v1197 = vpop.permute.xlu0 %1196
      %1198 = vrot.lane.b32.xlu0 %v1167, 120
      %v1199 = vpop.permute.xlu0 %1198
      %1204 = vst.msk [vmem:[#allocation5 + $0x20] sm:$0xf] %vm785, %v1193
      %1205 = vst.msk [vmem:[#allocation5 + $0x24] sm:$0xf] %vm785, %v1195
      %1206 = vst.msk [vmem:[#allocation5 + $0x28] sm:$0xf] %vm785, %v1197
      %1207 = vst.msk [vmem:[#allocation5 + $0x2c] sm:$0xf] %vm785, %v1199
      %v1208 = vld [vmem:[%s407] sm:$0xf]
      %v1209 = vld [vmem:[%s407 + $0x4] sm:$0xf]
      %v1210 = vld [vmem:[%s407 + $0x8] sm:$0xf]
      %v1211 = vld [vmem:[%s407 + $0xc] sm:$0xf]
      %1212 = vst.msk [vmem:[#allocation5 + $0x30] sm:$0xf] %vm785, %v1208
      %1213 = vst.msk [vmem:[#allocation5 + $0x34] sm:$0xf] %vm785, %v1209
      %1214 = vst.msk [vmem:[#allocation5 + $0x38] sm:$0xf] %vm785, %v1210
      %1215 = vst.msk [vmem:[#allocation5 + $0x3c] sm:$0xf] %vm785, %v1211
      %1220 = vrot.lane.b32.xlu0 %v1208, 124
      %v1221 = vpop.permute.xlu0 %1220
      %1222 = vrot.lane.b32.xlu0 %v1209, 124
      %v1223 = vpop.permute.xlu0 %1222
      %1224 = vrot.lane.b32.xlu0 %v1210, 124
      %v1225 = vpop.permute.xlu0 %1224
      %1226 = vrot.lane.b32.xlu0 %v1211, 124
      %v1227 = vpop.permute.xlu0 %1226
      %1232 = vst.msk [vmem:[#allocation5 + $0x40] sm:$0xf] %vm785, %v1221
      %1233 = vst.msk [vmem:[#allocation5 + $0x44] sm:$0xf] %vm785, %v1223
      %1234 = vst.msk [vmem:[#allocation5 + $0x48] sm:$0xf] %vm785, %v1225
      %1235 = vst.msk [vmem:[#allocation5 + $0x4c] sm:$0xf] %vm785, %v1227
      %1236 = vrot.lane.b32.xlu0 %v1208, 120
      %v1237 = vpop.permute.xlu0 %1236
      %1238 = vrot.lane.b32.xlu0 %v1209, 120
      %v1239 = vpop.permute.xlu0 %1238
      %1240 = vrot.lane.b32.xlu0 %v1210, 120
      %v1241 = vpop.permute.xlu0 %1240
      %1242 = vrot.lane.b32.xlu0 %v1211, 120
      %v1243 = vpop.permute.xlu0 %1242
      %1248 = vst.msk [vmem:[#allocation5 + $0x50] sm:$0xf] %vm785, %v1237
      %1249 = vst.msk [vmem:[#allocation5 + $0x54] sm:$0xf] %vm785, %v1239
      %1250 = vst.msk [vmem:[#allocation5 + $0x58] sm:$0xf] %vm785, %v1241
      %1251 = vst.msk [vmem:[#allocation5 + $0x5c] sm:$0xf] %vm785, %v1243
      %v1252 = vld [vmem:[%s463] sm:$0xf]
      %v1253 = vld [vmem:[%s463 + $0x4] sm:$0xf]
      %v1254 = vld [vmem:[%s463 + $0x8] sm:$0xf]
      %v1255 = vld [vmem:[%s463 + $0xc] sm:$0xf]
      %1256 = vst.msk [vmem:[#allocation5 + $0x60] sm:$0xf] %vm785, %v1252
      %1257 = vst.msk [vmem:[#allocation5 + $0x64] sm:$0xf] %vm785, %v1253
      %1258 = vst.msk [vmem:[#allocation5 + $0x68] sm:$0xf] %vm785, %v1254
      %1259 = vst.msk [vmem:[#allocation5 + $0x6c] sm:$0xf] %vm785, %v1255
      %1264 = vrot.lane.b32.xlu0 %v1252, 124
      %v1265 = vpop.permute.xlu0 %1264
      %1266 = vrot.lane.b32.xlu0 %v1253, 124
      %v1267 = vpop.permute.xlu0 %1266
      %1268 = vrot.lane.b32.xlu0 %v1254, 124
      %v1269 = vpop.permute.xlu0 %1268
      %1270 = vrot.lane.b32.xlu0 %v1255, 124
      %v1271 = vpop.permute.xlu0 %1270
      %1276 = vst.msk [vmem:[#allocation5 + $0x70] sm:$0xf] %vm785, %v1265
      %1277 = vst.msk [vmem:[#allocation5 + $0x74] sm:$0xf] %vm785, %v1267
      %1278 = vst.msk [vmem:[#allocation5 + $0x78] sm:$0xf] %vm785, %v1269
      %1279 = vst.msk [vmem:[#allocation5 + $0x7c] sm:$0xf] %vm785, %v1271
      %1280 = vrot.lane.b32.xlu0 %v1252, 120
      %v1281 = vpop.permute.xlu0 %1280
      %1282 = vrot.lane.b32.xlu0 %v1253, 120
      %v1283 = vpop.permute.xlu0 %1282
      %1284 = vrot.lane.b32.xlu0 %v1254, 120
      %v1285 = vpop.permute.xlu0 %1284
      %1286 = vrot.lane.b32.xlu0 %v1255, 120
      %v1287 = vpop.permute.xlu0 %1286
      %1292 = vst.msk [vmem:[#allocation5 + $0x80] sm:$0xf] %vm785, %v1281
      %1293 = vst.msk [vmem:[#allocation5 + $0x84] sm:$0xf] %vm785, %v1283
      %1294 = vst.msk [vmem:[#allocation5 + $0x88] sm:$0xf] %vm785, %v1285
      %1295 = vst.msk [vmem:[#allocation5 + $0x8c] sm:$0xf] %vm785, %v1287
      %v1296 = vld [vmem:[#allocation5] sm:$0xf]
      %v1297 = vld [vmem:[#allocation5 + $0x4] sm:$0xf]
      %v1298 = vld [vmem:[#allocation5 + $0x8] sm:$0xf]
      %v1299 = vld [vmem:[#allocation5 + $0xc] sm:$0xf]
      %v1300 = vld [vmem:[#allocation5 + $0x10] sm:$0xf]
      %v1301 = vld [vmem:[#allocation5 + $0x14] sm:$0xf]
      %v1302 = vld [vmem:[#allocation5 + $0x18] sm:$0xf]
      %v1303 = vld [vmem:[#allocation5 + $0x1c] sm:$0xf]
      %v1304 = vld [vmem:[#allocation5 + $0x20] sm:$0xf]
      %v1305 = vld [vmem:[#allocation5 + $0x24] sm:$0xf]
      %v1306 = vld [vmem:[#allocation5 + $0x28] sm:$0xf]
      %v1307 = vld [vmem:[#allocation5 + $0x2c] sm:$0xf]
      %v1308 = vld [vmem:[#allocation5 + $0x30] sm:$0xf]
      %v1309 = vld [vmem:[#allocation5 + $0x34] sm:$0xf]
      %v1310 = vld [vmem:[#allocation5 + $0x38] sm:$0xf]
      %v1311 = vld [vmem:[#allocation5 + $0x3c] sm:$0xf]
      %v1312 = vld [vmem:[#allocation5 + $0x40] sm:$0xf]
      %v1313 = vld [vmem:[#allocation5 + $0x44] sm:$0xf]
      %v1314 = vld [vmem:[#allocation5 + $0x48] sm:$0xf]
      %v1315 = vld [vmem:[#allocation5 + $0x4c] sm:$0xf]
      %v1316 = vld [vmem:[#allocation5 + $0x50] sm:$0xf]
      %v1317 = vld [vmem:[#allocation5 + $0x54] sm:$0xf]
      %v1318 = vld [vmem:[#allocation5 + $0x58] sm:$0xf]
      %v1319 = vld [vmem:[#allocation5 + $0x5c] sm:$0xf]
      %v1320 = vld [vmem:[#allocation5 + $0x60] sm:$0xf]
      %v1321 = vld [vmem:[#allocation5 + $0x64] sm:$0xf]
      %v1322 = vld [vmem:[#allocation5 + $0x68] sm:$0xf]
      %v1323 = vld [vmem:[#allocation5 + $0x6c] sm:$0xf]
      %v1324 = vld [vmem:[#allocation5 + $0x70] sm:$0xf]
      %v1325 = vld [vmem:[#allocation5 + $0x74] sm:$0xf]
      %v1326 = vld [vmem:[#allocation5 + $0x78] sm:$0xf]
      %v1327 = vld [vmem:[#allocation5 + $0x7c] sm:$0xf]
      %v1328 = vld [vmem:[#allocation5 + $0x80] sm:$0xf]
      %v1329 = vld [vmem:[#allocation5 + $0x84] sm:$0xf]
      %v1330 = vld [vmem:[#allocation5 + $0x88] sm:$0xf]
      %v1331 = vld [vmem:[#allocation5 + $0x8c] sm:$0xf]
      %v1368 = vunpack.c.l.b16 %v1296
      %v1369 = vunpack.c.l.b16 %v1297
      %v1370 = vunpack.c.l.b16 %v1298
      %v1371 = vunpack.c.l.b16 %v1299
      %v1372 = vunpack.c.l.b16 %v1300
      %v1373 = vunpack.c.l.b16 %v1301
      %v1374 = vunpack.c.l.b16 %v1302
      %v1375 = vunpack.c.l.b16 %v1303
      %v1376 = vunpack.c.l.b16 %v1304
      %v1377 = vunpack.c.l.b16 %v1305
      %v1378 = vunpack.c.l.b16 %v1306
      %v1379 = vunpack.c.l.b16 %v1307
      %v1380 = vunpack.c.l.b16 %v1308
      %v1381 = vunpack.c.l.b16 %v1309
      %v1382 = vunpack.c.l.b16 %v1310
      %v1383 = vunpack.c.l.b16 %v1311
      %v1384 = vunpack.c.l.b16 %v1312
      %v1385 = vunpack.c.l.b16 %v1313
      %v1386 = vunpack.c.l.b16 %v1314
      %v1387 = vunpack.c.l.b16 %v1315
      %v1388 = vunpack.c.l.b16 %v1316
      %v1389 = vunpack.c.l.b16 %v1317
      %v1390 = vunpack.c.l.b16 %v1318
      %v1391 = vunpack.c.l.b16 %v1319
      %v1392 = vunpack.c.l.b16 %v1320
      %v1393 = vunpack.c.l.b16 %v1321
      %v1394 = vunpack.c.l.b16 %v1322
      %v1395 = vunpack.c.l.b16 %v1323
      %v1396 = vunpack.c.l.b16 %v1324
      %v1397 = vunpack.c.l.b16 %v1325
      %v1398 = vunpack.c.l.b16 %v1326
      %v1399 = vunpack.c.l.b16 %v1327
      %v1400 = vunpack.c.l.b16 %v1328
      %v1401 = vunpack.c.l.b16 %v1329
      %v1402 = vunpack.c.l.b16 %v1330
      %v1403 = vunpack.c.l.b16 %v1331
      %v1404 = vpack.c.b16 %v1369, %v1368
      %v1405 = vpack.c.b16 %v1371, %v1370
      %v1406 = vpack.c.b16 %v1373, %v1372
      %v1407 = vpack.c.b16 %v1375, %v1374
      %v1408 = vpack.c.b16 %v1377, %v1376
      %v1409 = vpack.c.b16 %v1379, %v1378
      %v1410 = vpack.c.b16 %v1381, %v1380
      %v1411 = vpack.c.b16 %v1383, %v1382
      %v1412 = vpack.c.b16 %v1385, %v1384
      %v1413 = vpack.c.b16 %v1387, %v1386
      %v1414 = vpack.c.b16 %v1389, %v1388
      %v1415 = vpack.c.b16 %v1391, %v1390
      %v1416 = vpack.c.b16 %v1393, %v1392
      %v1417 = vpack.c.b16 %v1395, %v1394
      %v1418 = vpack.c.b16 %v1397, %v1396
      %v1419 = vpack.c.b16 %v1399, %v1398
      %v1420 = vpack.c.b16 %v1401, %v1400
      %v1421 = vpack.c.b16 %v1403, %v1402
      %1440 = vmatpush.bf16.msra.mxu0 %v1411
      %1441 = vmatpush.bf16.msra.mxu0 %v1410
      %1442 = vmatpush.bf16.msra.mxu0 %v1409
      %1443 = vmatpush.bf16.msra.mxu0 %v1408
      %1444 = vmatpush.bf16.msra.mxu0 %v1407
      %1445 = vmatpush.bf16.msra.mxu0 %v1406
      %1446 = vmatpush.bf16.msra.mxu0 %v1405
      %1447 = vmatpush.bf16.msra.mxu0 %v1404
      %1448 = vmatmul.bf16.gmra.mxu0 %v970
      %v1449 = vpop.f32.mrf.mxu0
      %v1450 = vadd.f32 %v764, %v1449
      %v1451 = vpop.f32.mrf.mxu0
      %v1452 = vadd.f32 %v769, %v1451
      %1453 = vmatmul.bf16.gmra.mxu0 %v973
      %v1454 = vpop.f32.mrf.mxu0
      %v1455 = vadd.f32 %v774, %v1454
      %v1456 = vpop.f32.mrf.mxu0
      %v1457 = vadd.f32 %v779, %v1456
      %1458 = vdwg.mxu0
      %1459 = vmatpush.bf16.msra.mxu0 %v1419
      %1460 = vmatpush.bf16.msra.mxu0 %v1418
      %1461 = vmatpush.bf16.msra.mxu0 %v1417
      %1462 = vmatpush.bf16.msra.mxu0 %v1416
      %1463 = vmatpush.bf16.msra.mxu0 %v1415
      %1464 = vmatpush.bf16.msra.mxu0 %v1414
      %1465 = vmatpush.bf16.msra.mxu0 %v1413
      %1466 = vmatpush.bf16.msra.mxu0 %v1412
      %1467 = vmatmul.bf16.gmra.mxu0 %v971
      %v1468 = vpop.f32.mrf.mxu0
      %v1469 = vadd.f32 %v1450, %v1468
      %v1470 = vpop.f32.mrf.mxu0
      %v1471 = vadd.f32 %v1452, %v1470
      %1472 = vmatmul.bf16.gmra.mxu0 %v974
      %v1473 = vpop.f32.mrf.mxu0
      %v1474 = vadd.f32 %v1455, %v1473
      %v1475 = vpop.f32.mrf.mxu0
      %v1476 = vadd.f32 %v1457, %v1475
      %1477 = vdwg.mxu0
      %1478 = vmatpush.bf16.msra.mxu0 0
      %1479 = vmatpush.bf16.msra.mxu0 0
      %1480 = vmatpush.bf16.msra.mxu0 0
      %1481 = vmatpush.bf16.msra.mxu0 0
      %1482 = vmatpush.bf16.msra.mxu0 0
      %1483 = vmatpush.bf16.msra.mxu0 0
      %1484 = vmatpush.bf16.msra.mxu0 %v1421
      %1485 = vmatpush.bf16.msra.mxu0 %v1420
      %1486 = vmatmul.bf16.gmra.mxu0 %v1090
      %v1487 = vpop.f32.mrf.mxu0
      %v1488 = vadd.f32 %v1469, %v1487
      %v1489 = vpop.f32.mrf.mxu0
      %v1490 = vadd.f32 %v1471, %v1489
      %1491 = vmatmul.bf16.gmra.mxu0 %v1093
      %v1492 = vpop.f32.mrf.mxu0
      %v1493 = vadd.f32 %v1474, %v1492
      %v1494 = vpop.f32.mrf.mxu0
      %v1495 = vadd.f32 %v1476, %v1494
      %1496 = vdwg.mxu0
      %v1497 = vmax.f32 %v1488, 0.0
      %v1498 = vmax.f32 %v1490, 0.0
      %v1499 = vmax.f32 %v1493, 0.0
      %v1500 = vmax.f32 %v1495, 0.0
      %v1501 = vpack.c.bf16 %v1497, %v1497
      %v1502 = vpack.c.bf16 %v1498, %v1498
      %v1503 = vpack.c.bf16 %v1499, %v1499
      %v1504 = vpack.c.bf16 %v1500, %v1500
      %s1505 = scalar_lea.vmem [#allocation3], 16
      %1506 = vst.msk [vmem:[%s1505] sm:$0xf] %vm785, %v1501
      %1507 = vst.msk [vmem:[%s1505 + $0x4] sm:$0xf] %vm785, %v1502
      %1508 = vst.msk [vmem:[%s1505 + $0x8] sm:$0xf] %vm785, %v1503
      %1509 = vst.msk [vmem:[%s1505 + $0xc] sm:$0xf] %vm785, %v1504
      %v1510 = vld [vmem:[%s407] sm:$0xf]
      %v1511 = vld [vmem:[%s407 + $0x4] sm:$0xf]
      %v1512 = vld [vmem:[%s407 + $0x8] sm:$0xf]
      %v1513 = vld [vmem:[%s407 + $0xc] sm:$0xf]
      %1514 = vst.msk [vmem:[#allocation5] sm:$0xf] %vm785, %v1510
      %1515 = vst.msk [vmem:[#allocation5 + $0x4] sm:$0xf] %vm785, %v1511
      %1516 = vst.msk [vmem:[#allocation5 + $0x8] sm:$0xf] %vm785, %v1512
      %1517 = vst.msk [vmem:[#allocation5 + $0xc] sm:$0xf] %vm785, %v1513
      %1522 = vrot.lane.b32.xlu0 %v1510, 124
      %v1523 = vpop.permute.xlu0 %1522
      %1524 = vrot.lane.b32.xlu0 %v1511, 124
      %v1525 = vpop.permute.xlu0 %1524
      %1526 = vrot.lane.b32.xlu0 %v1512, 124
      %v1527 = vpop.permute.xlu0 %1526
      %1528 = vrot.lane.b32.xlu0 %v1513, 124
      %v1529 = vpop.permute.xlu0 %1528
      %1534 = vst.msk [vmem:[#allocation5 + $0x10] sm:$0xf] %vm785, %v1523
      %1535 = vst.msk [vmem:[#allocation5 + $0x14] sm:$0xf] %vm785, %v1525
      %1536 = vst.msk [vmem:[#allocation5 + $0x18] sm:$0xf] %vm785, %v1527
      %1537 = vst.msk [vmem:[#allocation5 + $0x1c] sm:$0xf] %vm785, %v1529
      %1538 = vrot.lane.b32.xlu0 %v1510, 120
      %v1539 = vpop.permute.xlu0 %1538
      %1540 = vrot.lane.b32.xlu0 %v1511, 120
      %v1541 = vpop.permute.xlu0 %1540
      %1542 = vrot.lane.b32.xlu0 %v1512, 120
      %v1543 = vpop.permute.xlu0 %1542
      %1544 = vrot.lane.b32.xlu0 %v1513, 120
      %v1545 = vpop.permute.xlu0 %1544
      %1550 = vst.msk [vmem:[#allocation5 + $0x20] sm:$0xf] %vm785, %v1539
      %1551 = vst.msk [vmem:[#allocation5 + $0x24] sm:$0xf] %vm785, %v1541
      %1552 = vst.msk [vmem:[#allocation5 + $0x28] sm:$0xf] %vm785, %v1543
      %1553 = vst.msk [vmem:[#allocation5 + $0x2c] sm:$0xf] %vm785, %v1545
      %v1554 = vld [vmem:[%s463] sm:$0xf]
      %v1555 = vld [vmem:[%s463 + $0x4] sm:$0xf]
      %v1556 = vld [vmem:[%s463 + $0x8] sm:$0xf]
      %v1557 = vld [vmem:[%s463 + $0xc] sm:$0xf]
      %1558 = vst.msk [vmem:[#allocation5 + $0x30] sm:$0xf] %vm785, %v1554
      %1559 = vst.msk [vmem:[#allocation5 + $0x34] sm:$0xf] %vm785, %v1555
      %1560 = vst.msk [vmem:[#allocation5 + $0x38] sm:$0xf] %vm785, %v1556
      %1561 = vst.msk [vmem:[#allocation5 + $0x3c] sm:$0xf] %vm785, %v1557
      %1566 = vrot.lane.b32.xlu0 %v1554, 124
      %v1567 = vpop.permute.xlu0 %1566
      %1568 = vrot.lane.b32.xlu0 %v1555, 124
      %v1569 = vpop.permute.xlu0 %1568
      %1570 = vrot.lane.b32.xlu0 %v1556, 124
      %v1571 = vpop.permute.xlu0 %1570
      %1572 = vrot.lane.b32.xlu0 %v1557, 124
      %v1573 = vpop.permute.xlu0 %1572
      %1578 = vst.msk [vmem:[#allocation5 + $0x40] sm:$0xf] %vm785, %v1567
      %1579 = vst.msk [vmem:[#allocation5 + $0x44] sm:$0xf] %vm785, %v1569
      %1580 = vst.msk [vmem:[#allocation5 + $0x48] sm:$0xf] %vm785, %v1571
      %1581 = vst.msk [vmem:[#allocation5 + $0x4c] sm:$0xf] %vm785, %v1573
      %1582 = vrot.lane.b32.xlu0 %v1554, 120
      %v1583 = vpop.permute.xlu0 %1582
      %1584 = vrot.lane.b32.xlu0 %v1555, 120
      %v1585 = vpop.permute.xlu0 %1584
      %1586 = vrot.lane.b32.xlu0 %v1556, 120
      %v1587 = vpop.permute.xlu0 %1586
      %1588 = vrot.lane.b32.xlu0 %v1557, 120
      %v1589 = vpop.permute.xlu0 %1588
      %1594 = vst.msk [vmem:[#allocation5 + $0x50] sm:$0xf] %vm785, %v1583
      %1595 = vst.msk [vmem:[#allocation5 + $0x54] sm:$0xf] %vm785, %v1585
      %1596 = vst.msk [vmem:[#allocation5 + $0x58] sm:$0xf] %vm785, %v1587
      %1597 = vst.msk [vmem:[#allocation5 + $0x5c] sm:$0xf] %vm785, %v1589
      %v1598 = vld [vmem:[%s519] sm:$0xf]
      %v1599 = vld [vmem:[%s519 + $0x4] sm:$0xf]
      %v1600 = vld [vmem:[%s519 + $0x8] sm:$0xf]
      %v1601 = vld [vmem:[%s519 + $0xc] sm:$0xf]
      %1602 = vst.msk [vmem:[#allocation5 + $0x60] sm:$0xf] %vm785, %v1598
      %1603 = vst.msk [vmem:[#allocation5 + $0x64] sm:$0xf] %vm785, %v1599
      %1604 = vst.msk [vmem:[#allocation5 + $0x68] sm:$0xf] %vm785, %v1600
      %1605 = vst.msk [vmem:[#allocation5 + $0x6c] sm:$0xf] %vm785, %v1601
      %1610 = vrot.lane.b32.xlu0 %v1598, 124
      %v1611 = vpop.permute.xlu0 %1610
      %1612 = vrot.lane.b32.xlu0 %v1599, 124
      %v1613 = vpop.permute.xlu0 %1612
      %1614 = vrot.lane.b32.xlu0 %v1600, 124
      %v1615 = vpop.permute.xlu0 %1614
      %1616 = vrot.lane.b32.xlu0 %v1601, 124
      %v1617 = vpop.permute.xlu0 %1616
      %1622 = vst.msk [vmem:[#allocation5 + $0x70] sm:$0xf] %vm785, %v1611
      %1623 = vst.msk [vmem:[#allocation5 + $0x74] sm:$0xf] %vm785, %v1613
      %1624 = vst.msk [vmem:[#allocation5 + $0x78] sm:$0xf] %vm785, %v1615
      %1625 = vst.msk [vmem:[#allocation5 + $0x7c] sm:$0xf] %vm785, %v1617
      %1626 = vrot.lane.b32.xlu0 %v1598, 120
      %v1627 = vpop.permute.xlu0 %1626
      %1628 = vrot.lane.b32.xlu0 %v1599, 120
      %v1629 = vpop.permute.xlu0 %1628
      %1630 = vrot.lane.b32.xlu0 %v1600, 120
      %v1631 = vpop.permute.xlu0 %1630
      %1632 = vrot.lane.b32.xlu0 %v1601, 120
      %v1633 = vpop.permute.xlu0 %1632
      %1638 = vst.msk [vmem:[#allocation5 + $0x80] sm:$0xf] %vm785, %v1627
      %1639 = vst.msk [vmem:[#allocation5 + $0x84] sm:$0xf] %vm785, %v1629
      %1640 = vst.msk [vmem:[#allocation5 + $0x88] sm:$0xf] %vm785, %v1631
      %1641 = vst.msk [vmem:[#allocation5 + $0x8c] sm:$0xf] %vm785, %v1633
      %v1642 = vld [vmem:[#allocation5] sm:$0xf]
      %v1643 = vld [vmem:[#allocation5 + $0x4] sm:$0xf]
      %v1644 = vld [vmem:[#allocation5 + $0x8] sm:$0xf]
      %v1645 = vld [vmem:[#allocation5 + $0xc] sm:$0xf]
      %v1646 = vld [vmem:[#allocation5 + $0x10] sm:$0xf]
      %v1647 = vld [vmem:[#allocation5 + $0x14] sm:$0xf]
      %v1648 = vld [vmem:[#allocation5 + $0x18] sm:$0xf]
      %v1649 = vld [vmem:[#allocation5 + $0x1c] sm:$0xf]
      %v1650 = vld [vmem:[#allocation5 + $0x20] sm:$0xf]
      %v1651 = vld [vmem:[#allocation5 + $0x24] sm:$0xf]
      %v1652 = vld [vmem:[#allocation5 + $0x28] sm:$0xf]
      %v1653 = vld [vmem:[#allocation5 + $0x2c] sm:$0xf]
      %v1654 = vld [vmem:[#allocation5 + $0x30] sm:$0xf]
      %v1655 = vld [vmem:[#allocation5 + $0x34] sm:$0xf]
      %v1656 = vld [vmem:[#allocation5 + $0x38] sm:$0xf]
      %v1657 = vld [vmem:[#allocation5 + $0x3c] sm:$0xf]
      %v1658 = vld [vmem:[#allocation5 + $0x40] sm:$0xf]
      %v1659 = vld [vmem:[#allocation5 + $0x44] sm:$0xf]
      %v1660 = vld [vmem:[#allocation5 + $0x48] sm:$0xf]
      %v1661 = vld [vmem:[#allocation5 + $0x4c] sm:$0xf]
      %v1662 = vld [vmem:[#allocation5 + $0x50] sm:$0xf]
      %v1663 = vld [vmem:[#allocation5 + $0x54] sm:$0xf]
      %v1664 = vld [vmem:[#allocation5 + $0x58] sm:$0xf]
      %v1665 = vld [vmem:[#allocation5 + $0x5c] sm:$0xf]
      %v1666 = vld [vmem:[#allocation5 + $0x60] sm:$0xf]
      %v1667 = vld [vmem:[#allocation5 + $0x64] sm:$0xf]
      %v1668 = vld [vmem:[#allocation5 + $0x68] sm:$0xf]
      %v1669 = vld [vmem:[#allocation5 + $0x6c] sm:$0xf]
      %v1670 = vld [vmem:[#allocation5 + $0x70] sm:$0xf]
      %v1671 = vld [vmem:[#allocation5 + $0x74] sm:$0xf]
      %v1672 = vld [vmem:[#allocation5 + $0x78] sm:$0xf]
      %v1673 = vld [vmem:[#allocation5 + $0x7c] sm:$0xf]
      %v1674 = vld [vmem:[#allocation5 + $0x80] sm:$0xf]
      %v1675 = vld [vmem:[#allocation5 + $0x84] sm:$0xf]
      %v1676 = vld [vmem:[#allocation5 + $0x88] sm:$0xf]
      %v1677 = vld [vmem:[#allocation5 + $0x8c] sm:$0xf]
      %v1714 = vunpack.c.l.b16 %v1642
      %v1715 = vunpack.c.l.b16 %v1643
      %v1716 = vunpack.c.l.b16 %v1644
      %v1717 = vunpack.c.l.b16 %v1645
      %v1718 = vunpack.c.l.b16 %v1646
      %v1719 = vunpack.c.l.b16 %v1647
      %v1720 = vunpack.c.l.b16 %v1648
      %v1721 = vunpack.c.l.b16 %v1649
      %v1722 = vunpack.c.l.b16 %v1650
      %v1723 = vunpack.c.l.b16 %v1651
      %v1724 = vunpack.c.l.b16 %v1652
      %v1725 = vunpack.c.l.b16 %v1653
      %v1726 = vunpack.c.l.b16 %v1654
      %v1727 = vunpack.c.l.b16 %v1655
      %v1728 = vunpack.c.l.b16 %v1656
      %v1729 = vunpack.c.l.b16 %v1657
      %v1730 = vunpack.c.l.b16 %v1658
      %v1731 = vunpack.c.l.b16 %v1659
      %v1732 = vunpack.c.l.b16 %v1660
      %v1733 = vunpack.c.l.b16 %v1661
      %v1734 = vunpack.c.l.b16 %v1662
      %v1735 = vunpack.c.l.b16 %v1663
      %v1736 = vunpack.c.l.b16 %v1664
      %v1737 = vunpack.c.l.b16 %v1665
      %v1738 = vunpack.c.l.b16 %v1666
      %v1739 = vunpack.c.l.b16 %v1667
      %v1740 = vunpack.c.l.b16 %v1668
      %v1741 = vunpack.c.l.b16 %v1669
      %v1742 = vunpack.c.l.b16 %v1670
      %v1743 = vunpack.c.l.b16 %v1671
      %v1744 = vunpack.c.l.b16 %v1672
      %v1745 = vunpack.c.l.b16 %v1673
      %v1746 = vunpack.c.l.b16 %v1674
      %v1747 = vunpack.c.l.b16 %v1675
      %v1748 = vunpack.c.l.b16 %v1676
      %v1749 = vunpack.c.l.b16 %v1677
      %v1750 = vpack.c.b16 %v1715, %v1714
      %v1751 = vpack.c.b16 %v1717, %v1716
      %v1752 = vpack.c.b16 %v1719, %v1718
      %v1753 = vpack.c.b16 %v1721, %v1720
      %v1754 = vpack.c.b16 %v1723, %v1722
      %v1755 = vpack.c.b16 %v1725, %v1724
      %v1756 = vpack.c.b16 %v1727, %v1726
      %v1757 = vpack.c.b16 %v1729, %v1728
      %v1758 = vpack.c.b16 %v1731, %v1730
      %v1759 = vpack.c.b16 %v1733, %v1732
      %v1760 = vpack.c.b16 %v1735, %v1734
      %v1761 = vpack.c.b16 %v1737, %v1736
      %v1762 = vpack.c.b16 %v1739, %v1738
      %v1763 = vpack.c.b16 %v1741, %v1740
      %v1764 = vpack.c.b16 %v1743, %v1742
      %v1765 = vpack.c.b16 %v1745, %v1744
      %v1766 = vpack.c.b16 %v1747, %v1746
      %v1767 = vpack.c.b16 %v1749, %v1748
      %1786 = vmatpush.bf16.msra.mxu0 %v1757
      %1787 = vmatpush.bf16.msra.mxu0 %v1756
      %1788 = vmatpush.bf16.msra.mxu0 %v1755
      %1789 = vmatpush.bf16.msra.mxu0 %v1754
      %1790 = vmatpush.bf16.msra.mxu0 %v1753
      %1791 = vmatpush.bf16.msra.mxu0 %v1752
      %1792 = vmatpush.bf16.msra.mxu0 %v1751
      %1793 = vmatpush.bf16.msra.mxu0 %v1750
      %1794 = vmatmul.bf16.gmra.mxu0 %v970
      %v1795 = vpop.f32.mrf.mxu0
      %v1796 = vadd.f32 %v764, %v1795
      %v1797 = vpop.f32.mrf.mxu0
      %v1798 = vadd.f32 %v769, %v1797
      %1799 = vmatmul.bf16.gmra.mxu0 %v973
      %v1800 = vpop.f32.mrf.mxu0
      %v1801 = vadd.f32 %v774, %v1800
      %v1802 = vpop.f32.mrf.mxu0
      %v1803 = vadd.f32 %v779, %v1802
      %1804 = vdwg.mxu0
      %1805 = vmatpush.bf16.msra.mxu0 %v1765
      %1806 = vmatpush.bf16.msra.mxu0 %v1764
      %1807 = vmatpush.bf16.msra.mxu0 %v1763
      %1808 = vmatpush.bf16.msra.mxu0 %v1762
      %1809 = vmatpush.bf16.msra.mxu0 %v1761
      %1810 = vmatpush.bf16.msra.mxu0 %v1760
      %1811 = vmatpush.bf16.msra.mxu0 %v1759
      %1812 = vmatpush.bf16.msra.mxu0 %v1758
      %1813 = vmatmul.bf16.gmra.mxu0 %v971
      %v1814 = vpop.f32.mrf.mxu0
      %v1815 = vadd.f32 %v1796, %v1814
      %v1816 = vpop.f32.mrf.mxu0
      %v1817 = vadd.f32 %v1798, %v1816
      %1818 = vmatmul.bf16.gmra.mxu0 %v974
      %v1819 = vpop.f32.mrf.mxu0
      %v1820 = vadd.f32 %v1801, %v1819
      %v1821 = vpop.f32.mrf.mxu0
      %v1822 = vadd.f32 %v1803, %v1821
      %1823 = vdwg.mxu0
      %1824 = vmatpush.bf16.msra.mxu0 0
      %1825 = vmatpush.bf16.msra.mxu0 0
      %1826 = vmatpush.bf16.msra.mxu0 0
      %1827 = vmatpush.bf16.msra.mxu0 0
      %1828 = vmatpush.bf16.msra.mxu0 0
      %1829 = vmatpush.bf16.msra.mxu0 0
      %1830 = vmatpush.bf16.msra.mxu0 %v1767
      %1831 = vmatpush.bf16.msra.mxu0 %v1766
      %1832 = vmatmul.bf16.gmra.mxu0 %v1090
      %v1833 = vpop.f32.mrf.mxu0
      %v1834 = vadd.f32 %v1815, %v1833
      %v1835 = vpop.f32.mrf.mxu0
      %v1836 = vadd.f32 %v1817, %v1835
      %1837 = vmatmul.bf16.gmra.mxu0 %v1093
      %v1838 = vpop.f32.mrf.mxu0
      %v1839 = vadd.f32 %v1820, %v1838
      %v1840 = vpop.f32.mrf.mxu0
      %v1841 = vadd.f32 %v1822, %v1840
      %1842 = vdwg.mxu0
      %v1843 = vmax.f32 %v1834, 0.0
      %v1844 = vmax.f32 %v1836, 0.0
      %v1845 = vmax.f32 %v1839, 0.0
      %v1846 = vmax.f32 %v1841, 0.0
      %v1847 = vpack.c.bf16 %v1843, %v1843
      %v1848 = vpack.c.bf16 %v1844, %v1844
      %v1849 = vpack.c.bf16 %v1845, %v1845
      %v1850 = vpack.c.bf16 %v1846, %v1846
      %s1851 = scalar_lea.vmem [#allocation3], 32
      %1852 = vst.msk [vmem:[%s1851] sm:$0xf] %vm785, %v1847
      %1853 = vst.msk [vmem:[%s1851 + $0x4] sm:$0xf] %vm785, %v1848
      %1854 = vst.msk [vmem:[%s1851 + $0x8] sm:$0xf] %vm785, %v1849
      %1855 = vst.msk [vmem:[%s1851 + $0xc] sm:$0xf] %vm785, %v1850
      %v1856 = vld [vmem:[%s463] sm:$0xf]
      %v1857 = vld [vmem:[%s463 + $0x4] sm:$0xf]
      %v1858 = vld [vmem:[%s463 + $0x8] sm:$0xf]
      %v1859 = vld [vmem:[%s463 + $0xc] sm:$0xf]
      %1860 = vst.msk [vmem:[#allocation5] sm:$0xf] %vm785, %v1856
      %1861 = vst.msk [vmem:[#allocation5 + $0x4] sm:$0xf] %vm785, %v1857
      %1862 = vst.msk [vmem:[#allocation5 + $0x8] sm:$0xf] %vm785, %v1858
      %1863 = vst.msk [vmem:[#allocation5 + $0xc] sm:$0xf] %vm785, %v1859
      %1868 = vrot.lane.b32.xlu0 %v1856, 124
      %v1869 = vpop.permute.xlu0 %1868
      %1870 = vrot.lane.b32.xlu0 %v1857, 124
      %v1871 = vpop.permute.xlu0 %1870
      %1872 = vrot.lane.b32.xlu0 %v1858, 124
      %v1873 = vpop.permute.xlu0 %1872
      %1874 = vrot.lane.b32.xlu0 %v1859, 124
      %v1875 = vpop.permute.xlu0 %1874
      %1880 = vst.msk [vmem:[#allocation5 + $0x10] sm:$0xf] %vm785, %v1869
      %1881 = vst.msk [vmem:[#allocation5 + $0x14] sm:$0xf] %vm785, %v1871
      %1882 = vst.msk [vmem:[#allocation5 + $0x18] sm:$0xf] %vm785, %v1873
      %1883 = vst.msk [vmem:[#allocation5 + $0x1c] sm:$0xf] %vm785, %v1875
      %1884 = vrot.lane.b32.xlu0 %v1856, 120
      %v1885 = vpop.permute.xlu0 %1884
      %1886 = vrot.lane.b32.xlu0 %v1857, 120
      %v1887 = vpop.permute.xlu0 %1886
      %1888 = vrot.lane.b32.xlu0 %v1858, 120
      %v1889 = vpop.permute.xlu0 %1888
      %1890 = vrot.lane.b32.xlu0 %v1859, 120
      %v1891 = vpop.permute.xlu0 %1890
      %1896 = vst.msk [vmem:[#allocation5 + $0x20] sm:$0xf] %vm785, %v1885
      %1897 = vst.msk [vmem:[#allocation5 + $0x24] sm:$0xf] %vm785, %v1887
      %1898 = vst.msk [vmem:[#allocation5 + $0x28] sm:$0xf] %vm785, %v1889
      %1899 = vst.msk [vmem:[#allocation5 + $0x2c] sm:$0xf] %vm785, %v1891
      %v1900 = vld [vmem:[%s519] sm:$0xf]
      %v1901 = vld [vmem:[%s519 + $0x4] sm:$0xf]
      %v1902 = vld [vmem:[%s519 + $0x8] sm:$0xf]
      %v1903 = vld [vmem:[%s519 + $0xc] sm:$0xf]
      %1904 = vst.msk [vmem:[#allocation5 + $0x30] sm:$0xf] %vm785, %v1900
      %1905 = vst.msk [vmem:[#allocation5 + $0x34] sm:$0xf] %vm785, %v1901
      %1906 = vst.msk [vmem:[#allocation5 + $0x38] sm:$0xf] %vm785, %v1902
      %1907 = vst.msk [vmem:[#allocation5 + $0x3c] sm:$0xf] %vm785, %v1903
      %1912 = vrot.lane.b32.xlu0 %v1900, 124
      %v1913 = vpop.permute.xlu0 %1912
      %1914 = vrot.lane.b32.xlu0 %v1901, 124
      %v1915 = vpop.permute.xlu0 %1914
      %1916 = vrot.lane.b32.xlu0 %v1902, 124
      %v1917 = vpop.permute.xlu0 %1916
      %1918 = vrot.lane.b32.xlu0 %v1903, 124
      %v1919 = vpop.permute.xlu0 %1918
      %1924 = vst.msk [vmem:[#allocation5 + $0x40] sm:$0xf] %vm785, %v1913
      %1925 = vst.msk [vmem:[#allocation5 + $0x44] sm:$0xf] %vm785, %v1915
      %1926 = vst.msk [vmem:[#allocation5 + $0x48] sm:$0xf] %vm785, %v1917
      %1927 = vst.msk [vmem:[#allocation5 + $0x4c] sm:$0xf] %vm785, %v1919
      %1928 = vrot.lane.b32.xlu0 %v1900, 120
      %v1929 = vpop.permute.xlu0 %1928
      %1930 = vrot.lane.b32.xlu0 %v1901, 120
      %v1931 = vpop.permute.xlu0 %1930
      %1932 = vrot.lane.b32.xlu0 %v1902, 120
      %v1933 = vpop.permute.xlu0 %1932
      %1934 = vrot.lane.b32.xlu0 %v1903, 120
      %v1935 = vpop.permute.xlu0 %1934
      %1940 = vst.msk [vmem:[#allocation5 + $0x50] sm:$0xf] %vm785, %v1929
      %1941 = vst.msk [vmem:[#allocation5 + $0x54] sm:$0xf] %vm785, %v1931
      %1942 = vst.msk [vmem:[#allocation5 + $0x58] sm:$0xf] %vm785, %v1933
      %1943 = vst.msk [vmem:[#allocation5 + $0x5c] sm:$0xf] %vm785, %v1935
      %v1944 = vld [vmem:[%s575] sm:$0xf]
      %v1945 = vld [vmem:[%s575 + $0x4] sm:$0xf]
      %v1946 = vld [vmem:[%s575 + $0x8] sm:$0xf]
      %v1947 = vld [vmem:[%s575 + $0xc] sm:$0xf]
      %1948 = vst.msk [vmem:[#allocation5 + $0x60] sm:$0xf] %vm785, %v1944
      %1949 = vst.msk [vmem:[#allocation5 + $0x64] sm:$0xf] %vm785, %v1945
      %1950 = vst.msk [vmem:[#allocation5 + $0x68] sm:$0xf] %vm785, %v1946
      %1951 = vst.msk [vmem:[#allocation5 + $0x6c] sm:$0xf] %vm785, %v1947
      %1956 = vrot.lane.b32.xlu0 %v1944, 124
      %v1957 = vpop.permute.xlu0 %1956
      %1958 = vrot.lane.b32.xlu0 %v1945, 124
      %v1959 = vpop.permute.xlu0 %1958
      %1960 = vrot.lane.b32.xlu0 %v1946, 124
      %v1961 = vpop.permute.xlu0 %1960
      %1962 = vrot.lane.b32.xlu0 %v1947, 124
      %v1963 = vpop.permute.xlu0 %1962
      %1968 = vst.msk [vmem:[#allocation5 + $0x70] sm:$0xf] %vm785, %v1957
      %1969 = vst.msk [vmem:[#allocation5 + $0x74] sm:$0xf] %vm785, %v1959
      %1970 = vst.msk [vmem:[#allocation5 + $0x78] sm:$0xf] %vm785, %v1961
      %1971 = vst.msk [vmem:[#allocation5 + $0x7c] sm:$0xf] %vm785, %v1963
      %1972 = vrot.lane.b32.xlu0 %v1944, 120
      %v1973 = vpop.permute.xlu0 %1972
      %1974 = vrot.lane.b32.xlu0 %v1945, 120
      %v1975 = vpop.permute.xlu0 %1974
      %1976 = vrot.lane.b32.xlu0 %v1946, 120
      %v1977 = vpop.permute.xlu0 %1976
      %1978 = vrot.lane.b32.xlu0 %v1947, 120
      %v1979 = vpop.permute.xlu0 %1978
      %1984 = vst.msk [vmem:[#allocation5 + $0x80] sm:$0xf] %vm785, %v1973
      %1985 = vst.msk [vmem:[#allocation5 + $0x84] sm:$0xf] %vm785, %v1975
      %1986 = vst.msk [vmem:[#allocation5 + $0x88] sm:$0xf] %vm785, %v1977
      %1987 = vst.msk [vmem:[#allocation5 + $0x8c] sm:$0xf] %vm785, %v1979
      %v1988 = vld [vmem:[#allocation5] sm:$0xf]
      %v1989 = vld [vmem:[#allocation5 + $0x4] sm:$0xf]
      %v1990 = vld [vmem:[#allocation5 + $0x8] sm:$0xf]
      %v1991 = vld [vmem:[#allocation5 + $0xc] sm:$0xf]
      %v1992 = vld [vmem:[#allocation5 + $0x10] sm:$0xf]
      %v1993 = vld [vmem:[#allocation5 + $0x14] sm:$0xf]
      %v1994 = vld [vmem:[#allocation5 + $0x18] sm:$0xf]
      %v1995 = vld [vmem:[#allocation5 + $0x1c] sm:$0xf]
      %v1996 = vld [vmem:[#allocation5 + $0x20] sm:$0xf]
      %v1997 = vld [vmem:[#allocation5 + $0x24] sm:$0xf]
      %v1998 = vld [vmem:[#allocation5 + $0x28] sm:$0xf]
      %v1999 = vld [vmem:[#allocation5 + $0x2c] sm:$0xf]
      %v2000 = vld [vmem:[#allocation5 + $0x30] sm:$0xf]
      %v2001 = vld [vmem:[#allocation5 + $0x34] sm:$0xf]
      %v2002 = vld [vmem:[#allocation5 + $0x38] sm:$0xf]
      %v2003 = vld [vmem:[#allocation5 + $0x3c] sm:$0xf]
      %v2004 = vld [vmem:[#allocation5 + $0x40] sm:$0xf]
      %v2005 = vld [vmem:[#allocation5 + $0x44] sm:$0xf]
      %v2006 = vld [vmem:[#allocation5 + $0x48] sm:$0xf]
      %v2007 = vld [vmem:[#allocation5 + $0x4c] sm:$0xf]
      %v2008 = vld [vmem:[#allocation5 + $0x50] sm:$0xf]
      %v2009 = vld [vmem:[#allocation5 + $0x54] sm:$0xf]
      %v2010 = vld [vmem:[#allocation5 + $0x58] sm:$0xf]
      %v2011 = vld [vmem:[#allocation5 + $0x5c] sm:$0xf]
      %v2012 = vld [vmem:[#allocation5 + $0x60] sm:$0xf]
      %v2013 = vld [vmem:[#allocation5 + $0x64] sm:$0xf]
      %v2014 = vld [vmem:[#allocation5 + $0x68] sm:$0xf]
      %v2015 = vld [vmem:[#allocation5 + $0x6c] sm:$0xf]
      %v2016 = vld [vmem:[#allocation5 + $0x70] sm:$0xf]
      %v2017 = vld [vmem:[#allocation5 + $0x74] sm:$0xf]
      %v2018 = vld [vmem:[#allocation5 + $0x78] sm:$0xf]
      %v2019 = vld [vmem:[#allocation5 + $0x7c] sm:$0xf]
      %v2020 = vld [vmem:[#allocation5 + $0x80] sm:$0xf]
      %v2021 = vld [vmem:[#allocation5 + $0x84] sm:$0xf]
      %v2022 = vld [vmem:[#allocation5 + $0x88] sm:$0xf]
      %v2023 = vld [vmem:[#allocation5 + $0x8c] sm:$0xf]
      %v2060 = vunpack.c.l.b16 %v1988
      %v2061 = vunpack.c.l.b16 %v1989
      %v2062 = vunpack.c.l.b16 %v1990
      %v2063 = vunpack.c.l.b16 %v1991
      %v2064 = vunpack.c.l.b16 %v1992
      %v2065 = vunpack.c.l.b16 %v1993
      %v2066 = vunpack.c.l.b16 %v1994
      %v2067 = vunpack.c.l.b16 %v1995
      %v2068 = vunpack.c.l.b16 %v1996
      %v2069 = vunpack.c.l.b16 %v1997
      %v2070 = vunpack.c.l.b16 %v1998
      %v2071 = vunpack.c.l.b16 %v1999
      %v2072 = vunpack.c.l.b16 %v2000
      %v2073 = vunpack.c.l.b16 %v2001
      %v2074 = vunpack.c.l.b16 %v2002
      %v2075 = vunpack.c.l.b16 %v2003
      %v2076 = vunpack.c.l.b16 %v2004
      %v2077 = vunpack.c.l.b16 %v2005
      %v2078 = vunpack.c.l.b16 %v2006
      %v2079 = vunpack.c.l.b16 %v2007
      %v2080 = vunpack.c.l.b16 %v2008
      %v2081 = vunpack.c.l.b16 %v2009
      %v2082 = vunpack.c.l.b16 %v2010
      %v2083 = vunpack.c.l.b16 %v2011
      %v2084 = vunpack.c.l.b16 %v2012
      %v2085 = vunpack.c.l.b16 %v2013
      %v2086 = vunpack.c.l.b16 %v2014
      %v2087 = vunpack.c.l.b16 %v2015
      %v2088 = vunpack.c.l.b16 %v2016
      %v2089 = vunpack.c.l.b16 %v2017
      %v2090 = vunpack.c.l.b16 %v2018
      %v2091 = vunpack.c.l.b16 %v2019
      %v2092 = vunpack.c.l.b16 %v2020
      %v2093 = vunpack.c.l.b16 %v2021
      %v2094 = vunpack.c.l.b16 %v2022
      %v2095 = vunpack.c.l.b16 %v2023
      %v2096 = vpack.c.b16 %v2061, %v2060
      %v2097 = vpack.c.b16 %v2063, %v2062
      %v2098 = vpack.c.b16 %v2065, %v2064
      %v2099 = vpack.c.b16 %v2067, %v2066
      %v2100 = vpack.c.b16 %v2069, %v2068
      %v2101 = vpack.c.b16 %v2071, %v2070
      %v2102 = vpack.c.b16 %v2073, %v2072
      %v2103 = vpack.c.b16 %v2075, %v2074
      %v2104 = vpack.c.b16 %v2077, %v2076
      %v2105 = vpack.c.b16 %v2079, %v2078
      %v2106 = vpack.c.b16 %v2081, %v2080
      %v2107 = vpack.c.b16 %v2083, %v2082
      %v2108 = vpack.c.b16 %v2085, %v2084
      %v2109 = vpack.c.b16 %v2087, %v2086
      %v2110 = vpack.c.b16 %v2089, %v2088
      %v2111 = vpack.c.b16 %v2091, %v2090
      %v2112 = vpack.c.b16 %v2093, %v2092
      %v2113 = vpack.c.b16 %v2095, %v2094
      %2132 = vmatpush.bf16.msra.mxu0 %v2103
      %2133 = vmatpush.bf16.msra.mxu0 %v2102
      %2134 = vmatpush.bf16.msra.mxu0 %v2101
      %2135 = vmatpush.bf16.msra.mxu0 %v2100
      %2136 = vmatpush.bf16.msra.mxu0 %v2099
      %2137 = vmatpush.bf16.msra.mxu0 %v2098
      %2138 = vmatpush.bf16.msra.mxu0 %v2097
      %2139 = vmatpush.bf16.msra.mxu0 %v2096
      %2140 = vmatmul.bf16.gmra.mxu0 %v970
      %v2141 = vpop.f32.mrf.mxu0
      %v2142 = vadd.f32 %v764, %v2141
      %v2143 = vpop.f32.mrf.mxu0
      %v2144 = vadd.f32 %v769, %v2143
      %2145 = vmatmul.bf16.gmra.mxu0 %v973
      %v2146 = vpop.f32.mrf.mxu0
      %v2147 = vadd.f32 %v774, %v2146
      %v2148 = vpop.f32.mrf.mxu0
      %v2149 = vadd.f32 %v779, %v2148
      %2150 = vdwg.mxu0
      %2151 = vmatpush.bf16.msra.mxu0 %v2111
      %2152 = vmatpush.bf16.msra.mxu0 %v2110
      %2153 = vmatpush.bf16.msra.mxu0 %v2109
      %2154 = vmatpush.bf16.msra.mxu0 %v2108
      %2155 = vmatpush.bf16.msra.mxu0 %v2107
      %2156 = vmatpush.bf16.msra.mxu0 %v2106
      %2157 = vmatpush.bf16.msra.mxu0 %v2105
      %2158 = vmatpush.bf16.msra.mxu0 %v2104
      %2159 = vmatmul.bf16.gmra.mxu0 %v971
      %v2160 = vpop.f32.mrf.mxu0
      %v2161 = vadd.f32 %v2142, %v2160
      %v2162 = vpop.f32.mrf.mxu0
      %v2163 = vadd.f32 %v2144, %v2162
      %2164 = vmatmul.bf16.gmra.mxu0 %v974
      %v2165 = vpop.f32.mrf.mxu0
      %v2166 = vadd.f32 %v2147, %v2165
      %v2167 = vpop.f32.mrf.mxu0
      %v2168 = vadd.f32 %v2149, %v2167
      %2169 = vdwg.mxu0
      %2170 = vmatpush.bf16.msra.mxu0 0
      %2171 = vmatpush.bf16.msra.mxu0 0
      %2172 = vmatpush.bf16.msra.mxu0 0
      %2173 = vmatpush.bf16.msra.mxu0 0
      %2174 = vmatpush.bf16.msra.mxu0 0
      %2175 = vmatpush.bf16.msra.mxu0 0
      %2176 = vmatpush.bf16.msra.mxu0 %v2113
      %2177 = vmatpush.bf16.msra.mxu0 %v2112
      %2178 = vmatmul.bf16.gmra.mxu0 %v1090
      %v2179 = vpop.f32.mrf.mxu0
      %v2180 = vadd.f32 %v2161, %v2179
      %v2181 = vpop.f32.mrf.mxu0
      %v2182 = vadd.f32 %v2163, %v2181
      %2183 = vmatmul.bf16.gmra.mxu0 %v1093
      %v2184 = vpop.f32.mrf.mxu0
      %v2185 = vadd.f32 %v2166, %v2184
      %v2186 = vpop.f32.mrf.mxu0
      %v2187 = vadd.f32 %v2168, %v2186
      %2188 = vdwg.mxu0
      %v2189 = vmax.f32 %v2180, 0.0
      %v2190 = vmax.f32 %v2182, 0.0
      %v2191 = vmax.f32 %v2185, 0.0
      %v2192 = vmax.f32 %v2187, 0.0
      %v2193 = vpack.c.bf16 %v2189, %v2189
      %v2194 = vpack.c.bf16 %v2190, %v2190
      %v2195 = vpack.c.bf16 %v2191, %v2191
      %v2196 = vpack.c.bf16 %v2192, %v2192
      %s2197 = scalar_lea.vmem [#allocation3], 48
      %2198 = vst.msk [vmem:[%s2197] sm:$0xf] %vm785, %v2193
      %2199 = vst.msk [vmem:[%s2197 + $0x4] sm:$0xf] %vm785, %v2194
      %2200 = vst.msk [vmem:[%s2197 + $0x8] sm:$0xf] %vm785, %v2195
      %2201 = vst.msk [vmem:[%s2197 + $0xc] sm:$0xf] %vm785, %v2196
      %v2202 = vld [vmem:[%s519] sm:$0xf]
      %v2203 = vld [vmem:[%s519 + $0x4] sm:$0xf]
      %v2204 = vld [vmem:[%s519 + $0x8] sm:$0xf]
      %v2205 = vld [vmem:[%s519 + $0xc] sm:$0xf]
      %2206 = vst.msk [vmem:[#allocation5] sm:$0xf] %vm785, %v2202
      %2207 = vst.msk [vmem:[#allocation5 + $0x4] sm:$0xf] %vm785, %v2203
      %2208 = vst.msk [vmem:[#allocation5 + $0x8] sm:$0xf] %vm785, %v2204
      %2209 = vst.msk [vmem:[#allocation5 + $0xc] sm:$0xf] %vm785, %v2205
      %2214 = vrot.lane.b32.xlu0 %v2202, 124
      %v2215 = vpop.permute.xlu0 %2214
      %2216 = vrot.lane.b32.xlu0 %v2203, 124
      %v2217 = vpop.permute.xlu0 %2216
      %2218 = vrot.lane.b32.xlu0 %v2204, 124
      %v2219 = vpop.permute.xlu0 %2218
      %2220 = vrot.lane.b32.xlu0 %v2205, 124
      %v2221 = vpop.permute.xlu0 %2220
      %2226 = vst.msk [vmem:[#allocation5 + $0x10] sm:$0xf] %vm785, %v2215
      %2227 = vst.msk [vmem:[#allocation5 + $0x14] sm:$0xf] %vm785, %v2217
      %2228 = vst.msk [vmem:[#allocation5 + $0x18] sm:$0xf] %vm785, %v2219
      %2229 = vst.msk [vmem:[#allocation5 + $0x1c] sm:$0xf] %vm785, %v2221
      %2230 = vrot.lane.b32.xlu0 %v2202, 120
      %v2231 = vpop.permute.xlu0 %2230
      %2232 = vrot.lane.b32.xlu0 %v2203, 120
      %v2233 = vpop.permute.xlu0 %2232
      %2234 = vrot.lane.b32.xlu0 %v2204, 120
      %v2235 = vpop.permute.xlu0 %2234
      %2236 = vrot.lane.b32.xlu0 %v2205, 120
      %v2237 = vpop.permute.xlu0 %2236
      %2242 = vst.msk [vmem:[#allocation5 + $0x20] sm:$0xf] %vm785, %v2231
      %2243 = vst.msk [vmem:[#allocation5 + $0x24] sm:$0xf] %vm785, %v2233
      %2244 = vst.msk [vmem:[#allocation5 + $0x28] sm:$0xf] %vm785, %v2235
      %2245 = vst.msk [vmem:[#allocation5 + $0x2c] sm:$0xf] %vm785, %v2237
      %v2246 = vld [vmem:[%s575] sm:$0xf]
      %v2247 = vld [vmem:[%s575 + $0x4] sm:$0xf]
      %v2248 = vld [vmem:[%s575 + $0x8] sm:$0xf]
      %v2249 = vld [vmem:[%s575 + $0xc] sm:$0xf]
      %2250 = vst.msk [vmem:[#allocation5 + $0x30] sm:$0xf] %vm785, %v2246
      %2251 = vst.msk [vmem:[#allocation5 + $0x34] sm:$0xf] %vm785, %v2247
      %2252 = vst.msk [vmem:[#allocation5 + $0x38] sm:$0xf] %vm785, %v2248
      %2253 = vst.msk [vmem:[#allocation5 + $0x3c] sm:$0xf] %vm785, %v2249
      %2258 = vrot.lane.b32.xlu0 %v2246, 124
      %v2259 = vpop.permute.xlu0 %2258
      %2260 = vrot.lane.b32.xlu0 %v2247, 124
      %v2261 = vpop.permute.xlu0 %2260
      %2262 = vrot.lane.b32.xlu0 %v2248, 124
      %v2263 = vpop.permute.xlu0 %2262
      %2264 = vrot.lane.b32.xlu0 %v2249, 124
      %v2265 = vpop.permute.xlu0 %2264
      %2270 = vst.msk [vmem:[#allocation5 + $0x40] sm:$0xf] %vm785, %v2259
      %2271 = vst.msk [vmem:[#allocation5 + $0x44] sm:$0xf] %vm785, %v2261
      %2272 = vst.msk [vmem:[#allocation5 + $0x48] sm:$0xf] %vm785, %v2263
      %2273 = vst.msk [vmem:[#allocation5 + $0x4c] sm:$0xf] %vm785, %v2265
      %2274 = vrot.lane.b32.xlu0 %v2246, 120
      %v2275 = vpop.permute.xlu0 %2274
      %2276 = vrot.lane.b32.xlu0 %v2247, 120
      %v2277 = vpop.permute.xlu0 %2276
      %2278 = vrot.lane.b32.xlu0 %v2248, 120
      %v2279 = vpop.permute.xlu0 %2278
      %2280 = vrot.lane.b32.xlu0 %v2249, 120
      %v2281 = vpop.permute.xlu0 %2280
      %2286 = vst.msk [vmem:[#allocation5 + $0x50] sm:$0xf] %vm785, %v2275
      %2287 = vst.msk [vmem:[#allocation5 + $0x54] sm:$0xf] %vm785, %v2277
      %2288 = vst.msk [vmem:[#allocation5 + $0x58] sm:$0xf] %vm785, %v2279
      %2289 = vst.msk [vmem:[#allocation5 + $0x5c] sm:$0xf] %vm785, %v2281
      %v2290 = vld [vmem:[%s631] sm:$0xf]
      %v2291 = vld [vmem:[%s631 + $0x4] sm:$0xf]
      %v2292 = vld [vmem:[%s631 + $0x8] sm:$0xf]
      %v2293 = vld [vmem:[%s631 + $0xc] sm:$0xf]
      %2294 = vst.msk [vmem:[#allocation5 + $0x60] sm:$0xf] %vm785, %v2290
      %2295 = vst.msk [vmem:[#allocation5 + $0x64] sm:$0xf] %vm785, %v2291
      %2296 = vst.msk [vmem:[#allocation5 + $0x68] sm:$0xf] %vm785, %v2292
      %2297 = vst.msk [vmem:[#allocation5 + $0x6c] sm:$0xf] %vm785, %v2293
      %2302 = vrot.lane.b32.xlu0 %v2290, 124
      %v2303 = vpop.permute.xlu0 %2302
      %2304 = vrot.lane.b32.xlu0 %v2291, 124
      %v2305 = vpop.permute.xlu0 %2304
      %2306 = vrot.lane.b32.xlu0 %v2292, 124
      %v2307 = vpop.permute.xlu0 %2306
      %2308 = vrot.lane.b32.xlu0 %v2293, 124
      %v2309 = vpop.permute.xlu0 %2308
      %2314 = vst.msk [vmem:[#allocation5 + $0x70] sm:$0xf] %vm785, %v2303
      %2315 = vst.msk [vmem:[#allocation5 + $0x74] sm:$0xf] %vm785, %v2305
      %2316 = vst.msk [vmem:[#allocation5 + $0x78] sm:$0xf] %vm785, %v2307
      %2317 = vst.msk [vmem:[#allocation5 + $0x7c] sm:$0xf] %vm785, %v2309
      %2318 = vrot.lane.b32.xlu0 %v2290, 120
      %v2319 = vpop.permute.xlu0 %2318
      %2320 = vrot.lane.b32.xlu0 %v2291, 120
      %v2321 = vpop.permute.xlu0 %2320
      %2322 = vrot.lane.b32.xlu0 %v2292, 120
      %v2323 = vpop.permute.xlu0 %2322
      %2324 = vrot.lane.b32.xlu0 %v2293, 120
      %v2325 = vpop.permute.xlu0 %2324
      %2330 = vst.msk [vmem:[#allocation5 + $0x80] sm:$0xf] %vm785, %v2319
      %2331 = vst.msk [vmem:[#allocation5 + $0x84] sm:$0xf] %vm785, %v2321
      %2332 = vst.msk [vmem:[#allocation5 + $0x88] sm:$0xf] %vm785, %v2323
      %2333 = vst.msk [vmem:[#allocation5 + $0x8c] sm:$0xf] %vm785, %v2325
      %v2334 = vld [vmem:[#allocation5] sm:$0xf]
      %v2335 = vld [vmem:[#allocation5 + $0x4] sm:$0xf]
      %v2336 = vld [vmem:[#allocation5 + $0x8] sm:$0xf]
      %v2337 = vld [vmem:[#allocation5 + $0xc] sm:$0xf]
      %v2338 = vld [vmem:[#allocation5 + $0x10] sm:$0xf]
      %v2339 = vld [vmem:[#allocation5 + $0x14] sm:$0xf]
      %v2340 = vld [vmem:[#allocation5 + $0x18] sm:$0xf]
      %v2341 = vld [vmem:[#allocation5 + $0x1c] sm:$0xf]
      %v2342 = vld [vmem:[#allocation5 + $0x20] sm:$0xf]
      %v2343 = vld [vmem:[#allocation5 + $0x24] sm:$0xf]
      %v2344 = vld [vmem:[#allocation5 + $0x28] sm:$0xf]
      %v2345 = vld [vmem:[#allocation5 + $0x2c] sm:$0xf]
      %v2346 = vld [vmem:[#allocation5 + $0x30] sm:$0xf]
      %v2347 = vld [vmem:[#allocation5 + $0x34] sm:$0xf]
      %v2348 = vld [vmem:[#allocation5 + $0x38] sm:$0xf]
      %v2349 = vld [vmem:[#allocation5 + $0x3c] sm:$0xf]
      %v2350 = vld [vmem:[#allocation5 + $0x40] sm:$0xf]
      %v2351 = vld [vmem:[#allocation5 + $0x44] sm:$0xf]
      %v2352 = vld [vmem:[#allocation5 + $0x48] sm:$0xf]
      %v2353 = vld [vmem:[#allocation5 + $0x4c] sm:$0xf]
      %v2354 = vld [vmem:[#allocation5 + $0x50] sm:$0xf]
      %v2355 = vld [vmem:[#allocation5 + $0x54] sm:$0xf]
      %v2356 = vld [vmem:[#allocation5 + $0x58] sm:$0xf]
      %v2357 = vld [vmem:[#allocation5 + $0x5c] sm:$0xf]
      %v2358 = vld [vmem:[#allocation5 + $0x60] sm:$0xf]
      %v2359 = vld [vmem:[#allocation5 + $0x64] sm:$0xf]
      %v2360 = vld [vmem:[#allocation5 + $0x68] sm:$0xf]
      %v2361 = vld [vmem:[#allocation5 + $0x6c] sm:$0xf]
      %v2362 = vld [vmem:[#allocation5 + $0x70] sm:$0xf]
      %v2363 = vld [vmem:[#allocation5 + $0x74] sm:$0xf]
      %v2364 = vld [vmem:[#allocation5 + $0x78] sm:$0xf]
      %v2365 = vld [vmem:[#allocation5 + $0x7c] sm:$0xf]
      %v2366 = vld [vmem:[#allocation5 + $0x80] sm:$0xf]
      %v2367 = vld [vmem:[#allocation5 + $0x84] sm:$0xf]
      %v2368 = vld [vmem:[#allocation5 + $0x88] sm:$0xf]
      %v2369 = vld [vmem:[#allocation5 + $0x8c] sm:$0xf]
      %v2406 = vunpack.c.l.b16 %v2334
      %v2407 = vunpack.c.l.b16 %v2335
      %v2408 = vunpack.c.l.b16 %v2336
      %v2409 = vunpack.c.l.b16 %v2337
      %v2410 = vunpack.c.l.b16 %v2338
      %v2411 = vunpack.c.l.b16 %v2339
      %v2412 = vunpack.c.l.b16 %v2340
      %v2413 = vunpack.c.l.b16 %v2341
      %v2414 = vunpack.c.l.b16 %v2342
      %v2415 = vunpack.c.l.b16 %v2343
      %v2416 = vunpack.c.l.b16 %v2344
      %v2417 = vunpack.c.l.b16 %v2345
      %v2418 = vunpack.c.l.b16 %v2346
      %v2419 = vunpack.c.l.b16 %v2347
      %v2420 = vunpack.c.l.b16 %v2348
      %v2421 = vunpack.c.l.b16 %v2349
      %v2422 = vunpack.c.l.b16 %v2350
      %v2423 = vunpack.c.l.b16 %v2351
      %v2424 = vunpack.c.l.b16 %v2352
      %v2425 = vunpack.c.l.b16 %v2353
      %v2426 = vunpack.c.l.b16 %v2354
      %v2427 = vunpack.c.l.b16 %v2355
      %v2428 = vunpack.c.l.b16 %v2356
      %v2429 = vunpack.c.l.b16 %v2357
      %v2430 = vunpack.c.l.b16 %v2358
      %v2431 = vunpack.c.l.b16 %v2359
      %v2432 = vunpack.c.l.b16 %v2360
      %v2433 = vunpack.c.l.b16 %v2361
      %v2434 = vunpack.c.l.b16 %v2362
      %v2435 = vunpack.c.l.b16 %v2363
      %v2436 = vunpack.c.l.b16 %v2364
      %v2437 = vunpack.c.l.b16 %v2365
      %v2438 = vunpack.c.l.b16 %v2366
      %v2439 = vunpack.c.l.b16 %v2367
      %v2440 = vunpack.c.l.b16 %v2368
      %v2441 = vunpack.c.l.b16 %v2369
      %v2442 = vpack.c.b16 %v2407, %v2406
      %v2443 = vpack.c.b16 %v2409, %v2408
      %v2444 = vpack.c.b16 %v2411, %v2410
      %v2445 = vpack.c.b16 %v2413, %v2412
      %v2446 = vpack.c.b16 %v2415, %v2414
      %v2447 = vpack.c.b16 %v2417, %v2416
      %v2448 = vpack.c.b16 %v2419, %v2418
      %v2449 = vpack.c.b16 %v2421, %v2420
      %v2450 = vpack.c.b16 %v2423, %v2422
      %v2451 = vpack.c.b16 %v2425, %v2424
      %v2452 = vpack.c.b16 %v2427, %v2426
      %v2453 = vpack.c.b16 %v2429, %v2428
      %v2454 = vpack.c.b16 %v2431, %v2430
      %v2455 = vpack.c.b16 %v2433, %v2432
      %v2456 = vpack.c.b16 %v2435, %v2434
      %v2457 = vpack.c.b16 %v2437, %v2436
      %v2458 = vpack.c.b16 %v2439, %v2438
      %v2459 = vpack.c.b16 %v2441, %v2440
      %2478 = vmatpush.bf16.msra.mxu0 %v2449
      %2479 = vmatpush.bf16.msra.mxu0 %v2448
      %2480 = vmatpush.bf16.msra.mxu0 %v2447
      %2481 = vmatpush.bf16.msra.mxu0 %v2446
      %2482 = vmatpush.bf16.msra.mxu0 %v2445
      %2483 = vmatpush.bf16.msra.mxu0 %v2444
      %2484 = vmatpush.bf16.msra.mxu0 %v2443
      %2485 = vmatpush.bf16.msra.mxu0 %v2442
      %2486 = vmatmul.bf16.gmra.mxu0 %v970
      %v2487 = vpop.f32.mrf.mxu0
      %v2488 = vadd.f32 %v764, %v2487
      %v2489 = vpop.f32.mrf.mxu0
      %v2490 = vadd.f32 %v769, %v2489
      %2491 = vmatmul.bf16.gmra.mxu0 %v973
      %v2492 = vpop.f32.mrf.mxu0
      %v2493 = vadd.f32 %v774, %v2492
      %v2494 = vpop.f32.mrf.mxu0
      %v2495 = vadd.f32 %v779, %v2494
      %2496 = vdwg.mxu0
      %2497 = vmatpush.bf16.msra.mxu0 %v2457
      %2498 = vmatpush.bf16.msra.mxu0 %v2456
      %2499 = vmatpush.bf16.msra.mxu0 %v2455
      %2500 = vmatpush.bf16.msra.mxu0 %v2454
      %2501 = vmatpush.bf16.msra.mxu0 %v2453
      %2502 = vmatpush.bf16.msra.mxu0 %v2452
      %2503 = vmatpush.bf16.msra.mxu0 %v2451
      %2504 = vmatpush.bf16.msra.mxu0 %v2450
      %2505 = vmatmul.bf16.gmra.mxu0 %v971
      %v2506 = vpop.f32.mrf.mxu0
      %v2507 = vadd.f32 %v2488, %v2506
      %v2508 = vpop.f32.mrf.mxu0
      %v2509 = vadd.f32 %v2490, %v2508
      %2510 = vmatmul.bf16.gmra.mxu0 %v974
      %v2511 = vpop.f32.mrf.mxu0
      %v2512 = vadd.f32 %v2493, %v2511
      %v2513 = vpop.f32.mrf.mxu0
      %v2514 = vadd.f32 %v2495, %v2513
      %2515 = vdwg.mxu0
      %2516 = vmatpush.bf16.msra.mxu0 0
      %2517 = vmatpush.bf16.msra.mxu0 0
      %2518 = vmatpush.bf16.msra.mxu0 0
      %2519 = vmatpush.bf16.msra.mxu0 0
      %2520 = vmatpush.bf16.msra.mxu0 0
      %2521 = vmatpush.bf16.msra.mxu0 0
      %2522 = vmatpush.bf16.msra.mxu0 %v2459
      %2523 = vmatpush.bf16.msra.mxu0 %v2458
      %2524 = vmatmul.bf16.gmra.mxu0 %v1090
      %v2525 = vpop.f32.mrf.mxu0
      %v2526 = vadd.f32 %v2507, %v2525
      %v2527 = vpop.f32.mrf.mxu0
      %v2528 = vadd.f32 %v2509, %v2527
      %2529 = vmatmul.bf16.gmra.mxu0 %v1093
      %v2530 = vpop.f32.mrf.mxu0
      %v2531 = vadd.f32 %v2512, %v2530
      %v2532 = vpop.f32.mrf.mxu0
      %v2533 = vadd.f32 %v2514, %v2532
      %2534 = vdwg.mxu0
      %v2535 = vmax.f32 %v2526, 0.0
      %v2536 = vmax.f32 %v2528, 0.0
      %v2537 = vmax.f32 %v2531, 0.0
      %v2538 = vmax.f32 %v2533, 0.0
      %v2539 = vpack.c.bf16 %v2535, %v2535
      %v2540 = vpack.c.bf16 %v2536, %v2536
      %v2541 = vpack.c.bf16 %v2537, %v2537
      %v2542 = vpack.c.bf16 %v2538, %v2538
      %s2543 = scalar_lea.vmem [#allocation3], 64
      %2544 = vst.msk [vmem:[%s2543] sm:$0xf] %vm785, %v2539
      %2545 = vst.msk [vmem:[%s2543 + $0x4] sm:$0xf] %vm785, %v2540
      %2546 = vst.msk [vmem:[%s2543 + $0x8] sm:$0xf] %vm785, %v2541
      %2547 = vst.msk [vmem:[%s2543 + $0xc] sm:$0xf] %vm785, %v2542
      %v2548 = vld [vmem:[%s575] sm:$0xf]
      %v2549 = vld [vmem:[%s575 + $0x4] sm:$0xf]
      %v2550 = vld [vmem:[%s575 + $0x8] sm:$0xf]
      %v2551 = vld [vmem:[%s575 + $0xc] sm:$0xf]
      %2552 = vst.msk [vmem:[#allocation5] sm:$0xf] %vm785, %v2548
      %2553 = vst.msk [vmem:[#allocation5 + $0x4] sm:$0xf] %vm785, %v2549
      %2554 = vst.msk [vmem:[#allocation5 + $0x8] sm:$0xf] %vm785, %v2550
      %2555 = vst.msk [vmem:[#allocation5 + $0xc] sm:$0xf] %vm785, %v2551
      %2560 = vrot.lane.b32.xlu0 %v2548, 124
      %v2561 = vpop.permute.xlu0 %2560
      %2562 = vrot.lane.b32.xlu0 %v2549, 124
      %v2563 = vpop.permute.xlu0 %2562
      %2564 = vrot.lane.b32.xlu0 %v2550, 124
      %v2565 = vpop.permute.xlu0 %2564
      %2566 = vrot.lane.b32.xlu0 %v2551, 124
      %v2567 = vpop.permute.xlu0 %2566
      %2572 = vst.msk [vmem:[#allocation5 + $0x10] sm:$0xf] %vm785, %v2561
      %2573 = vst.msk [vmem:[#allocation5 + $0x14] sm:$0xf] %vm785, %v2563
      %2574 = vst.msk [vmem:[#allocation5 + $0x18] sm:$0xf] %vm785, %v2565
      %2575 = vst.msk [vmem:[#allocation5 + $0x1c] sm:$0xf] %vm785, %v2567
      %2576 = vrot.lane.b32.xlu0 %v2548, 120
      %v2577 = vpop.permute.xlu0 %2576
      %2578 = vrot.lane.b32.xlu0 %v2549, 120
      %v2579 = vpop.permute.xlu0 %2578
      %2580 = vrot.lane.b32.xlu0 %v2550, 120
      %v2581 = vpop.permute.xlu0 %2580
      %2582 = vrot.lane.b32.xlu0 %v2551, 120
      %v2583 = vpop.permute.xlu0 %2582
      %2588 = vst.msk [vmem:[#allocation5 + $0x20] sm:$0xf] %vm785, %v2577
      %2589 = vst.msk [vmem:[#allocation5 + $0x24] sm:$0xf] %vm785, %v2579
      %2590 = vst.msk [vmem:[#allocation5 + $0x28] sm:$0xf] %vm785, %v2581
      %2591 = vst.msk [vmem:[#allocation5 + $0x2c] sm:$0xf] %vm785, %v2583
      %v2592 = vld [vmem:[%s631] sm:$0xf]
      %v2593 = vld [vmem:[%s631 + $0x4] sm:$0xf]
      %v2594 = vld [vmem:[%s631 + $0x8] sm:$0xf]
      %v2595 = vld [vmem:[%s631 + $0xc] sm:$0xf]
      %2596 = vst.msk [vmem:[#allocation5 + $0x30] sm:$0xf] %vm785, %v2592
      %2597 = vst.msk [vmem:[#allocation5 + $0x34] sm:$0xf] %vm785, %v2593
      %2598 = vst.msk [vmem:[#allocation5 + $0x38] sm:$0xf] %vm785, %v2594
      %2599 = vst.msk [vmem:[#allocation5 + $0x3c] sm:$0xf] %vm785, %v2595
      %2604 = vrot.lane.b32.xlu0 %v2592, 124
      %v2605 = vpop.permute.xlu0 %2604
      %2606 = vrot.lane.b32.xlu0 %v2593, 124
      %v2607 = vpop.permute.xlu0 %2606
      %2608 = vrot.lane.b32.xlu0 %v2594, 124
      %v2609 = vpop.permute.xlu0 %2608
      %2610 = vrot.lane.b32.xlu0 %v2595, 124
      %v2611 = vpop.permute.xlu0 %2610
      %2616 = vst.msk [vmem:[#allocation5 + $0x40] sm:$0xf] %vm785, %v2605
      %2617 = vst.msk [vmem:[#allocation5 + $0x44] sm:$0xf] %vm785, %v2607
      %2618 = vst.msk [vmem:[#allocation5 + $0x48] sm:$0xf] %vm785, %v2609
      %2619 = vst.msk [vmem:[#allocation5 + $0x4c] sm:$0xf] %vm785, %v2611
      %2620 = vrot.lane.b32.xlu0 %v2592, 120
      %v2621 = vpop.permute.xlu0 %2620
      %2622 = vrot.lane.b32.xlu0 %v2593, 120
      %v2623 = vpop.permute.xlu0 %2622
      %2624 = vrot.lane.b32.xlu0 %v2594, 120
      %v2625 = vpop.permute.xlu0 %2624
      %2626 = vrot.lane.b32.xlu0 %v2595, 120
      %v2627 = vpop.permute.xlu0 %2626
      %2632 = vst.msk [vmem:[#allocation5 + $0x50] sm:$0xf] %vm785, %v2621
      %2633 = vst.msk [vmem:[#allocation5 + $0x54] sm:$0xf] %vm785, %v2623
      %2634 = vst.msk [vmem:[#allocation5 + $0x58] sm:$0xf] %vm785, %v2625
      %2635 = vst.msk [vmem:[#allocation5 + $0x5c] sm:$0xf] %vm785, %v2627
      %v2636 = vld [vmem:[%s687] sm:$0xf]
      %v2637 = vld [vmem:[%s687 + $0x4] sm:$0xf]
      %v2638 = vld [vmem:[%s687 + $0x8] sm:$0xf]
      %v2639 = vld [vmem:[%s687 + $0xc] sm:$0xf]
      %2640 = vst.msk [vmem:[#allocation5 + $0x60] sm:$0xf] %vm785, %v2636
      %2641 = vst.msk [vmem:[#allocation5 + $0x64] sm:$0xf] %vm785, %v2637
      %2642 = vst.msk [vmem:[#allocation5 + $0x68] sm:$0xf] %vm785, %v2638
      %2643 = vst.msk [vmem:[#allocation5 + $0x6c] sm:$0xf] %vm785, %v2639
      %2648 = vrot.lane.b32.xlu0 %v2636, 124
      %v2649 = vpop.permute.xlu0 %2648
      %2650 = vrot.lane.b32.xlu0 %v2637, 124
      %v2651 = vpop.permute.xlu0 %2650
      %2652 = vrot.lane.b32.xlu0 %v2638, 124
      %v2653 = vpop.permute.xlu0 %2652
      %2654 = vrot.lane.b32.xlu0 %v2639, 124
      %v2655 = vpop.permute.xlu0 %2654
      %2660 = vst.msk [vmem:[#allocation5 + $0x70] sm:$0xf] %vm785, %v2649
      %2661 = vst.msk [vmem:[#allocation5 + $0x74] sm:$0xf] %vm785, %v2651
      %2662 = vst.msk [vmem:[#allocation5 + $0x78] sm:$0xf] %vm785, %v2653
      %2663 = vst.msk [vmem:[#allocation5 + $0x7c] sm:$0xf] %vm785, %v2655
      %2664 = vrot.lane.b32.xlu0 %v2636, 120
      %v2665 = vpop.permute.xlu0 %2664
      %2666 = vrot.lane.b32.xlu0 %v2637, 120
      %v2667 = vpop.permute.xlu0 %2666
      %2668 = vrot.lane.b32.xlu0 %v2638, 120
      %v2669 = vpop.permute.xlu0 %2668
      %2670 = vrot.lane.b32.xlu0 %v2639, 120
      %v2671 = vpop.permute.xlu0 %2670
      %2676 = vst.msk [vmem:[#allocation5 + $0x80] sm:$0xf] %vm785, %v2665
      %2677 = vst.msk [vmem:[#allocation5 + $0x84] sm:$0xf] %vm785, %v2667
      %2678 = vst.msk [vmem:[#allocation5 + $0x88] sm:$0xf] %vm785, %v2669
      %2679 = vst.msk [vmem:[#allocation5 + $0x8c] sm:$0xf] %vm785, %v2671
      %v2680 = vld [vmem:[#allocation5] sm:$0xf]
      %v2681 = vld [vmem:[#allocation5 + $0x4] sm:$0xf]
      %v2682 = vld [vmem:[#allocation5 + $0x8] sm:$0xf]
      %v2683 = vld [vmem:[#allocation5 + $0xc] sm:$0xf]
      %v2684 = vld [vmem:[#allocation5 + $0x10] sm:$0xf]
      %v2685 = vld [vmem:[#allocation5 + $0x14] sm:$0xf]
      %v2686 = vld [vmem:[#allocation5 + $0x18] sm:$0xf]
      %v2687 = vld [vmem:[#allocation5 + $0x1c] sm:$0xf]
      %v2688 = vld [vmem:[#allocation5 + $0x20] sm:$0xf]
      %v2689 = vld [vmem:[#allocation5 + $0x24] sm:$0xf]
      %v2690 = vld [vmem:[#allocation5 + $0x28] sm:$0xf]
      %v2691 = vld [vmem:[#allocation5 + $0x2c] sm:$0xf]
      %v2692 = vld [vmem:[#allocation5 + $0x30] sm:$0xf]
      %v2693 = vld [vmem:[#allocation5 + $0x34] sm:$0xf]
      %v2694 = vld [vmem:[#allocation5 + $0x38] sm:$0xf]
      %v2695 = vld [vmem:[#allocation5 + $0x3c] sm:$0xf]
      %v2696 = vld [vmem:[#allocation5 + $0x40] sm:$0xf]
      %v2697 = vld [vmem:[#allocation5 + $0x44] sm:$0xf]
      %v2698 = vld [vmem:[#allocation5 + $0x48] sm:$0xf]
      %v2699 = vld [vmem:[#allocation5 + $0x4c] sm:$0xf]
      %v2700 = vld [vmem:[#allocation5 + $0x50] sm:$0xf]
      %v2701 = vld [vmem:[#allocation5 + $0x54] sm:$0xf]
      %v2702 = vld [vmem:[#allocation5 + $0x58] sm:$0xf]
      %v2703 = vld [vmem:[#allocation5 + $0x5c] sm:$0xf]
      %v2704 = vld [vmem:[#allocation5 + $0x60] sm:$0xf]
      %v2705 = vld [vmem:[#allocation5 + $0x64] sm:$0xf]
      %v2706 = vld [vmem:[#allocation5 + $0x68] sm:$0xf]
      %v2707 = vld [vmem:[#allocation5 + $0x6c] sm:$0xf]
      %v2708 = vld [vmem:[#allocation5 + $0x70] sm:$0xf]
      %v2709 = vld [vmem:[#allocation5 + $0x74] sm:$0xf]
      %v2710 = vld [vmem:[#allocation5 + $0x78] sm:$0xf]
      %v2711 = vld [vmem:[#allocation5 + $0x7c] sm:$0xf]
      %v2712 = vld [vmem:[#allocation5 + $0x80] sm:$0xf]
      %v2713 = vld [vmem:[#allocation5 + $0x84] sm:$0xf]
      %v2714 = vld [vmem:[#allocation5 + $0x88] sm:$0xf]
      %v2715 = vld [vmem:[#allocation5 + $0x8c] sm:$0xf]
      %v2752 = vunpack.c.l.b16 %v2680
      %v2753 = vunpack.c.l.b16 %v2681
      %v2754 = vunpack.c.l.b16 %v2682
      %v2755 = vunpack.c.l.b16 %v2683
      %v2756 = vunpack.c.l.b16 %v2684
      %v2757 = vunpack.c.l.b16 %v2685
      %v2758 = vunpack.c.l.b16 %v2686
      %v2759 = vunpack.c.l.b16 %v2687
      %v2760 = vunpack.c.l.b16 %v2688
      %v2761 = vunpack.c.l.b16 %v2689
      %v2762 = vunpack.c.l.b16 %v2690
      %v2763 = vunpack.c.l.b16 %v2691
      %v2764 = vunpack.c.l.b16 %v2692
      %v2765 = vunpack.c.l.b16 %v2693
      %v2766 = vunpack.c.l.b16 %v2694
      %v2767 = vunpack.c.l.b16 %v2695
      %v2768 = vunpack.c.l.b16 %v2696
      %v2769 = vunpack.c.l.b16 %v2697
      %v2770 = vunpack.c.l.b16 %v2698
      %v2771 = vunpack.c.l.b16 %v2699
      %v2772 = vunpack.c.l.b16 %v2700
      %v2773 = vunpack.c.l.b16 %v2701
      %v2774 = vunpack.c.l.b16 %v2702
      %v2775 = vunpack.c.l.b16 %v2703
      %v2776 = vunpack.c.l.b16 %v2704
      %v2777 = vunpack.c.l.b16 %v2705
      %v2778 = vunpack.c.l.b16 %v2706
      %v2779 = vunpack.c.l.b16 %v2707
      %v2780 = vunpack.c.l.b16 %v2708
      %v2781 = vunpack.c.l.b16 %v2709
      %v2782 = vunpack.c.l.b16 %v2710
      %v2783 = vunpack.c.l.b16 %v2711
      %v2784 = vunpack.c.l.b16 %v2712
      %v2785 = vunpack.c.l.b16 %v2713
      %v2786 = vunpack.c.l.b16 %v2714
      %v2787 = vunpack.c.l.b16 %v2715
      %v2788 = vpack.c.b16 %v2753, %v2752
      %v2789 = vpack.c.b16 %v2755, %v2754
      %v2790 = vpack.c.b16 %v2757, %v2756
      %v2791 = vpack.c.b16 %v2759, %v2758
      %v2792 = vpack.c.b16 %v2761, %v2760
      %v2793 = vpack.c.b16 %v2763, %v2762
      %v2794 = vpack.c.b16 %v2765, %v2764
      %v2795 = vpack.c.b16 %v2767, %v2766
      %v2796 = vpack.c.b16 %v2769, %v2768
      %v2797 = vpack.c.b16 %v2771, %v2770
      %v2798 = vpack.c.b16 %v2773, %v2772
      %v2799 = vpack.c.b16 %v2775, %v2774
      %v2800 = vpack.c.b16 %v2777, %v2776
      %v2801 = vpack.c.b16 %v2779, %v2778
      %v2802 = vpack.c.b16 %v2781, %v2780
      %v2803 = vpack.c.b16 %v2783, %v2782
      %v2804 = vpack.c.b16 %v2785, %v2784
      %v2805 = vpack.c.b16 %v2787, %v2786
      %2824 = vmatpush.bf16.msra.mxu0 %v2795
      %2825 = vmatpush.bf16.msra.mxu0 %v2794
      %2826 = vmatpush.bf16.msra.mxu0 %v2793
      %2827 = vmatpush.bf16.msra.mxu0 %v2792
      %2828 = vmatpush.bf16.msra.mxu0 %v2791
      %2829 = vmatpush.bf16.msra.mxu0 %v2790
      %2830 = vmatpush.bf16.msra.mxu0 %v2789
      %2831 = vmatpush.bf16.msra.mxu0 %v2788
      %2832 = vmatmul.bf16.gmra.mxu0 %v970
      %v2833 = vpop.f32.mrf.mxu0
      %v2834 = vadd.f32 %v764, %v2833
      %v2835 = vpop.f32.mrf.mxu0
      %v2836 = vadd.f32 %v769, %v2835
      %2837 = vmatmul.bf16.gmra.mxu0 %v973
      %v2838 = vpop.f32.mrf.mxu0
      %v2839 = vadd.f32 %v774, %v2838
      %v2840 = vpop.f32.mrf.mxu0
      %v2841 = vadd.f32 %v779, %v2840
      %2842 = vdwg.mxu0
      %2843 = vmatpush.bf16.msra.mxu0 %v2803
      %2844 = vmatpush.bf16.msra.mxu0 %v2802
      %2845 = vmatpush.bf16.msra.mxu0 %v2801
      %2846 = vmatpush.bf16.msra.mxu0 %v2800
      %2847 = vmatpush.bf16.msra.mxu0 %v2799
      %2848 = vmatpush.bf16.msra.mxu0 %v2798
      %2849 = vmatpush.bf16.msra.mxu0 %v2797
      %2850 = vmatpush.bf16.msra.mxu0 %v2796
      %2851 = vmatmul.bf16.gmra.mxu0 %v971
      %v2852 = vpop.f32.mrf.mxu0
      %v2853 = vadd.f32 %v2834, %v2852
      %v2854 = vpop.f32.mrf.mxu0
      %v2855 = vadd.f32 %v2836, %v2854
      %2856 = vmatmul.bf16.gmra.mxu0 %v974
      %v2857 = vpop.f32.mrf.mxu0
      %v2858 = vadd.f32 %v2839, %v2857
      %v2859 = vpop.f32.mrf.mxu0
      %v2860 = vadd.f32 %v2841, %v2859
      %2861 = vdwg.mxu0
      %2862 = vmatpush.bf16.msra.mxu0 0
      %2863 = vmatpush.bf16.msra.mxu0 0
      %2864 = vmatpush.bf16.msra.mxu0 0
      %2865 = vmatpush.bf16.msra.mxu0 0
      %2866 = vmatpush.bf16.msra.mxu0 0
      %2867 = vmatpush.bf16.msra.mxu0 0
      %2868 = vmatpush.bf16.msra.mxu0 %v2805
      %2869 = vmatpush.bf16.msra.mxu0 %v2804
      %2870 = vmatmul.bf16.gmra.mxu0 %v1090
      %v2871 = vpop.f32.mrf.mxu0
      %v2872 = vadd.f32 %v2853, %v2871
      %v2873 = vpop.f32.mrf.mxu0
      %v2874 = vadd.f32 %v2855, %v2873
      %2875 = vmatmul.bf16.gmra.mxu0 %v1093
      %v2876 = vpop.f32.mrf.mxu0
      %v2877 = vadd.f32 %v2858, %v2876
      %v2878 = vpop.f32.mrf.mxu0
      %v2879 = vadd.f32 %v2860, %v2878
      %2880 = vdwg.mxu0
      %v2881 = vmax.f32 %v2872, 0.0
      %v2882 = vmax.f32 %v2874, 0.0
      %v2883 = vmax.f32 %v2877, 0.0
      %v2884 = vmax.f32 %v2879, 0.0
      %v2885 = vpack.c.bf16 %v2881, %v2881
      %v2886 = vpack.c.bf16 %v2882, %v2882
      %v2887 = vpack.c.bf16 %v2883, %v2883
      %v2888 = vpack.c.bf16 %v2884, %v2884
      %s2889 = scalar_lea.vmem [#allocation3], 80
      %2890 = vst.msk [vmem:[%s2889] sm:$0xf] %vm785, %v2885
      %2891 = vst.msk [vmem:[%s2889 + $0x4] sm:$0xf] %vm785, %v2886
      %2892 = vst.msk [vmem:[%s2889 + $0x8] sm:$0xf] %vm785, %v2887
      %2893 = vst.msk [vmem:[%s2889 + $0xc] sm:$0xf] %vm785, %v2888
      %v2894 = vld [vmem:[%s631] sm:$0xf]
      %v2895 = vld [vmem:[%s631 + $0x4] sm:$0xf]
      %v2896 = vld [vmem:[%s631 + $0x8] sm:$0xf]
      %v2897 = vld [vmem:[%s631 + $0xc] sm:$0xf]
      %2898 = vst.msk [vmem:[#allocation5] sm:$0xf] %vm785, %v2894
      %2899 = vst.msk [vmem:[#allocation5 + $0x4] sm:$0xf] %vm785, %v2895
      %2900 = vst.msk [vmem:[#allocation5 + $0x8] sm:$0xf] %vm785, %v2896
      %2901 = vst.msk [vmem:[#allocation5 + $0xc] sm:$0xf] %vm785, %v2897
      %2906 = vrot.lane.b32.xlu0 %v2894, 124
      %v2907 = vpop.permute.xlu0 %2906
      %2908 = vrot.lane.b32.xlu0 %v2895, 124
      %v2909 = vpop.permute.xlu0 %2908
      %2910 = vrot.lane.b32.xlu0 %v2896, 124
      %v2911 = vpop.permute.xlu0 %2910
      %2912 = vrot.lane.b32.xlu0 %v2897, 124
      %v2913 = vpop.permute.xlu0 %2912
      %2918 = vst.msk [vmem:[#allocation5 + $0x10] sm:$0xf] %vm785, %v2907
      %2919 = vst.msk [vmem:[#allocation5 + $0x14] sm:$0xf] %vm785, %v2909
      %2920 = vst.msk [vmem:[#allocation5 + $0x18] sm:$0xf] %vm785, %v2911
      %2921 = vst.msk [vmem:[#allocation5 + $0x1c] sm:$0xf] %vm785, %v2913
      %2922 = vrot.lane.b32.xlu0 %v2894, 120
      %v2923 = vpop.permute.xlu0 %2922
      %2924 = vrot.lane.b32.xlu0 %v2895, 120
      %v2925 = vpop.permute.xlu0 %2924
      %2926 = vrot.lane.b32.xlu0 %v2896, 120
      %v2927 = vpop.permute.xlu0 %2926
      %2928 = vrot.lane.b32.xlu0 %v2897, 120
      %v2929 = vpop.permute.xlu0 %2928
      %2934 = vst.msk [vmem:[#allocation5 + $0x20] sm:$0xf] %vm785, %v2923
      %2935 = vst.msk [vmem:[#allocation5 + $0x24] sm:$0xf] %vm785, %v2925
      %2936 = vst.msk [vmem:[#allocation5 + $0x28] sm:$0xf] %vm785, %v2927
      %2937 = vst.msk [vmem:[#allocation5 + $0x2c] sm:$0xf] %vm785, %v2929
      %v2938 = vld [vmem:[%s687] sm:$0xf]
      %v2939 = vld [vmem:[%s687 + $0x4] sm:$0xf]
      %v2940 = vld [vmem:[%s687 + $0x8] sm:$0xf]
      %v2941 = vld [vmem:[%s687 + $0xc] sm:$0xf]
      %2942 = vst.msk [vmem:[#allocation5 + $0x30] sm:$0xf] %vm785, %v2938
      %2943 = vst.msk [vmem:[#allocation5 + $0x34] sm:$0xf] %vm785, %v2939
      %2944 = vst.msk [vmem:[#allocation5 + $0x38] sm:$0xf] %vm785, %v2940
      %2945 = vst.msk [vmem:[#allocation5 + $0x3c] sm:$0xf] %vm785, %v2941
      %2950 = vrot.lane.b32.xlu0 %v2938, 124
      %v2951 = vpop.permute.xlu0 %2950
      %2952 = vrot.lane.b32.xlu0 %v2939, 124
      %v2953 = vpop.permute.xlu0 %2952
      %2954 = vrot.lane.b32.xlu0 %v2940, 124
      %v2955 = vpop.permute.xlu0 %2954
      %2956 = vrot.lane.b32.xlu0 %v2941, 124
      %v2957 = vpop.permute.xlu0 %2956
      %2962 = vst.msk [vmem:[#allocation5 + $0x40] sm:$0xf] %vm785, %v2951
      %2963 = vst.msk [vmem:[#allocation5 + $0x44] sm:$0xf] %vm785, %v2953
      %2964 = vst.msk [vmem:[#allocation5 + $0x48] sm:$0xf] %vm785, %v2955
      %2965 = vst.msk [vmem:[#allocation5 + $0x4c] sm:$0xf] %vm785, %v2957
      %2966 = vrot.lane.b32.xlu0 %v2938, 120
      %v2967 = vpop.permute.xlu0 %2966
      %2968 = vrot.lane.b32.xlu0 %v2939, 120
      %v2969 = vpop.permute.xlu0 %2968
      %2970 = vrot.lane.b32.xlu0 %v2940, 120
      %v2971 = vpop.permute.xlu0 %2970
      %2972 = vrot.lane.b32.xlu0 %v2941, 120
      %v2973 = vpop.permute.xlu0 %2972
      %2978 = vst.msk [vmem:[#allocation5 + $0x50] sm:$0xf] %vm785, %v2967
      %2979 = vst.msk [vmem:[#allocation5 + $0x54] sm:$0xf] %vm785, %v2969
      %2980 = vst.msk [vmem:[#allocation5 + $0x58] sm:$0xf] %vm785, %v2971
      %2981 = vst.msk [vmem:[#allocation5 + $0x5c] sm:$0xf] %vm785, %v2973
      %v2982 = vld [vmem:[%s743] sm:$0xf]
      %v2983 = vld [vmem:[%s743 + $0x4] sm:$0xf]
      %v2984 = vld [vmem:[%s743 + $0x8] sm:$0xf]
      %v2985 = vld [vmem:[%s743 + $0xc] sm:$0xf]
      %2986 = vst.msk [vmem:[#allocation5 + $0x60] sm:$0xf] %vm785, %v2982
      %2987 = vst.msk [vmem:[#allocation5 + $0x64] sm:$0xf] %vm785, %v2983
      %2988 = vst.msk [vmem:[#allocation5 + $0x68] sm:$0xf] %vm785, %v2984
      %2989 = vst.msk [vmem:[#allocation5 + $0x6c] sm:$0xf] %vm785, %v2985
      %2994 = vrot.lane.b32.xlu0 %v2982, 124
      %v2995 = vpop.permute.xlu0 %2994
      %2996 = vrot.lane.b32.xlu0 %v2983, 124
      %v2997 = vpop.permute.xlu0 %2996
      %2998 = vrot.lane.b32.xlu0 %v2984, 124
      %v2999 = vpop.permute.xlu0 %2998
      %3000 = vrot.lane.b32.xlu0 %v2985, 124
      %v3001 = vpop.permute.xlu0 %3000
      %3006 = vst.msk [vmem:[#allocation5 + $0x70] sm:$0xf] %vm785, %v2995
      %3007 = vst.msk [vmem:[#allocation5 + $0x74] sm:$0xf] %vm785, %v2997
      %3008 = vst.msk [vmem:[#allocation5 + $0x78] sm:$0xf] %vm785, %v2999
      %3009 = vst.msk [vmem:[#allocation5 + $0x7c] sm:$0xf] %vm785, %v3001
      %3010 = vrot.lane.b32.xlu0 %v2982, 120
      %v3011 = vpop.permute.xlu0 %3010
      %3012 = vrot.lane.b32.xlu0 %v2983, 120
      %v3013 = vpop.permute.xlu0 %3012
      %3014 = vrot.lane.b32.xlu0 %v2984, 120
      %v3015 = vpop.permute.xlu0 %3014
      %3016 = vrot.lane.b32.xlu0 %v2985, 120
      %v3017 = vpop.permute.xlu0 %3016
      %3022 = vst.msk [vmem:[#allocation5 + $0x80] sm:$0xf] %vm785, %v3011
      %3023 = vst.msk [vmem:[#allocation5 + $0x84] sm:$0xf] %vm785, %v3013
      %3024 = vst.msk [vmem:[#allocation5 + $0x88] sm:$0xf] %vm785, %v3015
      %3025 = vst.msk [vmem:[#allocation5 + $0x8c] sm:$0xf] %vm785, %v3017
      %v3026 = vld [vmem:[#allocation5] sm:$0xf]
      %v3027 = vld [vmem:[#allocation5 + $0x4] sm:$0xf]
      %v3028 = vld [vmem:[#allocation5 + $0x8] sm:$0xf]
      %v3029 = vld [vmem:[#allocation5 + $0xc] sm:$0xf]
      %v3030 = vld [vmem:[#allocation5 + $0x10] sm:$0xf]
      %v3031 = vld [vmem:[#allocation5 + $0x14] sm:$0xf]
      %v3032 = vld [vmem:[#allocation5 + $0x18] sm:$0xf]
      %v3033 = vld [vmem:[#allocation5 + $0x1c] sm:$0xf]
      %v3034 = vld [vmem:[#allocation5 + $0x20] sm:$0xf]
      %v3035 = vld [vmem:[#allocation5 + $0x24] sm:$0xf]
      %v3036 = vld [vmem:[#allocation5 + $0x28] sm:$0xf]
      %v3037 = vld [vmem:[#allocation5 + $0x2c] sm:$0xf]
      %v3038 = vld [vmem:[#allocation5 + $0x30] sm:$0xf]
      %v3039 = vld [vmem:[#allocation5 + $0x34] sm:$0xf]
      %v3040 = vld [vmem:[#allocation5 + $0x38] sm:$0xf]
      %v3041 = vld [vmem:[#allocation5 + $0x3c] sm:$0xf]
      %v3042 = vld [vmem:[#allocation5 + $0x40] sm:$0xf]
      %v3043 = vld [vmem:[#allocation5 + $0x44] sm:$0xf]
      %v3044 = vld [vmem:[#allocation5 + $0x48] sm:$0xf]
      %v3045 = vld [vmem:[#allocation5 + $0x4c] sm:$0xf]
      %v3046 = vld [vmem:[#allocation5 + $0x50] sm:$0xf]
      %v3047 = vld [vmem:[#allocation5 + $0x54] sm:$0xf]
      %v3048 = vld [vmem:[#allocation5 + $0x58] sm:$0xf]
      %v3049 = vld [vmem:[#allocation5 + $0x5c] sm:$0xf]
      %v3050 = vld [vmem:[#allocation5 + $0x60] sm:$0xf]
      %v3051 = vld [vmem:[#allocation5 + $0x64] sm:$0xf]
      %v3052 = vld [vmem:[#allocation5 + $0x68] sm:$0xf]
      %v3053 = vld [vmem:[#allocation5 + $0x6c] sm:$0xf]
      %v3054 = vld [vmem:[#allocation5 + $0x70] sm:$0xf]
      %v3055 = vld [vmem:[#allocation5 + $0x74] sm:$0xf]
      %v3056 = vld [vmem:[#allocation5 + $0x78] sm:$0xf]
      %v3057 = vld [vmem:[#allocation5 + $0x7c] sm:$0xf]
      %v3058 = vld [vmem:[#allocation5 + $0x80] sm:$0xf]
      %v3059 = vld [vmem:[#allocation5 + $0x84] sm:$0xf]
      %v3060 = vld [vmem:[#allocation5 + $0x88] sm:$0xf]
      %v3061 = vld [vmem:[#allocation5 + $0x8c] sm:$0xf]
      %v3098 = vunpack.c.l.b16 %v3026
      %v3099 = vunpack.c.l.b16 %v3027
      %v3100 = vunpack.c.l.b16 %v3028
      %v3101 = vunpack.c.l.b16 %v3029
      %v3102 = vunpack.c.l.b16 %v3030
      %v3103 = vunpack.c.l.b16 %v3031
      %v3104 = vunpack.c.l.b16 %v3032
      %v3105 = vunpack.c.l.b16 %v3033
      %v3106 = vunpack.c.l.b16 %v3034
      %v3107 = vunpack.c.l.b16 %v3035
      %v3108 = vunpack.c.l.b16 %v3036
      %v3109 = vunpack.c.l.b16 %v3037
      %v3110 = vunpack.c.l.b16 %v3038
      %v3111 = vunpack.c.l.b16 %v3039
      %v3112 = vunpack.c.l.b16 %v3040
      %v3113 = vunpack.c.l.b16 %v3041
      %v3114 = vunpack.c.l.b16 %v3042
      %v3115 = vunpack.c.l.b16 %v3043
      %v3116 = vunpack.c.l.b16 %v3044
      %v3117 = vunpack.c.l.b16 %v3045
      %v3118 = vunpack.c.l.b16 %v3046
      %v3119 = vunpack.c.l.b16 %v3047
      %v3120 = vunpack.c.l.b16 %v3048
      %v3121 = vunpack.c.l.b16 %v3049
      %v3122 = vunpack.c.l.b16 %v3050
      %v3123 = vunpack.c.l.b16 %v3051
      %v3124 = vunpack.c.l.b16 %v3052
      %v3125 = vunpack.c.l.b16 %v3053
      %v3126 = vunpack.c.l.b16 %v3054
      %v3127 = vunpack.c.l.b16 %v3055
      %v3128 = vunpack.c.l.b16 %v3056
      %v3129 = vunpack.c.l.b16 %v3057
      %v3130 = vunpack.c.l.b16 %v3058
      %v3131 = vunpack.c.l.b16 %v3059
      %v3132 = vunpack.c.l.b16 %v3060
      %v3133 = vunpack.c.l.b16 %v3061
      %v3134 = vpack.c.b16 %v3099, %v3098
      %v3135 = vpack.c.b16 %v3101, %v3100
      %v3136 = vpack.c.b16 %v3103, %v3102
      %v3137 = vpack.c.b16 %v3105, %v3104
      %v3138 = vpack.c.b16 %v3107, %v3106
      %v3139 = vpack.c.b16 %v3109, %v3108
      %v3140 = vpack.c.b16 %v3111, %v3110
      %v3141 = vpack.c.b16 %v3113, %v3112
      %v3142 = vpack.c.b16 %v3115, %v3114
      %v3143 = vpack.c.b16 %v3117, %v3116
      %v3144 = vpack.c.b16 %v3119, %v3118
      %v3145 = vpack.c.b16 %v3121, %v3120
      %v3146 = vpack.c.b16 %v3123, %v3122
      %v3147 = vpack.c.b16 %v3125, %v3124
      %v3148 = vpack.c.b16 %v3127, %v3126
      %v3149 = vpack.c.b16 %v3129, %v3128
      %v3150 = vpack.c.b16 %v3131, %v3130
      %v3151 = vpack.c.b16 %v3133, %v3132
      %3170 = vmatpush.bf16.msra.mxu0 %v3141
      %3171 = vmatpush.bf16.msra.mxu0 %v3140
      %3172 = vmatpush.bf16.msra.mxu0 %v3139
      %3173 = vmatpush.bf16.msra.mxu0 %v3138
      %3174 = vmatpush.bf16.msra.mxu0 %v3137
      %3175 = vmatpush.bf16.msra.mxu0 %v3136
      %3176 = vmatpush.bf16.msra.mxu0 %v3135
      %3177 = vmatpush.bf16.msra.mxu0 %v3134
      %3178 = vmatmul.bf16.gmra.mxu0 %v970
      %v3179 = vpop.f32.mrf.mxu0
      %v3180 = vadd.f32 %v764, %v3179
      %v3181 = vpop.f32.mrf.mxu0
      %v3182 = vadd.f32 %v769, %v3181
      %3183 = vmatmul.bf16.gmra.mxu0 %v973
      %v3184 = vpop.f32.mrf.mxu0
      %v3185 = vadd.f32 %v774, %v3184
      %v3186 = vpop.f32.mrf.mxu0
      %v3187 = vadd.f32 %v779, %v3186
      %3188 = vdwg.mxu0
      %3189 = vmatpush.bf16.msra.mxu0 %v3149
      %3190 = vmatpush.bf16.msra.mxu0 %v3148
      %3191 = vmatpush.bf16.msra.mxu0 %v3147
      %3192 = vmatpush.bf16.msra.mxu0 %v3146
      %3193 = vmatpush.bf16.msra.mxu0 %v3145
      %3194 = vmatpush.bf16.msra.mxu0 %v3144
      %3195 = vmatpush.bf16.msra.mxu0 %v3143
      %3196 = vmatpush.bf16.msra.mxu0 %v3142
      %3197 = vmatmul.bf16.gmra.mxu0 %v971
      %v3198 = vpop.f32.mrf.mxu0
      %v3199 = vadd.f32 %v3180, %v3198
      %v3200 = vpop.f32.mrf.mxu0
      %v3201 = vadd.f32 %v3182, %v3200
      %3202 = vmatmul.bf16.gmra.mxu0 %v974
      %v3203 = vpop.f32.mrf.mxu0
      %v3204 = vadd.f32 %v3185, %v3203
      %v3205 = vpop.f32.mrf.mxu0
      %v3206 = vadd.f32 %v3187, %v3205
      %3207 = vdwg.mxu0
      %3208 = vmatpush.bf16.msra.mxu0 0
      %3209 = vmatpush.bf16.msra.mxu0 0
      %3210 = vmatpush.bf16.msra.mxu0 0
      %3211 = vmatpush.bf16.msra.mxu0 0
      %3212 = vmatpush.bf16.msra.mxu0 0
      %3213 = vmatpush.bf16.msra.mxu0 0
      %3214 = vmatpush.bf16.msra.mxu0 %v3151
      %3215 = vmatpush.bf16.msra.mxu0 %v3150
      %3216 = vmatmul.bf16.gmra.mxu0 %v1090
      %v3217 = vpop.f32.mrf.mxu0
      %v3218 = vadd.f32 %v3199, %v3217
      %v3219 = vpop.f32.mrf.mxu0
      %v3220 = vadd.f32 %v3201, %v3219
      %3221 = vmatmul.bf16.gmra.mxu0 %v1093
      %v3222 = vpop.f32.mrf.mxu0
      %v3223 = vadd.f32 %v3204, %v3222
      %v3224 = vpop.f32.mrf.mxu0
      %v3225 = vadd.f32 %v3206, %v3224
      %3226 = vdwg.mxu0
      %v3227 = vmax.f32 %v3218, 0.0
      %v3228 = vmax.f32 %v3220, 0.0
      %v3229 = vmax.f32 %v3223, 0.0
      %v3230 = vmax.f32 %v3225, 0.0
      %v3231 = vpack.c.bf16 %v3227, %v3227
      %v3232 = vpack.c.bf16 %v3228, %v3228
      %v3233 = vpack.c.bf16 %v3229, %v3229
      %v3234 = vpack.c.bf16 %v3230, %v3230
      %s3235 = scalar_lea.vmem [#allocation3], 96
      %3236 = vst.msk [vmem:[%s3235] sm:$0xf] %vm785, %v3231
      %3237 = vst.msk [vmem:[%s3235 + $0x4] sm:$0xf] %vm785, %v3232
      %3238 = vst.msk [vmem:[%s3235 + $0x8] sm:$0xf] %vm785, %v3233
      %3239 = vst.msk [vmem:[%s3235 + $0xc] sm:$0xf] %vm785, %v3234
      %s3240 = scalar_lea.vmem %s2, 48
      %v3241 = vld [vmem:[%s3240] sm:$0xff]
      %v3242 = vld [vmem:[%s3240 + $0x8] sm:$0xf]
      %v3243 = vld [vmem:[%s3240 + $0xc] sm:$0xff]
      %v3244 = vld [vmem:[%s3240 + $0x14] sm:$0xf]
      %v3245 = vld [vmem:[%s3240 + $0x18] sm:$0xff]
      %v3246 = vld [vmem:[%s3240 + $0x20] sm:$0xf]
      %v3247 = vld [vmem:[%s3240 + $0x24] sm:$0xff]
      %v3248 = vld [vmem:[%s3240 + $0x2c] sm:$0xf]
      %s3249 = scalar_lea.vmem %s3, 64
      %v3250 = vld [vmem:[%s3249] sm:$0xff]
      %v3251 = vld [vmem:[%s3249 + $0x8] sm:$0xff]
      %v3252 = vld [vmem:[%s3249 + $0x10] sm:$0xff]
      %v3253 = vld [vmem:[%s3249 + $0x18] sm:$0xff]
      %3255 = vset.pattern.permute.xlu0 0
      %3256 = vperm.xlu0 %3255, %v3250
      %v3257 = vpop.permute.xlu0 %3256
      %3260 = vset.pattern.permute.xlu0 0
      %3261 = vperm.xlu0 %3260, %v3251
      %v3262 = vpop.permute.xlu0 %3261
      %3265 = vset.pattern.permute.xlu0 0
      %3266 = vperm.xlu0 %3265, %v3252
      %v3267 = vpop.permute.xlu0 %3266
      %3270 = vset.pattern.permute.xlu0 0
      %3271 = vperm.xlu0 %3270, %v3253
      %v3272 = vpop.permute.xlu0 %3271
      %v3274 = vld [vmem:[#allocation3] sm:$0xf]
      %v3275 = vld [vmem:[#allocation3 + $0x4] sm:$0xf]
      %v3276 = vld [vmem:[#allocation3 + $0x8] sm:$0xf]
      %v3277 = vld [vmem:[#allocation3 + $0xc] sm:$0xf]
      %vm3278 = vcmask 158720
      %3279 = vst.msk [vmem:[#allocation5] sm:$0xf] %vm3278, %v3274
      %3280 = vst.msk [vmem:[#allocation5 + $0x4] sm:$0xf] %vm3278, %v3275
      %3281 = vst.msk [vmem:[#allocation5 + $0x8] sm:$0xf] %vm3278, %v3276
      %3282 = vst.msk [vmem:[#allocation5 + $0xc] sm:$0xf] %vm3278, %v3277
      %3287 = vrot.lane.b32.xlu0 %v3274, 124
      %v3288 = vpop.permute.xlu0 %3287
      %3289 = vrot.lane.b32.xlu0 %v3275, 124
      %v3290 = vpop.permute.xlu0 %3289
      %3291 = vrot.lane.b32.xlu0 %v3276, 124
      %v3292 = vpop.permute.xlu0 %3291
      %3293 = vrot.lane.b32.xlu0 %v3277, 124
      %v3294 = vpop.permute.xlu0 %3293
      %3299 = vst.msk [vmem:[#allocation5 + $0x10] sm:$0xf] %vm3278, %v3288
      %3300 = vst.msk [vmem:[#allocation5 + $0x14] sm:$0xf] %vm3278, %v3290
      %3301 = vst.msk [vmem:[#allocation5 + $0x18] sm:$0xf] %vm3278, %v3292
      %3302 = vst.msk [vmem:[#allocation5 + $0x1c] sm:$0xf] %vm3278, %v3294
      %3303 = vrot.lane.b32.xlu0 %v3274, 120
      %v3304 = vpop.permute.xlu0 %3303
      %3305 = vrot.lane.b32.xlu0 %v3275, 120
      %v3306 = vpop.permute.xlu0 %3305
      %3307 = vrot.lane.b32.xlu0 %v3276, 120
      %v3308 = vpop.permute.xlu0 %3307
      %3309 = vrot.lane.b32.xlu0 %v3277, 120
      %v3310 = vpop.permute.xlu0 %3309
      %3315 = vst.msk [vmem:[#allocation5 + $0x20] sm:$0xf] %vm3278, %v3304
      %3316 = vst.msk [vmem:[#allocation5 + $0x24] sm:$0xf] %vm3278, %v3306
      %3317 = vst.msk [vmem:[#allocation5 + $0x28] sm:$0xf] %vm3278, %v3308
      %3318 = vst.msk [vmem:[#allocation5 + $0x2c] sm:$0xf] %vm3278, %v3310
      %v3319 = vld [vmem:[%s1505] sm:$0xf]
      %v3320 = vld [vmem:[%s1505 + $0x4] sm:$0xf]
      %v3321 = vld [vmem:[%s1505 + $0x8] sm:$0xf]
      %v3322 = vld [vmem:[%s1505 + $0xc] sm:$0xf]
      %3323 = vst.msk [vmem:[#allocation5 + $0x30] sm:$0xf] %vm3278, %v3319
      %3324 = vst.msk [vmem:[#allocation5 + $0x34] sm:$0xf] %vm3278, %v3320
      %3325 = vst.msk [vmem:[#allocation5 + $0x38] sm:$0xf] %vm3278, %v3321
      %3326 = vst.msk [vmem:[#allocation5 + $0x3c] sm:$0xf] %vm3278, %v3322
      %3331 = vrot.lane.b32.xlu0 %v3319, 124
      %v3332 = vpop.permute.xlu0 %3331
      %3333 = vrot.lane.b32.xlu0 %v3320, 124
      %v3334 = vpop.permute.xlu0 %3333
      %3335 = vrot.lane.b32.xlu0 %v3321, 124
      %v3336 = vpop.permute.xlu0 %3335
      %3337 = vrot.lane.b32.xlu0 %v3322, 124
      %v3338 = vpop.permute.xlu0 %3337
      %3343 = vst.msk [vmem:[#allocation5 + $0x40] sm:$0xf] %vm3278, %v3332
      %3344 = vst.msk [vmem:[#allocation5 + $0x44] sm:$0xf] %vm3278, %v3334
      %3345 = vst.msk [vmem:[#allocation5 + $0x48] sm:$0xf] %vm3278, %v3336
      %3346 = vst.msk [vmem:[#allocation5 + $0x4c] sm:$0xf] %vm3278, %v3338
      %3347 = vrot.lane.b32.xlu0 %v3319, 120
      %v3348 = vpop.permute.xlu0 %3347
      %3349 = vrot.lane.b32.xlu0 %v3320, 120
      %v3350 = vpop.permute.xlu0 %3349
      %3351 = vrot.lane.b32.xlu0 %v3321, 120
      %v3352 = vpop.permute.xlu0 %3351
      %3353 = vrot.lane.b32.xlu0 %v3322, 120
      %v3354 = vpop.permute.xlu0 %3353
      %3359 = vst.msk [vmem:[#allocation5 + $0x50] sm:$0xf] %vm3278, %v3348
      %3360 = vst.msk [vmem:[#allocation5 + $0x54] sm:$0xf] %vm3278, %v3350
      %3361 = vst.msk [vmem:[#allocation5 + $0x58] sm:$0xf] %vm3278, %v3352
      %3362 = vst.msk [vmem:[#allocation5 + $0x5c] sm:$0xf] %vm3278, %v3354
      %v3363 = vld [vmem:[%s1851] sm:$0xf]
      %v3364 = vld [vmem:[%s1851 + $0x4] sm:$0xf]
      %v3365 = vld [vmem:[%s1851 + $0x8] sm:$0xf]
      %v3366 = vld [vmem:[%s1851 + $0xc] sm:$0xf]
      %3367 = vst.msk [vmem:[#allocation5 + $0x60] sm:$0xf] %vm3278, %v3363
      %3368 = vst.msk [vmem:[#allocation5 + $0x64] sm:$0xf] %vm3278, %v3364
      %3369 = vst.msk [vmem:[#allocation5 + $0x68] sm:$0xf] %vm3278, %v3365
      %3370 = vst.msk [vmem:[#allocation5 + $0x6c] sm:$0xf] %vm3278, %v3366
      %3375 = vrot.lane.b32.xlu0 %v3363, 124
      %v3376 = vpop.permute.xlu0 %3375
      %3377 = vrot.lane.b32.xlu0 %v3364, 124
      %v3378 = vpop.permute.xlu0 %3377
      %3379 = vrot.lane.b32.xlu0 %v3365, 124
      %v3380 = vpop.permute.xlu0 %3379
      %3381 = vrot.lane.b32.xlu0 %v3366, 124
      %v3382 = vpop.permute.xlu0 %3381
      %3387 = vst.msk [vmem:[#allocation5 + $0x70] sm:$0xf] %vm3278, %v3376
      %3388 = vst.msk [vmem:[#allocation5 + $0x74] sm:$0xf] %vm3278, %v3378
      %3389 = vst.msk [vmem:[#allocation5 + $0x78] sm:$0xf] %vm3278, %v3380
      %3390 = vst.msk [vmem:[#allocation5 + $0x7c] sm:$0xf] %vm3278, %v3382
      %3391 = vrot.lane.b32.xlu0 %v3363, 120
      %v3392 = vpop.permute.xlu0 %3391
      %3393 = vrot.lane.b32.xlu0 %v3364, 120
      %v3394 = vpop.permute.xlu0 %3393
      %3395 = vrot.lane.b32.xlu0 %v3365, 120
      %v3396 = vpop.permute.xlu0 %3395
      %3397 = vrot.lane.b32.xlu0 %v3366, 120
      %v3398 = vpop.permute.xlu0 %3397
      %3403 = vst.msk [vmem:[#allocation5 + $0x80] sm:$0xf] %vm3278, %v3392
      %3404 = vst.msk [vmem:[#allocation5 + $0x84] sm:$0xf] %vm3278, %v3394
      %3405 = vst.msk [vmem:[#allocation5 + $0x88] sm:$0xf] %vm3278, %v3396
      %3406 = vst.msk [vmem:[#allocation5 + $0x8c] sm:$0xf] %vm3278, %v3398
      %v3407 = vld [vmem:[#allocation5] sm:$0xf]
      %v3408 = vld [vmem:[#allocation5 + $0x4] sm:$0xf]
      %v3409 = vld [vmem:[#allocation5 + $0x8] sm:$0xf]
      %v3410 = vld [vmem:[#allocation5 + $0xc] sm:$0xf]
      %v3411 = vld [vmem:[#allocation5 + $0x10] sm:$0xf]
      %v3412 = vld [vmem:[#allocation5 + $0x14] sm:$0xf]
      %v3413 = vld [vmem:[#allocation5 + $0x18] sm:$0xf]
      %v3414 = vld [vmem:[#allocation5 + $0x1c] sm:$0xf]
      %v3415 = vld [vmem:[#allocation5 + $0x20] sm:$0xf]
      %v3416 = vld [vmem:[#allocation5 + $0x24] sm:$0xf]
      %v3417 = vld [vmem:[#allocation5 + $0x28] sm:$0xf]
      %v3418 = vld [vmem:[#allocation5 + $0x2c] sm:$0xf]
      %v3419 = vld [vmem:[#allocation5 + $0x30] sm:$0xf]
      %v3420 = vld [vmem:[#allocation5 + $0x34] sm:$0xf]
      %v3421 = vld [vmem:[#allocation5 + $0x38] sm:$0xf]
      %v3422 = vld [vmem:[#allocation5 + $0x3c] sm:$0xf]
      %v3423 = vld [vmem:[#allocation5 + $0x40] sm:$0xf]
      %v3424 = vld [vmem:[#allocation5 + $0x44] sm:$0xf]
      %v3425 = vld [vmem:[#allocation5 + $0x48] sm:$0xf]
      %v3426 = vld [vmem:[#allocation5 + $0x4c] sm:$0xf]
      %v3427 = vld [vmem:[#allocation5 + $0x50] sm:$0xf]
      %v3428 = vld [vmem:[#allocation5 + $0x54] sm:$0xf]
      %v3429 = vld [vmem:[#allocation5 + $0x58] sm:$0xf]
      %v3430 = vld [vmem:[#allocation5 + $0x5c] sm:$0xf]
      %v3431 = vld [vmem:[#allocation5 + $0x60] sm:$0xf]
      %v3432 = vld [vmem:[#allocation5 + $0x64] sm:$0xf]
      %v3433 = vld [vmem:[#allocation5 + $0x68] sm:$0xf]
      %v3434 = vld [vmem:[#allocation5 + $0x6c] sm:$0xf]
      %v3435 = vld [vmem:[#allocation5 + $0x70] sm:$0xf]
      %v3436 = vld [vmem:[#allocation5 + $0x74] sm:$0xf]
      %v3437 = vld [vmem:[#allocation5 + $0x78] sm:$0xf]
      %v3438 = vld [vmem:[#allocation5 + $0x7c] sm:$0xf]
      %v3439 = vld [vmem:[#allocation5 + $0x80] sm:$0xf]
      %v3440 = vld [vmem:[#allocation5 + $0x84] sm:$0xf]
      %v3441 = vld [vmem:[#allocation5 + $0x88] sm:$0xf]
      %v3442 = vld [vmem:[#allocation5 + $0x8c] sm:$0xf]
      %v3451 = vunpack.c.l.b16 %v3241
      %v3452 = vunpack.c.h.b16 %v3241
      %v3453 = vunpack.c.l.b16 %v3242
      %v3454 = vunpack.c.l.b16 %v3243
      %v3455 = vunpack.c.h.b16 %v3243
      %v3456 = vunpack.c.l.b16 %v3244
      %v3457 = vunpack.c.l.b16 %v3245
      %v3458 = vunpack.c.h.b16 %v3245
      %v3459 = vunpack.c.l.b16 %v3246
      %v3460 = vunpack.c.l.b16 %v3247
      %v3461 = vunpack.c.h.b16 %v3247
      %v3462 = vunpack.c.l.b16 %v3248
      %v3463 = vpack.c.b16 %v3454, %v3451
      %v3464 = vpack.c.b16 %v3455, %v3452
      %v3465 = vpack.c.b16 %v3456, %v3453
      %v3466 = vpack.c.b16 %v3460, %v3457
      %v3467 = vpack.c.b16 %v3461, %v3458
      %v3468 = vpack.c.b16 %v3462, %v3459
      %v3509 = vunpack.c.l.b16 %v3407
      %v3510 = vunpack.c.l.b16 %v3408
      %v3511 = vunpack.c.l.b16 %v3409
      %v3512 = vunpack.c.l.b16 %v3410
      %v3513 = vunpack.c.l.b16 %v3411
      %v3514 = vunpack.c.l.b16 %v3412
      %v3515 = vunpack.c.l.b16 %v3413
      %v3516 = vunpack.c.l.b16 %v3414
      %v3517 = vunpack.c.l.b16 %v3415
      %v3518 = vunpack.c.l.b16 %v3416
      %v3519 = vunpack.c.l.b16 %v3417
      %v3520 = vunpack.c.l.b16 %v3418
      %v3521 = vunpack.c.l.b16 %v3419
      %v3522 = vunpack.c.l.b16 %v3420
      %v3523 = vunpack.c.l.b16 %v3421
      %v3524 = vunpack.c.l.b16 %v3422
      %v3525 = vunpack.c.l.b16 %v3423
      %v3526 = vunpack.c.l.b16 %v3424
      %v3527 = vunpack.c.l.b16 %v3425
      %v3528 = vunpack.c.l.b16 %v3426
      %v3529 = vunpack.c.l.b16 %v3427
      %v3530 = vunpack.c.l.b16 %v3428
      %v3531 = vunpack.c.l.b16 %v3429
      %v3532 = vunpack.c.l.b16 %v3430
      %v3533 = vunpack.c.l.b16 %v3431
      %v3534 = vunpack.c.l.b16 %v3432
      %v3535 = vunpack.c.l.b16 %v3433
      %v3536 = vunpack.c.l.b16 %v3434
      %v3537 = vunpack.c.l.b16 %v3435
      %v3538 = vunpack.c.l.b16 %v3436
      %v3539 = vunpack.c.l.b16 %v3437
      %v3540 = vunpack.c.l.b16 %v3438
      %v3541 = vunpack.c.l.b16 %v3439
      %v3542 = vunpack.c.l.b16 %v3440
      %v3543 = vunpack.c.l.b16 %v3441
      %v3544 = vunpack.c.l.b16 %v3442
      %v3545 = vpack.c.b16 %v3510, %v3509
      %v3546 = vpack.c.b16 %v3512, %v3511
      %v3547 = vpack.c.b16 %v3514, %v3513
      %v3548 = vpack.c.b16 %v3516, %v3515
      %v3549 = vpack.c.b16 %v3518, %v3517
      %v3550 = vpack.c.b16 %v3520, %v3519
      %v3551 = vpack.c.b16 %v3522, %v3521
      %v3552 = vpack.c.b16 %v3524, %v3523
      %v3553 = vpack.c.b16 %v3526, %v3525
      %v3554 = vpack.c.b16 %v3528, %v3527
      %v3555 = vpack.c.b16 %v3530, %v3529
      %v3556 = vpack.c.b16 %v3532, %v3531
      %v3557 = vpack.c.b16 %v3534, %v3533
      %v3558 = vpack.c.b16 %v3536, %v3535
      %v3559 = vpack.c.b16 %v3538, %v3537
      %v3560 = vpack.c.b16 %v3540, %v3539
      %v3561 = vpack.c.b16 %v3542, %v3541
      %v3562 = vpack.c.b16 %v3544, %v3543
      %v3582 = vsel %vm1088, %v3465, 0
      %v3585 = vsel %vm1088, %v3468, 0
      %3587 = vmatpush.bf16.msra.mxu0 %v3552
      %3588 = vmatpush.bf16.msra.mxu0 %v3551
      %3589 = vmatpush.bf16.msra.mxu0 %v3550
      %3590 = vmatpush.bf16.msra.mxu0 %v3549
      %3591 = vmatpush.bf16.msra.mxu0 %v3548
      %3592 = vmatpush.bf16.msra.mxu0 %v3547
      %3593 = vmatpush.bf16.msra.mxu0 %v3546
      %3594 = vmatpush.bf16.msra.mxu0 %v3545
      %3595 = vmatmul.bf16.gmra.mxu0 %v3463
      %v3596 = vpop.f32.mrf.mxu0
      %v3597 = vadd.f32 %v3257, %v3596
      %v3598 = vpop.f32.mrf.mxu0
      %v3599 = vadd.f32 %v3262, %v3598
      %3600 = vmatmul.bf16.gmra.mxu0 %v3466
      %v3601 = vpop.f32.mrf.mxu0
      %v3602 = vadd.f32 %v3267, %v3601
      %v3603 = vpop.f32.mrf.mxu0
      %v3604 = vadd.f32 %v3272, %v3603
      %3605 = vdwg.mxu0
      %3606 = vmatpush.bf16.msra.mxu0 %v3560
      %3607 = vmatpush.bf16.msra.mxu0 %v3559
      %3608 = vmatpush.bf16.msra.mxu0 %v3558
      %3609 = vmatpush.bf16.msra.mxu0 %v3557
      %3610 = vmatpush.bf16.msra.mxu0 %v3556
      %3611 = vmatpush.bf16.msra.mxu0 %v3555
      %3612 = vmatpush.bf16.msra.mxu0 %v3554
      %3613 = vmatpush.bf16.msra.mxu0 %v3553
      %3614 = vmatmul.bf16.gmra.mxu0 %v3464
      %v3615 = vpop.f32.mrf.mxu0
      %v3616 = vadd.f32 %v3597, %v3615
      %v3617 = vpop.f32.mrf.mxu0
      %v3618 = vadd.f32 %v3599, %v3617
      %3619 = vmatmul.bf16.gmra.mxu0 %v3467
      %v3620 = vpop.f32.mrf.mxu0
      %v3621 = vadd.f32 %v3602, %v3620
      %v3622 = vpop.f32.mrf.mxu0
      %v3623 = vadd.f32 %v3604, %v3622
      %3624 = vdwg.mxu0
      %3625 = vmatpush.bf16.msra.mxu0 0
      %3626 = vmatpush.bf16.msra.mxu0 0
      %3627 = vmatpush.bf16.msra.mxu0 0
      %3628 = vmatpush.bf16.msra.mxu0 0
      %3629 = vmatpush.bf16.msra.mxu0 0
      %3630 = vmatpush.bf16.msra.mxu0 0
      %3631 = vmatpush.bf16.msra.mxu0 %v3562
      %3632 = vmatpush.bf16.msra.mxu0 %v3561
      %3633 = vmatmul.bf16.gmra.mxu0 %v3582
      %v3634 = vpop.f32.mrf.mxu0
      %v3635 = vadd.f32 %v3616, %v3634
      %v3636 = vpop.f32.mrf.mxu0
      %v3637 = vadd.f32 %v3618, %v3636
      %3638 = vmatmul.bf16.gmra.mxu0 %v3585
      %v3639 = vpop.f32.mrf.mxu0
      %v3640 = vadd.f32 %v3621, %v3639
      %v3641 = vpop.f32.mrf.mxu0
      %v3642 = vadd.f32 %v3623, %v3641
      %3643 = vdwg.mxu0
      %v3644 = vmax.f32 %v3635, 0.0
      %v3645 = vmax.f32 %v3637, 0.0
      %v3646 = vmax.f32 %v3640, 0.0
      %v3647 = vmax.f32 %v3642, 0.0
      %v3648 = vpack.c.bf16 %v3644, %v3644
      %v3649 = vpack.c.bf16 %v3645, %v3645
      %v3650 = vpack.c.bf16 %v3646, %v3646
      %v3651 = vpack.c.bf16 %v3647, %v3647
      %3652 = vst.msk [vmem:[#allocation4] sm:$0xf] %vm3278, %v3648
      %3653 = vst.msk [vmem:[#allocation4 + $0x4] sm:$0xf] %vm3278, %v3649
      %3654 = vst.msk [vmem:[#allocation4 + $0x8] sm:$0xf] %vm3278, %v3650
      %3655 = vst.msk [vmem:[#allocation4 + $0xc] sm:$0xf] %vm3278, %v3651
      %v3656 = vld [vmem:[%s1505] sm:$0xf]
      %v3657 = vld [vmem:[%s1505 + $0x4] sm:$0xf]
      %v3658 = vld [vmem:[%s1505 + $0x8] sm:$0xf]
      %v3659 = vld [vmem:[%s1505 + $0xc] sm:$0xf]
      %3660 = vst.msk [vmem:[#allocation5] sm:$0xf] %vm3278, %v3656
      %3661 = vst.msk [vmem:[#allocation5 + $0x4] sm:$0xf] %vm3278, %v3657
      %3662 = vst.msk [vmem:[#allocation5 + $0x8] sm:$0xf] %vm3278, %v3658
      %3663 = vst.msk [vmem:[#allocation5 + $0xc] sm:$0xf] %vm3278, %v3659
      %3668 = vrot.lane.b32.xlu0 %v3656, 124
      %v3669 = vpop.permute.xlu0 %3668
      %3670 = vrot.lane.b32.xlu0 %v3657, 124
      %v3671 = vpop.permute.xlu0 %3670
      %3672 = vrot.lane.b32.xlu0 %v3658, 124
      %v3673 = vpop.permute.xlu0 %3672
      %3674 = vrot.lane.b32.xlu0 %v3659, 124
      %v3675 = vpop.permute.xlu0 %3674
      %3680 = vst.msk [vmem:[#allocation5 + $0x10] sm:$0xf] %vm3278, %v3669
      %3681 = vst.msk [vmem:[#allocation5 + $0x14] sm:$0xf] %vm3278, %v3671
      %3682 = vst.msk [vmem:[#allocation5 + $0x18] sm:$0xf] %vm3278, %v3673
      %3683 = vst.msk [vmem:[#allocation5 + $0x1c] sm:$0xf] %vm3278, %v3675
      %3684 = vrot.lane.b32.xlu0 %v3656, 120
      %v3685 = vpop.permute.xlu0 %3684
      %3686 = vrot.lane.b32.xlu0 %v3657, 120
      %v3687 = vpop.permute.xlu0 %3686
      %3688 = vrot.lane.b32.xlu0 %v3658, 120
      %v3689 = vpop.permute.xlu0 %3688
      %3690 = vrot.lane.b32.xlu0 %v3659, 120
      %v3691 = vpop.permute.xlu0 %3690
      %3696 = vst.msk [vmem:[#allocation5 + $0x20] sm:$0xf] %vm3278, %v3685
      %3697 = vst.msk [vmem:[#allocation5 + $0x24] sm:$0xf] %vm3278, %v3687
      %3698 = vst.msk [vmem:[#allocation5 + $0x28] sm:$0xf] %vm3278, %v3689
      %3699 = vst.msk [vmem:[#allocation5 + $0x2c] sm:$0xf] %vm3278, %v3691
      %v3700 = vld [vmem:[%s1851] sm:$0xf]
      %v3701 = vld [vmem:[%s1851 + $0x4] sm:$0xf]
      %v3702 = vld [vmem:[%s1851 + $0x8] sm:$0xf]
      %v3703 = vld [vmem:[%s1851 + $0xc] sm:$0xf]
      %3704 = vst.msk [vmem:[#allocation5 + $0x30] sm:$0xf] %vm3278, %v3700
      %3705 = vst.msk [vmem:[#allocation5 + $0x34] sm:$0xf] %vm3278, %v3701
      %3706 = vst.msk [vmem:[#allocation5 + $0x38] sm:$0xf] %vm3278, %v3702
      %3707 = vst.msk [vmem:[#allocation5 + $0x3c] sm:$0xf] %vm3278, %v3703
      %3712 = vrot.lane.b32.xlu0 %v3700, 124
      %v3713 = vpop.permute.xlu0 %3712
      %3714 = vrot.lane.b32.xlu0 %v3701, 124
      %v3715 = vpop.permute.xlu0 %3714
      %3716 = vrot.lane.b32.xlu0 %v3702, 124
      %v3717 = vpop.permute.xlu0 %3716
      %3718 = vrot.lane.b32.xlu0 %v3703, 124
      %v3719 = vpop.permute.xlu0 %3718
      %3724 = vst.msk [vmem:[#allocation5 + $0x40] sm:$0xf] %vm3278, %v3713
      %3725 = vst.msk [vmem:[#allocation5 + $0x44] sm:$0xf] %vm3278, %v3715
      %3726 = vst.msk [vmem:[#allocation5 + $0x48] sm:$0xf] %vm3278, %v3717
      %3727 = vst.msk [vmem:[#allocation5 + $0x4c] sm:$0xf] %vm3278, %v3719
      %3728 = vrot.lane.b32.xlu0 %v3700, 120
      %v3729 = vpop.permute.xlu0 %3728
      %3730 = vrot.lane.b32.xlu0 %v3701, 120
      %v3731 = vpop.permute.xlu0 %3730
      %3732 = vrot.lane.b32.xlu0 %v3702, 120
      %v3733 = vpop.permute.xlu0 %3732
      %3734 = vrot.lane.b32.xlu0 %v3703, 120
      %v3735 = vpop.permute.xlu0 %3734
      %3740 = vst.msk [vmem:[#allocation5 + $0x50] sm:$0xf] %vm3278, %v3729
      %3741 = vst.msk [vmem:[#allocation5 + $0x54] sm:$0xf] %vm3278, %v3731
      %3742 = vst.msk [vmem:[#allocation5 + $0x58] sm:$0xf] %vm3278, %v3733
      %3743 = vst.msk [vmem:[#allocation5 + $0x5c] sm:$0xf] %vm3278, %v3735
      %v3744 = vld [vmem:[%s2197] sm:$0xf]
      %v3745 = vld [vmem:[%s2197 + $0x4] sm:$0xf]
      %v3746 = vld [vmem:[%s2197 + $0x8] sm:$0xf]
      %v3747 = vld [vmem:[%s2197 + $0xc] sm:$0xf]
      %3748 = vst.msk [vmem:[#allocation5 + $0x60] sm:$0xf] %vm3278, %v3744
      %3749 = vst.msk [vmem:[#allocation5 + $0x64] sm:$0xf] %vm3278, %v3745
      %3750 = vst.msk [vmem:[#allocation5 + $0x68] sm:$0xf] %vm3278, %v3746
      %3751 = vst.msk [vmem:[#allocation5 + $0x6c] sm:$0xf] %vm3278, %v3747
      %3756 = vrot.lane.b32.xlu0 %v3744, 124
      %v3757 = vpop.permute.xlu0 %3756
      %3758 = vrot.lane.b32.xlu0 %v3745, 124
      %v3759 = vpop.permute.xlu0 %3758
      %3760 = vrot.lane.b32.xlu0 %v3746, 124
      %v3761 = vpop.permute.xlu0 %3760
      %3762 = vrot.lane.b32.xlu0 %v3747, 124
      %v3763 = vpop.permute.xlu0 %3762
      %3768 = vst.msk [vmem:[#allocation5 + $0x70] sm:$0xf] %vm3278, %v3757
      %3769 = vst.msk [vmem:[#allocation5 + $0x74] sm:$0xf] %vm3278, %v3759
      %3770 = vst.msk [vmem:[#allocation5 + $0x78] sm:$0xf] %vm3278, %v3761
      %3771 = vst.msk [vmem:[#allocation5 + $0x7c] sm:$0xf] %vm3278, %v3763
      %3772 = vrot.lane.b32.xlu0 %v3744, 120
      %v3773 = vpop.permute.xlu0 %3772
      %3774 = vrot.lane.b32.xlu0 %v3745, 120
      %v3775 = vpop.permute.xlu0 %3774
      %3776 = vrot.lane.b32.xlu0 %v3746, 120
      %v3777 = vpop.permute.xlu0 %3776
      %3778 = vrot.lane.b32.xlu0 %v3747, 120
      %v3779 = vpop.permute.xlu0 %3778
      %3784 = vst.msk [vmem:[#allocation5 + $0x80] sm:$0xf] %vm3278, %v3773
      %3785 = vst.msk [vmem:[#allocation5 + $0x84] sm:$0xf] %vm3278, %v3775
      %3786 = vst.msk [vmem:[#allocation5 + $0x88] sm:$0xf] %vm3278, %v3777
      %3787 = vst.msk [vmem:[#allocation5 + $0x8c] sm:$0xf] %vm3278, %v3779
      %v3788 = vld [vmem:[#allocation5] sm:$0xf]
      %v3789 = vld [vmem:[#allocation5 + $0x4] sm:$0xf]
      %v3790 = vld [vmem:[#allocation5 + $0x8] sm:$0xf]
      %v3791 = vld [vmem:[#allocation5 + $0xc] sm:$0xf]
      %v3792 = vld [vmem:[#allocation5 + $0x10] sm:$0xf]
      %v3793 = vld [vmem:[#allocation5 + $0x14] sm:$0xf]
      %v3794 = vld [vmem:[#allocation5 + $0x18] sm:$0xf]
      %v3795 = vld [vmem:[#allocation5 + $0x1c] sm:$0xf]
      %v3796 = vld [vmem:[#allocation5 + $0x20] sm:$0xf]
      %v3797 = vld [vmem:[#allocation5 + $0x24] sm:$0xf]
      %v3798 = vld [vmem:[#allocation5 + $0x28] sm:$0xf]
      %v3799 = vld [vmem:[#allocation5 + $0x2c] sm:$0xf]
      %v3800 = vld [vmem:[#allocation5 + $0x30] sm:$0xf]
      %v3801 = vld [vmem:[#allocation5 + $0x34] sm:$0xf]
      %v3802 = vld [vmem:[#allocation5 + $0x38] sm:$0xf]
      %v3803 = vld [vmem:[#allocation5 + $0x3c] sm:$0xf]
      %v3804 = vld [vmem:[#allocation5 + $0x40] sm:$0xf]
      %v3805 = vld [vmem:[#allocation5 + $0x44] sm:$0xf]
      %v3806 = vld [vmem:[#allocation5 + $0x48] sm:$0xf]
      %v3807 = vld [vmem:[#allocation5 + $0x4c] sm:$0xf]
      %v3808 = vld [vmem:[#allocation5 + $0x50] sm:$0xf]
      %v3809 = vld [vmem:[#allocation5 + $0x54] sm:$0xf]
      %v3810 = vld [vmem:[#allocation5 + $0x58] sm:$0xf]
      %v3811 = vld [vmem:[#allocation5 + $0x5c] sm:$0xf]
      %v3812 = vld [vmem:[#allocation5 + $0x60] sm:$0xf]
      %v3813 = vld [vmem:[#allocation5 + $0x64] sm:$0xf]
      %v3814 = vld [vmem:[#allocation5 + $0x68] sm:$0xf]
      %v3815 = vld [vmem:[#allocation5 + $0x6c] sm:$0xf]
      %v3816 = vld [vmem:[#allocation5 + $0x70] sm:$0xf]
      %v3817 = vld [vmem:[#allocation5 + $0x74] sm:$0xf]
      %v3818 = vld [vmem:[#allocation5 + $0x78] sm:$0xf]
      %v3819 = vld [vmem:[#allocation5 + $0x7c] sm:$0xf]
      %v3820 = vld [vmem:[#allocation5 + $0x80] sm:$0xf]
      %v3821 = vld [vmem:[#allocation5 + $0x84] sm:$0xf]
      %v3822 = vld [vmem:[#allocation5 + $0x88] sm:$0xf]
      %v3823 = vld [vmem:[#allocation5 + $0x8c] sm:$0xf]
      %v3860 = vunpack.c.l.b16 %v3788
      %v3861 = vunpack.c.l.b16 %v3789
      %v3862 = vunpack.c.l.b16 %v3790
      %v3863 = vunpack.c.l.b16 %v3791
      %v3864 = vunpack.c.l.b16 %v3792
      %v3865 = vunpack.c.l.b16 %v3793
      %v3866 = vunpack.c.l.b16 %v3794
      %v3867 = vunpack.c.l.b16 %v3795
      %v3868 = vunpack.c.l.b16 %v3796
      %v3869 = vunpack.c.l.b16 %v3797
      %v3870 = vunpack.c.l.b16 %v3798
      %v3871 = vunpack.c.l.b16 %v3799
      %v3872 = vunpack.c.l.b16 %v3800
      %v3873 = vunpack.c.l.b16 %v3801
      %v3874 = vunpack.c.l.b16 %v3802
      %v3875 = vunpack.c.l.b16 %v3803
      %v3876 = vunpack.c.l.b16 %v3804
      %v3877 = vunpack.c.l.b16 %v3805
      %v3878 = vunpack.c.l.b16 %v3806
      %v3879 = vunpack.c.l.b16 %v3807
      %v3880 = vunpack.c.l.b16 %v3808
      %v3881 = vunpack.c.l.b16 %v3809
      %v3882 = vunpack.c.l.b16 %v3810
      %v3883 = vunpack.c.l.b16 %v3811
      %v3884 = vunpack.c.l.b16 %v3812
      %v3885 = vunpack.c.l.b16 %v3813
      %v3886 = vunpack.c.l.b16 %v3814
      %v3887 = vunpack.c.l.b16 %v3815
      %v3888 = vunpack.c.l.b16 %v3816
      %v3889 = vunpack.c.l.b16 %v3817
      %v3890 = vunpack.c.l.b16 %v3818
      %v3891 = vunpack.c.l.b16 %v3819
      %v3892 = vunpack.c.l.b16 %v3820
      %v3893 = vunpack.c.l.b16 %v3821
      %v3894 = vunpack.c.l.b16 %v3822
      %v3895 = vunpack.c.l.b16 %v3823
      %v3896 = vpack.c.b16 %v3861, %v3860
      %v3897 = vpack.c.b16 %v3863, %v3862
      %v3898 = vpack.c.b16 %v3865, %v3864
      %v3899 = vpack.c.b16 %v3867, %v3866
      %v3900 = vpack.c.b16 %v3869, %v3868
      %v3901 = vpack.c.b16 %v3871, %v3870
      %v3902 = vpack.c.b16 %v3873, %v3872
      %v3903 = vpack.c.b16 %v3875, %v3874
      %v3904 = vpack.c.b16 %v3877, %v3876
      %v3905 = vpack.c.b16 %v3879, %v3878
      %v3906 = vpack.c.b16 %v3881, %v3880
      %v3907 = vpack.c.b16 %v3883, %v3882
      %v3908 = vpack.c.b16 %v3885, %v3884
      %v3909 = vpack.c.b16 %v3887, %v3886
      %v3910 = vpack.c.b16 %v3889, %v3888
      %v3911 = vpack.c.b16 %v3891, %v3890
      %v3912 = vpack.c.b16 %v3893, %v3892
      %v3913 = vpack.c.b16 %v3895, %v3894
      %3932 = vmatpush.bf16.msra.mxu0 %v3903
      %3933 = vmatpush.bf16.msra.mxu0 %v3902
      %3934 = vmatpush.bf16.msra.mxu0 %v3901
      %3935 = vmatpush.bf16.msra.mxu0 %v3900
      %3936 = vmatpush.bf16.msra.mxu0 %v3899
      %3937 = vmatpush.bf16.msra.mxu0 %v3898
      %3938 = vmatpush.bf16.msra.mxu0 %v3897
      %3939 = vmatpush.bf16.msra.mxu0 %v3896
      %3940 = vmatmul.bf16.gmra.mxu0 %v3463
      %v3941 = vpop.f32.mrf.mxu0
      %v3942 = vadd.f32 %v3257, %v3941
      %v3943 = vpop.f32.mrf.mxu0
      %v3944 = vadd.f32 %v3262, %v3943
      %3945 = vmatmul.bf16.gmra.mxu0 %v3466
      %v3946 = vpop.f32.mrf.mxu0
      %v3947 = vadd.f32 %v3267, %v3946
      %v3948 = vpop.f32.mrf.mxu0
      %v3949 = vadd.f32 %v3272, %v3948
      %3950 = vdwg.mxu0
      %3951 = vmatpush.bf16.msra.mxu0 %v3911
      %3952 = vmatpush.bf16.msra.mxu0 %v3910
      %3953 = vmatpush.bf16.msra.mxu0 %v3909
      %3954 = vmatpush.bf16.msra.mxu0 %v3908
      %3955 = vmatpush.bf16.msra.mxu0 %v3907
      %3956 = vmatpush.bf16.msra.mxu0 %v3906
      %3957 = vmatpush.bf16.msra.mxu0 %v3905
      %3958 = vmatpush.bf16.msra.mxu0 %v3904
      %3959 = vmatmul.bf16.gmra.mxu0 %v3464
      %v3960 = vpop.f32.mrf.mxu0
      %v3961 = vadd.f32 %v3942, %v3960
      %v3962 = vpop.f32.mrf.mxu0
      %v3963 = vadd.f32 %v3944, %v3962
      %3964 = vmatmul.bf16.gmra.mxu0 %v3467
      %v3965 = vpop.f32.mrf.mxu0
      %v3966 = vadd.f32 %v3947, %v3965
      %v3967 = vpop.f32.mrf.mxu0
      %v3968 = vadd.f32 %v3949, %v3967
      %3969 = vdwg.mxu0
      %3970 = vmatpush.bf16.msra.mxu0 0
      %3971 = vmatpush.bf16.msra.mxu0 0
      %3972 = vmatpush.bf16.msra.mxu0 0
      %3973 = vmatpush.bf16.msra.mxu0 0
      %3974 = vmatpush.bf16.msra.mxu0 0
      %3975 = vmatpush.bf16.msra.mxu0 0
      %3976 = vmatpush.bf16.msra.mxu0 %v3913
      %3977 = vmatpush.bf16.msra.mxu0 %v3912
      %3978 = vmatmul.bf16.gmra.mxu0 %v3582
      %v3979 = vpop.f32.mrf.mxu0
      %v3980 = vadd.f32 %v3961, %v3979
      %v3981 = vpop.f32.mrf.mxu0
      %v3982 = vadd.f32 %v3963, %v3981
      %3983 = vmatmul.bf16.gmra.mxu0 %v3585
      %v3984 = vpop.f32.mrf.mxu0
      %v3985 = vadd.f32 %v3966, %v3984
      %v3986 = vpop.f32.mrf.mxu0
      %v3987 = vadd.f32 %v3968, %v3986
      %3988 = vdwg.mxu0
      %v3989 = vmax.f32 %v3980, 0.0
      %v3990 = vmax.f32 %v3982, 0.0
      %v3991 = vmax.f32 %v3985, 0.0
      %v3992 = vmax.f32 %v3987, 0.0
      %v3993 = vpack.c.bf16 %v3989, %v3989
      %v3994 = vpack.c.bf16 %v3990, %v3990
      %v3995 = vpack.c.bf16 %v3991, %v3991
      %v3996 = vpack.c.bf16 %v3992, %v3992
      %s3997 = scalar_lea.vmem [#allocation4], 16
      %3998 = vst.msk [vmem:[%s3997] sm:$0xf] %vm3278, %v3993
      %3999 = vst.msk [vmem:[%s3997 + $0x4] sm:$0xf] %vm3278, %v3994
      %4000 = vst.msk [vmem:[%s3997 + $0x8] sm:$0xf] %vm3278, %v3995
      %4001 = vst.msk [vmem:[%s3997 + $0xc] sm:$0xf] %vm3278, %v3996
      %v4002 = vld [vmem:[%s1851] sm:$0xf]
      %v4003 = vld [vmem:[%s1851 + $0x4] sm:$0xf]
      %v4004 = vld [vmem:[%s1851 + $0x8] sm:$0xf]
      %v4005 = vld [vmem:[%s1851 + $0xc] sm:$0xf]
      %4006 = vst.msk [vmem:[#allocation5] sm:$0xf] %vm3278, %v4002
      %4007 = vst.msk [vmem:[#allocation5 + $0x4] sm:$0xf] %vm3278, %v4003
      %4008 = vst.msk [vmem:[#allocation5 + $0x8] sm:$0xf] %vm3278, %v4004
      %4009 = vst.msk [vmem:[#allocation5 + $0xc] sm:$0xf] %vm3278, %v4005
      %4014 = vrot.lane.b32.xlu0 %v4002, 124
      %v4015 = vpop.permute.xlu0 %4014
      %4016 = vrot.lane.b32.xlu0 %v4003, 124
      %v4017 = vpop.permute.xlu0 %4016
      %4018 = vrot.lane.b32.xlu0 %v4004, 124
      %v4019 = vpop.permute.xlu0 %4018
      %4020 = vrot.lane.b32.xlu0 %v4005, 124
      %v4021 = vpop.permute.xlu0 %4020
      %4026 = vst.msk [vmem:[#allocation5 + $0x10] sm:$0xf] %vm3278, %v4015
      %4027 = vst.msk [vmem:[#allocation5 + $0x14] sm:$0xf] %vm3278, %v4017
      %4028 = vst.msk [vmem:[#allocation5 + $0x18] sm:$0xf] %vm3278, %v4019
      %4029 = vst.msk [vmem:[#allocation5 + $0x1c] sm:$0xf] %vm3278, %v4021
      %4030 = vrot.lane.b32.xlu0 %v4002, 120
      %v4031 = vpop.permute.xlu0 %4030
      %4032 = vrot.lane.b32.xlu0 %v4003, 120
      %v4033 = vpop.permute.xlu0 %4032
      %4034 = vrot.lane.b32.xlu0 %v4004, 120
      %v4035 = vpop.permute.xlu0 %4034
      %4036 = vrot.lane.b32.xlu0 %v4005, 120
      %v4037 = vpop.permute.xlu0 %4036
      %4042 = vst.msk [vmem:[#allocation5 + $0x20] sm:$0xf] %vm3278, %v4031
      %4043 = vst.msk [vmem:[#allocation5 + $0x24] sm:$0xf] %vm3278, %v4033
      %4044 = vst.msk [vmem:[#allocation5 + $0x28] sm:$0xf] %vm3278, %v4035
      %4045 = vst.msk [vmem:[#allocation5 + $0x2c] sm:$0xf] %vm3278, %v4037
      %v4046 = vld [vmem:[%s2197] sm:$0xf]
      %v4047 = vld [vmem:[%s2197 + $0x4] sm:$0xf]
      %v4048 = vld [vmem:[%s2197 + $0x8] sm:$0xf]
      %v4049 = vld [vmem:[%s2197 + $0xc] sm:$0xf]
      %4050 = vst.msk [vmem:[#allocation5 + $0x30] sm:$0xf] %vm3278, %v4046
      %4051 = vst.msk [vmem:[#allocation5 + $0x34] sm:$0xf] %vm3278, %v4047
      %4052 = vst.msk [vmem:[#allocation5 + $0x38] sm:$0xf] %vm3278, %v4048
      %4053 = vst.msk [vmem:[#allocation5 + $0x3c] sm:$0xf] %vm3278, %v4049
      %4058 = vrot.lane.b32.xlu0 %v4046, 124
      %v4059 = vpop.permute.xlu0 %4058
      %4060 = vrot.lane.b32.xlu0 %v4047, 124
      %v4061 = vpop.permute.xlu0 %4060
      %4062 = vrot.lane.b32.xlu0 %v4048, 124
      %v4063 = vpop.permute.xlu0 %4062
      %4064 = vrot.lane.b32.xlu0 %v4049, 124
      %v4065 = vpop.permute.xlu0 %4064
      %4070 = vst.msk [vmem:[#allocation5 + $0x40] sm:$0xf] %vm3278, %v4059
      %4071 = vst.msk [vmem:[#allocation5 + $0x44] sm:$0xf] %vm3278, %v4061
      %4072 = vst.msk [vmem:[#allocation5 + $0x48] sm:$0xf] %vm3278, %v4063
      %4073 = vst.msk [vmem:[#allocation5 + $0x4c] sm:$0xf] %vm3278, %v4065
      %4074 = vrot.lane.b32.xlu0 %v4046, 120
      %v4075 = vpop.permute.xlu0 %4074
      %4076 = vrot.lane.b32.xlu0 %v4047, 120
      %v4077 = vpop.permute.xlu0 %4076
      %4078 = vrot.lane.b32.xlu0 %v4048, 120
      %v4079 = vpop.permute.xlu0 %4078
      %4080 = vrot.lane.b32.xlu0 %v4049, 120
      %v4081 = vpop.permute.xlu0 %4080
      %4086 = vst.msk [vmem:[#allocation5 + $0x50] sm:$0xf] %vm3278, %v4075
      %4087 = vst.msk [vmem:[#allocation5 + $0x54] sm:$0xf] %vm3278, %v4077
      %4088 = vst.msk [vmem:[#allocation5 + $0x58] sm:$0xf] %vm3278, %v4079
      %4089 = vst.msk [vmem:[#allocation5 + $0x5c] sm:$0xf] %vm3278, %v4081
      %v4090 = vld [vmem:[%s2543] sm:$0xf]
      %v4091 = vld [vmem:[%s2543 + $0x4] sm:$0xf]
      %v4092 = vld [vmem:[%s2543 + $0x8] sm:$0xf]
      %v4093 = vld [vmem:[%s2543 + $0xc] sm:$0xf]
      %4094 = vst.msk [vmem:[#allocation5 + $0x60] sm:$0xf] %vm3278, %v4090
      %4095 = vst.msk [vmem:[#allocation5 + $0x64] sm:$0xf] %vm3278, %v4091
      %4096 = vst.msk [vmem:[#allocation5 + $0x68] sm:$0xf] %vm3278, %v4092
      %4097 = vst.msk [vmem:[#allocation5 + $0x6c] sm:$0xf] %vm3278, %v4093
      %4102 = vrot.lane.b32.xlu0 %v4090, 124
      %v4103 = vpop.permute.xlu0 %4102
      %4104 = vrot.lane.b32.xlu0 %v4091, 124
      %v4105 = vpop.permute.xlu0 %4104
      %4106 = vrot.lane.b32.xlu0 %v4092, 124
      %v4107 = vpop.permute.xlu0 %4106
      %4108 = vrot.lane.b32.xlu0 %v4093, 124
      %v4109 = vpop.permute.xlu0 %4108
      %4114 = vst.msk [vmem:[#allocation5 + $0x70] sm:$0xf] %vm3278, %v4103
      %4115 = vst.msk [vmem:[#allocation5 + $0x74] sm:$0xf] %vm3278, %v4105
      %4116 = vst.msk [vmem:[#allocation5 + $0x78] sm:$0xf] %vm3278, %v4107
      %4117 = vst.msk [vmem:[#allocation5 + $0x7c] sm:$0xf] %vm3278, %v4109
      %4118 = vrot.lane.b32.xlu0 %v4090, 120
      %v4119 = vpop.permute.xlu0 %4118
      %4120 = vrot.lane.b32.xlu0 %v4091, 120
      %v4121 = vpop.permute.xlu0 %4120
      %4122 = vrot.lane.b32.xlu0 %v4092, 120
      %v4123 = vpop.permute.xlu0 %4122
      %4124 = vrot.lane.b32.xlu0 %v4093, 120
      %v4125 = vpop.permute.xlu0 %4124
      %4130 = vst.msk [vmem:[#allocation5 + $0x80] sm:$0xf] %vm3278, %v4119
      %4131 = vst.msk [vmem:[#allocation5 + $0x84] sm:$0xf] %vm3278, %v4121
      %4132 = vst.msk [vmem:[#allocation5 + $0x88] sm:$0xf] %vm3278, %v4123
      %4133 = vst.msk [vmem:[#allocation5 + $0x8c] sm:$0xf] %vm3278, %v4125
      %v4134 = vld [vmem:[#allocation5] sm:$0xf]
      %v4135 = vld [vmem:[#allocation5 + $0x4] sm:$0xf]
      %v4136 = vld [vmem:[#allocation5 + $0x8] sm:$0xf]
      %v4137 = vld [vmem:[#allocation5 + $0xc] sm:$0xf]
      %v4138 = vld [vmem:[#allocation5 + $0x10] sm:$0xf]
      %v4139 = vld [vmem:[#allocation5 + $0x14] sm:$0xf]
      %v4140 = vld [vmem:[#allocation5 + $0x18] sm:$0xf]
      %v4141 = vld [vmem:[#allocation5 + $0x1c] sm:$0xf]
      %v4142 = vld [vmem:[#allocation5 + $0x20] sm:$0xf]
      %v4143 = vld [vmem:[#allocation5 + $0x24] sm:$0xf]
      %v4144 = vld [vmem:[#allocation5 + $0x28] sm:$0xf]
      %v4145 = vld [vmem:[#allocation5 + $0x2c] sm:$0xf]
      %v4146 = vld [vmem:[#allocation5 + $0x30] sm:$0xf]
      %v4147 = vld [vmem:[#allocation5 + $0x34] sm:$0xf]
      %v4148 = vld [vmem:[#allocation5 + $0x38] sm:$0xf]
      %v4149 = vld [vmem:[#allocation5 + $0x3c] sm:$0xf]
      %v4150 = vld [vmem:[#allocation5 + $0x40] sm:$0xf]
      %v4151 = vld [vmem:[#allocation5 + $0x44] sm:$0xf]
      %v4152 = vld [vmem:[#allocation5 + $0x48] sm:$0xf]
      %v4153 = vld [vmem:[#allocation5 + $0x4c] sm:$0xf]
      %v4154 = vld [vmem:[#allocation5 + $0x50] sm:$0xf]
      %v4155 = vld [vmem:[#allocation5 + $0x54] sm:$0xf]
      %v4156 = vld [vmem:[#allocation5 + $0x58] sm:$0xf]
      %v4157 = vld [vmem:[#allocation5 + $0x5c] sm:$0xf]
      %v4158 = vld [vmem:[#allocation5 + $0x60] sm:$0xf]
      %v4159 = vld [vmem:[#allocation5 + $0x64] sm:$0xf]
      %v4160 = vld [vmem:[#allocation5 + $0x68] sm:$0xf]
      %v4161 = vld [vmem:[#allocation5 + $0x6c] sm:$0xf]
      %v4162 = vld [vmem:[#allocation5 + $0x70] sm:$0xf]
      %v4163 = vld [vmem:[#allocation5 + $0x74] sm:$0xf]
      %v4164 = vld [vmem:[#allocation5 + $0x78] sm:$0xf]
      %v4165 = vld [vmem:[#allocation5 + $0x7c] sm:$0xf]
      %v4166 = vld [vmem:[#allocation5 + $0x80] sm:$0xf]
      %v4167 = vld [vmem:[#allocation5 + $0x84] sm:$0xf]
      %v4168 = vld [vmem:[#allocation5 + $0x88] sm:$0xf]
      %v4169 = vld [vmem:[#allocation5 + $0x8c] sm:$0xf]
      %v4206 = vunpack.c.l.b16 %v4134
      %v4207 = vunpack.c.l.b16 %v4135
      %v4208 = vunpack.c.l.b16 %v4136
      %v4209 = vunpack.c.l.b16 %v4137
      %v4210 = vunpack.c.l.b16 %v4138
      %v4211 = vunpack.c.l.b16 %v4139
      %v4212 = vunpack.c.l.b16 %v4140
      %v4213 = vunpack.c.l.b16 %v4141
      %v4214 = vunpack.c.l.b16 %v4142
      %v4215 = vunpack.c.l.b16 %v4143
      %v4216 = vunpack.c.l.b16 %v4144
      %v4217 = vunpack.c.l.b16 %v4145
      %v4218 = vunpack.c.l.b16 %v4146
      %v4219 = vunpack.c.l.b16 %v4147
      %v4220 = vunpack.c.l.b16 %v4148
      %v4221 = vunpack.c.l.b16 %v4149
      %v4222 = vunpack.c.l.b16 %v4150
      %v4223 = vunpack.c.l.b16 %v4151
      %v4224 = vunpack.c.l.b16 %v4152
      %v4225 = vunpack.c.l.b16 %v4153
      %v4226 = vunpack.c.l.b16 %v4154
      %v4227 = vunpack.c.l.b16 %v4155
      %v4228 = vunpack.c.l.b16 %v4156
      %v4229 = vunpack.c.l.b16 %v4157
      %v4230 = vunpack.c.l.b16 %v4158
      %v4231 = vunpack.c.l.b16 %v4159
      %v4232 = vunpack.c.l.b16 %v4160
      %v4233 = vunpack.c.l.b16 %v4161
      %v4234 = vunpack.c.l.b16 %v4162
      %v4235 = vunpack.c.l.b16 %v4163
      %v4236 = vunpack.c.l.b16 %v4164
      %v4237 = vunpack.c.l.b16 %v4165
      %v4238 = vunpack.c.l.b16 %v4166
      %v4239 = vunpack.c.l.b16 %v4167
      %v4240 = vunpack.c.l.b16 %v4168
      %v4241 = vunpack.c.l.b16 %v4169
      %v4242 = vpack.c.b16 %v4207, %v4206
      %v4243 = vpack.c.b16 %v4209, %v4208
      %v4244 = vpack.c.b16 %v4211, %v4210
      %v4245 = vpack.c.b16 %v4213, %v4212
      %v4246 = vpack.c.b16 %v4215, %v4214
      %v4247 = vpack.c.b16 %v4217, %v4216
      %v4248 = vpack.c.b16 %v4219, %v4218
      %v4249 = vpack.c.b16 %v4221, %v4220
      %v4250 = vpack.c.b16 %v4223, %v4222
      %v4251 = vpack.c.b16 %v4225, %v4224
      %v4252 = vpack.c.b16 %v4227, %v4226
      %v4253 = vpack.c.b16 %v4229, %v4228
      %v4254 = vpack.c.b16 %v4231, %v4230
      %v4255 = vpack.c.b16 %v4233, %v4232
      %v4256 = vpack.c.b16 %v4235, %v4234
      %v4257 = vpack.c.b16 %v4237, %v4236
      %v4258 = vpack.c.b16 %v4239, %v4238
      %v4259 = vpack.c.b16 %v4241, %v4240
      %4278 = vmatpush.bf16.msra.mxu0 %v4249
      %4279 = vmatpush.bf16.msra.mxu0 %v4248
      %4280 = vmatpush.bf16.msra.mxu0 %v4247
      %4281 = vmatpush.bf16.msra.mxu0 %v4246
      %4282 = vmatpush.bf16.msra.mxu0 %v4245
      %4283 = vmatpush.bf16.msra.mxu0 %v4244
      %4284 = vmatpush.bf16.msra.mxu0 %v4243
      %4285 = vmatpush.bf16.msra.mxu0 %v4242
      %4286 = vmatmul.bf16.gmra.mxu0 %v3463
      %v4287 = vpop.f32.mrf.mxu0
      %v4288 = vadd.f32 %v3257, %v4287
      %v4289 = vpop.f32.mrf.mxu0
      %v4290 = vadd.f32 %v3262, %v4289
      %4291 = vmatmul.bf16.gmra.mxu0 %v3466
      %v4292 = vpop.f32.mrf.mxu0
      %v4293 = vadd.f32 %v3267, %v4292
      %v4294 = vpop.f32.mrf.mxu0
      %v4295 = vadd.f32 %v3272, %v4294
      %4296 = vdwg.mxu0
      %4297 = vmatpush.bf16.msra.mxu0 %v4257
      %4298 = vmatpush.bf16.msra.mxu0 %v4256
      %4299 = vmatpush.bf16.msra.mxu0 %v4255
      %4300 = vmatpush.bf16.msra.mxu0 %v4254
      %4301 = vmatpush.bf16.msra.mxu0 %v4253
      %4302 = vmatpush.bf16.msra.mxu0 %v4252
      %4303 = vmatpush.bf16.msra.mxu0 %v4251
      %4304 = vmatpush.bf16.msra.mxu0 %v4250
      %4305 = vmatmul.bf16.gmra.mxu0 %v3464
      %v4306 = vpop.f32.mrf.mxu0
      %v4307 = vadd.f32 %v4288, %v4306
      %v4308 = vpop.f32.mrf.mxu0
      %v4309 = vadd.f32 %v4290, %v4308
      %4310 = vmatmul.bf16.gmra.mxu0 %v3467
      %v4311 = vpop.f32.mrf.mxu0
      %v4312 = vadd.f32 %v4293, %v4311
      %v4313 = vpop.f32.mrf.mxu0
      %v4314 = vadd.f32 %v4295, %v4313
      %4315 = vdwg.mxu0
      %4316 = vmatpush.bf16.msra.mxu0 0
      %4317 = vmatpush.bf16.msra.mxu0 0
      %4318 = vmatpush.bf16.msra.mxu0 0
      %4319 = vmatpush.bf16.msra.mxu0 0
      %4320 = vmatpush.bf16.msra.mxu0 0
      %4321 = vmatpush.bf16.msra.mxu0 0
      %4322 = vmatpush.bf16.msra.mxu0 %v4259
      %4323 = vmatpush.bf16.msra.mxu0 %v4258
      %4324 = vmatmul.bf16.gmra.mxu0 %v3582
      %v4325 = vpop.f32.mrf.mxu0
      %v4326 = vadd.f32 %v4307, %v4325
      %v4327 = vpop.f32.mrf.mxu0
      %v4328 = vadd.f32 %v4309, %v4327
      %4329 = vmatmul.bf16.gmra.mxu0 %v3585
      %v4330 = vpop.f32.mrf.mxu0
      %v4331 = vadd.f32 %v4312, %v4330
      %v4332 = vpop.f32.mrf.mxu0
      %v4333 = vadd.f32 %v4314, %v4332
      %4334 = vdwg.mxu0
      %v4335 = vmax.f32 %v4326, 0.0
      %v4336 = vmax.f32 %v4328, 0.0
      %v4337 = vmax.f32 %v4331, 0.0
      %v4338 = vmax.f32 %v4333, 0.0
      %v4339 = vpack.c.bf16 %v4335, %v4335
      %v4340 = vpack.c.bf16 %v4336, %v4336
      %v4341 = vpack.c.bf16 %v4337, %v4337
      %v4342 = vpack.c.bf16 %v4338, %v4338
      %s4343 = scalar_lea.vmem [#allocation4], 32
      %4344 = vst.msk [vmem:[%s4343] sm:$0xf] %vm3278, %v4339
      %4345 = vst.msk [vmem:[%s4343 + $0x4] sm:$0xf] %vm3278, %v4340
      %4346 = vst.msk [vmem:[%s4343 + $0x8] sm:$0xf] %vm3278, %v4341
      %4347 = vst.msk [vmem:[%s4343 + $0xc] sm:$0xf] %vm3278, %v4342
      %v4348 = vld [vmem:[%s2197] sm:$0xf]
      %v4349 = vld [vmem:[%s2197 + $0x4] sm:$0xf]
      %v4350 = vld [vmem:[%s2197 + $0x8] sm:$0xf]
      %v4351 = vld [vmem:[%s2197 + $0xc] sm:$0xf]
      %4352 = vst.msk [vmem:[#allocation5] sm:$0xf] %vm3278, %v4348
      %4353 = vst.msk [vmem:[#allocation5 + $0x4] sm:$0xf] %vm3278, %v4349
      %4354 = vst.msk [vmem:[#allocation5 + $0x8] sm:$0xf] %vm3278, %v4350
      %4355 = vst.msk [vmem:[#allocation5 + $0xc] sm:$0xf] %vm3278, %v4351
      %4360 = vrot.lane.b32.xlu0 %v4348, 124
      %v4361 = vpop.permute.xlu0 %4360
      %4362 = vrot.lane.b32.xlu0 %v4349, 124
      %v4363 = vpop.permute.xlu0 %4362
      %4364 = vrot.lane.b32.xlu0 %v4350, 124
      %v4365 = vpop.permute.xlu0 %4364
      %4366 = vrot.lane.b32.xlu0 %v4351, 124
      %v4367 = vpop.permute.xlu0 %4366
      %4372 = vst.msk [vmem:[#allocation5 + $0x10] sm:$0xf] %vm3278, %v4361
      %4373 = vst.msk [vmem:[#allocation5 + $0x14] sm:$0xf] %vm3278, %v4363
      %4374 = vst.msk [vmem:[#allocation5 + $0x18] sm:$0xf] %vm3278, %v4365
      %4375 = vst.msk [vmem:[#allocation5 + $0x1c] sm:$0xf] %vm3278, %v4367
      %4376 = vrot.lane.b32.xlu0 %v4348, 120
      %v4377 = vpop.permute.xlu0 %4376
      %4378 = vrot.lane.b32.xlu0 %v4349, 120
      %v4379 = vpop.permute.xlu0 %4378
      %4380 = vrot.lane.b32.xlu0 %v4350, 120
      %v4381 = vpop.permute.xlu0 %4380
      %4382 = vrot.lane.b32.xlu0 %v4351, 120
      %v4383 = vpop.permute.xlu0 %4382
      %4388 = vst.msk [vmem:[#allocation5 + $0x20] sm:$0xf] %vm3278, %v4377
      %4389 = vst.msk [vmem:[#allocation5 + $0x24] sm:$0xf] %vm3278, %v4379
      %4390 = vst.msk [vmem:[#allocation5 + $0x28] sm:$0xf] %vm3278, %v4381
      %4391 = vst.msk [vmem:[#allocation5 + $0x2c] sm:$0xf] %vm3278, %v4383
      %v4392 = vld [vmem:[%s2543] sm:$0xf]
      %v4393 = vld [vmem:[%s2543 + $0x4] sm:$0xf]
      %v4394 = vld [vmem:[%s2543 + $0x8] sm:$0xf]
      %v4395 = vld [vmem:[%s2543 + $0xc] sm:$0xf]
      %4396 = vst.msk [vmem:[#allocation5 + $0x30] sm:$0xf] %vm3278, %v4392
      %4397 = vst.msk [vmem:[#allocation5 + $0x34] sm:$0xf] %vm3278, %v4393
      %4398 = vst.msk [vmem:[#allocation5 + $0x38] sm:$0xf] %vm3278, %v4394
      %4399 = vst.msk [vmem:[#allocation5 + $0x3c] sm:$0xf] %vm3278, %v4395
      %4404 = vrot.lane.b32.xlu0 %v4392, 124
      %v4405 = vpop.permute.xlu0 %4404
      %4406 = vrot.lane.b32.xlu0 %v4393, 124
      %v4407 = vpop.permute.xlu0 %4406
      %4408 = vrot.lane.b32.xlu0 %v4394, 124
      %v4409 = vpop.permute.xlu0 %4408
      %4410 = vrot.lane.b32.xlu0 %v4395, 124
      %v4411 = vpop.permute.xlu0 %4410
      %4416 = vst.msk [vmem:[#allocation5 + $0x40] sm:$0xf] %vm3278, %v4405
      %4417 = vst.msk [vmem:[#allocation5 + $0x44] sm:$0xf] %vm3278, %v4407
      %4418 = vst.msk [vmem:[#allocation5 + $0x48] sm:$0xf] %vm3278, %v4409
      %4419 = vst.msk [vmem:[#allocation5 + $0x4c] sm:$0xf] %vm3278, %v4411
      %4420 = vrot.lane.b32.xlu0 %v4392, 120
      %v4421 = vpop.permute.xlu0 %4420
      %4422 = vrot.lane.b32.xlu0 %v4393, 120
      %v4423 = vpop.permute.xlu0 %4422
      %4424 = vrot.lane.b32.xlu0 %v4394, 120
      %v4425 = vpop.permute.xlu0 %4424
      %4426 = vrot.lane.b32.xlu0 %v4395, 120
      %v4427 = vpop.permute.xlu0 %4426
      %4432 = vst.msk [vmem:[#allocation5 + $0x50] sm:$0xf] %vm3278, %v4421
      %4433 = vst.msk [vmem:[#allocation5 + $0x54] sm:$0xf] %vm3278, %v4423
      %4434 = vst.msk [vmem:[#allocation5 + $0x58] sm:$0xf] %vm3278, %v4425
      %4435 = vst.msk [vmem:[#allocation5 + $0x5c] sm:$0xf] %vm3278, %v4427
      %v4436 = vld [vmem:[%s2889] sm:$0xf]
      %v4437 = vld [vmem:[%s2889 + $0x4] sm:$0xf]
      %v4438 = vld [vmem:[%s2889 + $0x8] sm:$0xf]
      %v4439 = vld [vmem:[%s2889 + $0xc] sm:$0xf]
      %4440 = vst.msk [vmem:[#allocation5 + $0x60] sm:$0xf] %vm3278, %v4436
      %4441 = vst.msk [vmem:[#allocation5 + $0x64] sm:$0xf] %vm3278, %v4437
      %4442 = vst.msk [vmem:[#allocation5 + $0x68] sm:$0xf] %vm3278, %v4438
      %4443 = vst.msk [vmem:[#allocation5 + $0x6c] sm:$0xf] %vm3278, %v4439
      %4448 = vrot.lane.b32.xlu0 %v4436, 124
      %v4449 = vpop.permute.xlu0 %4448
      %4450 = vrot.lane.b32.xlu0 %v4437, 124
      %v4451 = vpop.permute.xlu0 %4450
      %4452 = vrot.lane.b32.xlu0 %v4438, 124
      %v4453 = vpop.permute.xlu0 %4452
      %4454 = vrot.lane.b32.xlu0 %v4439, 124
      %v4455 = vpop.permute.xlu0 %4454
      %4460 = vst.msk [vmem:[#allocation5 + $0x70] sm:$0xf] %vm3278, %v4449
      %4461 = vst.msk [vmem:[#allocation5 + $0x74] sm:$0xf] %vm3278, %v4451
      %4462 = vst.msk [vmem:[#allocation5 + $0x78] sm:$0xf] %vm3278, %v4453
      %4463 = vst.msk [vmem:[#allocation5 + $0x7c] sm:$0xf] %vm3278, %v4455
      %4464 = vrot.lane.b32.xlu0 %v4436, 120
      %v4465 = vpop.permute.xlu0 %4464
      %4466 = vrot.lane.b32.xlu0 %v4437, 120
      %v4467 = vpop.permute.xlu0 %4466
      %4468 = vrot.lane.b32.xlu0 %v4438, 120
      %v4469 = vpop.permute.xlu0 %4468
      %4470 = vrot.lane.b32.xlu0 %v4439, 120
      %v4471 = vpop.permute.xlu0 %4470
      %4476 = vst.msk [vmem:[#allocation5 + $0x80] sm:$0xf] %vm3278, %v4465
      %4477 = vst.msk [vmem:[#allocation5 + $0x84] sm:$0xf] %vm3278, %v4467
      %4478 = vst.msk [vmem:[#allocation5 + $0x88] sm:$0xf] %vm3278, %v4469
      %4479 = vst.msk [vmem:[#allocation5 + $0x8c] sm:$0xf] %vm3278, %v4471
      %v4480 = vld [vmem:[#allocation5] sm:$0xf]
      %v4481 = vld [vmem:[#allocation5 + $0x4] sm:$0xf]
      %v4482 = vld [vmem:[#allocation5 + $0x8] sm:$0xf]
      %v4483 = vld [vmem:[#allocation5 + $0xc] sm:$0xf]
      %v4484 = vld [vmem:[#allocation5 + $0x10] sm:$0xf]
      %v4485 = vld [vmem:[#allocation5 + $0x14] sm:$0xf]
      %v4486 = vld [vmem:[#allocation5 + $0x18] sm:$0xf]
      %v4487 = vld [vmem:[#allocation5 + $0x1c] sm:$0xf]
      %v4488 = vld [vmem:[#allocation5 + $0x20] sm:$0xf]
      %v4489 = vld [vmem:[#allocation5 + $0x24] sm:$0xf]
      %v4490 = vld [vmem:[#allocation5 + $0x28] sm:$0xf]
      %v4491 = vld [vmem:[#allocation5 + $0x2c] sm:$0xf]
      %v4492 = vld [vmem:[#allocation5 + $0x30] sm:$0xf]
      %v4493 = vld [vmem:[#allocation5 + $0x34] sm:$0xf]
      %v4494 = vld [vmem:[#allocation5 + $0x38] sm:$0xf]
      %v4495 = vld [vmem:[#allocation5 + $0x3c] sm:$0xf]
      %v4496 = vld [vmem:[#allocation5 + $0x40] sm:$0xf]
      %v4497 = vld [vmem:[#allocation5 + $0x44] sm:$0xf]
      %v4498 = vld [vmem:[#allocation5 + $0x48] sm:$0xf]
      %v4499 = vld [vmem:[#allocation5 + $0x4c] sm:$0xf]
      %v4500 = vld [vmem:[#allocation5 + $0x50] sm:$0xf]
      %v4501 = vld [vmem:[#allocation5 + $0x54] sm:$0xf]
      %v4502 = vld [vmem:[#allocation5 + $0x58] sm:$0xf]
      %v4503 = vld [vmem:[#allocation5 + $0x5c] sm:$0xf]
      %v4504 = vld [vmem:[#allocation5 + $0x60] sm:$0xf]
      %v4505 = vld [vmem:[#allocation5 + $0x64] sm:$0xf]
      %v4506 = vld [vmem:[#allocation5 + $0x68] sm:$0xf]
      %v4507 = vld [vmem:[#allocation5 + $0x6c] sm:$0xf]
      %v4508 = vld [vmem:[#allocation5 + $0x70] sm:$0xf]
      %v4509 = vld [vmem:[#allocation5 + $0x74] sm:$0xf]
      %v4510 = vld [vmem:[#allocation5 + $0x78] sm:$0xf]
      %v4511 = vld [vmem:[#allocation5 + $0x7c] sm:$0xf]
      %v4512 = vld [vmem:[#allocation5 + $0x80] sm:$0xf]
      %v4513 = vld [vmem:[#allocation5 + $0x84] sm:$0xf]
      %v4514 = vld [vmem:[#allocation5 + $0x88] sm:$0xf]
      %v4515 = vld [vmem:[#allocation5 + $0x8c] sm:$0xf]
      %v4552 = vunpack.c.l.b16 %v4480
      %v4553 = vunpack.c.l.b16 %v4481
      %v4554 = vunpack.c.l.b16 %v4482
      %v4555 = vunpack.c.l.b16 %v4483
      %v4556 = vunpack.c.l.b16 %v4484
      %v4557 = vunpack.c.l.b16 %v4485
      %v4558 = vunpack.c.l.b16 %v4486
      %v4559 = vunpack.c.l.b16 %v4487
      %v4560 = vunpack.c.l.b16 %v4488
      %v4561 = vunpack.c.l.b16 %v4489
      %v4562 = vunpack.c.l.b16 %v4490
      %v4563 = vunpack.c.l.b16 %v4491
      %v4564 = vunpack.c.l.b16 %v4492
      %v4565 = vunpack.c.l.b16 %v4493
      %v4566 = vunpack.c.l.b16 %v4494
      %v4567 = vunpack.c.l.b16 %v4495
      %v4568 = vunpack.c.l.b16 %v4496
      %v4569 = vunpack.c.l.b16 %v4497
      %v4570 = vunpack.c.l.b16 %v4498
      %v4571 = vunpack.c.l.b16 %v4499
      %v4572 = vunpack.c.l.b16 %v4500
      %v4573 = vunpack.c.l.b16 %v4501
      %v4574 = vunpack.c.l.b16 %v4502
      %v4575 = vunpack.c.l.b16 %v4503
      %v4576 = vunpack.c.l.b16 %v4504
      %v4577 = vunpack.c.l.b16 %v4505
      %v4578 = vunpack.c.l.b16 %v4506
      %v4579 = vunpack.c.l.b16 %v4507
      %v4580 = vunpack.c.l.b16 %v4508
      %v4581 = vunpack.c.l.b16 %v4509
      %v4582 = vunpack.c.l.b16 %v4510
      %v4583 = vunpack.c.l.b16 %v4511
      %v4584 = vunpack.c.l.b16 %v4512
      %v4585 = vunpack.c.l.b16 %v4513
      %v4586 = vunpack.c.l.b16 %v4514
      %v4587 = vunpack.c.l.b16 %v4515
      %v4588 = vpack.c.b16 %v4553, %v4552
      %v4589 = vpack.c.b16 %v4555, %v4554
      %v4590 = vpack.c.b16 %v4557, %v4556
      %v4591 = vpack.c.b16 %v4559, %v4558
      %v4592 = vpack.c.b16 %v4561, %v4560
      %v4593 = vpack.c.b16 %v4563, %v4562
      %v4594 = vpack.c.b16 %v4565, %v4564
      %v4595 = vpack.c.b16 %v4567, %v4566
      %v4596 = vpack.c.b16 %v4569, %v4568
      %v4597 = vpack.c.b16 %v4571, %v4570
      %v4598 = vpack.c.b16 %v4573, %v4572
      %v4599 = vpack.c.b16 %v4575, %v4574
      %v4600 = vpack.c.b16 %v4577, %v4576
      %v4601 = vpack.c.b16 %v4579, %v4578
      %v4602 = vpack.c.b16 %v4581, %v4580
      %v4603 = vpack.c.b16 %v4583, %v4582
      %v4604 = vpack.c.b16 %v4585, %v4584
      %v4605 = vpack.c.b16 %v4587, %v4586
      %4624 = vmatpush.bf16.msra.mxu0 %v4595
      %4625 = vmatpush.bf16.msra.mxu0 %v4594
      %4626 = vmatpush.bf16.msra.mxu0 %v4593
      %4627 = vmatpush.bf16.msra.mxu0 %v4592
      %4628 = vmatpush.bf16.msra.mxu0 %v4591
      %4629 = vmatpush.bf16.msra.mxu0 %v4590
      %4630 = vmatpush.bf16.msra.mxu0 %v4589
      %4631 = vmatpush.bf16.msra.mxu0 %v4588
      %4632 = vmatmul.bf16.gmra.mxu0 %v3463
      %v4633 = vpop.f32.mrf.mxu0
      %v4634 = vadd.f32 %v3257, %v4633
      %v4635 = vpop.f32.mrf.mxu0
      %v4636 = vadd.f32 %v3262, %v4635
      %4637 = vmatmul.bf16.gmra.mxu0 %v3466
      %v4638 = vpop.f32.mrf.mxu0
      %v4639 = vadd.f32 %v3267, %v4638
      %v4640 = vpop.f32.mrf.mxu0
      %v4641 = vadd.f32 %v3272, %v4640
      %4642 = vdwg.mxu0
      %4643 = vmatpush.bf16.msra.mxu0 %v4603
      %4644 = vmatpush.bf16.msra.mxu0 %v4602
      %4645 = vmatpush.bf16.msra.mxu0 %v4601
      %4646 = vmatpush.bf16.msra.mxu0 %v4600
      %4647 = vmatpush.bf16.msra.mxu0 %v4599
      %4648 = vmatpush.bf16.msra.mxu0 %v4598
      %4649 = vmatpush.bf16.msra.mxu0 %v4597
      %4650 = vmatpush.bf16.msra.mxu0 %v4596
      %4651 = vmatmul.bf16.gmra.mxu0 %v3464
      %v4652 = vpop.f32.mrf.mxu0
      %v4653 = vadd.f32 %v4634, %v4652
      %v4654 = vpop.f32.mrf.mxu0
      %v4655 = vadd.f32 %v4636, %v4654
      %4656 = vmatmul.bf16.gmra.mxu0 %v3467
      %v4657 = vpop.f32.mrf.mxu0
      %v4658 = vadd.f32 %v4639, %v4657
      %v4659 = vpop.f32.mrf.mxu0
      %v4660 = vadd.f32 %v4641, %v4659
      %4661 = vdwg.mxu0
      %4662 = vmatpush.bf16.msra.mxu0 0
      %4663 = vmatpush.bf16.msra.mxu0 0
      %4664 = vmatpush.bf16.msra.mxu0 0
      %4665 = vmatpush.bf16.msra.mxu0 0
      %4666 = vmatpush.bf16.msra.mxu0 0
      %4667 = vmatpush.bf16.msra.mxu0 0
      %4668 = vmatpush.bf16.msra.mxu0 %v4605
      %4669 = vmatpush.bf16.msra.mxu0 %v4604
      %4670 = vmatmul.bf16.gmra.mxu0 %v3582
      %v4671 = vpop.f32.mrf.mxu0
      %v4672 = vadd.f32 %v4653, %v4671
      %v4673 = vpop.f32.mrf.mxu0
      %v4674 = vadd.f32 %v4655, %v4673
      %4675 = vmatmul.bf16.gmra.mxu0 %v3585
      %v4676 = vpop.f32.mrf.mxu0
      %v4677 = vadd.f32 %v4658, %v4676
      %v4678 = vpop.f32.mrf.mxu0
      %v4679 = vadd.f32 %v4660, %v4678
      %4680 = vdwg.mxu0
      %v4681 = vmax.f32 %v4672, 0.0
      %v4682 = vmax.f32 %v4674, 0.0
      %v4683 = vmax.f32 %v4677, 0.0
      %v4684 = vmax.f32 %v4679, 0.0
      %v4685 = vpack.c.bf16 %v4681, %v4681
      %v4686 = vpack.c.bf16 %v4682, %v4682
      %v4687 = vpack.c.bf16 %v4683, %v4683
      %v4688 = vpack.c.bf16 %v4684, %v4684
      %s4689 = scalar_lea.vmem [#allocation4], 48
      %4690 = vst.msk [vmem:[%s4689] sm:$0xf] %vm3278, %v4685
      %4691 = vst.msk [vmem:[%s4689 + $0x4] sm:$0xf] %vm3278, %v4686
      %4692 = vst.msk [vmem:[%s4689 + $0x8] sm:$0xf] %vm3278, %v4687
      %4693 = vst.msk [vmem:[%s4689 + $0xc] sm:$0xf] %vm3278, %v4688
      %v4694 = vld [vmem:[%s2543] sm:$0xf]
      %v4695 = vld [vmem:[%s2543 + $0x4] sm:$0xf]
      %v4696 = vld [vmem:[%s2543 + $0x8] sm:$0xf]
      %v4697 = vld [vmem:[%s2543 + $0xc] sm:$0xf]
      %4698 = vst.msk [vmem:[#allocation5] sm:$0xf] %vm3278, %v4694
      %4699 = vst.msk [vmem:[#allocation5 + $0x4] sm:$0xf] %vm3278, %v4695
      %4700 = vst.msk [vmem:[#allocation5 + $0x8] sm:$0xf] %vm3278, %v4696
      %4701 = vst.msk [vmem:[#allocation5 + $0xc] sm:$0xf] %vm3278, %v4697
      %4706 = vrot.lane.b32.xlu0 %v4694, 124
      %v4707 = vpop.permute.xlu0 %4706
      %4708 = vrot.lane.b32.xlu0 %v4695, 124
      %v4709 = vpop.permute.xlu0 %4708
      %4710 = vrot.lane.b32.xlu0 %v4696, 124
      %v4711 = vpop.permute.xlu0 %4710
      %4712 = vrot.lane.b32.xlu0 %v4697, 124
      %v4713 = vpop.permute.xlu0 %4712
      %4718 = vst.msk [vmem:[#allocation5 + $0x10] sm:$0xf] %vm3278, %v4707
      %4719 = vst.msk [vmem:[#allocation5 + $0x14] sm:$0xf] %vm3278, %v4709
      %4720 = vst.msk [vmem:[#allocation5 + $0x18] sm:$0xf] %vm3278, %v4711
      %4721 = vst.msk [vmem:[#allocation5 + $0x1c] sm:$0xf] %vm3278, %v4713
      %4722 = vrot.lane.b32.xlu0 %v4694, 120
      %v4723 = vpop.permute.xlu0 %4722
      %4724 = vrot.lane.b32.xlu0 %v4695, 120
      %v4725 = vpop.permute.xlu0 %4724
      %4726 = vrot.lane.b32.xlu0 %v4696, 120
      %v4727 = vpop.permute.xlu0 %4726
      %4728 = vrot.lane.b32.xlu0 %v4697, 120
      %v4729 = vpop.permute.xlu0 %4728
      %4734 = vst.msk [vmem:[#allocation5 + $0x20] sm:$0xf] %vm3278, %v4723
      %4735 = vst.msk [vmem:[#allocation5 + $0x24] sm:$0xf] %vm3278, %v4725
      %4736 = vst.msk [vmem:[#allocation5 + $0x28] sm:$0xf] %vm3278, %v4727
      %4737 = vst.msk [vmem:[#allocation5 + $0x2c] sm:$0xf] %vm3278, %v4729
      %v4738 = vld [vmem:[%s2889] sm:$0xf]
      %v4739 = vld [vmem:[%s2889 + $0x4] sm:$0xf]
      %v4740 = vld [vmem:[%s2889 + $0x8] sm:$0xf]
      %v4741 = vld [vmem:[%s2889 + $0xc] sm:$0xf]
      %4742 = vst.msk [vmem:[#allocation5 + $0x30] sm:$0xf] %vm3278, %v4738
      %4743 = vst.msk [vmem:[#allocation5 + $0x34] sm:$0xf] %vm3278, %v4739
      %4744 = vst.msk [vmem:[#allocation5 + $0x38] sm:$0xf] %vm3278, %v4740
      %4745 = vst.msk [vmem:[#allocation5 + $0x3c] sm:$0xf] %vm3278, %v4741
      %4750 = vrot.lane.b32.xlu0 %v4738, 124
      %v4751 = vpop.permute.xlu0 %4750
      %4752 = vrot.lane.b32.xlu0 %v4739, 124
      %v4753 = vpop.permute.xlu0 %4752
      %4754 = vrot.lane.b32.xlu0 %v4740, 124
      %v4755 = vpop.permute.xlu0 %4754
      %4756 = vrot.lane.b32.xlu0 %v4741, 124
      %v4757 = vpop.permute.xlu0 %4756
      %4762 = vst.msk [vmem:[#allocation5 + $0x40] sm:$0xf] %vm3278, %v4751
      %4763 = vst.msk [vmem:[#allocation5 + $0x44] sm:$0xf] %vm3278, %v4753
      %4764 = vst.msk [vmem:[#allocation5 + $0x48] sm:$0xf] %vm3278, %v4755
      %4765 = vst.msk [vmem:[#allocation5 + $0x4c] sm:$0xf] %vm3278, %v4757
      %4766 = vrot.lane.b32.xlu0 %v4738, 120
      %v4767 = vpop.permute.xlu0 %4766
      %4768 = vrot.lane.b32.xlu0 %v4739, 120
      %v4769 = vpop.permute.xlu0 %4768
      %4770 = vrot.lane.b32.xlu0 %v4740, 120
      %v4771 = vpop.permute.xlu0 %4770
      %4772 = vrot.lane.b32.xlu0 %v4741, 120
      %v4773 = vpop.permute.xlu0 %4772
      %4778 = vst.msk [vmem:[#allocation5 + $0x50] sm:$0xf] %vm3278, %v4767
      %4779 = vst.msk [vmem:[#allocation5 + $0x54] sm:$0xf] %vm3278, %v4769
      %4780 = vst.msk [vmem:[#allocation5 + $0x58] sm:$0xf] %vm3278, %v4771
      %4781 = vst.msk [vmem:[#allocation5 + $0x5c] sm:$0xf] %vm3278, %v4773
      %v4782 = vld [vmem:[%s3235] sm:$0xf]
      %v4783 = vld [vmem:[%s3235 + $0x4] sm:$0xf]
      %v4784 = vld [vmem:[%s3235 + $0x8] sm:$0xf]
      %v4785 = vld [vmem:[%s3235 + $0xc] sm:$0xf]
      %4786 = vst.msk [vmem:[#allocation5 + $0x60] sm:$0xf] %vm3278, %v4782
      %4787 = vst.msk [vmem:[#allocation5 + $0x64] sm:$0xf] %vm3278, %v4783
      %4788 = vst.msk [vmem:[#allocation5 + $0x68] sm:$0xf] %vm3278, %v4784
      %4789 = vst.msk [vmem:[#allocation5 + $0x6c] sm:$0xf] %vm3278, %v4785
      %4794 = vrot.lane.b32.xlu0 %v4782, 124
      %v4795 = vpop.permute.xlu0 %4794
      %4796 = vrot.lane.b32.xlu0 %v4783, 124
      %v4797 = vpop.permute.xlu0 %4796
      %4798 = vrot.lane.b32.xlu0 %v4784, 124
      %v4799 = vpop.permute.xlu0 %4798
      %4800 = vrot.lane.b32.xlu0 %v4785, 124
      %v4801 = vpop.permute.xlu0 %4800
      %4806 = vst.msk [vmem:[#allocation5 + $0x70] sm:$0xf] %vm3278, %v4795
      %4807 = vst.msk [vmem:[#allocation5 + $0x74] sm:$0xf] %vm3278, %v4797
      %4808 = vst.msk [vmem:[#allocation5 + $0x78] sm:$0xf] %vm3278, %v4799
      %4809 = vst.msk [vmem:[#allocation5 + $0x7c] sm:$0xf] %vm3278, %v4801
      %4810 = vrot.lane.b32.xlu0 %v4782, 120
      %v4811 = vpop.permute.xlu0 %4810
      %4812 = vrot.lane.b32.xlu0 %v4783, 120
      %v4813 = vpop.permute.xlu0 %4812
      %4814 = vrot.lane.b32.xlu0 %v4784, 120
      %v4815 = vpop.permute.xlu0 %4814
      %4816 = vrot.lane.b32.xlu0 %v4785, 120
      %v4817 = vpop.permute.xlu0 %4816
      %4822 = vst.msk [vmem:[#allocation5 + $0x80] sm:$0xf] %vm3278, %v4811
      %4823 = vst.msk [vmem:[#allocation5 + $0x84] sm:$0xf] %vm3278, %v4813
      %4824 = vst.msk [vmem:[#allocation5 + $0x88] sm:$0xf] %vm3278, %v4815
      %4825 = vst.msk [vmem:[#allocation5 + $0x8c] sm:$0xf] %vm3278, %v4817
      %v4826 = vld [vmem:[#allocation5] sm:$0xf]
      %v4827 = vld [vmem:[#allocation5 + $0x4] sm:$0xf]
      %v4828 = vld [vmem:[#allocation5 + $0x8] sm:$0xf]
      %v4829 = vld [vmem:[#allocation5 + $0xc] sm:$0xf]
      %v4830 = vld [vmem:[#allocation5 + $0x10] sm:$0xf]
      %v4831 = vld [vmem:[#allocation5 + $0x14] sm:$0xf]
      %v4832 = vld [vmem:[#allocation5 + $0x18] sm:$0xf]
      %v4833 = vld [vmem:[#allocation5 + $0x1c] sm:$0xf]
      %v4834 = vld [vmem:[#allocation5 + $0x20] sm:$0xf]
      %v4835 = vld [vmem:[#allocation5 + $0x24] sm:$0xf]
      %v4836 = vld [vmem:[#allocation5 + $0x28] sm:$0xf]
      %v4837 = vld [vmem:[#allocation5 + $0x2c] sm:$0xf]
      %v4838 = vld [vmem:[#allocation5 + $0x30] sm:$0xf]
      %v4839 = vld [vmem:[#allocation5 + $0x34] sm:$0xf]
      %v4840 = vld [vmem:[#allocation5 + $0x38] sm:$0xf]
      %v4841 = vld [vmem:[#allocation5 + $0x3c] sm:$0xf]
      %v4842 = vld [vmem:[#allocation5 + $0x40] sm:$0xf]
      %v4843 = vld [vmem:[#allocation5 + $0x44] sm:$0xf]
      %v4844 = vld [vmem:[#allocation5 + $0x48] sm:$0xf]
      %v4845 = vld [vmem:[#allocation5 + $0x4c] sm:$0xf]
      %v4846 = vld [vmem:[#allocation5 + $0x50] sm:$0xf]
      %v4847 = vld [vmem:[#allocation5 + $0x54] sm:$0xf]
      %v4848 = vld [vmem:[#allocation5 + $0x58] sm:$0xf]
      %v4849 = vld [vmem:[#allocation5 + $0x5c] sm:$0xf]
      %v4850 = vld [vmem:[#allocation5 + $0x60] sm:$0xf]
      %v4851 = vld [vmem:[#allocation5 + $0x64] sm:$0xf]
      %v4852 = vld [vmem:[#allocation5 + $0x68] sm:$0xf]
      %v4853 = vld [vmem:[#allocation5 + $0x6c] sm:$0xf]
      %v4854 = vld [vmem:[#allocation5 + $0x70] sm:$0xf]
      %v4855 = vld [vmem:[#allocation5 + $0x74] sm:$0xf]
      %v4856 = vld [vmem:[#allocation5 + $0x78] sm:$0xf]
      %v4857 = vld [vmem:[#allocation5 + $0x7c] sm:$0xf]
      %v4858 = vld [vmem:[#allocation5 + $0x80] sm:$0xf]
      %v4859 = vld [vmem:[#allocation5 + $0x84] sm:$0xf]
      %v4860 = vld [vmem:[#allocation5 + $0x88] sm:$0xf]
      %v4861 = vld [vmem:[#allocation5 + $0x8c] sm:$0xf]
      %v4898 = vunpack.c.l.b16 %v4826
      %v4899 = vunpack.c.l.b16 %v4827
      %v4900 = vunpack.c.l.b16 %v4828
      %v4901 = vunpack.c.l.b16 %v4829
      %v4902 = vunpack.c.l.b16 %v4830
      %v4903 = vunpack.c.l.b16 %v4831
      %v4904 = vunpack.c.l.b16 %v4832
      %v4905 = vunpack.c.l.b16 %v4833
      %v4906 = vunpack.c.l.b16 %v4834
      %v4907 = vunpack.c.l.b16 %v4835
      %v4908 = vunpack.c.l.b16 %v4836
      %v4909 = vunpack.c.l.b16 %v4837
      %v4910 = vunpack.c.l.b16 %v4838
      %v4911 = vunpack.c.l.b16 %v4839
      %v4912 = vunpack.c.l.b16 %v4840
      %v4913 = vunpack.c.l.b16 %v4841
      %v4914 = vunpack.c.l.b16 %v4842
      %v4915 = vunpack.c.l.b16 %v4843
      %v4916 = vunpack.c.l.b16 %v4844
      %v4917 = vunpack.c.l.b16 %v4845
      %v4918 = vunpack.c.l.b16 %v4846
      %v4919 = vunpack.c.l.b16 %v4847
      %v4920 = vunpack.c.l.b16 %v4848
      %v4921 = vunpack.c.l.b16 %v4849
      %v4922 = vunpack.c.l.b16 %v4850
      %v4923 = vunpack.c.l.b16 %v4851
      %v4924 = vunpack.c.l.b16 %v4852
      %v4925 = vunpack.c.l.b16 %v4853
      %v4926 = vunpack.c.l.b16 %v4854
      %v4927 = vunpack.c.l.b16 %v4855
      %v4928 = vunpack.c.l.b16 %v4856
      %v4929 = vunpack.c.l.b16 %v4857
      %v4930 = vunpack.c.l.b16 %v4858
      %v4931 = vunpack.c.l.b16 %v4859
      %v4932 = vunpack.c.l.b16 %v4860
      %v4933 = vunpack.c.l.b16 %v4861
      %v4934 = vpack.c.b16 %v4899, %v4898
      %v4935 = vpack.c.b16 %v4901, %v4900
      %v4936 = vpack.c.b16 %v4903, %v4902
      %v4937 = vpack.c.b16 %v4905, %v4904
      %v4938 = vpack.c.b16 %v4907, %v4906
      %v4939 = vpack.c.b16 %v4909, %v4908
      %v4940 = vpack.c.b16 %v4911, %v4910
      %v4941 = vpack.c.b16 %v4913, %v4912
      %v4942 = vpack.c.b16 %v4915, %v4914
      %v4943 = vpack.c.b16 %v4917, %v4916
      %v4944 = vpack.c.b16 %v4919, %v4918
      %v4945 = vpack.c.b16 %v4921, %v4920
      %v4946 = vpack.c.b16 %v4923, %v4922
      %v4947 = vpack.c.b16 %v4925, %v4924
      %v4948 = vpack.c.b16 %v4927, %v4926
      %v4949 = vpack.c.b16 %v4929, %v4928
      %v4950 = vpack.c.b16 %v4931, %v4930
      %v4951 = vpack.c.b16 %v4933, %v4932
      %4970 = vmatpush.bf16.msra.mxu0 %v4941
      %4971 = vmatpush.bf16.msra.mxu0 %v4940
      %4972 = vmatpush.bf16.msra.mxu0 %v4939
      %4973 = vmatpush.bf16.msra.mxu0 %v4938
      %4974 = vmatpush.bf16.msra.mxu0 %v4937
      %4975 = vmatpush.bf16.msra.mxu0 %v4936
      %4976 = vmatpush.bf16.msra.mxu0 %v4935
      %4977 = vmatpush.bf16.msra.mxu0 %v4934
      %4978 = vmatmul.bf16.gmra.mxu0 %v3463
      %v4979 = vpop.f32.mrf.mxu0
      %v4980 = vadd.f32 %v3257, %v4979
      %v4981 = vpop.f32.mrf.mxu0
      %v4982 = vadd.f32 %v3262, %v4981
      %4983 = vmatmul.bf16.gmra.mxu0 %v3466
      %v4984 = vpop.f32.mrf.mxu0
      %v4985 = vadd.f32 %v3267, %v4984
      %v4986 = vpop.f32.mrf.mxu0
      %v4987 = vadd.f32 %v3272, %v4986
      %4988 = vdwg.mxu0
      %4989 = vmatpush.bf16.msra.mxu0 %v4949
      %4990 = vmatpush.bf16.msra.mxu0 %v4948
      %4991 = vmatpush.bf16.msra.mxu0 %v4947
      %4992 = vmatpush.bf16.msra.mxu0 %v4946
      %4993 = vmatpush.bf16.msra.mxu0 %v4945
      %4994 = vmatpush.bf16.msra.mxu0 %v4944
      %4995 = vmatpush.bf16.msra.mxu0 %v4943
      %4996 = vmatpush.bf16.msra.mxu0 %v4942
      %4997 = vmatmul.bf16.gmra.mxu0 %v3464
      %v4998 = vpop.f32.mrf.mxu0
      %v4999 = vadd.f32 %v4980, %v4998
      %v5000 = vpop.f32.mrf.mxu0
      %v5001 = vadd.f32 %v4982, %v5000
      %5002 = vmatmul.bf16.gmra.mxu0 %v3467
      %v5003 = vpop.f32.mrf.mxu0
      %v5004 = vadd.f32 %v4985, %v5003
      %v5005 = vpop.f32.mrf.mxu0
      %v5006 = vadd.f32 %v4987, %v5005
      %5007 = vdwg.mxu0
      %5008 = vmatpush.bf16.msra.mxu0 0
      %5009 = vmatpush.bf16.msra.mxu0 0
      %5010 = vmatpush.bf16.msra.mxu0 0
      %5011 = vmatpush.bf16.msra.mxu0 0
      %5012 = vmatpush.bf16.msra.mxu0 0
      %5013 = vmatpush.bf16.msra.mxu0 0
      %5014 = vmatpush.bf16.msra.mxu0 %v4951
      %5015 = vmatpush.bf16.msra.mxu0 %v4950
      %5016 = vmatmul.bf16.gmra.mxu0 %v3582
      %v5017 = vpop.f32.mrf.mxu0
      %v5018 = vadd.f32 %v4999, %v5017
      %v5019 = vpop.f32.mrf.mxu0
      %v5020 = vadd.f32 %v5001, %v5019
      %5021 = vmatmul.bf16.gmra.mxu0 %v3585
      %v5022 = vpop.f32.mrf.mxu0
      %v5023 = vadd.f32 %v5004, %v5022
      %v5024 = vpop.f32.mrf.mxu0
      %v5025 = vadd.f32 %v5006, %v5024
      %5026 = vdwg.mxu0
      %v5027 = vmax.f32 %v5018, 0.0
      %v5028 = vmax.f32 %v5020, 0.0
      %v5029 = vmax.f32 %v5023, 0.0
      %v5030 = vmax.f32 %v5025, 0.0
      %v5031 = vpack.c.bf16 %v5027, %v5027
      %v5032 = vpack.c.bf16 %v5028, %v5028
      %v5033 = vpack.c.bf16 %v5029, %v5029
      %v5034 = vpack.c.bf16 %v5030, %v5030
      %s5035 = scalar_lea.vmem [#allocation4], 64
      %5036 = vst.msk [vmem:[%s5035] sm:$0xf] %vm3278, %v5031
      %5037 = vst.msk [vmem:[%s5035 + $0x4] sm:$0xf] %vm3278, %v5032
      %5038 = vst.msk [vmem:[%s5035 + $0x8] sm:$0xf] %vm3278, %v5033
      %5039 = vst.msk [vmem:[%s5035 + $0xc] sm:$0xf] %vm3278, %v5034
      %s5040 = scalar_lea.vmem %s2, 96
      %v5041 = vld [vmem:[%s5040] sm:$0xff]
      %v5042 = vld [vmem:[%s5040 + $0x8] sm:$0xf]
      %v5043 = vld [vmem:[%s5040 + $0xc] sm:$0xff]
      %v5044 = vld [vmem:[%s5040 + $0x14] sm:$0xf]
      %v5045 = vld [vmem:[%s5040 + $0x18] sm:$0xff]
      %v5046 = vld [vmem:[%s5040 + $0x20] sm:$0xf]
      %v5047 = vld [vmem:[%s5040 + $0x24] sm:$0xff]
      %v5048 = vld [vmem:[%s5040 + $0x2c] sm:$0xf]
      %s5049 = scalar_lea.vmem %s3, 96
      %v5050 = vld [vmem:[%s5049] sm:$0xff]
      %v5051 = vld [vmem:[%s5049 + $0x8] sm:$0xff]
      %v5052 = vld [vmem:[%s5049 + $0x10] sm:$0xff]
      %v5053 = vld [vmem:[%s5049 + $0x18] sm:$0xff]
      %5055 = vset.pattern.permute.xlu0 0
      %5056 = vperm.xlu0 %5055, %v5050
      %v5057 = vpop.permute.xlu0 %5056
      %5060 = vset.pattern.permute.xlu0 0
      %5061 = vperm.xlu0 %5060, %v5051
      %v5062 = vpop.permute.xlu0 %5061
      %5065 = vset.pattern.permute.xlu0 0
      %5066 = vperm.xlu0 %5065, %v5052
      %v5067 = vpop.permute.xlu0 %5066
      %5070 = vset.pattern.permute.xlu0 0
      %5071 = vperm.xlu0 %5070, %v5053
      %v5072 = vpop.permute.xlu0 %5071
      %v5074 = vld [vmem:[#allocation4] sm:$0xf]
      %v5075 = vld [vmem:[#allocation4 + $0x4] sm:$0xf]
      %v5076 = vld [vmem:[#allocation4 + $0x8] sm:$0xf]
      %v5077 = vld [vmem:[#allocation4 + $0xc] sm:$0xf]
      %vm5078 = vcmask 93184
      %5079 = vst.msk [vmem:[#allocation5] sm:$0xf] %vm5078, %v5074
      %5080 = vst.msk [vmem:[#allocation5 + $0x4] sm:$0xf] %vm5078, %v5075
      %5081 = vst.msk [vmem:[#allocation5 + $0x8] sm:$0xf] %vm5078, %v5076
      %5082 = vst.msk [vmem:[#allocation5 + $0xc] sm:$0xf] %vm5078, %v5077
      %5087 = vrot.lane.b32.xlu0 %v5074, 124
      %v5088 = vpop.permute.xlu0 %5087
      %5089 = vrot.lane.b32.xlu0 %v5075, 124
      %v5090 = vpop.permute.xlu0 %5089
      %5091 = vrot.lane.b32.xlu0 %v5076, 124
      %v5092 = vpop.permute.xlu0 %5091
      %5093 = vrot.lane.b32.xlu0 %v5077, 124
      %v5094 = vpop.permute.xlu0 %5093
      %5099 = vst.msk [vmem:[#allocation5 + $0x10] sm:$0xf] %vm5078, %v5088
      %5100 = vst.msk [vmem:[#allocation5 + $0x14] sm:$0xf] %vm5078, %v5090
      %5101 = vst.msk [vmem:[#allocation5 + $0x18] sm:$0xf] %vm5078, %v5092
      %5102 = vst.msk [vmem:[#allocation5 + $0x1c] sm:$0xf] %vm5078, %v5094
      %5103 = vrot.lane.b32.xlu0 %v5074, 120
      %v5104 = vpop.permute.xlu0 %5103
      %5105 = vrot.lane.b32.xlu0 %v5075, 120
      %v5106 = vpop.permute.xlu0 %5105
      %5107 = vrot.lane.b32.xlu0 %v5076, 120
      %v5108 = vpop.permute.xlu0 %5107
      %5109 = vrot.lane.b32.xlu0 %v5077, 120
      %v5110 = vpop.permute.xlu0 %5109
      %5115 = vst.msk [vmem:[#allocation5 + $0x20] sm:$0xf] %vm5078, %v5104
      %5116 = vst.msk [vmem:[#allocation5 + $0x24] sm:$0xf] %vm5078, %v5106
      %5117 = vst.msk [vmem:[#allocation5 + $0x28] sm:$0xf] %vm5078, %v5108
      %5118 = vst.msk [vmem:[#allocation5 + $0x2c] sm:$0xf] %vm5078, %v5110
      %v5119 = vld [vmem:[%s3997] sm:$0xf]
      %v5120 = vld [vmem:[%s3997 + $0x4] sm:$0xf]
      %v5121 = vld [vmem:[%s3997 + $0x8] sm:$0xf]
      %v5122 = vld [vmem:[%s3997 + $0xc] sm:$0xf]
      %5123 = vst.msk [vmem:[#allocation5 + $0x30] sm:$0xf] %vm5078, %v5119
      %5124 = vst.msk [vmem:[#allocation5 + $0x34] sm:$0xf] %vm5078, %v5120
      %5125 = vst.msk [vmem:[#allocation5 + $0x38] sm:$0xf] %vm5078, %v5121
      %5126 = vst.msk [vmem:[#allocation5 + $0x3c] sm:$0xf] %vm5078, %v5122
      %5131 = vrot.lane.b32.xlu0 %v5119, 124
      %v5132 = vpop.permute.xlu0 %5131
      %5133 = vrot.lane.b32.xlu0 %v5120, 124
      %v5134 = vpop.permute.xlu0 %5133
      %5135 = vrot.lane.b32.xlu0 %v5121, 124
      %v5136 = vpop.permute.xlu0 %5135
      %5137 = vrot.lane.b32.xlu0 %v5122, 124
      %v5138 = vpop.permute.xlu0 %5137
      %5143 = vst.msk [vmem:[#allocation5 + $0x40] sm:$0xf] %vm5078, %v5132
      %5144 = vst.msk [vmem:[#allocation5 + $0x44] sm:$0xf] %vm5078, %v5134
      %5145 = vst.msk [vmem:[#allocation5 + $0x48] sm:$0xf] %vm5078, %v5136
      %5146 = vst.msk [vmem:[#allocation5 + $0x4c] sm:$0xf] %vm5078, %v5138
      %5147 = vrot.lane.b32.xlu0 %v5119, 120
      %v5148 = vpop.permute.xlu0 %5147
      %5149 = vrot.lane.b32.xlu0 %v5120, 120
      %v5150 = vpop.permute.xlu0 %5149
      %5151 = vrot.lane.b32.xlu0 %v5121, 120
      %v5152 = vpop.permute.xlu0 %5151
      %5153 = vrot.lane.b32.xlu0 %v5122, 120
      %v5154 = vpop.permute.xlu0 %5153
      %5159 = vst.msk [vmem:[#allocation5 + $0x50] sm:$0xf] %vm5078, %v5148
      %5160 = vst.msk [vmem:[#allocation5 + $0x54] sm:$0xf] %vm5078, %v5150
      %5161 = vst.msk [vmem:[#allocation5 + $0x58] sm:$0xf] %vm5078, %v5152
      %5162 = vst.msk [vmem:[#allocation5 + $0x5c] sm:$0xf] %vm5078, %v5154
      %v5163 = vld [vmem:[%s4343] sm:$0xf]
      %v5164 = vld [vmem:[%s4343 + $0x4] sm:$0xf]
      %v5165 = vld [vmem:[%s4343 + $0x8] sm:$0xf]
      %v5166 = vld [vmem:[%s4343 + $0xc] sm:$0xf]
      %5167 = vst.msk [vmem:[#allocation5 + $0x60] sm:$0xf] %vm5078, %v5163
      %5168 = vst.msk [vmem:[#allocation5 + $0x64] sm:$0xf] %vm5078, %v5164
      %5169 = vst.msk [vmem:[#allocation5 + $0x68] sm:$0xf] %vm5078, %v5165
      %5170 = vst.msk [vmem:[#allocation5 + $0x6c] sm:$0xf] %vm5078, %v5166
      %5175 = vrot.lane.b32.xlu0 %v5163, 124
      %v5176 = vpop.permute.xlu0 %5175
      %5177 = vrot.lane.b32.xlu0 %v5164, 124
      %v5178 = vpop.permute.xlu0 %5177
      %5179 = vrot.lane.b32.xlu0 %v5165, 124
      %v5180 = vpop.permute.xlu0 %5179
      %5181 = vrot.lane.b32.xlu0 %v5166, 124
      %v5182 = vpop.permute.xlu0 %5181
      %5187 = vst.msk [vmem:[#allocation5 + $0x70] sm:$0xf] %vm5078, %v5176
      %5188 = vst.msk [vmem:[#allocation5 + $0x74] sm:$0xf] %vm5078, %v5178
      %5189 = vst.msk [vmem:[#allocation5 + $0x78] sm:$0xf] %vm5078, %v5180
      %5190 = vst.msk [vmem:[#allocation5 + $0x7c] sm:$0xf] %vm5078, %v5182
      %5191 = vrot.lane.b32.xlu0 %v5163, 120
      %v5192 = vpop.permute.xlu0 %5191
      %5193 = vrot.lane.b32.xlu0 %v5164, 120
      %v5194 = vpop.permute.xlu0 %5193
      %5195 = vrot.lane.b32.xlu0 %v5165, 120
      %v5196 = vpop.permute.xlu0 %5195
      %5197 = vrot.lane.b32.xlu0 %v5166, 120
      %v5198 = vpop.permute.xlu0 %5197
      %5203 = vst.msk [vmem:[#allocation5 + $0x80] sm:$0xf] %vm5078, %v5192
      %5204 = vst.msk [vmem:[#allocation5 + $0x84] sm:$0xf] %vm5078, %v5194
      %5205 = vst.msk [vmem:[#allocation5 + $0x88] sm:$0xf] %vm5078, %v5196
      %5206 = vst.msk [vmem:[#allocation5 + $0x8c] sm:$0xf] %vm5078, %v5198
      %v5207 = vld [vmem:[#allocation5] sm:$0xf]
      %v5208 = vld [vmem:[#allocation5 + $0x4] sm:$0xf]
      %v5209 = vld [vmem:[#allocation5 + $0x8] sm:$0xf]
      %v5210 = vld [vmem:[#allocation5 + $0xc] sm:$0xf]
      %v5211 = vld [vmem:[#allocation5 + $0x10] sm:$0xf]
      %v5212 = vld [vmem:[#allocation5 + $0x14] sm:$0xf]
      %v5213 = vld [vmem:[#allocation5 + $0x18] sm:$0xf]
      %v5214 = vld [vmem:[#allocation5 + $0x1c] sm:$0xf]
      %v5215 = vld [vmem:[#allocation5 + $0x20] sm:$0xf]
      %v5216 = vld [vmem:[#allocation5 + $0x24] sm:$0xf]
      %v5217 = vld [vmem:[#allocation5 + $0x28] sm:$0xf]
      %v5218 = vld [vmem:[#allocation5 + $0x2c] sm:$0xf]
      %v5219 = vld [vmem:[#allocation5 + $0x30] sm:$0xf]
      %v5220 = vld [vmem:[#allocation5 + $0x34] sm:$0xf]
      %v5221 = vld [vmem:[#allocation5 + $0x38] sm:$0xf]
      %v5222 = vld [vmem:[#allocation5 + $0x3c] sm:$0xf]
      %v5223 = vld [vmem:[#allocation5 + $0x40] sm:$0xf]
      %v5224 = vld [vmem:[#allocation5 + $0x44] sm:$0xf]
      %v5225 = vld [vmem:[#allocation5 + $0x48] sm:$0xf]
      %v5226 = vld [vmem:[#allocation5 + $0x4c] sm:$0xf]
      %v5227 = vld [vmem:[#allocation5 + $0x50] sm:$0xf]
      %v5228 = vld [vmem:[#allocation5 + $0x54] sm:$0xf]
      %v5229 = vld [vmem:[#allocation5 + $0x58] sm:$0xf]
      %v5230 = vld [vmem:[#allocation5 + $0x5c] sm:$0xf]
      %v5231 = vld [vmem:[#allocation5 + $0x60] sm:$0xf]
      %v5232 = vld [vmem:[#allocation5 + $0x64] sm:$0xf]
      %v5233 = vld [vmem:[#allocation5 + $0x68] sm:$0xf]
      %v5234 = vld [vmem:[#allocation5 + $0x6c] sm:$0xf]
      %v5235 = vld [vmem:[#allocation5 + $0x70] sm:$0xf]
      %v5236 = vld [vmem:[#allocation5 + $0x74] sm:$0xf]
      %v5237 = vld [vmem:[#allocation5 + $0x78] sm:$0xf]
      %v5238 = vld [vmem:[#allocation5 + $0x7c] sm:$0xf]
      %v5239 = vld [vmem:[#allocation5 + $0x80] sm:$0xf]
      %v5240 = vld [vmem:[#allocation5 + $0x84] sm:$0xf]
      %v5241 = vld [vmem:[#allocation5 + $0x88] sm:$0xf]
      %v5242 = vld [vmem:[#allocation5 + $0x8c] sm:$0xf]
      %v5251 = vunpack.c.l.b16 %v5041
      %v5252 = vunpack.c.h.b16 %v5041
      %v5253 = vunpack.c.l.b16 %v5042
      %v5254 = vunpack.c.l.b16 %v5043
      %v5255 = vunpack.c.h.b16 %v5043
      %v5256 = vunpack.c.l.b16 %v5044
      %v5257 = vunpack.c.l.b16 %v5045
      %v5258 = vunpack.c.h.b16 %v5045
      %v5259 = vunpack.c.l.b16 %v5046
      %v5260 = vunpack.c.l.b16 %v5047
      %v5261 = vunpack.c.h.b16 %v5047
      %v5262 = vunpack.c.l.b16 %v5048
      %v5263 = vpack.c.b16 %v5254, %v5251
      %v5264 = vpack.c.b16 %v5255, %v5252
      %v5265 = vpack.c.b16 %v5256, %v5253
      %v5266 = vpack.c.b16 %v5260, %v5257
      %v5267 = vpack.c.b16 %v5261, %v5258
      %v5268 = vpack.c.b16 %v5262, %v5259
      %v5309 = vunpack.c.l.b16 %v5207
      %v5310 = vunpack.c.l.b16 %v5208
      %v5311 = vunpack.c.l.b16 %v5209
      %v5312 = vunpack.c.l.b16 %v5210
      %v5313 = vunpack.c.l.b16 %v5211
      %v5314 = vunpack.c.l.b16 %v5212
      %v5315 = vunpack.c.l.b16 %v5213
      %v5316 = vunpack.c.l.b16 %v5214
      %v5317 = vunpack.c.l.b16 %v5215
      %v5318 = vunpack.c.l.b16 %v5216
      %v5319 = vunpack.c.l.b16 %v5217
      %v5320 = vunpack.c.l.b16 %v5218
      %v5321 = vunpack.c.l.b16 %v5219
      %v5322 = vunpack.c.l.b16 %v5220
      %v5323 = vunpack.c.l.b16 %v5221
      %v5324 = vunpack.c.l.b16 %v5222
      %v5325 = vunpack.c.l.b16 %v5223
      %v5326 = vunpack.c.l.b16 %v5224
      %v5327 = vunpack.c.l.b16 %v5225
      %v5328 = vunpack.c.l.b16 %v5226
      %v5329 = vunpack.c.l.b16 %v5227
      %v5330 = vunpack.c.l.b16 %v5228
      %v5331 = vunpack.c.l.b16 %v5229
      %v5332 = vunpack.c.l.b16 %v5230
      %v5333 = vunpack.c.l.b16 %v5231
      %v5334 = vunpack.c.l.b16 %v5232
      %v5335 = vunpack.c.l.b16 %v5233
      %v5336 = vunpack.c.l.b16 %v5234
      %v5337 = vunpack.c.l.b16 %v5235
      %v5338 = vunpack.c.l.b16 %v5236
      %v5339 = vunpack.c.l.b16 %v5237
      %v5340 = vunpack.c.l.b16 %v5238
      %v5341 = vunpack.c.l.b16 %v5239
      %v5342 = vunpack.c.l.b16 %v5240
      %v5343 = vunpack.c.l.b16 %v5241
      %v5344 = vunpack.c.l.b16 %v5242
      %v5345 = vpack.c.b16 %v5310, %v5309
      %v5346 = vpack.c.b16 %v5312, %v5311
      %v5347 = vpack.c.b16 %v5314, %v5313
      %v5348 = vpack.c.b16 %v5316, %v5315
      %v5349 = vpack.c.b16 %v5318, %v5317
      %v5350 = vpack.c.b16 %v5320, %v5319
      %v5351 = vpack.c.b16 %v5322, %v5321
      %v5352 = vpack.c.b16 %v5324, %v5323
      %v5353 = vpack.c.b16 %v5326, %v5325
      %v5354 = vpack.c.b16 %v5328, %v5327
      %v5355 = vpack.c.b16 %v5330, %v5329
      %v5356 = vpack.c.b16 %v5332, %v5331
      %v5357 = vpack.c.b16 %v5334, %v5333
      %v5358 = vpack.c.b16 %v5336, %v5335
      %v5359 = vpack.c.b16 %v5338, %v5337
      %v5360 = vpack.c.b16 %v5340, %v5339
      %v5361 = vpack.c.b16 %v5342, %v5341
      %v5362 = vpack.c.b16 %v5344, %v5343
      %v5382 = vsel %vm1088, %v5265, 0
      %v5385 = vsel %vm1088, %v5268, 0
      %5387 = vmatpush.bf16.msra.mxu0 %v5352
      %5388 = vmatpush.bf16.msra.mxu0 %v5351
      %5389 = vmatpush.bf16.msra.mxu0 %v5350
      %5390 = vmatpush.bf16.msra.mxu0 %v5349
      %5391 = vmatpush.bf16.msra.mxu0 %v5348
      %5392 = vmatpush.bf16.msra.mxu0 %v5347
      %5393 = vmatpush.bf16.msra.mxu0 %v5346
      %5394 = vmatpush.bf16.msra.mxu0 %v5345
      %5395 = vmatmul.bf16.gmra.mxu0 %v5263
      %v5396 = vpop.f32.mrf.mxu0
      %v5397 = vadd.f32 %v5057, %v5396
      %v5398 = vpop.f32.mrf.mxu0
      %v5399 = vadd.f32 %v5062, %v5398
      %5400 = vmatmul.bf16.gmra.mxu0 %v5266
      %v5401 = vpop.f32.mrf.mxu0
      %v5402 = vadd.f32 %v5067, %v5401
      %v5403 = vpop.f32.mrf.mxu0
      %v5404 = vadd.f32 %v5072, %v5403
      %5405 = vdwg.mxu0
      %5406 = vmatpush.bf16.msra.mxu0 %v5360
      %5407 = vmatpush.bf16.msra.mxu0 %v5359
      %5408 = vmatpush.bf16.msra.mxu0 %v5358
      %5409 = vmatpush.bf16.msra.mxu0 %v5357
      %5410 = vmatpush.bf16.msra.mxu0 %v5356
      %5411 = vmatpush.bf16.msra.mxu0 %v5355
      %5412 = vmatpush.bf16.msra.mxu0 %v5354
      %5413 = vmatpush.bf16.msra.mxu0 %v5353
      %5414 = vmatmul.bf16.gmra.mxu0 %v5264
      %v5415 = vpop.f32.mrf.mxu0
      %v5416 = vadd.f32 %v5397, %v5415
      %v5417 = vpop.f32.mrf.mxu0
      %v5418 = vadd.f32 %v5399, %v5417
      %5419 = vmatmul.bf16.gmra.mxu0 %v5267
      %v5420 = vpop.f32.mrf.mxu0
      %v5421 = vadd.f32 %v5402, %v5420
      %v5422 = vpop.f32.mrf.mxu0
      %v5423 = vadd.f32 %v5404, %v5422
      %5424 = vdwg.mxu0
      %5425 = vmatpush.bf16.msra.mxu0 0
      %5426 = vmatpush.bf16.msra.mxu0 0
      %5427 = vmatpush.bf16.msra.mxu0 0
      %5428 = vmatpush.bf16.msra.mxu0 0
      %5429 = vmatpush.bf16.msra.mxu0 0
      %5430 = vmatpush.bf16.msra.mxu0 0
      %5431 = vmatpush.bf16.msra.mxu0 %v5362
      %5432 = vmatpush.bf16.msra.mxu0 %v5361
      %5433 = vmatmul.bf16.gmra.mxu0 %v5382
      %v5434 = vpop.f32.mrf.mxu0
      %v5435 = vadd.f32 %v5416, %v5434
      %v5436 = vpop.f32.mrf.mxu0
      %v5437 = vadd.f32 %v5418, %v5436
      %5438 = vmatmul.bf16.gmra.mxu0 %v5385
      %v5439 = vpop.f32.mrf.mxu0
      %v5440 = vadd.f32 %v5421, %v5439
      %v5441 = vpop.f32.mrf.mxu0
      %v5442 = vadd.f32 %v5423, %v5441
      %5443 = vdwg.mxu0
      %v5444 = vmax.f32 %v5435, 0.0
      %v5445 = vmax.f32 %v5437, 0.0
      %v5446 = vmax.f32 %v5440, 0.0
      %v5447 = vmax.f32 %v5442, 0.0
      %vm5448 = vcmask 97280
      %5449 = vst.msk [vmem:[%s197] sm:$0xff] %vm5448, %v5444
      %5450 = vst.msk [vmem:[%s197 + $0x8] sm:$0xff] %vm5448, %v5445
      %5451 = vst.msk [vmem:[%s197 + $0x10] sm:$0xff] %vm5448, %v5446
      %5452 = vst.msk [vmem:[%s197 + $0x18] sm:$0xff] %vm5448, %v5447
      %v5453 = vld [vmem:[%s3997] sm:$0xf]
      %v5454 = vld [vmem:[%s3997 + $0x4] sm:$0xf]
      %v5455 = vld [vmem:[%s3997 + $0x8] sm:$0xf]
      %v5456 = vld [vmem:[%s3997 + $0xc] sm:$0xf]
      %5457 = vst.msk [vmem:[#allocation5] sm:$0xf] %vm5078, %v5453
      %5458 = vst.msk [vmem:[#allocation5 + $0x4] sm:$0xf] %vm5078, %v5454
      %5459 = vst.msk [vmem:[#allocation5 + $0x8] sm:$0xf] %vm5078, %v5455
      %5460 = vst.msk [vmem:[#allocation5 + $0xc] sm:$0xf] %vm5078, %v5456
      %5465 = vrot.lane.b32.xlu0 %v5453, 124
      %v5466 = vpop.permute.xlu0 %5465
      %5467 = vrot.lane.b32.xlu0 %v5454, 124
      %v5468 = vpop.permute.xlu0 %5467
      %5469 = vrot.lane.b32.xlu0 %v5455, 124
      %v5470 = vpop.permute.xlu0 %5469
      %5471 = vrot.lane.b32.xlu0 %v5456, 124
      %v5472 = vpop.permute.xlu0 %5471
      %5477 = vst.msk [vmem:[#allocation5 + $0x10] sm:$0xf] %vm5078, %v5466
      %5478 = vst.msk [vmem:[#allocation5 + $0x14] sm:$0xf] %vm5078, %v5468
      %5479 = vst.msk [vmem:[#allocation5 + $0x18] sm:$0xf] %vm5078, %v5470
      %5480 = vst.msk [vmem:[#allocation5 + $0x1c] sm:$0xf] %vm5078, %v5472
      %5481 = vrot.lane.b32.xlu0 %v5453, 120
      %v5482 = vpop.permute.xlu0 %5481
      %5483 = vrot.lane.b32.xlu0 %v5454, 120
      %v5484 = vpop.permute.xlu0 %5483
      %5485 = vrot.lane.b32.xlu0 %v5455, 120
      %v5486 = vpop.permute.xlu0 %5485
      %5487 = vrot.lane.b32.xlu0 %v5456, 120
      %v5488 = vpop.permute.xlu0 %5487
      %5493 = vst.msk [vmem:[#allocation5 + $0x20] sm:$0xf] %vm5078, %v5482
      %5494 = vst.msk [vmem:[#allocation5 + $0x24] sm:$0xf] %vm5078, %v5484
      %5495 = vst.msk [vmem:[#allocation5 + $0x28] sm:$0xf] %vm5078, %v5486
      %5496 = vst.msk [vmem:[#allocation5 + $0x2c] sm:$0xf] %vm5078, %v5488
      %v5497 = vld [vmem:[%s4343] sm:$0xf]
      %v5498 = vld [vmem:[%s4343 + $0x4] sm:$0xf]
      %v5499 = vld [vmem:[%s4343 + $0x8] sm:$0xf]
      %v5500 = vld [vmem:[%s4343 + $0xc] sm:$0xf]
      %5501 = vst.msk [vmem:[#allocation5 + $0x30] sm:$0xf] %vm5078, %v5497
      %5502 = vst.msk [vmem:[#allocation5 + $0x34] sm:$0xf] %vm5078, %v5498
      %5503 = vst.msk [vmem:[#allocation5 + $0x38] sm:$0xf] %vm5078, %v5499
      %5504 = vst.msk [vmem:[#allocation5 + $0x3c] sm:$0xf] %vm5078, %v5500
      %5509 = vrot.lane.b32.xlu0 %v5497, 124
      %v5510 = vpop.permute.xlu0 %5509
      %5511 = vrot.lane.b32.xlu0 %v5498, 124
      %v5512 = vpop.permute.xlu0 %5511
      %5513 = vrot.lane.b32.xlu0 %v5499, 124
      %v5514 = vpop.permute.xlu0 %5513
      %5515 = vrot.lane.b32.xlu0 %v5500, 124
      %v5516 = vpop.permute.xlu0 %5515
      %5521 = vst.msk [vmem:[#allocation5 + $0x40] sm:$0xf] %vm5078, %v5510
      %5522 = vst.msk [vmem:[#allocation5 + $0x44] sm:$0xf] %vm5078, %v5512
      %5523 = vst.msk [vmem:[#allocation5 + $0x48] sm:$0xf] %vm5078, %v5514
      %5524 = vst.msk [vmem:[#allocation5 + $0x4c] sm:$0xf] %vm5078, %v5516
      %5525 = vrot.lane.b32.xlu0 %v5497, 120
      %v5526 = vpop.permute.xlu0 %5525
      %5527 = vrot.lane.b32.xlu0 %v5498, 120
      %v5528 = vpop.permute.xlu0 %5527
      %5529 = vrot.lane.b32.xlu0 %v5499, 120
      %v5530 = vpop.permute.xlu0 %5529
      %5531 = vrot.lane.b32.xlu0 %v5500, 120
      %v5532 = vpop.permute.xlu0 %5531
      %5537 = vst.msk [vmem:[#allocation5 + $0x50] sm:$0xf] %vm5078, %v5526
      %5538 = vst.msk [vmem:[#allocation5 + $0x54] sm:$0xf] %vm5078, %v5528
      %5539 = vst.msk [vmem:[#allocation5 + $0x58] sm:$0xf] %vm5078, %v5530
      %5540 = vst.msk [vmem:[#allocation5 + $0x5c] sm:$0xf] %vm5078, %v5532
      %v5541 = vld [vmem:[%s4689] sm:$0xf]
      %v5542 = vld [vmem:[%s4689 + $0x4] sm:$0xf]
      %v5543 = vld [vmem:[%s4689 + $0x8] sm:$0xf]
      %v5544 = vld [vmem:[%s4689 + $0xc] sm:$0xf]
      %5545 = vst.msk [vmem:[#allocation5 + $0x60] sm:$0xf] %vm5078, %v5541
      %5546 = vst.msk [vmem:[#allocation5 + $0x64] sm:$0xf] %vm5078, %v5542
      %5547 = vst.msk [vmem:[#allocation5 + $0x68] sm:$0xf] %vm5078, %v5543
      %5548 = vst.msk [vmem:[#allocation5 + $0x6c] sm:$0xf] %vm5078, %v5544
      %5553 = vrot.lane.b32.xlu0 %v5541, 124
      %v5554 = vpop.permute.xlu0 %5553
      %5555 = vrot.lane.b32.xlu0 %v5542, 124
      %v5556 = vpop.permute.xlu0 %5555
      %5557 = vrot.lane.b32.xlu0 %v5543, 124
      %v5558 = vpop.permute.xlu0 %5557
      %5559 = vrot.lane.b32.xlu0 %v5544, 124
      %v5560 = vpop.permute.xlu0 %5559
      %5565 = vst.msk [vmem:[#allocation5 + $0x70] sm:$0xf] %vm5078, %v5554
      %5566 = vst.msk [vmem:[#allocation5 + $0x74] sm:$0xf] %vm5078, %v5556
      %5567 = vst.msk [vmem:[#allocation5 + $0x78] sm:$0xf] %vm5078, %v5558
      %5568 = vst.msk [vmem:[#allocation5 + $0x7c] sm:$0xf] %vm5078, %v5560
      %5569 = vrot.lane.b32.xlu0 %v5541, 120
      %v5570 = vpop.permute.xlu0 %5569
      %5571 = vrot.lane.b32.xlu0 %v5542, 120
      %v5572 = vpop.permute.xlu0 %5571
      %5573 = vrot.lane.b32.xlu0 %v5543, 120
      %v5574 = vpop.permute.xlu0 %5573
      %5575 = vrot.lane.b32.xlu0 %v5544, 120
      %v5576 = vpop.permute.xlu0 %5575
      %5581 = vst.msk [vmem:[#allocation5 + $0x80] sm:$0xf] %vm5078, %v5570
      %5582 = vst.msk [vmem:[#allocation5 + $0x84] sm:$0xf] %vm5078, %v5572
      %5583 = vst.msk [vmem:[#allocation5 + $0x88] sm:$0xf] %vm5078, %v5574
      %5584 = vst.msk [vmem:[#allocation5 + $0x8c] sm:$0xf] %vm5078, %v5576
      %v5585 = vld [vmem:[#allocation5] sm:$0xf]
      %v5586 = vld [vmem:[#allocation5 + $0x4] sm:$0xf]
      %v5587 = vld [vmem:[#allocation5 + $0x8] sm:$0xf]
      %v5588 = vld [vmem:[#allocation5 + $0xc] sm:$0xf]
      %v5589 = vld [vmem:[#allocation5 + $0x10] sm:$0xf]
      %v5590 = vld [vmem:[#allocation5 + $0x14] sm:$0xf]
      %v5591 = vld [vmem:[#allocation5 + $0x18] sm:$0xf]
      %v5592 = vld [vmem:[#allocation5 + $0x1c] sm:$0xf]
      %v5593 = vld [vmem:[#allocation5 + $0x20] sm:$0xf]
      %v5594 = vld [vmem:[#allocation5 + $0x24] sm:$0xf]
      %v5595 = vld [vmem:[#allocation5 + $0x28] sm:$0xf]
      %v5596 = vld [vmem:[#allocation5 + $0x2c] sm:$0xf]
      %v5597 = vld [vmem:[#allocation5 + $0x30] sm:$0xf]
      %v5598 = vld [vmem:[#allocation5 + $0x34] sm:$0xf]
      %v5599 = vld [vmem:[#allocation5 + $0x38] sm:$0xf]
      %v5600 = vld [vmem:[#allocation5 + $0x3c] sm:$0xf]
      %v5601 = vld [vmem:[#allocation5 + $0x40] sm:$0xf]
      %v5602 = vld [vmem:[#allocation5 + $0x44] sm:$0xf]
      %v5603 = vld [vmem:[#allocation5 + $0x48] sm:$0xf]
      %v5604 = vld [vmem:[#allocation5 + $0x4c] sm:$0xf]
      %v5605 = vld [vmem:[#allocation5 + $0x50] sm:$0xf]
      %v5606 = vld [vmem:[#allocation5 + $0x54] sm:$0xf]
      %v5607 = vld [vmem:[#allocation5 + $0x58] sm:$0xf]
      %v5608 = vld [vmem:[#allocation5 + $0x5c] sm:$0xf]
      %v5609 = vld [vmem:[#allocation5 + $0x60] sm:$0xf]
      %v5610 = vld [vmem:[#allocation5 + $0x64] sm:$0xf]
      %v5611 = vld [vmem:[#allocation5 + $0x68] sm:$0xf]
      %v5612 = vld [vmem:[#allocation5 + $0x6c] sm:$0xf]
      %v5613 = vld [vmem:[#allocation5 + $0x70] sm:$0xf]
      %v5614 = vld [vmem:[#allocation5 + $0x74] sm:$0xf]
      %v5615 = vld [vmem:[#allocation5 + $0x78] sm:$0xf]
      %v5616 = vld [vmem:[#allocation5 + $0x7c] sm:$0xf]
      %v5617 = vld [vmem:[#allocation5 + $0x80] sm:$0xf]
      %v5618 = vld [vmem:[#allocation5 + $0x84] sm:$0xf]
      %v5619 = vld [vmem:[#allocation5 + $0x88] sm:$0xf]
      %v5620 = vld [vmem:[#allocation5 + $0x8c] sm:$0xf]
      %v5657 = vunpack.c.l.b16 %v5585
      %v5658 = vunpack.c.l.b16 %v5586
      %v5659 = vunpack.c.l.b16 %v5587
      %v5660 = vunpack.c.l.b16 %v5588
      %v5661 = vunpack.c.l.b16 %v5589
      %v5662 = vunpack.c.l.b16 %v5590
      %v5663 = vunpack.c.l.b16 %v5591
      %v5664 = vunpack.c.l.b16 %v5592
      %v5665 = vunpack.c.l.b16 %v5593
      %v5666 = vunpack.c.l.b16 %v5594
      %v5667 = vunpack.c.l.b16 %v5595
      %v5668 = vunpack.c.l.b16 %v5596
      %v5669 = vunpack.c.l.b16 %v5597
      %v5670 = vunpack.c.l.b16 %v5598
      %v5671 = vunpack.c.l.b16 %v5599
      %v5672 = vunpack.c.l.b16 %v5600
      %v5673 = vunpack.c.l.b16 %v5601
      %v5674 = vunpack.c.l.b16 %v5602
      %v5675 = vunpack.c.l.b16 %v5603
      %v5676 = vunpack.c.l.b16 %v5604
      %v5677 = vunpack.c.l.b16 %v5605
      %v5678 = vunpack.c.l.b16 %v5606
      %v5679 = vunpack.c.l.b16 %v5607
      %v5680 = vunpack.c.l.b16 %v5608
      %v5681 = vunpack.c.l.b16 %v5609
      %v5682 = vunpack.c.l.b16 %v5610
      %v5683 = vunpack.c.l.b16 %v5611
      %v5684 = vunpack.c.l.b16 %v5612
      %v5685 = vunpack.c.l.b16 %v5613
      %v5686 = vunpack.c.l.b16 %v5614
      %v5687 = vunpack.c.l.b16 %v5615
      %v5688 = vunpack.c.l.b16 %v5616
      %v5689 = vunpack.c.l.b16 %v5617
      %v5690 = vunpack.c.l.b16 %v5618
      %v5691 = vunpack.c.l.b16 %v5619
      %v5692 = vunpack.c.l.b16 %v5620
      %v5693 = vpack.c.b16 %v5658, %v5657
      %v5694 = vpack.c.b16 %v5660, %v5659
      %v5695 = vpack.c.b16 %v5662, %v5661
      %v5696 = vpack.c.b16 %v5664, %v5663
      %v5697 = vpack.c.b16 %v5666, %v5665
      %v5698 = vpack.c.b16 %v5668, %v5667
      %v5699 = vpack.c.b16 %v5670, %v5669
      %v5700 = vpack.c.b16 %v5672, %v5671
      %v5701 = vpack.c.b16 %v5674, %v5673
      %v5702 = vpack.c.b16 %v5676, %v5675
      %v5703 = vpack.c.b16 %v5678, %v5677
      %v5704 = vpack.c.b16 %v5680, %v5679
      %v5705 = vpack.c.b16 %v5682, %v5681
      %v5706 = vpack.c.b16 %v5684, %v5683
      %v5707 = vpack.c.b16 %v5686, %v5685
      %v5708 = vpack.c.b16 %v5688, %v5687
      %v5709 = vpack.c.b16 %v5690, %v5689
      %v5710 = vpack.c.b16 %v5692, %v5691
      %5729 = vmatpush.bf16.msra.mxu0 %v5700
      %5730 = vmatpush.bf16.msra.mxu0 %v5699
      %5731 = vmatpush.bf16.msra.mxu0 %v5698
      %5732 = vmatpush.bf16.msra.mxu0 %v5697
      %5733 = vmatpush.bf16.msra.mxu0 %v5696
      %5734 = vmatpush.bf16.msra.mxu0 %v5695
      %5735 = vmatpush.bf16.msra.mxu0 %v5694
      %5736 = vmatpush.bf16.msra.mxu0 %v5693
      %5737 = vmatmul.bf16.gmra.mxu0 %v5263
      %v5738 = vpop.f32.mrf.mxu0
      %v5739 = vadd.f32 %v5057, %v5738
      %v5740 = vpop.f32.mrf.mxu0
      %v5741 = vadd.f32 %v5062, %v5740
      %5742 = vmatmul.bf16.gmra.mxu0 %v5266
      %v5743 = vpop.f32.mrf.mxu0
      %v5744 = vadd.f32 %v5067, %v5743
      %v5745 = vpop.f32.mrf.mxu0
      %v5746 = vadd.f32 %v5072, %v5745
      %5747 = vdwg.mxu0
      %5748 = vmatpush.bf16.msra.mxu0 %v5708
      %5749 = vmatpush.bf16.msra.mxu0 %v5707
      %5750 = vmatpush.bf16.msra.mxu0 %v5706
      %5751 = vmatpush.bf16.msra.mxu0 %v5705
      %5752 = vmatpush.bf16.msra.mxu0 %v5704
      %5753 = vmatpush.bf16.msra.mxu0 %v5703
      %5754 = vmatpush.bf16.msra.mxu0 %v5702
      %5755 = vmatpush.bf16.msra.mxu0 %v5701
      %5756 = vmatmul.bf16.gmra.mxu0 %v5264
      %v5757 = vpop.f32.mrf.mxu0
      %v5758 = vadd.f32 %v5739, %v5757
      %v5759 = vpop.f32.mrf.mxu0
      %v5760 = vadd.f32 %v5741, %v5759
      %5761 = vmatmul.bf16.gmra.mxu0 %v5267
      %v5762 = vpop.f32.mrf.mxu0
      %v5763 = vadd.f32 %v5744, %v5762
      %v5764 = vpop.f32.mrf.mxu0
      %v5765 = vadd.f32 %v5746, %v5764
      %5766 = vdwg.mxu0
      %5767 = vmatpush.bf16.msra.mxu0 0
      %5768 = vmatpush.bf16.msra.mxu0 0
      %5769 = vmatpush.bf16.msra.mxu0 0
      %5770 = vmatpush.bf16.msra.mxu0 0
      %5771 = vmatpush.bf16.msra.mxu0 0
      %5772 = vmatpush.bf16.msra.mxu0 0
      %5773 = vmatpush.bf16.msra.mxu0 %v5710
      %5774 = vmatpush.bf16.msra.mxu0 %v5709
      %5775 = vmatmul.bf16.gmra.mxu0 %v5382
      %v5776 = vpop.f32.mrf.mxu0
      %v5777 = vadd.f32 %v5758, %v5776
      %v5778 = vpop.f32.mrf.mxu0
      %v5779 = vadd.f32 %v5760, %v5778
      %5780 = vmatmul.bf16.gmra.mxu0 %v5385
      %v5781 = vpop.f32.mrf.mxu0
      %v5782 = vadd.f32 %v5763, %v5781
      %v5783 = vpop.f32.mrf.mxu0
      %v5784 = vadd.f32 %v5765, %v5783
      %5785 = vdwg.mxu0
      %v5786 = vmax.f32 %v5777, 0.0
      %v5787 = vmax.f32 %v5779, 0.0
      %v5788 = vmax.f32 %v5782, 0.0
      %v5789 = vmax.f32 %v5784, 0.0
      %s5790 = scalar_lea.vmem %s197, 32
      %5791 = vst.msk [vmem:[%s5790] sm:$0xff] %vm5448, %v5786
      %5792 = vst.msk [vmem:[%s5790 + $0x8] sm:$0xff] %vm5448, %v5787
      %5793 = vst.msk [vmem:[%s5790 + $0x10] sm:$0xff] %vm5448, %v5788
      %5794 = vst.msk [vmem:[%s5790 + $0x18] sm:$0xff] %vm5448, %v5789
      %v5795 = vld [vmem:[%s4343] sm:$0xf]
      %v5796 = vld [vmem:[%s4343 + $0x4] sm:$0xf]
      %v5797 = vld [vmem:[%s4343 + $0x8] sm:$0xf]
      %v5798 = vld [vmem:[%s4343 + $0xc] sm:$0xf]
      %5799 = vst.msk [vmem:[#allocation5] sm:$0xf] %vm5078, %v5795
      %5800 = vst.msk [vmem:[#allocation5 + $0x4] sm:$0xf] %vm5078, %v5796
      %5801 = vst.msk [vmem:[#allocation5 + $0x8] sm:$0xf] %vm5078, %v5797
      %5802 = vst.msk [vmem:[#allocation5 + $0xc] sm:$0xf] %vm5078, %v5798
      %5807 = vrot.lane.b32.xlu0 %v5795, 124
      %v5808 = vpop.permute.xlu0 %5807
      %5809 = vrot.lane.b32.xlu0 %v5796, 124
      %v5810 = vpop.permute.xlu0 %5809
      %5811 = vrot.lane.b32.xlu0 %v5797, 124
      %v5812 = vpop.permute.xlu0 %5811
      %5813 = vrot.lane.b32.xlu0 %v5798, 124
      %v5814 = vpop.permute.xlu0 %5813
      %5819 = vst.msk [vmem:[#allocation5 + $0x10] sm:$0xf] %vm5078, %v5808
      %5820 = vst.msk [vmem:[#allocation5 + $0x14] sm:$0xf] %vm5078, %v5810
      %5821 = vst.msk [vmem:[#allocation5 + $0x18] sm:$0xf] %vm5078, %v5812
      %5822 = vst.msk [vmem:[#allocation5 + $0x1c] sm:$0xf] %vm5078, %v5814
      %5823 = vrot.lane.b32.xlu0 %v5795, 120
      %v5824 = vpop.permute.xlu0 %5823
      %5825 = vrot.lane.b32.xlu0 %v5796, 120
      %v5826 = vpop.permute.xlu0 %5825
      %5827 = vrot.lane.b32.xlu0 %v5797, 120
      %v5828 = vpop.permute.xlu0 %5827
      %5829 = vrot.lane.b32.xlu0 %v5798, 120
      %v5830 = vpop.permute.xlu0 %5829
      %5835 = vst.msk [vmem:[#allocation5 + $0x20] sm:$0xf] %vm5078, %v5824
      %5836 = vst.msk [vmem:[#allocation5 + $0x24] sm:$0xf] %vm5078, %v5826
      %5837 = vst.msk [vmem:[#allocation5 + $0x28] sm:$0xf] %vm5078, %v5828
      %5838 = vst.msk [vmem:[#allocation5 + $0x2c] sm:$0xf] %vm5078, %v5830
      %v5839 = vld [vmem:[%s4689] sm:$0xf]
      %v5840 = vld [vmem:[%s4689 + $0x4] sm:$0xf]
      %v5841 = vld [vmem:[%s4689 + $0x8] sm:$0xf]
      %v5842 = vld [vmem:[%s4689 + $0xc] sm:$0xf]
      %5843 = vst.msk [vmem:[#allocation5 + $0x30] sm:$0xf] %vm5078, %v5839
      %5844 = vst.msk [vmem:[#allocation5 + $0x34] sm:$0xf] %vm5078, %v5840
      %5845 = vst.msk [vmem:[#allocation5 + $0x38] sm:$0xf] %vm5078, %v5841
      %5846 = vst.msk [vmem:[#allocation5 + $0x3c] sm:$0xf] %vm5078, %v5842
      %5851 = vrot.lane.b32.xlu0 %v5839, 124
      %v5852 = vpop.permute.xlu0 %5851
      %5853 = vrot.lane.b32.xlu0 %v5840, 124
      %v5854 = vpop.permute.xlu0 %5853
      %5855 = vrot.lane.b32.xlu0 %v5841, 124
      %v5856 = vpop.permute.xlu0 %5855
      %5857 = vrot.lane.b32.xlu0 %v5842, 124
      %v5858 = vpop.permute.xlu0 %5857
      %5863 = vst.msk [vmem:[#allocation5 + $0x40] sm:$0xf] %vm5078, %v5852
      %5864 = vst.msk [vmem:[#allocation5 + $0x44] sm:$0xf] %vm5078, %v5854
      %5865 = vst.msk [vmem:[#allocation5 + $0x48] sm:$0xf] %vm5078, %v5856
      %5866 = vst.msk [vmem:[#allocation5 + $0x4c] sm:$0xf] %vm5078, %v5858
      %5867 = vrot.lane.b32.xlu0 %v5839, 120
      %v5868 = vpop.permute.xlu0 %5867
      %5869 = vrot.lane.b32.xlu0 %v5840, 120
      %v5870 = vpop.permute.xlu0 %5869
      %5871 = vrot.lane.b32.xlu0 %v5841, 120
      %v5872 = vpop.permute.xlu0 %5871
      %5873 = vrot.lane.b32.xlu0 %v5842, 120
      %v5874 = vpop.permute.xlu0 %5873
      %5879 = vst.msk [vmem:[#allocation5 + $0x50] sm:$0xf] %vm5078, %v5868
      %5880 = vst.msk [vmem:[#allocation5 + $0x54] sm:$0xf] %vm5078, %v5870
      %5881 = vst.msk [vmem:[#allocation5 + $0x58] sm:$0xf] %vm5078, %v5872
      %5882 = vst.msk [vmem:[#allocation5 + $0x5c] sm:$0xf] %vm5078, %v5874
      %v5883 = vld [vmem:[%s5035] sm:$0xf]
      %v5884 = vld [vmem:[%s5035 + $0x4] sm:$0xf]
      %v5885 = vld [vmem:[%s5035 + $0x8] sm:$0xf]
      %v5886 = vld [vmem:[%s5035 + $0xc] sm:$0xf]
      %5887 = vst.msk [vmem:[#allocation5 + $0x60] sm:$0xf] %vm5078, %v5883
      %5888 = vst.msk [vmem:[#allocation5 + $0x64] sm:$0xf] %vm5078, %v5884
      %5889 = vst.msk [vmem:[#allocation5 + $0x68] sm:$0xf] %vm5078, %v5885
      %5890 = vst.msk [vmem:[#allocation5 + $0x6c] sm:$0xf] %vm5078, %v5886
      %5895 = vrot.lane.b32.xlu0 %v5883, 124
      %v5896 = vpop.permute.xlu0 %5895
      %5897 = vrot.lane.b32.xlu0 %v5884, 124
      %v5898 = vpop.permute.xlu0 %5897
      %5899 = vrot.lane.b32.xlu0 %v5885, 124
      %v5900 = vpop.permute.xlu0 %5899
      %5901 = vrot.lane.b32.xlu0 %v5886, 124
      %v5902 = vpop.permute.xlu0 %5901
      %5907 = vst.msk [vmem:[#allocation5 + $0x70] sm:$0xf] %vm5078, %v5896
      %5908 = vst.msk [vmem:[#allocation5 + $0x74] sm:$0xf] %vm5078, %v5898
      %5909 = vst.msk [vmem:[#allocation5 + $0x78] sm:$0xf] %vm5078, %v5900
      %5910 = vst.msk [vmem:[#allocation5 + $0x7c] sm:$0xf] %vm5078, %v5902
      %5911 = vrot.lane.b32.xlu0 %v5883, 120
      %v5912 = vpop.permute.xlu0 %5911
      %5913 = vrot.lane.b32.xlu0 %v5884, 120
      %v5914 = vpop.permute.xlu0 %5913
      %5915 = vrot.lane.b32.xlu0 %v5885, 120
      %v5916 = vpop.permute.xlu0 %5915
      %5917 = vrot.lane.b32.xlu0 %v5886, 120
      %v5918 = vpop.permute.xlu0 %5917
      %5923 = vst.msk [vmem:[#allocation5 + $0x80] sm:$0xf] %vm5078, %v5912
      %5924 = vst.msk [vmem:[#allocation5 + $0x84] sm:$0xf] %vm5078, %v5914
      %5925 = vst.msk [vmem:[#allocation5 + $0x88] sm:$0xf] %vm5078, %v5916
      %5926 = vst.msk [vmem:[#allocation5 + $0x8c] sm:$0xf] %vm5078, %v5918
      %v5927 = vld [vmem:[#allocation5] sm:$0xf]
      %v5928 = vld [vmem:[#allocation5 + $0x4] sm:$0xf]
      %v5929 = vld [vmem:[#allocation5 + $0x8] sm:$0xf]
      %v5930 = vld [vmem:[#allocation5 + $0xc] sm:$0xf]
      %v5931 = vld [vmem:[#allocation5 + $0x10] sm:$0xf]
      %v5932 = vld [vmem:[#allocation5 + $0x14] sm:$0xf]
      %v5933 = vld [vmem:[#allocation5 + $0x18] sm:$0xf]
      %v5934 = vld [vmem:[#allocation5 + $0x1c] sm:$0xf]
      %v5935 = vld [vmem:[#allocation5 + $0x20] sm:$0xf]
      %v5936 = vld [vmem:[#allocation5 + $0x24] sm:$0xf]
      %v5937 = vld [vmem:[#allocation5 + $0x28] sm:$0xf]
      %v5938 = vld [vmem:[#allocation5 + $0x2c] sm:$0xf]
      %v5939 = vld [vmem:[#allocation5 + $0x30] sm:$0xf]
      %v5940 = vld [vmem:[#allocation5 + $0x34] sm:$0xf]
      %v5941 = vld [vmem:[#allocation5 + $0x38] sm:$0xf]
      %v5942 = vld [vmem:[#allocation5 + $0x3c] sm:$0xf]
      %v5943 = vld [vmem:[#allocation5 + $0x40] sm:$0xf]
      %v5944 = vld [vmem:[#allocation5 + $0x44] sm:$0xf]
      %v5945 = vld [vmem:[#allocation5 + $0x48] sm:$0xf]
      %v5946 = vld [vmem:[#allocation5 + $0x4c] sm:$0xf]
      %v5947 = vld [vmem:[#allocation5 + $0x50] sm:$0xf]
      %v5948 = vld [vmem:[#allocation5 + $0x54] sm:$0xf]
      %v5949 = vld [vmem:[#allocation5 + $0x58] sm:$0xf]
      %v5950 = vld [vmem:[#allocation5 + $0x5c] sm:$0xf]
      %v5951 = vld [vmem:[#allocation5 + $0x60] sm:$0xf]
      %v5952 = vld [vmem:[#allocation5 + $0x64] sm:$0xf]
      %v5953 = vld [vmem:[#allocation5 + $0x68] sm:$0xf]
      %v5954 = vld [vmem:[#allocation5 + $0x6c] sm:$0xf]
      %v5955 = vld [vmem:[#allocation5 + $0x70] sm:$0xf]
      %v5956 = vld [vmem:[#allocation5 + $0x74] sm:$0xf]
      %v5957 = vld [vmem:[#allocation5 + $0x78] sm:$0xf]
      %v5958 = vld [vmem:[#allocation5 + $0x7c] sm:$0xf]
      %v5959 = vld [vmem:[#allocation5 + $0x80] sm:$0xf]
      %v5960 = vld [vmem:[#allocation5 + $0x84] sm:$0xf]
      %v5961 = vld [vmem:[#allocation5 + $0x88] sm:$0xf]
      %v5962 = vld [vmem:[#allocation5 + $0x8c] sm:$0xf]
      %v5999 = vunpack.c.l.b16 %v5927
      %v6000 = vunpack.c.l.b16 %v5928
      %v6001 = vunpack.c.l.b16 %v5929
      %v6002 = vunpack.c.l.b16 %v5930
      %v6003 = vunpack.c.l.b16 %v5931
      %v6004 = vunpack.c.l.b16 %v5932
      %v6005 = vunpack.c.l.b16 %v5933
      %v6006 = vunpack.c.l.b16 %v5934
      %v6007 = vunpack.c.l.b16 %v5935
      %v6008 = vunpack.c.l.b16 %v5936
      %v6009 = vunpack.c.l.b16 %v5937
      %v6010 = vunpack.c.l.b16 %v5938
      %v6011 = vunpack.c.l.b16 %v5939
      %v6012 = vunpack.c.l.b16 %v5940
      %v6013 = vunpack.c.l.b16 %v5941
      %v6014 = vunpack.c.l.b16 %v5942
      %v6015 = vunpack.c.l.b16 %v5943
      %v6016 = vunpack.c.l.b16 %v5944
      %v6017 = vunpack.c.l.b16 %v5945
      %v6018 = vunpack.c.l.b16 %v5946
      %v6019 = vunpack.c.l.b16 %v5947
      %v6020 = vunpack.c.l.b16 %v5948
      %v6021 = vunpack.c.l.b16 %v5949
      %v6022 = vunpack.c.l.b16 %v5950
      %v6023 = vunpack.c.l.b16 %v5951
      %v6024 = vunpack.c.l.b16 %v5952
      %v6025 = vunpack.c.l.b16 %v5953
      %v6026 = vunpack.c.l.b16 %v5954
      %v6027 = vunpack.c.l.b16 %v5955
      %v6028 = vunpack.c.l.b16 %v5956
      %v6029 = vunpack.c.l.b16 %v5957
      %v6030 = vunpack.c.l.b16 %v5958
      %v6031 = vunpack.c.l.b16 %v5959
      %v6032 = vunpack.c.l.b16 %v5960
      %v6033 = vunpack.c.l.b16 %v5961
      %v6034 = vunpack.c.l.b16 %v5962
      %v6035 = vpack.c.b16 %v6000, %v5999
      %v6036 = vpack.c.b16 %v6002, %v6001
      %v6037 = vpack.c.b16 %v6004, %v6003
      %v6038 = vpack.c.b16 %v6006, %v6005
      %v6039 = vpack.c.b16 %v6008, %v6007
      %v6040 = vpack.c.b16 %v6010, %v6009
      %v6041 = vpack.c.b16 %v6012, %v6011
      %v6042 = vpack.c.b16 %v6014, %v6013
      %v6043 = vpack.c.b16 %v6016, %v6015
      %v6044 = vpack.c.b16 %v6018, %v6017
      %v6045 = vpack.c.b16 %v6020, %v6019
      %v6046 = vpack.c.b16 %v6022, %v6021
      %v6047 = vpack.c.b16 %v6024, %v6023
      %v6048 = vpack.c.b16 %v6026, %v6025
      %v6049 = vpack.c.b16 %v6028, %v6027
      %v6050 = vpack.c.b16 %v6030, %v6029
      %v6051 = vpack.c.b16 %v6032, %v6031
      %v6052 = vpack.c.b16 %v6034, %v6033
      %6071 = vmatpush.bf16.msra.mxu0 %v6042
      %6072 = vmatpush.bf16.msra.mxu0 %v6041
      %6073 = vmatpush.bf16.msra.mxu0 %v6040
      %6074 = vmatpush.bf16.msra.mxu0 %v6039
      %6075 = vmatpush.bf16.msra.mxu0 %v6038
      %6076 = vmatpush.bf16.msra.mxu0 %v6037
      %6077 = vmatpush.bf16.msra.mxu0 %v6036
      %6078 = vmatpush.bf16.msra.mxu0 %v6035
      %6079 = vmatmul.bf16.gmra.mxu0 %v5263
      %v6080 = vpop.f32.mrf.mxu0
      %v6081 = vadd.f32 %v5057, %v6080
      %v6082 = vpop.f32.mrf.mxu0
      %v6083 = vadd.f32 %v5062, %v6082
      %6084 = vmatmul.bf16.gmra.mxu0 %v5266
      %v6085 = vpop.f32.mrf.mxu0
      %v6086 = vadd.f32 %v5067, %v6085
      %v6087 = vpop.f32.mrf.mxu0
      %v6088 = vadd.f32 %v5072, %v6087
      %6089 = vdwg.mxu0
      %6090 = vmatpush.bf16.msra.mxu0 %v6050
      %6091 = vmatpush.bf16.msra.mxu0 %v6049
      %6092 = vmatpush.bf16.msra.mxu0 %v6048
      %6093 = vmatpush.bf16.msra.mxu0 %v6047
      %6094 = vmatpush.bf16.msra.mxu0 %v6046
      %6095 = vmatpush.bf16.msra.mxu0 %v6045
      %6096 = vmatpush.bf16.msra.mxu0 %v6044
      %6097 = vmatpush.bf16.msra.mxu0 %v6043
      %6098 = vmatmul.bf16.gmra.mxu0 %v5264
      %v6099 = vpop.f32.mrf.mxu0
      %v6100 = vadd.f32 %v6081, %v6099
      %v6101 = vpop.f32.mrf.mxu0
      %v6102 = vadd.f32 %v6083, %v6101
      %6103 = vmatmul.bf16.gmra.mxu0 %v5267
      %v6104 = vpop.f32.mrf.mxu0
      %v6105 = vadd.f32 %v6086, %v6104
      %v6106 = vpop.f32.mrf.mxu0
      %v6107 = vadd.f32 %v6088, %v6106
      %6108 = vdwg.mxu0
      %6109 = vmatpush.bf16.msra.mxu0 0
      %6110 = vmatpush.bf16.msra.mxu0 0
      %6111 = vmatpush.bf16.msra.mxu0 0
      %6112 = vmatpush.bf16.msra.mxu0 0
      %6113 = vmatpush.bf16.msra.mxu0 0
      %6114 = vmatpush.bf16.msra.mxu0 0
      %6115 = vmatpush.bf16.msra.mxu0 %v6052
      %6116 = vmatpush.bf16.msra.mxu0 %v6051
      %6117 = vmatmul.bf16.gmra.mxu0 %v5382
      %v6118 = vpop.f32.mrf.mxu0
      %v6119 = vadd.f32 %v6100, %v6118
      %v6120 = vpop.f32.mrf.mxu0
      %v6121 = vadd.f32 %v6102, %v6120
      %6122 = vmatmul.bf16.gmra.mxu0 %v5385
      %v6123 = vpop.f32.mrf.mxu0
      %v6124 = vadd.f32 %v6105, %v6123
      %v6125 = vpop.f32.mrf.mxu0
      %v6126 = vadd.f32 %v6107, %v6125
      %6127 = vdwg.mxu0
      %v6128 = vmax.f32 %v6119, 0.0
      %v6129 = vmax.f32 %v6121, 0.0
      %v6130 = vmax.f32 %v6124, 0.0
      %v6131 = vmax.f32 %v6126, 0.0
      %s6132 = scalar_lea.vmem %s197, 64
      %6133 = vst.msk [vmem:[%s6132] sm:$0xff] %vm5448, %v6128
      %6134 = vst.msk [vmem:[%s6132 + $0x8] sm:$0xff] %vm5448, %v6129
      %6135 = vst.msk [vmem:[%s6132 + $0x10] sm:$0xff] %vm5448, %v6130
      %6136 = vst.msk [vmem:[%s6132 + $0x18] sm:$0xff] %vm5448, %v6131
      %p6137 = scmp.lt.s32.totalorder %s15, 1
      %s6138 = scalar_select %p6137, %s15, 1
      %s6139 = smul.addr %s6138, 12
      %s6140 = smul.addr %s6139, 8
      %s6141 = scalar_lea.vmem %s4, %s6140
      // Predicated region
      $region37: #{encoder_forward.1} parent=35 // pred_check
        %p6142 = pneg %p122
      $region38: #{encoder_forward.1} parent=35 // pred_check_branch
        %6144 = sbr.rel (%p6142) target = $region40
      $region39: #{encoder_forward.1} parent=35 // pred_region
        _
      $region40: #{encoder_forward.1} parent=35 // pred_fallthru
        _
    $region36: #{encoder_forward.1} parent=5 // pred_fallthru
      _
    %p6145 = scmp.le.s32.totalorder 2, %s10
    // Predicated region
    $region41: #{encoder_forward.1} parent=5 // pred_check
      %p6146 = pneg %p6145
    $region42: #{encoder_forward.1} parent=5 // pred_check_branch
      %6148 = sbr.rel (%p6146) target = $region44
    $region43: #{encoder_forward.1} parent=5 // pred_region
      %s6149 = ssub.s32 %s10, 2
      // Predicated region
      $region45: #{encoder_forward.1} parent=43 // pred_check
        %p6150 = pneg %p128
      $region46: #{encoder_forward.1} parent=43 // pred_check_branch
        %6152 = sbr.rel (%p6150) target = $region48
      $region47: #{encoder_forward.1} parent=43 // pred_region
        %p6153 = scmp.lt.s32.totalorder %s16, 1
        %s6154 = scalar_select %p6153, %s16, 1
        %s6155 = smul.addr %s6154, 12
        %s6156 = smul.addr %s6155, 8
        %s6157 = scalar_lea.vmem %s4, %s6156
      $region48: #{encoder_forward.1} parent=43 // pred_fallthru
        _
    $region44: #{encoder_forward.1} parent=5 // pred_fallthru
      _
  $region6: #{encoder_forward.1} parent=0 // loop_footer
    %s14 = sadd.s32 1, %s10
  $region7: #{encoder_forward.1} parent=0 // loop_footer_branch
    %9 = sbr.rel target = $region3
  $region8: #{encoder_forward.1} parent=0 // loop_exit
    _

</llo_original>
